<compile_context>
chip_gen: v5e
topology: v5e:2x2
jax: 0.10.0
libtpu: 0.0.40
codegen_flags: <defaults>
</compile_context>

<pallas_src>
import numpy as np
import jax
import jax.numpy as jnp
from jax import lax
from jax.experimental import pallas as pl
from jax.experimental.pallas import tpu as pltpu

KSIZE = 3
C_IN = 11
C_PAD = 16          # block-1 input channels zero-padded 11 -> 16 (8-aligned)
C_OUT = 11
MAX_DIL = 32
# (in_ch, out_ch, dilation, has_norm)  -- matches GeneratorTCN.__init__
BLOCK_CFG = [
    (11, 64, 1, False),
    (64, 64, 2, True),
    (64, 64, 4, True),
    (64, 64, 8, True),
    (64, 32, 16, True),
    (32, 16, 32, False),
]


def _round8(n):
    return -(-n // 8) * 8


def _mish(x):
    # PyTorch nn.Mish: x * tanh(softplus(x)).
    # tanh(softplus(x)) = (e^2 + 2e) / (e^2 + 2e + 2), e = exp(x); clamping x at
    # 20 (the softplus threshold) makes the ratio exactly 1.0 in f32, i.e. the
    # same x-passthrough PyTorch uses.  1 exp (EUP) + 1 approx reciprocal (EUP).
    e = jnp.exp(jnp.minimum(x, 20.0))
    num = e * (e + 2.0)
    return x * (num * pl.reciprocal(num + 2.0, approx=True))


def _make_kernel(Bt, L):
    """Kernel processing one (C, W = Bt*L) slab (Bt samples folded into lanes)."""
    W = Bt * L
    # (cin_kernel, cout, dilation, has_norm, has_proj); block-1 cin padded to 16
    cfg = [(_round8(ci), co, d, hn, ci != co) for (ci, co, d, hn) in BLOCK_CFG]

    def kernel(*refs):
        x_ref = refs[0]        # (1, C_PAD, W)
        j_ref = refs[1]        # (32, 32) exchange (anti-identity) matrix, bf16
        o_ref = refs[-2]       # (1, C_OUT, W)
        stk_ref = refs[-1]     # (192, W) bf16 scratch: [tap_l; center; tap_r]
        wrefs = refs[2:-2]
        cur = [0]

        def nxt():
            r = wrefs[cur[0]]
            cur[0] += 1
            return r

        def stage_taps(hb, cin, d):
            """Write the K-stacked operand [tap_l; center; tap_r] (3*cin, W)
            into stk_ref rows [0, 3*cin) with exact reflect boundaries."""
            stk_ref[cin:2 * cin, :] = hb                      # center tap
            for s in range(Bt):
                o = s * L
                # interior (shifted) parts of the left / right taps
                stk_ref[0:cin, o + d:o + L] = hb[:, o:o + L - d]
                stk_ref[2 * cin:3 * cin, o:o + L - d] = hb[:, o + d:o + L]
                if d < 8:
                    # tiny boundaries: per-column reflected copies
                    for j in range(d):
                        stk_ref[0:cin, o + j:o + j + 1] = \
                            hb[:, o + d - j:o + d - j + 1]
                        stk_ref[2 * cin:3 * cin, o + L - d + j:o + L - d + j + 1] = \
                            hb[:, o + L - 2 - j:o + L - 1 - j]
                else:
                    # reversed d-wide segments via a (d, d) exchange matmul
                    Jd = j_ref[32 - d:32, 0:d]                # (d, d) 0/1, bf16
                    seg_l = jnp.dot(hb[:, o + 1:o + d + 1], Jd,
                                    preferred_element_type=jnp.float32
                                    ).astype(hb.dtype)        # h[:, d - i]
                    seg_r = jnp.dot(hb[:, o + L - d - 1:o + L - 1], Jd,
                                    preferred_element_type=jnp.float32
                                    ).astype(hb.dtype)        # h[:, L - 2 - j]
                    stk_ref[0:cin, o:o + d] = seg_l
                    stk_ref[2 * cin:3 * cin, o + L - d:o + L] = seg_r

        def conv(hb, cin, d, w_ref, b_ref):
            stage_taps(hb, cin, d)
            acc = jnp.dot(w_ref[...], stk_ref[0:3 * cin, :],
                          preferred_element_type=jnp.float32)  # (cout, W)
            if b_ref is not None:
                acc = acc + b_ref[...]                         # (cout, 1) bcast
            return acc

        h = x_ref[0].astype(jnp.float32)                       # (C_PAD, W)
        lane = lax.broadcasted_iota(jnp.int32, (1, W), 1)

        for (cin, cout, d, has_norm, has_proj) in cfg:
            has_bias = not has_norm                            # added_norm => bias=False
            w1 = nxt()
            b1 = nxt() if has_bias else None
            w2 = nxt()
            b2 = nxt() if has_bias else None
            wd = nxt() if has_proj else None

            hb = h.astype(jnp.bfloat16)                        # hoisted bf16 cast
            y = _mish(conv(hb, cin, d, w1, b1))
            yb = y.astype(jnp.bfloat16)
            z = _mish(conv(yb, cout, d, w2, b2))

            if has_norm:
                # GroupNorm(1, C, affine=False): per-sample over (C, L), eps=1e-5
                inv_n = 1.0 / float(cout * L)
                if Bt == 1:
                    m = jnp.sum(z) * inv_n
                    m2 = jnp.sum(z * z) * inv_n
                    z = (z - m) * lax.rsqrt(m2 - m * m + 1e-5)
                else:
                    mean_l = jnp.zeros((1, W), jnp.float32)
                    rstd_l = jnp.zeros((1, W), jnp.float32)
                    for s in range(Bt):
                        seg = z[:, s * L:(s + 1) * L]
                        m = jnp.sum(seg) * inv_n
                        m2 = jnp.sum(seg * seg) * inv_n
                        r = lax.rsqrt(m2 - m * m + 1e-5)
                        in_s = (lane >= s * L) & (lane < (s + 1) * L)
                        mean_l = jnp.where(in_s, m, mean_l)
                        rstd_l = jnp.where(in_s, r, rstd_l)
                    z = (z - mean_l) * rstd_l

            if has_proj:
                ident = jnp.dot(wd[...], hb, preferred_element_type=jnp.float32)
            else:
                ident = h
            h = z + ident                                      # (cout, W) f32

        # 1x1 conv head, fused
        wo = nxt()                                             # (11, 16) bf16
        bo = nxt()                                             # (11, 1)  f32
        out = jnp.dot(wo[...], h.astype(jnp.bfloat16),
                      preferred_element_type=jnp.float32) + bo[...]
        o_ref[0] = out.astype(o_ref.dtype)

    return kernel


def generator_tcn_forward(x, block_params, out_params, samples_per_step=None):
    """x: (B, 11, L) PyTorch NCL layout -> (B, 11, L). Whole net = one pallas_call."""
    B, C, L = x.shape
    assert C == C_IN
    assert L >= MAX_DIL + 1, "reflect 'same' padding needs L > max dilation (32)"

    if samples_per_step is None:
        Bt = 1
        for cand in range(1, min(B, 8) + 1):
            if B % cand == 0 and cand * L <= 1024:
                Bt = cand
    else:
        Bt = int(samples_per_step)
        assert B % Bt == 0
    G = B // Bt
    W = Bt * L

    # Pad channels 11 -> 16 and fold Bt samples into the lane axis.
    xp = jnp.pad(x, ((0, 0), (0, C_PAD - C), (0, 0)))
    xs = xp.reshape(G, Bt, C_PAD, L).transpose(0, 2, 1, 3).reshape(G, C_PAD, W)

    # 32x32 exchange matrix (J[r, c] = 1 iff r + c == 31); J[32-d:, :d] reverses
    # a d-wide lane segment exactly (0/1 values are exact in bf16).
    j32 = jnp.asarray(np.eye(32, dtype=np.float32)[::-1].copy(), jnp.bfloat16)

    args = [xs, j32]
    in_specs = [pl.BlockSpec((1, C_PAD, W), lambda g: (g, 0, 0)),
                pl.BlockSpec(j32.shape, lambda g: (0, 0))]

    def add_rep(a):
        # small weight/constant, replicated across the grid (full-array block)
        args.append(a)
        in_specs.append(pl.BlockSpec(a.shape, lambda g: (0, 0)))

    def pack_conv(w, cin, cin_k):
        # (K, cout, cin) -> (cout, K*cin_k) matching the [tap_l; center; tap_r]
        # stacking order, zero-padding cin -> cin_k.
        taps = []
        for t in range(KSIZE):
            wt = w[t]
            if cin_k != cin:
                wt = jnp.pad(wt, ((0, 0), (0, cin_k - cin)))
            taps.append(wt)
        return jnp.concatenate(taps, axis=1).astype(jnp.bfloat16)

    for p, (cin, cout, dil, has_norm) in zip(block_params, BLOCK_CFG):
        cin_k = _round8(cin)
        add_rep(pack_conv(p["w1"], cin, cin_k))
        if not has_norm:
            add_rep(p["b1"])
        add_rep(pack_conv(p["w2"], cout, cout))
        if not has_norm:
            add_rep(p["b2"])
        if cin != cout:
            wd = p["wd"]
            if cin_k != cin:
                wd = jnp.pad(wd, ((0, 0), (0, cin_k - cin)))
            add_rep(wd.astype(jnp.bfloat16))
    add_rep(out_params["w"].astype(jnp.bfloat16))
    add_rep(out_params["b"])

    out_slab = pl.pallas_call(
        _make_kernel(Bt, L),
        out_shape=jax.ShapeDtypeStruct((G, C_OUT, W), jnp.float32),
        grid=(G,),
        in_specs=in_specs,
        out_specs=pl.BlockSpec((1, C_OUT, W), lambda g: (g, 0, 0)),
        scratch_shapes=[pltpu.VMEM((3 * 64, W), jnp.bfloat16)],
        compiler_params=pltpu.CompilerParams(
            dimension_semantics=("parallel",)),
    )(*args)

    # Un-fold the lane axis back to (B, C_OUT, L).
    return (out_slab.reshape(G, C_OUT, Bt, L)
            .transpose(0, 2, 1, 3)
            .reshape(B, C_OUT, L))


def init_params(key):
    """Deterministic synthetic parameters with the module's shapes.
    Conv weights are stored per-tap as (K, out_ch, in_ch); biases as (out_ch, 1)."""
    block_params = []
    for (cin, cout, dil, has_norm) in BLOCK_CFG:
        key, k1, k2, k3, k4, k5 = jax.random.split(key, 6)
        s1 = 1.0 / np.sqrt(cin * KSIZE)
        s2 = 1.0 / np.sqrt(cout * KSIZE)
        p = {
            "w1": jax.random.normal(k1, (KSIZE, cout, cin), jnp.float32) * s1,
            "w2": jax.random.normal(k3, (KSIZE, cout, cout), jnp.float32) * s2,
        }
        if not has_norm:                      # norm blocks have bias=False convs
            p["b1"] = jax.random.normal(k2, (cout, 1), jnp.float32) * s1
            p["b2"] = jax.random.normal(k4, (cout, 1), jnp.float32) * s2
        if cin != cout:                       # dim_conv (1x1, no bias)
            p["wd"] = (jax.random.normal(k5, (cout, cin), jnp.float32)
                       / np.sqrt(cin))
        block_params.append(p)
    key, ko1, ko2 = jax.random.split(key, 3)
    out_params = {
        "w": jax.random.normal(ko1, (C_OUT, 16), jnp.float32) / np.sqrt(16.0),
        "b": jax.random.normal(ko2, (C_OUT, 1), jnp.float32) * 0.1,
    }
    return block_params, out_params


if __name__ == "__main__":
    key = jax.random.PRNGKey(0)
    kx, kp = jax.random.split(key)
    B, C, L = 4, 11, 64          # L must exceed the largest dilation (32)
    x = jax.random.normal(kx, (B, C, L), jnp.float32)
    block_params, out_params = init_params(kp)

    fwd = jax.jit(generator_tcn_forward, static_argnames=("samples_per_step",))
    # Bt=2 folds two samples into the lane axis -> 128 dense lanes per step.
    out = jax.block_until_ready(fwd(x, block_params, out_params,
                                    samples_per_step=2))

    assert out.shape == (B, C_OUT, L), out.shape
    assert bool(jnp.all(jnp.isfinite(out)))
    print("KERNEL_OK")
</pallas_src>

<mosaic_0001>
module attributes {stable_mosaic.version = 11 : i64} {
  func.func @kernel(%arg0: i32, %arg1: memref<1x16x128xf32, #tpu.memory_space<vmem>>, %arg2: memref<32x32xbf16, #tpu.memory_space<vmem>>, %arg3: memref<64x48xbf16, #tpu.memory_space<vmem>>, %arg4: memref<64x1xf32, #tpu.memory_space<vmem>>, %arg5: memref<64x192xbf16, #tpu.memory_space<vmem>>, %arg6: memref<64x1xf32, #tpu.memory_space<vmem>>, %arg7: memref<64x16xbf16, #tpu.memory_space<vmem>>, %arg8: memref<64x192xbf16, #tpu.memory_space<vmem>>, %arg9: memref<64x192xbf16, #tpu.memory_space<vmem>>, %arg10: memref<64x192xbf16, #tpu.memory_space<vmem>>, %arg11: memref<64x192xbf16, #tpu.memory_space<vmem>>, %arg12: memref<64x192xbf16, #tpu.memory_space<vmem>>, %arg13: memref<64x192xbf16, #tpu.memory_space<vmem>>, %arg14: memref<32x192xbf16, #tpu.memory_space<vmem>>, %arg15: memref<32x96xbf16, #tpu.memory_space<vmem>>, %arg16: memref<32x64xbf16, #tpu.memory_space<vmem>>, %arg17: memref<16x96xbf16, #tpu.memory_space<vmem>>, %arg18: memref<16x1xf32, #tpu.memory_space<vmem>>, %arg19: memref<16x48xbf16, #tpu.memory_space<vmem>>, %arg20: memref<16x1xf32, #tpu.memory_space<vmem>>, %arg21: memref<16x32xbf16, #tpu.memory_space<vmem>>, %arg22: memref<11x16xbf16, #tpu.memory_space<vmem>>, %arg23: memref<11x1xf32, #tpu.memory_space<vmem>>, %arg24: memref<1x11x128xf32, #tpu.memory_space<vmem>>, %arg25: memref<192x128xbf16, #tpu.memory_space<vmem>>) attributes {dimension_semantics = [#tpu.dimension_semantics<parallel>], iteration_bounds = array<i64: 2>, scalar_prefetch = 0 : i64, scratch_operands = 1 : i64, tpu.core_type = #tpu.core_type<tc>, window_params = [{transform_indices = @transform_0, window_bounds = array<i64: 1, 16, 128>}, {pipeline_mode = #tpu.pipeline_mode<synchronous>, transform_indices = @transform_1, window_bounds = array<i64: 32, 32>}, {pipeline_mode = #tpu.pipeline_mode<synchronous>, transform_indices = @transform_2, window_bounds = array<i64: 64, 48>}, {pipeline_mode = #tpu.pipeline_mode<synchronous>, transform_indices = @transform_3, window_bounds = array<i64: 64, 1>}, {pipeline_mode = #tpu.pipeline_mode<synchronous>, transform_indices = @transform_4, window_bounds = array<i64: 64, 192>}, {pipeline_mode = #tpu.pipeline_mode<synchronous>, transform_indices = @transform_5, window_bounds = array<i64: 64, 1>}, {pipeline_mode = #tpu.pipeline_mode<synchronous>, transform_indices = @transform_6, window_bounds = array<i64: 64, 16>}, {pipeline_mode = #tpu.pipeline_mode<synchronous>, transform_indices = @transform_7, window_bounds = array<i64: 64, 192>}, {pipeline_mode = #tpu.pipeline_mode<synchronous>, transform_indices = @transform_8, window_bounds = array<i64: 64, 192>}, {pipeline_mode = #tpu.pipeline_mode<synchronous>, transform_indices = @transform_9, window_bounds = array<i64: 64, 192>}, {pipeline_mode = #tpu.pipeline_mode<synchronous>, transform_indices = @transform_10, window_bounds = array<i64: 64, 192>}, {pipeline_mode = #tpu.pipeline_mode<synchronous>, transform_indices = @transform_11, window_bounds = array<i64: 64, 192>}, {pipeline_mode = #tpu.pipeline_mode<synchronous>, transform_indices = @transform_12, window_bounds = array<i64: 64, 192>}, {pipeline_mode = #tpu.pipeline_mode<synchronous>, transform_indices = @transform_13, window_bounds = array<i64: 32, 192>}, {pipeline_mode = #tpu.pipeline_mode<synchronous>, transform_indices = @transform_14, window_bounds = array<i64: 32, 96>}, {pipeline_mode = #tpu.pipeline_mode<synchronous>, transform_indices = @transform_15, window_bounds = array<i64: 32, 64>}, {pipeline_mode = #tpu.pipeline_mode<synchronous>, transform_indices = @transform_16, window_bounds = array<i64: 16, 96>}, {pipeline_mode = #tpu.pipeline_mode<synchronous>, transform_indices = @transform_17, window_bounds = array<i64: 16, 1>}, {pipeline_mode = #tpu.pipeline_mode<synchronous>, transform_indices = @transform_18, window_bounds = array<i64: 16, 48>}, {pipeline_mode = #tpu.pipeline_mode<synchronous>, transform_indices = @transform_19, window_bounds = array<i64: 16, 1>}, {pipeline_mode = #tpu.pipeline_mode<synchronous>, transform_indices = @transform_20, window_bounds = array<i64: 16, 32>}, {pipeline_mode = #tpu.pipeline_mode<synchronous>, transform_indices = @transform_21, window_bounds = array<i64: 11, 16>}, {pipeline_mode = #tpu.pipeline_mode<synchronous>, transform_indices = @transform_22, window_bounds = array<i64: 11, 1>}, {transform_indices = @transform_23, window_bounds = array<i64: 1, 11, 128>}]} {
    %c0 = arith.constant 0 : index
    %c0_0 = arith.constant 0 : index
    %c0_1 = arith.constant 0 : index
    %0 = vector.load %arg1[%c0, %c0_0, %c0_1] : memref<1x16x128xf32, #tpu.memory_space<vmem>>, vector<1x16x128xf32>
    %1 = vector.shape_cast %0 : vector<1x16x128xf32> to vector<16x128xf32>
    %2 = tpu.iota {dimensions = array<i32: 1>} : vector<1x128xi32>
    %3 = arith.truncf %1 : vector<16x128xf32> to vector<16x128xbf16>
    %c16 = arith.constant 16 : index
    %c0_2 = arith.constant 0 : index
    %4 = vector.load %arg25[%c16, %c0_2] : memref<192x128xbf16, #tpu.memory_space<vmem>>, vector<16x128xbf16>
    tpu.vector_store %arg25[%c16, %c0_2], %3 {strides = array<i32>} : memref<192x128xbf16, #tpu.memory_space<vmem>>, vector<16x128xbf16>,
    %5 = vector.extract_strided_slice %3 {offsets = [0, 0], sizes = [16, 63], strides = [1, 1]} : vector<16x128xbf16> to vector<16x63xbf16>
    %c0_3 = arith.constant 0 : index
    %c1 = arith.constant 1 : index
    %6 = vector.load %arg25[%c0_3, %c1] : memref<192x128xbf16, #tpu.memory_space<vmem>>, vector<16x63xbf16>
    tpu.vector_store %arg25[%c0_3, %c1], %5 {strides = array<i32>} : memref<192x128xbf16, #tpu.memory_space<vmem>>, vector<16x63xbf16>,
    %7 = vector.extract_strided_slice %3 {offsets = [0, 1], sizes = [16, 63], strides = [1, 1]} : vector<16x128xbf16> to vector<16x63xbf16>
    %c32 = arith.constant 32 : index
    %c0_4 = arith.constant 0 : index
    %8 = vector.load %arg25[%c32, %c0_4] : memref<192x128xbf16, #tpu.memory_space<vmem>>, vector<16x63xbf16>
    tpu.vector_store %arg25[%c32, %c0_4], %7 {strides = array<i32>} : memref<192x128xbf16, #tpu.memory_space<vmem>>, vector<16x63xbf16>,
    %9 = vector.extract_strided_slice %3 {offsets = [0, 1], sizes = [16, 1], strides = [1, 1]} : vector<16x128xbf16> to vector<16x1xbf16>
    %c0_5 = arith.constant 0 : index
    %c0_6 = arith.constant 0 : index
    %10 = vector.load %arg25[%c0_5, %c0_6] : memref<192x128xbf16, #tpu.memory_space<vmem>>, vector<16x1xbf16>
    tpu.vector_store %arg25[%c0_5, %c0_6], %9 {strides = array<i32>} : memref<192x128xbf16, #tpu.memory_space<vmem>>, vector<16x1xbf16>,
    %11 = vector.extract_strided_slice %3 {offsets = [0, 62], sizes = [16, 1], strides = [1, 1]} : vector<16x128xbf16> to vector<16x1xbf16>
    %c32_7 = arith.constant 32 : index
    %c63 = arith.constant 63 : index
    %12 = vector.load %arg25[%c32_7, %c63] : memref<192x128xbf16, #tpu.memory_space<vmem>>, vector<16x1xbf16>
    tpu.vector_store %arg25[%c32_7, %c63], %11 {strides = array<i32>} : memref<192x128xbf16, #tpu.memory_space<vmem>>, vector<16x1xbf16>,
    %13 = vector.extract_strided_slice %3 {offsets = [0, 64], sizes = [16, 63], strides = [1, 1]} : vector<16x128xbf16> to vector<16x63xbf16>
    %c0_8 = arith.constant 0 : index
    %c65 = arith.constant 65 : index
    %14 = vector.load %arg25[%c0_8, %c65] : memref<192x128xbf16, #tpu.memory_space<vmem>>, vector<16x63xbf16>
    tpu.vector_store %arg25[%c0_8, %c65], %13 {strides = array<i32>} : memref<192x128xbf16, #tpu.memory_space<vmem>>, vector<16x63xbf16>,
    %15 = vector.extract_strided_slice %3 {offsets = [0, 65], sizes = [16, 63], strides = [1, 1]} : vector<16x128xbf16> to vector<16x63xbf16>
    %c32_9 = arith.constant 32 : index
    %c64 = arith.constant 64 : index
    %16 = vector.load %arg25[%c32_9, %c64] : memref<192x128xbf16, #tpu.memory_space<vmem>>, vector<16x63xbf16>
    tpu.vector_store %arg25[%c32_9, %c64], %15 {strides = array<i32>} : memref<192x128xbf16, #tpu.memory_space<vmem>>, vector<16x63xbf16>,
    %17 = vector.extract_strided_slice %3 {offsets = [0, 65], sizes = [16, 1], strides = [1, 1]} : vector<16x128xbf16> to vector<16x1xbf16>
    %c0_10 = arith.constant 0 : index
    %c64_11 = arith.constant 64 : index
    %18 = vector.load %arg25[%c0_10, %c64_11] : memref<192x128xbf16, #tpu.memory_space<vmem>>, vector<16x1xbf16>
    tpu.vector_store %arg25[%c0_10, %c64_11], %17 {strides = array<i32>} : memref<192x128xbf16, #tpu.memory_space<vmem>>, vector<16x1xbf16>,
    %19 = vector.extract_strided_slice %3 {offsets = [0, 126], sizes = [16, 1], strides = [1, 1]} : vector<16x128xbf16> to vector<16x1xbf16>
    %c32_12 = arith.constant 32 : index
    %c127 = arith.constant 127 : index
    %20 = vector.load %arg25[%c32_12, %c127] : memref<192x128xbf16, #tpu.memory_space<vmem>>, vector<16x1xbf16>
    tpu.vector_store %arg25[%c32_12, %c127], %19 {strides = array<i32>} : memref<192x128xbf16, #tpu.memory_space<vmem>>, vector<16x1xbf16>,
    %c0_13 = arith.constant 0 : index
    %c0_14 = arith.constant 0 : index
    %21 = vector.load %arg3[%c0_13, %c0_14] : memref<64x48xbf16, #tpu.memory_space<vmem>>, vector<64x48xbf16>
    %c0_15 = arith.constant 0 : index
    %c0_16 = arith.constant 0 : index
    %22 = vector.load %arg25[%c0_15, %c0_16] : memref<192x128xbf16, #tpu.memory_space<vmem>>, vector<48x128xbf16>
    %cst = arith.constant dense<0.000000e+00> : vector<64x128xf32>
    %23 = tpu.matmul %21, %22, %cst {dimension_numbers = #tpu.dot_dimension_numbers<[1], [0], [0], [1], [0, 0, 1, 1], [], []>} : vector<64x48xbf16>, vector<48x128xbf16>, vector<64x128xf32> -> vector<64x128xf32>
    %c0_17 = arith.constant 0 : index
    %c0_18 = arith.constant 0 : index
    %24 = vector.load %arg4[%c0_17, %c0_18] : memref<64x1xf32, #tpu.memory_space<vmem>>, vector<64x1xf32>
    %25 = vector.broadcast %24 : vector<64x1xf32> to vector<64x128xf32>
    %26 = arith.addf %23, %25 : vector<64x128xf32>
    %cst_19 = arith.constant 2.000000e+01 : f32
    %27 = vector.broadcast %cst_19 : f32 to vector<64x128xf32>
    %28 = arith.minimumf %26, %27 : vector<64x128xf32>
    %29 = math.exp %28 : vector<64x128xf32>
    %cst_20 = arith.constant 2.000000e+00 : f32
    %30 = vector.broadcast %cst_20 : f32 to vector<64x128xf32>
    %31 = arith.addf %29, %30 : vector<64x128xf32>
    %32 = arith.mulf %29, %31 : vector<64x128xf32>
    %cst_21 = arith.constant 2.000000e+00 : f32
    %33 = vector.broadcast %cst_21 : f32 to vector<64x128xf32>
    %34 = arith.addf %32, %33 : vector<64x128xf32>
    %35 = tpu.reciprocal %34 {approx = true} : vector<64x128xf32> -> vector<64x128xf32>
    %36 = arith.mulf %32, %35 : vector<64x128xf32>
    %37 = arith.mulf %26, %36 : vector<64x128xf32>
    %38 = arith.truncf %37 : vector<64x128xf32> to vector<64x128xbf16>
    %c64_22 = arith.constant 64 : index
    %c0_23 = arith.constant 0 : index
    %39 = vector.load %arg25[%c64_22, %c0_23] : memref<192x128xbf16, #tpu.memory_space<vmem>>, vector<64x128xbf16>
    tpu.vector_store %arg25[%c64_22, %c0_23], %38 {strides = array<i32>} : memref<192x128xbf16, #tpu.memory_space<vmem>>, vector<64x128xbf16>,
    %40 = vector.extract_strided_slice %38 {offsets = [0, 0], sizes = [64, 63], strides = [1, 1]} : vector<64x128xbf16> to vector<64x63xbf16>
    %c0_24 = arith.constant 0 : index
    %c1_25 = arith.constant 1 : index
    %41 = vector.load %arg25[%c0_24, %c1_25] : memref<192x128xbf16, #tpu.memory_space<vmem>>, vector<64x63xbf16>
    tpu.vector_store %arg25[%c0_24, %c1_25], %40 {strides = array<i32>} : memref<192x128xbf16, #tpu.memory_space<vmem>>, vector<64x63xbf16>,
    %42 = vector.extract_strided_slice %38 {offsets = [0, 1], sizes = [64, 63], strides = [1, 1]} : vector<64x128xbf16> to vector<64x63xbf16>
    %c128 = arith.constant 128 : index
    %c0_26 = arith.constant 0 : index
    %43 = vector.load %arg25[%c128, %c0_26] : memref<192x128xbf16, #tpu.memory_space<vmem>>, vector<64x63xbf16>
    tpu.vector_store %arg25[%c128, %c0_26], %42 {strides = array<i32>} : memref<192x128xbf16, #tpu.memory_space<vmem>>, vector<64x63xbf16>,
    %44 = vector.extract_strided_slice %38 {offsets = [0, 1], sizes = [64, 1], strides = [1, 1]} : vector<64x128xbf16> to vector<64x1xbf16>
    %c0_27 = arith.constant 0 : index
    %c0_28 = arith.constant 0 : index
    %45 = vector.load %arg25[%c0_27, %c0_28] : memref<192x128xbf16, #tpu.memory_space<vmem>>, vector<64x1xbf16>
    tpu.vector_store %arg25[%c0_27, %c0_28], %44 {strides = array<i32>} : memref<192x128xbf16, #tpu.memory_space<vmem>>, vector<64x1xbf16>,
    %46 = vector.extract_strided_slice %38 {offsets = [0, 62], sizes = [64, 1], strides = [1, 1]} : vector<64x128xbf16> to vector<64x1xbf16>
    %c128_29 = arith.constant 128 : index
    %c63_30 = arith.constant 63 : index
    %47 = vector.load %arg25[%c128_29, %c63_30] : memref<192x128xbf16, #tpu.memory_space<vmem>>, vector<64x1xbf16>
    tpu.vector_store %arg25[%c128_29, %c63_30], %46 {strides = array<i32>} : memref<192x128xbf16, #tpu.memory_space<vmem>>, vector<64x1xbf16>,
    %48 = vector.extract_strided_slice %38 {offsets = [0, 64], sizes = [64, 63], strides = [1, 1]} : vector<64x128xbf16> to vector<64x63xbf16>
    %c0_31 = arith.constant 0 : index
    %c65_32 = arith.constant 65 : index
    %49 = vector.load %arg25[%c0_31, %c65_32] : memref<192x128xbf16, #tpu.memory_space<vmem>>, vector<64x63xbf16>
    tpu.vector_store %arg25[%c0_31, %c65_32], %48 {strides = array<i32>} : memref<192x128xbf16, #tpu.memory_space<vmem>>, vector<64x63xbf16>,
    %50 = vector.extract_strided_slice %38 {offsets = [0, 65], sizes = [64, 63], strides = [1, 1]} : vector<64x128xbf16> to vector<64x63xbf16>
    %c128_33 = arith.constant 128 : index
    %c64_34 = arith.constant 64 : index
    %51 = vector.load %arg25[%c128_33, %c64_34] : memref<192x128xbf16, #tpu.memory_space<vmem>>, vector<64x63xbf16>
    tpu.vector_store %arg25[%c128_33, %c64_34], %50 {strides = array<i32>} : memref<192x128xbf16, #tpu.memory_space<vmem>>, vector<64x63xbf16>,
    %52 = vector.extract_strided_slice %38 {offsets = [0, 65], sizes = [64, 1], strides = [1, 1]} : vector<64x128xbf16> to vector<64x1xbf16>
    %c0_35 = arith.constant 0 : index
    %c64_36 = arith.constant 64 : index
    %53 = vector.load %arg25[%c0_35, %c64_36] : memref<192x128xbf16, #tpu.memory_space<vmem>>, vector<64x1xbf16>
    tpu.vector_store %arg25[%c0_35, %c64_36], %52 {strides = array<i32>} : memref<192x128xbf16, #tpu.memory_space<vmem>>, vector<64x1xbf16>,
    %54 = vector.extract_strided_slice %38 {offsets = [0, 126], sizes = [64, 1], strides = [1, 1]} : vector<64x128xbf16> to vector<64x1xbf16>
    %c128_37 = arith.constant 128 : index
    %c127_38 = arith.constant 127 : index
    %55 = vector.load %arg25[%c128_37, %c127_38] : memref<192x128xbf16, #tpu.memory_space<vmem>>, vector<64x1xbf16>
    tpu.vector_store %arg25[%c128_37, %c127_38], %54 {strides = array<i32>} : memref<192x128xbf16, #tpu.memory_space<vmem>>, vector<64x1xbf16>,
    %c0_39 = arith.constant 0 : index
    %c0_40 = arith.constant 0 : index
    %56 = vector.load %arg5[%c0_39, %c0_40] : memref<64x192xbf16, #tpu.memory_space<vmem>>, vector<64x192xbf16>
    %c0_41 = arith.constant 0 : index
    %c0_42 = arith.constant 0 : index
    %57 = vector.load %arg25[%c0_41, %c0_42] : memref<192x128xbf16, #tpu.memory_space<vmem>>, vector<192x128xbf16>
    %cst_43 = arith.constant dense<0.000000e+00> : vector<64x128xf32>
    %58 = tpu.matmul %56, %57, %cst_43 {dimension_numbers = #tpu.dot_dimension_numbers<[1], [0], [0], [1], [0, 0, 1, 1], [], []>} : vector<64x192xbf16>, vector<192x128xbf16>, vector<64x128xf32> -> vector<64x128xf32>
    %c0_44 = arith.constant 0 : index
    %c0_45 = arith.constant 0 : index
    %59 = vector.load %arg6[%c0_44, %c0_45] : memref<64x1xf32, #tpu.memory_space<vmem>>, vector<64x1xf32>
    %60 = vector.broadcast %59 : vector<64x1xf32> to vector<64x128xf32>
    %61 = arith.addf %58, %60 : vector<64x128xf32>
    %cst_46 = arith.constant 2.000000e+01 : f32
    %62 = vector.broadcast %cst_46 : f32 to vector<64x128xf32>
    %63 = arith.minimumf %61, %62 : vector<64x128xf32>
    %64 = math.exp %63 : vector<64x128xf32>
    %cst_47 = arith.constant 2.000000e+00 : f32
    %65 = vector.broadcast %cst_47 : f32 to vector<64x128xf32>
    %66 = arith.addf %64, %65 : vector<64x128xf32>
    %67 = arith.mulf %64, %66 : vector<64x128xf32>
    %cst_48 = arith.constant 2.000000e+00 : f32
    %68 = vector.broadcast %cst_48 : f32 to vector<64x128xf32>
    %69 = arith.addf %67, %68 : vector<64x128xf32>
    %70 = tpu.reciprocal %69 {approx = true} : vector<64x128xf32> -> vector<64x128xf32>
    %71 = arith.mulf %67, %70 : vector<64x128xf32>
    %72 = arith.mulf %61, %71 : vector<64x128xf32>
    %c0_49 = arith.constant 0 : index
    %c0_50 = arith.constant 0 : index
    %73 = vector.load %arg7[%c0_49, %c0_50] : memref<64x16xbf16, #tpu.memory_space<vmem>>, vector<64x16xbf16>
    %cst_51 = arith.constant dense<0.000000e+00> : vector<64x128xf32>
    %74 = tpu.matmul %73, %3, %cst_51 {dimension_numbers = #tpu.dot_dimension_numbers<[1], [0], [0], [1], [0, 0, 1, 1], [], []>} : vector<64x16xbf16>, vector<16x128xbf16>, vector<64x128xf32> -> vector<64x128xf32>
    %75 = arith.addf %72, %74 : vector<64x128xf32>
    %76 = arith.truncf %75 : vector<64x128xf32> to vector<64x128xbf16>
    %c64_52 = arith.constant 64 : index
    %c0_53 = arith.constant 0 : index
    %77 = vector.load %arg25[%c64_52, %c0_53] : memref<192x128xbf16, #tpu.memory_space<vmem>>, vector<64x128xbf16>
    tpu.vector_store %arg25[%c64_52, %c0_53], %76 {strides = array<i32>} : memref<192x128xbf16, #tpu.memory_space<vmem>>, vector<64x128xbf16>,
    %78 = vector.extract_strided_slice %76 {offsets = [0, 0], sizes = [64, 62], strides = [1, 1]} : vector<64x128xbf16> to vector<64x62xbf16>
    %c0_54 = arith.constant 0 : index
    %c2 = arith.constant 2 : index
    %79 = vector.load %arg25[%c0_54, %c2] : memref<192x128xbf16, #tpu.memory_space<vmem>>, vector<64x62xbf16>
    tpu.vector_store %arg25[%c0_54, %c2], %78 {strides = array<i32>} : memref<192x128xbf16, #tpu.memory_space<vmem>>, vector<64x62xbf16>,
    %80 = vector.extract_strided_slice %76 {offsets = [0, 2], sizes = [64, 62], strides = [1, 1]} : vector<64x128xbf16> to vector<64x62xbf16>
    %c128_55 = arith.constant 128 : index
    %c0_56 = arith.constant 0 : index
    %81 = vector.load %arg25[%c128_55, %c0_56] : memref<192x128xbf16, #tpu.memory_space<vmem>>, vector<64x62xbf16>
    tpu.vector_store %arg25[%c128_55, %c0_56], %80 {strides = array<i32>} : memref<192x128xbf16, #tpu.memory_space<vmem>>, vector<64x62xbf16>,
    %82 = vector.extract_strided_slice %76 {offsets = [0, 2], sizes = [64, 1], strides = [1, 1]} : vector<64x128xbf16> to vector<64x1xbf16>
    %c0_57 = arith.constant 0 : index
    %c0_58 = arith.constant 0 : index
    %83 = vector.load %arg25[%c0_57, %c0_58] : memref<192x128xbf16, #tpu.memory_space<vmem>>, vector<64x1xbf16>
    tpu.vector_store %arg25[%c0_57, %c0_58], %82 {strides = array<i32>} : memref<192x128xbf16, #tpu.memory_space<vmem>>, vector<64x1xbf16>,
    %84 = vector.extract_strided_slice %76 {offsets = [0, 62], sizes = [64, 1], strides = [1, 1]} : vector<64x128xbf16> to vector<64x1xbf16>
    %c128_59 = arith.constant 128 : index
    %c62 = arith.constant 62 : index
    %85 = vector.load %arg25[%c128_59, %c62] : memref<192x128xbf16, #tpu.memory_space<vmem>>, vector<64x1xbf16>
    tpu.vector_store %arg25[%c128_59, %c62], %84 {strides = array<i32>} : memref<192x128xbf16, #tpu.memory_space<vmem>>, vector<64x1xbf16>,
    %86 = vector.extract_strided_slice %76 {offsets = [0, 1], sizes = [64, 1], strides = [1, 1]} : vector<64x128xbf16> to vector<64x1xbf16>
    %c0_60 = arith.constant 0 : index
    %c1_61 = arith.constant 1 : index
    %87 = vector.load %arg25[%c0_60, %c1_61] : memref<192x128xbf16, #tpu.memory_space<vmem>>, vector<64x1xbf16>
    tpu.vector_store %arg25[%c0_60, %c1_61], %86 {strides = array<i32>} : memref<192x128xbf16, #tpu.memory_space<vmem>>, vector<64x1xbf16>,
    %88 = vector.extract_strided_slice %76 {offsets = [0, 61], sizes = [64, 1], strides = [1, 1]} : vector<64x128xbf16> to vector<64x1xbf16>
    %c128_62 = arith.constant 128 : index
    %c63_63 = arith.constant 63 : index
    %89 = vector.load %arg25[%c128_62, %c63_63] : memref<192x128xbf16, #tpu.memory_space<vmem>>, vector<64x1xbf16>
    tpu.vector_store %arg25[%c128_62, %c63_63], %88 {strides = array<i32>} : memref<192x128xbf16, #tpu.memory_space<vmem>>, vector<64x1xbf16>,
    %90 = vector.extract_strided_slice %76 {offsets = [0, 64], sizes = [64, 62], strides = [1, 1]} : vector<64x128xbf16> to vector<64x62xbf16>
    %c0_64 = arith.constant 0 : index
    %c66 = arith.constant 66 : index
    %91 = vector.load %arg25[%c0_64, %c66] : memref<192x128xbf16, #tpu.memory_space<vmem>>, vector<64x62xbf16>
    tpu.vector_store %arg25[%c0_64, %c66], %90 {strides = array<i32>} : memref<192x128xbf16, #tpu.memory_space<vmem>>, vector<64x62xbf16>,
    %92 = vector.extract_strided_slice %76 {offsets = [0, 66], sizes = [64, 62], strides = [1, 1]} : vector<64x128xbf16> to vector<64x62xbf16>
    %c128_65 = arith.constant 128 : index
    %c64_66 = arith.constant 64 : index
    %93 = vector.load %arg25[%c128_65, %c64_66] : memref<192x128xbf16, #tpu.memory_space<vmem>>, vector<64x62xbf16>
    tpu.vector_store %arg25[%c128_65, %c64_66], %92 {strides = array<i32>} : memref<192x128xbf16, #tpu.memory_space<vmem>>, vector<64x62xbf16>,
    %94 = vector.extract_strided_slice %76 {offsets = [0, 66], sizes = [64, 1], strides = [1, 1]} : vector<64x128xbf16> to vector<64x1xbf16>
    %c0_67 = arith.constant 0 : index
    %c64_68 = arith.constant 64 : index
    %95 = vector.load %arg25[%c0_67, %c64_68] : memref<192x128xbf16, #tpu.memory_space<vmem>>, vector<64x1xbf16>
    tpu.vector_store %arg25[%c0_67, %c64_68], %94 {strides = array<i32>} : memref<192x128xbf16, #tpu.memory_space<vmem>>, vector<64x1xbf16>,
    %96 = vector.extract_strided_slice %76 {offsets = [0, 126], sizes = [64, 1], strides = [1, 1]} : vector<64x128xbf16> to vector<64x1xbf16>
    %c128_69 = arith.constant 128 : index
    %c126 = arith.constant 126 : index
    %97 = vector.load %arg25[%c128_69, %c126] : memref<192x128xbf16, #tpu.memory_space<vmem>>, vector<64x1xbf16>
    tpu.vector_store %arg25[%c128_69, %c126], %96 {strides = array<i32>} : memref<192x128xbf16, #tpu.memory_space<vmem>>, vector<64x1xbf16>,
    %98 = vector.extract_strided_slice %76 {offsets = [0, 65], sizes = [64, 1], strides = [1, 1]} : vector<64x128xbf16> to vector<64x1xbf16>
    %c0_70 = arith.constant 0 : index
    %c65_71 = arith.constant 65 : index
    %99 = vector.load %arg25[%c0_70, %c65_71] : memref<192x128xbf16, #tpu.memory_space<vmem>>, vector<64x1xbf16>
    tpu.vector_store %arg25[%c0_70, %c65_71], %98 {strides = array<i32>} : memref<192x128xbf16, #tpu.memory_space<vmem>>, vector<64x1xbf16>,
    %100 = vector.extract_strided_slice %76 {offsets = [0, 125], sizes = [64, 1], strides = [1, 1]} : vector<64x128xbf16> to vector<64x1xbf16>
    %c128_72 = arith.constant 128 : index
    %c127_73 = arith.constant 127 : index
    %101 = vector.load %arg25[%c128_72, %c127_73] : memref<192x128xbf16, #tpu.memory_space<vmem>>, vector<64x1xbf16>
    tpu.vector_store %arg25[%c128_72, %c127_73], %100 {strides = array<i32>} : memref<192x128xbf16, #tpu.memory_space<vmem>>, vector<64x1xbf16>,
    %c0_74 = arith.constant 0 : index
    %c0_75 = arith.constant 0 : index
    %102 = vector.load %arg8[%c0_74, %c0_75] : memref<64x192xbf16, #tpu.memory_space<vmem>>, vector<64x192xbf16>
    %c0_76 = arith.constant 0 : index
    %c0_77 = arith.constant 0 : index
    %103 = vector.load %arg25[%c0_76, %c0_77] : memref<192x128xbf16, #tpu.memory_space<vmem>>, vector<192x128xbf16>
    %cst_78 = arith.constant dense<0.000000e+00> : vector<64x128xf32>
    %104 = tpu.matmul %102, %103, %cst_78 {dimension_numbers = #tpu.dot_dimension_numbers<[1], [0], [0], [1], [0, 0, 1, 1], [], []>} : vector<64x192xbf16>, vector<192x128xbf16>, vector<64x128xf32> -> vector<64x128xf32>
    %cst_79 = arith.constant 2.000000e+01 : f32
    %105 = vector.broadcast %cst_79 : f32 to vector<64x128xf32>
    %106 = arith.minimumf %104, %105 : vector<64x128xf32>
    %107 = math.exp %106 : vector<64x128xf32>
    %cst_80 = arith.constant 2.000000e+00 : f32
    %108 = vector.broadcast %cst_80 : f32 to vector<64x128xf32>
    %109 = arith.addf %107, %108 : vector<64x128xf32>
    %110 = arith.mulf %107, %109 : vector<64x128xf32>
    %cst_81 = arith.constant 2.000000e+00 : f32
    %111 = vector.broadcast %cst_81 : f32 to vector<64x128xf32>
    %112 = arith.addf %110, %111 : vector<64x128xf32>
    %113 = tpu.reciprocal %112 {approx = true} : vector<64x128xf32> -> vector<64x128xf32>
    %114 = arith.mulf %110, %113 : vector<64x128xf32>
    %115 = arith.mulf %104, %114 : vector<64x128xf32>
    %116 = arith.truncf %115 : vector<64x128xf32> to vector<64x128xbf16>
    %c64_82 = arith.constant 64 : index
    %c0_83 = arith.constant 0 : index
    %117 = vector.load %arg25[%c64_82, %c0_83] : memref<192x128xbf16, #tpu.memory_space<vmem>>, vector<64x128xbf16>
    tpu.vector_store %arg25[%c64_82, %c0_83], %116 {strides = array<i32>} : memref<192x128xbf16, #tpu.memory_space<vmem>>, vector<64x128xbf16>,
    %118 = vector.extract_strided_slice %116 {offsets = [0, 0], sizes = [64, 62], strides = [1, 1]} : vector<64x128xbf16> to vector<64x62xbf16>
    %c0_84 = arith.constant 0 : index
    %c2_85 = arith.constant 2 : index
    %119 = vector.load %arg25[%c0_84, %c2_85] : memref<192x128xbf16, #tpu.memory_space<vmem>>, vector<64x62xbf16>
    tpu.vector_store %arg25[%c0_84, %c2_85], %118 {strides = array<i32>} : memref<192x128xbf16, #tpu.memory_space<vmem>>, vector<64x62xbf16>,
    %120 = vector.extract_strided_slice %116 {offsets = [0, 2], sizes = [64, 62], strides = [1, 1]} : vector<64x128xbf16> to vector<64x62xbf16>
    %c128_86 = arith.constant 128 : index
    %c0_87 = arith.constant 0 : index
    %121 = vector.load %arg25[%c128_86, %c0_87] : memref<192x128xbf16, #tpu.memory_space<vmem>>, vector<64x62xbf16>
    tpu.vector_store %arg25[%c128_86, %c0_87], %120 {strides = array<i32>} : memref<192x128xbf16, #tpu.memory_space<vmem>>, vector<64x62xbf16>,
    %122 = vector.extract_strided_slice %116 {offsets = [0, 2], sizes = [64, 1], strides = [1, 1]} : vector<64x128xbf16> to vector<64x1xbf16>
    %c0_88 = arith.constant 0 : index
    %c0_89 = arith.constant 0 : index
    %123 = vector.load %arg25[%c0_88, %c0_89] : memref<192x128xbf16, #tpu.memory_space<vmem>>, vector<64x1xbf16>
    tpu.vector_store %arg25[%c0_88, %c0_89], %122 {strides = array<i32>} : memref<192x128xbf16, #tpu.memory_space<vmem>>, vector<64x1xbf16>,
    %124 = vector.extract_strided_slice %116 {offsets = [0, 62], sizes = [64, 1], strides = [1, 1]} : vector<64x128xbf16> to vector<64x1xbf16>
    %c128_90 = arith.constant 128 : index
    %c62_91 = arith.constant 62 : index
    %125 = vector.load %arg25[%c128_90, %c62_91] : memref<192x128xbf16, #tpu.memory_space<vmem>>, vector<64x1xbf16>
    tpu.vector_store %arg25[%c128_90, %c62_91], %124 {strides = array<i32>} : memref<192x128xbf16, #tpu.memory_space<vmem>>, vector<64x1xbf16>,
    %126 = vector.extract_strided_slice %116 {offsets = [0, 1], sizes = [64, 1], strides = [1, 1]} : vector<64x128xbf16> to vector<64x1xbf16>
    %c0_92 = arith.constant 0 : index
    %c1_93 = arith.constant 1 : index
    %127 = vector.load %arg25[%c0_92, %c1_93] : memref<192x128xbf16, #tpu.memory_space<vmem>>, vector<64x1xbf16>
    tpu.vector_store %arg25[%c0_92, %c1_93], %126 {strides = array<i32>} : memref<192x128xbf16, #tpu.memory_space<vmem>>, vector<64x1xbf16>,
    %128 = vector.extract_strided_slice %116 {offsets = [0, 61], sizes = [64, 1], strides = [1, 1]} : vector<64x128xbf16> to vector<64x1xbf16>
    %c128_94 = arith.constant 128 : index
    %c63_95 = arith.constant 63 : index
    %129 = vector.load %arg25[%c128_94, %c63_95] : memref<192x128xbf16, #tpu.memory_space<vmem>>, vector<64x1xbf16>
    tpu.vector_store %arg25[%c128_94, %c63_95], %128 {strides = array<i32>} : memref<192x128xbf16, #tpu.memory_space<vmem>>, vector<64x1xbf16>,
    %130 = vector.extract_strided_slice %116 {offsets = [0, 64], sizes = [64, 62], strides = [1, 1]} : vector<64x128xbf16> to vector<64x62xbf16>
    %c0_96 = arith.constant 0 : index
    %c66_97 = arith.constant 66 : index
    %131 = vector.load %arg25[%c0_96, %c66_97] : memref<192x128xbf16, #tpu.memory_space<vmem>>, vector<64x62xbf16>
    tpu.vector_store %arg25[%c0_96, %c66_97], %130 {strides = array<i32>} : memref<192x128xbf16, #tpu.memory_space<vmem>>, vector<64x62xbf16>,
    %132 = vector.extract_strided_slice %116 {offsets = [0, 66], sizes = [64, 62], strides = [1, 1]} : vector<64x128xbf16> to vector<64x62xbf16>
    %c128_98 = arith.constant 128 : index
    %c64_99 = arith.constant 64 : index
    %133 = vector.load %arg25[%c128_98, %c64_99] : memref<192x128xbf16, #tpu.memory_space<vmem>>, vector<64x62xbf16>
    tpu.vector_store %arg25[%c128_98, %c64_99], %132 {strides = array<i32>} : memref<192x128xbf16, #tpu.memory_space<vmem>>, vector<64x62xbf16>,
    %134 = vector.extract_strided_slice %116 {offsets = [0, 66], sizes = [64, 1], strides = [1, 1]} : vector<64x128xbf16> to vector<64x1xbf16>
    %c0_100 = arith.constant 0 : index
    %c64_101 = arith.constant 64 : index
    %135 = vector.load %arg25[%c0_100, %c64_101] : memref<192x128xbf16, #tpu.memory_space<vmem>>, vector<64x1xbf16>
    tpu.vector_store %arg25[%c0_100, %c64_101], %134 {strides = array<i32>} : memref<192x128xbf16, #tpu.memory_space<vmem>>, vector<64x1xbf16>,
    %136 = vector.extract_strided_slice %116 {offsets = [0, 126], sizes = [64, 1], strides = [1, 1]} : vector<64x128xbf16> to vector<64x1xbf16>
    %c128_102 = arith.constant 128 : index
    %c126_103 = arith.constant 126 : index
    %137 = vector.load %arg25[%c128_102, %c126_103] : memref<192x128xbf16, #tpu.memory_space<vmem>>, vector<64x1xbf16>
    tpu.vector_store %arg25[%c128_102, %c126_103], %136 {strides = array<i32>} : memref<192x128xbf16, #tpu.memory_space<vmem>>, vector<64x1xbf16>,
    %138 = vector.extract_strided_slice %116 {offsets = [0, 65], sizes = [64, 1], strides = [1, 1]} : vector<64x128xbf16> to vector<64x1xbf16>
    %c0_104 = arith.constant 0 : index
    %c65_105 = arith.constant 65 : index
    %139 = vector.load %arg25[%c0_104, %c65_105] : memref<192x128xbf16, #tpu.memory_space<vmem>>, vector<64x1xbf16>
    tpu.vector_store %arg25[%c0_104, %c65_105], %138 {strides = array<i32>} : memref<192x128xbf16, #tpu.memory_space<vmem>>, vector<64x1xbf16>,
    %140 = vector.extract_strided_slice %116 {offsets = [0, 125], sizes = [64, 1], strides = [1, 1]} : vector<64x128xbf16> to vector<64x1xbf16>
    %c128_106 = arith.constant 128 : index
    %c127_107 = arith.constant 127 : index
    %141 = vector.load %arg25[%c128_106, %c127_107] : memref<192x128xbf16, #tpu.memory_space<vmem>>, vector<64x1xbf16>
    tpu.vector_store %arg25[%c128_106, %c127_107], %140 {strides = array<i32>} : memref<192x128xbf16, #tpu.memory_space<vmem>>, vector<64x1xbf16>,
    %c0_108 = arith.constant 0 : index
    %c0_109 = arith.constant 0 : index
    %142 = vector.load %arg9[%c0_108, %c0_109] : memref<64x192xbf16, #tpu.memory_space<vmem>>, vector<64x192xbf16>
    %c0_110 = arith.constant 0 : index
    %c0_111 = arith.constant 0 : index
    %143 = vector.load %arg25[%c0_110, %c0_111] : memref<192x128xbf16, #tpu.memory_space<vmem>>, vector<192x128xbf16>
    %cst_112 = arith.constant dense<0.000000e+00> : vector<64x128xf32>
    %144 = tpu.matmul %142, %143, %cst_112 {dimension_numbers = #tpu.dot_dimension_numbers<[1], [0], [0], [1], [0, 0, 1, 1], [], []>} : vector<64x192xbf16>, vector<192x128xbf16>, vector<64x128xf32> -> vector<64x128xf32>
    %cst_113 = arith.constant 2.000000e+01 : f32
    %145 = vector.broadcast %cst_113 : f32 to vector<64x128xf32>
    %146 = arith.minimumf %144, %145 : vector<64x128xf32>
    %147 = math.exp %146 : vector<64x128xf32>
    %cst_114 = arith.constant 2.000000e+00 : f32
    %148 = vector.broadcast %cst_114 : f32 to vector<64x128xf32>
    %149 = arith.addf %147, %148 : vector<64x128xf32>
    %150 = arith.mulf %147, %149 : vector<64x128xf32>
    %cst_115 = arith.constant 2.000000e+00 : f32
    %151 = vector.broadcast %cst_115 : f32 to vector<64x128xf32>
    %152 = arith.addf %150, %151 : vector<64x128xf32>
    %153 = tpu.reciprocal %152 {approx = true} : vector<64x128xf32> -> vector<64x128xf32>
    %154 = arith.mulf %150, %153 : vector<64x128xf32>
    %155 = arith.mulf %144, %154 : vector<64x128xf32>
    %cst_116 = arith.constant 0.000000e+00 : f32
    %156 = vector.broadcast %cst_116 : f32 to vector<1x128xf32>
    %cst_117 = arith.constant 0.000000e+00 : f32
    %157 = vector.broadcast %cst_117 : f32 to vector<1x128xf32>
    %158 = vector.extract_strided_slice %155 {offsets = [0, 0], sizes = [64, 64], strides = [1, 1]} : vector<64x128xf32> to vector<64x64xf32>
    %159 = vector.shape_cast %158 : vector<64x64xf32> to vector<1x64x64xf32>
    %cst_118 = arith.constant dense<0.000000e+00> : vector<1xf32>
    %160 = vector.multi_reduction <add>, %159, %cst_118 [1, 2] : vector<1x64x64xf32> to vector<1xf32>
    %161 = vector.shape_cast %160 : vector<1xf32> to vector<1x1x1xf32>
    %162 = vector.extract %161[0, 0, 0] : f32 from vector<1x1x1xf32>
    %cst_119 = arith.constant 2.44140625E-4 : f32
    %163 = arith.mulf %162, %cst_119 : f32
    %164 = arith.mulf %158, %158 : vector<64x64xf32>
    %165 = vector.shape_cast %164 : vector<64x64xf32> to vector<1x64x64xf32>
    %cst_120 = arith.constant dense<0.000000e+00> : vector<1xf32>
    %166 = vector.multi_reduction <add>, %165, %cst_120 [1, 2] : vector<1x64x64xf32> to vector<1xf32>
    %167 = vector.shape_cast %166 : vector<1xf32> to vector<1x1x1xf32>
    %168 = vector.extract %167[0, 0, 0] : f32 from vector<1x1x1xf32>
    %cst_121 = arith.constant 2.44140625E-4 : f32
    %169 = arith.mulf %168, %cst_121 : f32
    %170 = arith.mulf %163, %163 : f32
    %171 = arith.subf %169, %170 : f32
    %cst_122 = arith.constant 9.99999974E-6 : f32
    %172 = arith.addf %171, %cst_122 : f32
    %173 = math.rsqrt %172 : f32
    %c0_i32 = arith.constant 0 : i32
    %174 = vector.broadcast %c0_i32 : i32 to vector<1x128xi32>
    %175 = arith.cmpi sge, %2, %174 : vector<1x128xi32>
    %c64_i32 = arith.constant 64 : i32
    %176 = vector.broadcast %c64_i32 : i32 to vector<1x128xi32>
    %177 = arith.cmpi slt, %2, %176 : vector<1x128xi32>
    %178 = arith.andi %175, %177 : vector<1x128xi1>
    %179 = vector.broadcast %163 : f32 to vector<1x128xf32>
    %180 = arith.select %178, %179, %156 : vector<1x128xi1>, vector<1x128xf32>
    %181 = vector.broadcast %173 : f32 to vector<1x128xf32>
    %182 = arith.select %178, %181, %157 : vector<1x128xi1>, vector<1x128xf32>
    %183 = vector.extract_strided_slice %155 {offsets = [0, 64], sizes = [64, 64], strides = [1, 1]} : vector<64x128xf32> to vector<64x64xf32>
    %184 = vector.shape_cast %183 : vector<64x64xf32> to vector<1x64x64xf32>
    %cst_123 = arith.constant dense<0.000000e+00> : vector<1xf32>
    %185 = vector.multi_reduction <add>, %184, %cst_123 [1, 2] : vector<1x64x64xf32> to vector<1xf32>
    %186 = vector.shape_cast %185 : vector<1xf32> to vector<1x1x1xf32>
    %187 = vector.extract %186[0, 0, 0] : f32 from vector<1x1x1xf32>
    %cst_124 = arith.constant 2.44140625E-4 : f32
    %188 = arith.mulf %187, %cst_124 : f32
    %189 = arith.mulf %183, %183 : vector<64x64xf32>
    %190 = vector.shape_cast %189 : vector<64x64xf32> to vector<1x64x64xf32>
    %cst_125 = arith.constant dense<0.000000e+00> : vector<1xf32>
    %191 = vector.multi_reduction <add>, %190, %cst_125 [1, 2] : vector<1x64x64xf32> to vector<1xf32>
    %192 = vector.shape_cast %191 : vector<1xf32> to vector<1x1x1xf32>
    %193 = vector.extract %192[0, 0, 0] : f32 from vector<1x1x1xf32>
    %cst_126 = arith.constant 2.44140625E-4 : f32
    %194 = arith.mulf %193, %cst_126 : f32
    %195 = arith.mulf %188, %188 : f32
    %196 = arith.subf %194, %195 : f32
    %cst_127 = arith.constant 9.99999974E-6 : f32
    %197 = arith.addf %196, %cst_127 : f32
    %198 = math.rsqrt %197 : f32
    %c64_i32_128 = arith.constant 64 : i32
    %199 = vector.broadcast %c64_i32_128 : i32 to vector<1x128xi32>
    %200 = arith.cmpi sge, %2, %199 : vector<1x128xi32>
    %c128_i32 = arith.constant 128 : i32
    %201 = vector.broadcast %c128_i32 : i32 to vector<1x128xi32>
    %202 = arith.cmpi slt, %2, %201 : vector<1x128xi32>
    %203 = arith.andi %200, %202 : vector<1x128xi1>
    %204 = vector.broadcast %188 : f32 to vector<1x128xf32>
    %205 = arith.select %203, %204, %180 : vector<1x128xi1>, vector<1x128xf32>
    %206 = vector.broadcast %198 : f32 to vector<1x128xf32>
    %207 = arith.select %203, %206, %182 : vector<1x128xi1>, vector<1x128xf32>
    %208 = vector.broadcast %205 : vector<1x128xf32> to vector<64x128xf32>
    %209 = arith.subf %155, %208 : vector<64x128xf32>
    %210 = vector.broadcast %207 : vector<1x128xf32> to vector<64x128xf32>
    %211 = arith.mulf %209, %210 : vector<64x128xf32>
    %212 = arith.addf %211, %75 : vector<64x128xf32>
    %213 = arith.truncf %212 : vector<64x128xf32> to vector<64x128xbf16>
    %c64_129 = arith.constant 64 : index
    %c0_130 = arith.constant 0 : index
    %214 = vector.load %arg25[%c64_129, %c0_130] : memref<192x128xbf16, #tpu.memory_space<vmem>>, vector<64x128xbf16>
    tpu.vector_store %arg25[%c64_129, %c0_130], %213 {strides = array<i32>} : memref<192x128xbf16, #tpu.memory_space<vmem>>, vector<64x128xbf16>,
    %215 = vector.extract_strided_slice %213 {offsets = [0, 0], sizes = [64, 60], strides = [1, 1]} : vector<64x128xbf16> to vector<64x60xbf16>
    %c0_131 = arith.constant 0 : index
    %c4 = arith.constant 4 : index
    %216 = vector.load %arg25[%c0_131, %c4] : memref<192x128xbf16, #tpu.memory_space<vmem>>, vector<64x60xbf16>
    tpu.vector_store %arg25[%c0_131, %c4], %215 {strides = array<i32>} : memref<192x128xbf16, #tpu.memory_space<vmem>>, vector<64x60xbf16>,
    %217 = vector.extract_strided_slice %213 {offsets = [0, 4], sizes = [64, 60], strides = [1, 1]} : vector<64x128xbf16> to vector<64x60xbf16>
    %c128_132 = arith.constant 128 : index
    %c0_133 = arith.constant 0 : index
    %218 = vector.load %arg25[%c128_132, %c0_133] : memref<192x128xbf16, #tpu.memory_space<vmem>>, vector<64x60xbf16>
    tpu.vector_store %arg25[%c128_132, %c0_133], %217 {strides = array<i32>} : memref<192x128xbf16, #tpu.memory_space<vmem>>, vector<64x60xbf16>,
    %219 = vector.extract_strided_slice %213 {offsets = [0, 4], sizes = [64, 1], strides = [1, 1]} : vector<64x128xbf16> to vector<64x1xbf16>
    %c0_134 = arith.constant 0 : index
    %c0_135 = arith.constant 0 : index
    %220 = vector.load %arg25[%c0_134, %c0_135] : memref<192x128xbf16, #tpu.memory_space<vmem>>, vector<64x1xbf16>
    tpu.vector_store %arg25[%c0_134, %c0_135], %219 {strides = array<i32>} : memref<192x128xbf16, #tpu.memory_space<vmem>>, vector<64x1xbf16>,
    %221 = vector.extract_strided_slice %213 {offsets = [0, 62], sizes = [64, 1], strides = [1, 1]} : vector<64x128xbf16> to vector<64x1xbf16>
    %c128_136 = arith.constant 128 : index
    %c60 = arith.constant 60 : index
    %222 = vector.load %arg25[%c128_136, %c60] : memref<192x128xbf16, #tpu.memory_space<vmem>>, vector<64x1xbf16>
    tpu.vector_store %arg25[%c128_136, %c60], %221 {strides = array<i32>} : memref<192x128xbf16, #tpu.memory_space<vmem>>, vector<64x1xbf16>,
    %223 = vector.extract_strided_slice %213 {offsets = [0, 3], sizes = [64, 1], strides = [1, 1]} : vector<64x128xbf16> to vector<64x1xbf16>
    %c0_137 = arith.constant 0 : index
    %c1_138 = arith.constant 1 : index
    %224 = vector.load %arg25[%c0_137, %c1_138] : memref<192x128xbf16, #tpu.memory_space<vmem>>, vector<64x1xbf16>
    tpu.vector_store %arg25[%c0_137, %c1_138], %223 {strides = array<i32>} : memref<192x128xbf16, #tpu.memory_space<vmem>>, vector<64x1xbf16>,
    %225 = vector.extract_strided_slice %213 {offsets = [0, 61], sizes = [64, 1], strides = [1, 1]} : vector<64x128xbf16> to vector<64x1xbf16>
    %c128_139 = arith.constant 128 : index
    %c61 = arith.constant 61 : index
    %226 = vector.load %arg25[%c128_139, %c61] : memref<192x128xbf16, #tpu.memory_space<vmem>>, vector<64x1xbf16>
    tpu.vector_store %arg25[%c128_139, %c61], %225 {strides = array<i32>} : memref<192x128xbf16, #tpu.memory_space<vmem>>, vector<64x1xbf16>,
    %227 = vector.extract_strided_slice %213 {offsets = [0, 2], sizes = [64, 1], strides = [1, 1]} : vector<64x128xbf16> to vector<64x1xbf16>
    %c0_140 = arith.constant 0 : index
    %c2_141 = arith.constant 2 : index
    %228 = vector.load %arg25[%c0_140, %c2_141] : memref<192x128xbf16, #tpu.memory_space<vmem>>, vector<64x1xbf16>
    tpu.vector_store %arg25[%c0_140, %c2_141], %227 {strides = array<i32>} : memref<192x128xbf16, #tpu.memory_space<vmem>>, vector<64x1xbf16>,
    %229 = vector.extract_strided_slice %213 {offsets = [0, 60], sizes = [64, 1], strides = [1, 1]} : vector<64x128xbf16> to vector<64x1xbf16>
    %c128_142 = arith.constant 128 : index
    %c62_143 = arith.constant 62 : index
    %230 = vector.load %arg25[%c128_142, %c62_143] : memref<192x128xbf16, #tpu.memory_space<vmem>>, vector<64x1xbf16>
    tpu.vector_store %arg25[%c128_142, %c62_143], %229 {strides = array<i32>} : memref<192x128xbf16, #tpu.memory_space<vmem>>, vector<64x1xbf16>,
    %231 = vector.extract_strided_slice %213 {offsets = [0, 1], sizes = [64, 1], strides = [1, 1]} : vector<64x128xbf16> to vector<64x1xbf16>
    %c0_144 = arith.constant 0 : index
    %c3 = arith.constant 3 : index
    %232 = vector.load %arg25[%c0_144, %c3] : memref<192x128xbf16, #tpu.memory_space<vmem>>, vector<64x1xbf16>
    tpu.vector_store %arg25[%c0_144, %c3], %231 {strides = array<i32>} : memref<192x128xbf16, #tpu.memory_space<vmem>>, vector<64x1xbf16>,
    %233 = vector.extract_strided_slice %213 {offsets = [0, 59], sizes = [64, 1], strides = [1, 1]} : vector<64x128xbf16> to vector<64x1xbf16>
    %c128_145 = arith.constant 128 : index
    %c63_146 = arith.constant 63 : index
    %234 = vector.load %arg25[%c128_145, %c63_146] : memref<192x128xbf16, #tpu.memory_space<vmem>>, vector<64x1xbf16>
    tpu.vector_store %arg25[%c128_145, %c63_146], %233 {strides = array<i32>} : memref<192x128xbf16, #tpu.memory_space<vmem>>, vector<64x1xbf16>,
    %235 = vector.extract_strided_slice %213 {offsets = [0, 64], sizes = [64, 60], strides = [1, 1]} : vector<64x128xbf16> to vector<64x60xbf16>
    %c0_147 = arith.constant 0 : index
    %c68 = arith.constant 68 : index
    %236 = vector.load %arg25[%c0_147, %c68] : memref<192x128xbf16, #tpu.memory_space<vmem>>, vector<64x60xbf16>
    tpu.vector_store %arg25[%c0_147, %c68], %235 {strides = array<i32>} : memref<192x128xbf16, #tpu.memory_space<vmem>>, vector<64x60xbf16>,
    %237 = vector.extract_strided_slice %213 {offsets = [0, 68], sizes = [64, 60], strides = [1, 1]} : vector<64x128xbf16> to vector<64x60xbf16>
    %c128_148 = arith.constant 128 : index
    %c64_149 = arith.constant 64 : index
    %238 = vector.load %arg25[%c128_148, %c64_149] : memref<192x128xbf16, #tpu.memory_space<vmem>>, vector<64x60xbf16>
    tpu.vector_store %arg25[%c128_148, %c64_149], %237 {strides = array<i32>} : memref<192x128xbf16, #tpu.memory_space<vmem>>, vector<64x60xbf16>,
    %239 = vector.extract_strided_slice %213 {offsets = [0, 68], sizes = [64, 1], strides = [1, 1]} : vector<64x128xbf16> to vector<64x1xbf16>
    %c0_150 = arith.constant 0 : index
    %c64_151 = arith.constant 64 : index
    %240 = vector.load %arg25[%c0_150, %c64_151] : memref<192x128xbf16, #tpu.memory_space<vmem>>, vector<64x1xbf16>
    tpu.vector_store %arg25[%c0_150, %c64_151], %239 {strides = array<i32>} : memref<192x128xbf16, #tpu.memory_space<vmem>>, vector<64x1xbf16>,
    %241 = vector.extract_strided_slice %213 {offsets = [0, 126], sizes = [64, 1], strides = [1, 1]} : vector<64x128xbf16> to vector<64x1xbf16>
    %c128_152 = arith.constant 128 : index
    %c124 = arith.constant 124 : index
    %242 = vector.load %arg25[%c128_152, %c124] : memref<192x128xbf16, #tpu.memory_space<vmem>>, vector<64x1xbf16>
    tpu.vector_store %arg25[%c128_152, %c124], %241 {strides = array<i32>} : memref<192x128xbf16, #tpu.memory_space<vmem>>, vector<64x1xbf16>,
    %243 = vector.extract_strided_slice %213 {offsets = [0, 67], sizes = [64, 1], strides = [1, 1]} : vector<64x128xbf16> to vector<64x1xbf16>
    %c0_153 = arith.constant 0 : index
    %c65_154 = arith.constant 65 : index
    %244 = vector.load %arg25[%c0_153, %c65_154] : memref<192x128xbf16, #tpu.memory_space<vmem>>, vector<64x1xbf16>
    tpu.vector_store %arg25[%c0_153, %c65_154], %243 {strides = array<i32>} : memref<192x128xbf16, #tpu.memory_space<vmem>>, vector<64x1xbf16>,
    %245 = vector.extract_strided_slice %213 {offsets = [0, 125], sizes = [64, 1], strides = [1, 1]} : vector<64x128xbf16> to vector<64x1xbf16>
    %c128_155 = arith.constant 128 : index
    %c125 = arith.constant 125 : index
    %246 = vector.load %arg25[%c128_155, %c125] : memref<192x128xbf16, #tpu.memory_space<vmem>>, vector<64x1xbf16>
    tpu.vector_store %arg25[%c128_155, %c125], %245 {strides = array<i32>} : memref<192x128xbf16, #tpu.memory_space<vmem>>, vector<64x1xbf16>,
    %247 = vector.extract_strided_slice %213 {offsets = [0, 66], sizes = [64, 1], strides = [1, 1]} : vector<64x128xbf16> to vector<64x1xbf16>
    %c0_156 = arith.constant 0 : index
    %c66_157 = arith.constant 66 : index
    %248 = vector.load %arg25[%c0_156, %c66_157] : memref<192x128xbf16, #tpu.memory_space<vmem>>, vector<64x1xbf16>
    tpu.vector_store %arg25[%c0_156, %c66_157], %247 {strides = array<i32>} : memref<192x128xbf16, #tpu.memory_space<vmem>>, vector<64x1xbf16>,
    %249 = vector.extract_strided_slice %213 {offsets = [0, 124], sizes = [64, 1], strides = [1, 1]} : vector<64x128xbf16> to vector<64x1xbf16>
    %c128_158 = arith.constant 128 : index
    %c126_159 = arith.constant 126 : index
    %250 = vector.load %arg25[%c128_158, %c126_159] : memref<192x128xbf16, #tpu.memory_space<vmem>>, vector<64x1xbf16>
    tpu.vector_store %arg25[%c128_158, %c126_159], %249 {strides = array<i32>} : memref<192x128xbf16, #tpu.memory_space<vmem>>, vector<64x1xbf16>,
    %251 = vector.extract_strided_slice %213 {offsets = [0, 65], sizes = [64, 1], strides = [1, 1]} : vector<64x128xbf16> to vector<64x1xbf16>
    %c0_160 = arith.constant 0 : index
    %c67 = arith.constant 67 : index
    %252 = vector.load %arg25[%c0_160, %c67] : memref<192x128xbf16, #tpu.memory_space<vmem>>, vector<64x1xbf16>
    tpu.vector_store %arg25[%c0_160, %c67], %251 {strides = array<i32>} : memref<192x128xbf16, #tpu.memory_space<vmem>>, vector<64x1xbf16>,
    %253 = vector.extract_strided_slice %213 {offsets = [0, 123], sizes = [64, 1], strides = [1, 1]} : vector<64x128xbf16> to vector<64x1xbf16>
    %c128_161 = arith.constant 128 : index
    %c127_162 = arith.constant 127 : index
    %254 = vector.load %arg25[%c128_161, %c127_162] : memref<192x128xbf16, #tpu.memory_space<vmem>>, vector<64x1xbf16>
    tpu.vector_store %arg25[%c128_161, %c127_162], %253 {strides = array<i32>} : memref<192x128xbf16, #tpu.memory_space<vmem>>, vector<64x1xbf16>,
    %c0_163 = arith.constant 0 : index
    %c0_164 = arith.constant 0 : index
    %255 = vector.load %arg10[%c0_163, %c0_164] : memref<64x192xbf16, #tpu.memory_space<vmem>>, vector<64x192xbf16>
    %c0_165 = arith.constant 0 : index
    %c0_166 = arith.constant 0 : index
    %256 = vector.load %arg25[%c0_165, %c0_166] : memref<192x128xbf16, #tpu.memory_space<vmem>>, vector<192x128xbf16>
    %cst_167 = arith.constant dense<0.000000e+00> : vector<64x128xf32>
    %257 = tpu.matmul %255, %256, %cst_167 {dimension_numbers = #tpu.dot_dimension_numbers<[1], [0], [0], [1], [0, 0, 1, 1], [], []>} : vector<64x192xbf16>, vector<192x128xbf16>, vector<64x128xf32> -> vector<64x128xf32>
    %cst_168 = arith.constant 2.000000e+01 : f32
    %258 = vector.broadcast %cst_168 : f32 to vector<64x128xf32>
    %259 = arith.minimumf %257, %258 : vector<64x128xf32>
    %260 = math.exp %259 : vector<64x128xf32>
    %cst_169 = arith.constant 2.000000e+00 : f32
    %261 = vector.broadcast %cst_169 : f32 to vector<64x128xf32>
    %262 = arith.addf %260, %261 : vector<64x128xf32>
    %263 = arith.mulf %260, %262 : vector<64x128xf32>
    %cst_170 = arith.constant 2.000000e+00 : f32
    %264 = vector.broadcast %cst_170 : f32 to vector<64x128xf32>
    %265 = arith.addf %263, %264 : vector<64x128xf32>
    %266 = tpu.reciprocal %265 {approx = true} : vector<64x128xf32> -> vector<64x128xf32>
    %267 = arith.mulf %263, %266 : vector<64x128xf32>
    %268 = arith.mulf %257, %267 : vector<64x128xf32>
    %269 = arith.truncf %268 : vector<64x128xf32> to vector<64x128xbf16>
    %c64_171 = arith.constant 64 : index
    %c0_172 = arith.constant 0 : index
    %270 = vector.load %arg25[%c64_171, %c0_172] : memref<192x128xbf16, #tpu.memory_space<vmem>>, vector<64x128xbf16>
    tpu.vector_store %arg25[%c64_171, %c0_172], %269 {strides = array<i32>} : memref<192x128xbf16, #tpu.memory_space<vmem>>, vector<64x128xbf16>,
    %271 = vector.extract_strided_slice %269 {offsets = [0, 0], sizes = [64, 60], strides = [1, 1]} : vector<64x128xbf16> to vector<64x60xbf16>
    %c0_173 = arith.constant 0 : index
    %c4_174 = arith.constant 4 : index
    %272 = vector.load %arg25[%c0_173, %c4_174] : memref<192x128xbf16, #tpu.memory_space<vmem>>, vector<64x60xbf16>
    tpu.vector_store %arg25[%c0_173, %c4_174], %271 {strides = array<i32>} : memref<192x128xbf16, #tpu.memory_space<vmem>>, vector<64x60xbf16>,
    %273 = vector.extract_strided_slice %269 {offsets = [0, 4], sizes = [64, 60], strides = [1, 1]} : vector<64x128xbf16> to vector<64x60xbf16>
    %c128_175 = arith.constant 128 : index
    %c0_176 = arith.constant 0 : index
    %274 = vector.load %arg25[%c128_175, %c0_176] : memref<192x128xbf16, #tpu.memory_space<vmem>>, vector<64x60xbf16>
    tpu.vector_store %arg25[%c128_175, %c0_176], %273 {strides = array<i32>} : memref<192x128xbf16, #tpu.memory_space<vmem>>, vector<64x60xbf16>,
    %275 = vector.extract_strided_slice %269 {offsets = [0, 4], sizes = [64, 1], strides = [1, 1]} : vector<64x128xbf16> to vector<64x1xbf16>
    %c0_177 = arith.constant 0 : index
    %c0_178 = arith.constant 0 : index
    %276 = vector.load %arg25[%c0_177, %c0_178] : memref<192x128xbf16, #tpu.memory_space<vmem>>, vector<64x1xbf16>
    tpu.vector_store %arg25[%c0_177, %c0_178], %275 {strides = array<i32>} : memref<192x128xbf16, #tpu.memory_space<vmem>>, vector<64x1xbf16>,
    %277 = vector.extract_strided_slice %269 {offsets = [0, 62], sizes = [64, 1], strides = [1, 1]} : vector<64x128xbf16> to vector<64x1xbf16>
    %c128_179 = arith.constant 128 : index
    %c60_180 = arith.constant 60 : index
    %278 = vector.load %arg25[%c128_179, %c60_180] : memref<192x128xbf16, #tpu.memory_space<vmem>>, vector<64x1xbf16>
    tpu.vector_store %arg25[%c128_179, %c60_180], %277 {strides = array<i32>} : memref<192x128xbf16, #tpu.memory_space<vmem>>, vector<64x1xbf16>,
    %279 = vector.extract_strided_slice %269 {offsets = [0, 3], sizes = [64, 1], strides = [1, 1]} : vector<64x128xbf16> to vector<64x1xbf16>
    %c0_181 = arith.constant 0 : index
    %c1_182 = arith.constant 1 : index
    %280 = vector.load %arg25[%c0_181, %c1_182] : memref<192x128xbf16, #tpu.memory_space<vmem>>, vector<64x1xbf16>
    tpu.vector_store %arg25[%c0_181, %c1_182], %279 {strides = array<i32>} : memref<192x128xbf16, #tpu.memory_space<vmem>>, vector<64x1xbf16>,
    %281 = vector.extract_strided_slice %269 {offsets = [0, 61], sizes = [64, 1], strides = [1, 1]} : vector<64x128xbf16> to vector<64x1xbf16>
    %c128_183 = arith.constant 128 : index
    %c61_184 = arith.constant 61 : index
    %282 = vector.load %arg25[%c128_183, %c61_184] : memref<192x128xbf16, #tpu.memory_space<vmem>>, vector<64x1xbf16>
    tpu.vector_store %arg25[%c128_183, %c61_184], %281 {strides = array<i32>} : memref<192x128xbf16, #tpu.memory_space<vmem>>, vector<64x1xbf16>,
    %283 = vector.extract_strided_slice %269 {offsets = [0, 2], sizes = [64, 1], strides = [1, 1]} : vector<64x128xbf16> to vector<64x1xbf16>
    %c0_185 = arith.constant 0 : index
    %c2_186 = arith.constant 2 : index
    %284 = vector.load %arg25[%c0_185, %c2_186] : memref<192x128xbf16, #tpu.memory_space<vmem>>, vector<64x1xbf16>
    tpu.vector_store %arg25[%c0_185, %c2_186], %283 {strides = array<i32>} : memref<192x128xbf16, #tpu.memory_space<vmem>>, vector<64x1xbf16>,
    %285 = vector.extract_strided_slice %269 {offsets = [0, 60], sizes = [64, 1], strides = [1, 1]} : vector<64x128xbf16> to vector<64x1xbf16>
    %c128_187 = arith.constant 128 : index
    %c62_188 = arith.constant 62 : index
    %286 = vector.load %arg25[%c128_187, %c62_188] : memref<192x128xbf16, #tpu.memory_space<vmem>>, vector<64x1xbf16>
    tpu.vector_store %arg25[%c128_187, %c62_188], %285 {strides = array<i32>} : memref<192x128xbf16, #tpu.memory_space<vmem>>, vector<64x1xbf16>,
    %287 = vector.extract_strided_slice %269 {offsets = [0, 1], sizes = [64, 1], strides = [1, 1]} : vector<64x128xbf16> to vector<64x1xbf16>
    %c0_189 = arith.constant 0 : index
    %c3_190 = arith.constant 3 : index
    %288 = vector.load %arg25[%c0_189, %c3_190] : memref<192x128xbf16, #tpu.memory_space<vmem>>, vector<64x1xbf16>
    tpu.vector_store %arg25[%c0_189, %c3_190], %287 {strides = array<i32>} : memref<192x128xbf16, #tpu.memory_space<vmem>>, vector<64x1xbf16>,
    %289 = vector.extract_strided_slice %269 {offsets = [0, 59], sizes = [64, 1], strides = [1, 1]} : vector<64x128xbf16> to vector<64x1xbf16>
    %c128_191 = arith.constant 128 : index
    %c63_192 = arith.constant 63 : index
    %290 = vector.load %arg25[%c128_191, %c63_192] : memref<192x128xbf16, #tpu.memory_space<vmem>>, vector<64x1xbf16>
    tpu.vector_store %arg25[%c128_191, %c63_192], %289 {strides = array<i32>} : memref<192x128xbf16, #tpu.memory_space<vmem>>, vector<64x1xbf16>,
    %291 = vector.extract_strided_slice %269 {offsets = [0, 64], sizes = [64, 60], strides = [1, 1]} : vector<64x128xbf16> to vector<64x60xbf16>
    %c0_193 = arith.constant 0 : index
    %c68_194 = arith.constant 68 : index
    %292 = vector.load %arg25[%c0_193, %c68_194] : memref<192x128xbf16, #tpu.memory_space<vmem>>, vector<64x60xbf16>
    tpu.vector_store %arg25[%c0_193, %c68_194], %291 {strides = array<i32>} : memref<192x128xbf16, #tpu.memory_space<vmem>>, vector<64x60xbf16>,
    %293 = vector.extract_strided_slice %269 {offsets = [0, 68], sizes = [64, 60], strides = [1, 1]} : vector<64x128xbf16> to vector<64x60xbf16>
    %c128_195 = arith.constant 128 : index
    %c64_196 = arith.constant 64 : index
    %294 = vector.load %arg25[%c128_195, %c64_196] : memref<192x128xbf16, #tpu.memory_space<vmem>>, vector<64x60xbf16>
    tpu.vector_store %arg25[%c128_195, %c64_196], %293 {strides = array<i32>} : memref<192x128xbf16, #tpu.memory_space<vmem>>, vector<64x60xbf16>,
    %295 = vector.extract_strided_slice %269 {offsets = [0, 68], sizes = [64, 1], strides = [1, 1]} : vector<64x128xbf16> to vector<64x1xbf16>
    %c0_197 = arith.constant 0 : index
    %c64_198 = arith.constant 64 : index
    %296 = vector.load %arg25[%c0_197, %c64_198] : memref<192x128xbf16, #tpu.memory_space<vmem>>, vector<64x1xbf16>
    tpu.vector_store %arg25[%c0_197, %c64_198], %295 {strides = array<i32>} : memref<192x128xbf16, #tpu.memory_space<vmem>>, vector<64x1xbf16>,
    %297 = vector.extract_strided_slice %269 {offsets = [0, 126], sizes = [64, 1], strides = [1, 1]} : vector<64x128xbf16> to vector<64x1xbf16>
    %c128_199 = arith.constant 128 : index
    %c124_200 = arith.constant 124 : index
    %298 = vector.load %arg25[%c128_199, %c124_200] : memref<192x128xbf16, #tpu.memory_space<vmem>>, vector<64x1xbf16>
    tpu.vector_store %arg25[%c128_199, %c124_200], %297 {strides = array<i32>} : memref<192x128xbf16, #tpu.memory_space<vmem>>, vector<64x1xbf16>,
    %299 = vector.extract_strided_slice %269 {offsets = [0, 67], sizes = [64, 1], strides = [1, 1]} : vector<64x128xbf16> to vector<64x1xbf16>
    %c0_201 = arith.constant 0 : index
    %c65_202 = arith.constant 65 : index
    %300 = vector.load %arg25[%c0_201, %c65_202] : memref<192x128xbf16, #tpu.memory_space<vmem>>, vector<64x1xbf16>
    tpu.vector_store %arg25[%c0_201, %c65_202], %299 {strides = array<i32>} : memref<192x128xbf16, #tpu.memory_space<vmem>>, vector<64x1xbf16>,
    %301 = vector.extract_strided_slice %269 {offsets = [0, 125], sizes = [64, 1], strides = [1, 1]} : vector<64x128xbf16> to vector<64x1xbf16>
    %c128_203 = arith.constant 128 : index
    %c125_204 = arith.constant 125 : index
    %302 = vector.load %arg25[%c128_203, %c125_204] : memref<192x128xbf16, #tpu.memory_space<vmem>>, vector<64x1xbf16>
    tpu.vector_store %arg25[%c128_203, %c125_204], %301 {strides = array<i32>} : memref<192x128xbf16, #tpu.memory_space<vmem>>, vector<64x1xbf16>,
    %303 = vector.extract_strided_slice %269 {offsets = [0, 66], sizes = [64, 1], strides = [1, 1]} : vector<64x128xbf16> to vector<64x1xbf16>
    %c0_205 = arith.constant 0 : index
    %c66_206 = arith.constant 66 : index
    %304 = vector.load %arg25[%c0_205, %c66_206] : memref<192x128xbf16, #tpu.memory_space<vmem>>, vector<64x1xbf16>
    tpu.vector_store %arg25[%c0_205, %c66_206], %303 {strides = array<i32>} : memref<192x128xbf16, #tpu.memory_space<vmem>>, vector<64x1xbf16>,
    %305 = vector.extract_strided_slice %269 {offsets = [0, 124], sizes = [64, 1], strides = [1, 1]} : vector<64x128xbf16> to vector<64x1xbf16>
    %c128_207 = arith.constant 128 : index
    %c126_208 = arith.constant 126 : index
    %306 = vector.load %arg25[%c128_207, %c126_208] : memref<192x128xbf16, #tpu.memory_space<vmem>>, vector<64x1xbf16>
    tpu.vector_store %arg25[%c128_207, %c126_208], %305 {strides = array<i32>} : memref<192x128xbf16, #tpu.memory_space<vmem>>, vector<64x1xbf16>,
    %307 = vector.extract_strided_slice %269 {offsets = [0, 65], sizes = [64, 1], strides = [1, 1]} : vector<64x128xbf16> to vector<64x1xbf16>
    %c0_209 = arith.constant 0 : index
    %c67_210 = arith.constant 67 : index
    %308 = vector.load %arg25[%c0_209, %c67_210] : memref<192x128xbf16, #tpu.memory_space<vmem>>, vector<64x1xbf16>
    tpu.vector_store %arg25[%c0_209, %c67_210], %307 {strides = array<i32>} : memref<192x128xbf16, #tpu.memory_space<vmem>>, vector<64x1xbf16>,
    %309 = vector.extract_strided_slice %269 {offsets = [0, 123], sizes = [64, 1], strides = [1, 1]} : vector<64x128xbf16> to vector<64x1xbf16>
    %c128_211 = arith.constant 128 : index
    %c127_212 = arith.constant 127 : index
    %310 = vector.load %arg25[%c128_211, %c127_212] : memref<192x128xbf16, #tpu.memory_space<vmem>>, vector<64x1xbf16>
    tpu.vector_store %arg25[%c128_211, %c127_212], %309 {strides = array<i32>} : memref<192x128xbf16, #tpu.memory_space<vmem>>, vector<64x1xbf16>,
    %c0_213 = arith.constant 0 : index
    %c0_214 = arith.constant 0 : index
    %311 = vector.load %arg11[%c0_213, %c0_214] : memref<64x192xbf16, #tpu.memory_space<vmem>>, vector<64x192xbf16>
    %c0_215 = arith.constant 0 : index
    %c0_216 = arith.constant 0 : index
    %312 = vector.load %arg25[%c0_215, %c0_216] : memref<192x128xbf16, #tpu.memory_space<vmem>>, vector<192x128xbf16>
    %cst_217 = arith.constant dense<0.000000e+00> : vector<64x128xf32>
    %313 = tpu.matmul %311, %312, %cst_217 {dimension_numbers = #tpu.dot_dimension_numbers<[1], [0], [0], [1], [0, 0, 1, 1], [], []>} : vector<64x192xbf16>, vector<192x128xbf16>, vector<64x128xf32> -> vector<64x128xf32>
    %cst_218 = arith.constant 2.000000e+01 : f32
    %314 = vector.broadcast %cst_218 : f32 to vector<64x128xf32>
    %315 = arith.minimumf %313, %314 : vector<64x128xf32>
    %316 = math.exp %315 : vector<64x128xf32>
    %cst_219 = arith.constant 2.000000e+00 : f32
    %317 = vector.broadcast %cst_219 : f32 to vector<64x128xf32>
    %318 = arith.addf %316, %317 : vector<64x128xf32>
    %319 = arith.mulf %316, %318 : vector<64x128xf32>
    %cst_220 = arith.constant 2.000000e+00 : f32
    %320 = vector.broadcast %cst_220 : f32 to vector<64x128xf32>
    %321 = arith.addf %319, %320 : vector<64x128xf32>
    %322 = tpu.reciprocal %321 {approx = true} : vector<64x128xf32> -> vector<64x128xf32>
    %323 = arith.mulf %319, %322 : vector<64x128xf32>
    %324 = arith.mulf %313, %323 : vector<64x128xf32>
    %cst_221 = arith.constant 0.000000e+00 : f32
    %325 = vector.broadcast %cst_221 : f32 to vector<1x128xf32>
    %cst_222 = arith.constant 0.000000e+00 : f32
    %326 = vector.broadcast %cst_222 : f32 to vector<1x128xf32>
    %327 = vector.extract_strided_slice %324 {offsets = [0, 0], sizes = [64, 64], strides = [1, 1]} : vector<64x128xf32> to vector<64x64xf32>
    %328 = vector.shape_cast %327 : vector<64x64xf32> to vector<1x64x64xf32>
    %cst_223 = arith.constant dense<0.000000e+00> : vector<1xf32>
    %329 = vector.multi_reduction <add>, %328, %cst_223 [1, 2] : vector<1x64x64xf32> to vector<1xf32>
    %330 = vector.shape_cast %329 : vector<1xf32> to vector<1x1x1xf32>
    %331 = vector.extract %330[0, 0, 0] : f32 from vector<1x1x1xf32>
    %cst_224 = arith.constant 2.44140625E-4 : f32
    %332 = arith.mulf %331, %cst_224 : f32
    %333 = arith.mulf %327, %327 : vector<64x64xf32>
    %334 = vector.shape_cast %333 : vector<64x64xf32> to vector<1x64x64xf32>
    %cst_225 = arith.constant dense<0.000000e+00> : vector<1xf32>
    %335 = vector.multi_reduction <add>, %334, %cst_225 [1, 2] : vector<1x64x64xf32> to vector<1xf32>
    %336 = vector.shape_cast %335 : vector<1xf32> to vector<1x1x1xf32>
    %337 = vector.extract %336[0, 0, 0] : f32 from vector<1x1x1xf32>
    %cst_226 = arith.constant 2.44140625E-4 : f32
    %338 = arith.mulf %337, %cst_226 : f32
    %339 = arith.mulf %332, %332 : f32
    %340 = arith.subf %338, %339 : f32
    %cst_227 = arith.constant 9.99999974E-6 : f32
    %341 = arith.addf %340, %cst_227 : f32
    %342 = math.rsqrt %341 : f32
    %c0_i32_228 = arith.constant 0 : i32
    %343 = vector.broadcast %c0_i32_228 : i32 to vector<1x128xi32>
    %344 = arith.cmpi sge, %2, %343 : vector<1x128xi32>
    %c64_i32_229 = arith.constant 64 : i32
    %345 = vector.broadcast %c64_i32_229 : i32 to vector<1x128xi32>
    %346 = arith.cmpi slt, %2, %345 : vector<1x128xi32>
    %347 = arith.andi %344, %346 : vector<1x128xi1>
    %348 = vector.broadcast %332 : f32 to vector<1x128xf32>
    %349 = arith.select %347, %348, %325 : vector<1x128xi1>, vector<1x128xf32>
    %350 = vector.broadcast %342 : f32 to vector<1x128xf32>
    %351 = arith.select %347, %350, %326 : vector<1x128xi1>, vector<1x128xf32>
    %352 = vector.extract_strided_slice %324 {offsets = [0, 64], sizes = [64, 64], strides = [1, 1]} : vector<64x128xf32> to vector<64x64xf32>
    %353 = vector.shape_cast %352 : vector<64x64xf32> to vector<1x64x64xf32>
    %cst_230 = arith.constant dense<0.000000e+00> : vector<1xf32>
    %354 = vector.multi_reduction <add>, %353, %cst_230 [1, 2] : vector<1x64x64xf32> to vector<1xf32>
    %355 = vector.shape_cast %354 : vector<1xf32> to vector<1x1x1xf32>
    %356 = vector.extract %355[0, 0, 0] : f32 from vector<1x1x1xf32>
    %cst_231 = arith.constant 2.44140625E-4 : f32
    %357 = arith.mulf %356, %cst_231 : f32
    %358 = arith.mulf %352, %352 : vector<64x64xf32>
    %359 = vector.shape_cast %358 : vector<64x64xf32> to vector<1x64x64xf32>
    %cst_232 = arith.constant dense<0.000000e+00> : vector<1xf32>
    %360 = vector.multi_reduction <add>, %359, %cst_232 [1, 2] : vector<1x64x64xf32> to vector<1xf32>
    %361 = vector.shape_cast %360 : vector<1xf32> to vector<1x1x1xf32>
    %362 = vector.extract %361[0, 0, 0] : f32 from vector<1x1x1xf32>
    %cst_233 = arith.constant 2.44140625E-4 : f32
    %363 = arith.mulf %362, %cst_233 : f32
    %364 = arith.mulf %357, %357 : f32
    %365 = arith.subf %363, %364 : f32
    %cst_234 = arith.constant 9.99999974E-6 : f32
    %366 = arith.addf %365, %cst_234 : f32
    %367 = math.rsqrt %366 : f32
    %c64_i32_235 = arith.constant 64 : i32
    %368 = vector.broadcast %c64_i32_235 : i32 to vector<1x128xi32>
    %369 = arith.cmpi sge, %2, %368 : vector<1x128xi32>
    %c128_i32_236 = arith.constant 128 : i32
    %370 = vector.broadcast %c128_i32_236 : i32 to vector<1x128xi32>
    %371 = arith.cmpi slt, %2, %370 : vector<1x128xi32>
    %372 = arith.andi %369, %371 : vector<1x128xi1>
    %373 = vector.broadcast %357 : f32 to vector<1x128xf32>
    %374 = arith.select %372, %373, %349 : vector<1x128xi1>, vector<1x128xf32>
    %375 = vector.broadcast %367 : f32 to vector<1x128xf32>
    %376 = arith.select %372, %375, %351 : vector<1x128xi1>, vector<1x128xf32>
    %377 = vector.broadcast %374 : vector<1x128xf32> to vector<64x128xf32>
    %378 = arith.subf %324, %377 : vector<64x128xf32>
    %379 = vector.broadcast %376 : vector<1x128xf32> to vector<64x128xf32>
    %380 = arith.mulf %378, %379 : vector<64x128xf32>
    %381 = arith.addf %380, %212 : vector<64x128xf32>
    %382 = arith.truncf %381 : vector<64x128xf32> to vector<64x128xbf16>
    %c64_237 = arith.constant 64 : index
    %c0_238 = arith.constant 0 : index
    %383 = vector.load %arg25[%c64_237, %c0_238] : memref<192x128xbf16, #tpu.memory_space<vmem>>, vector<64x128xbf16>
    tpu.vector_store %arg25[%c64_237, %c0_238], %382 {strides = array<i32>} : memref<192x128xbf16, #tpu.memory_space<vmem>>, vector<64x128xbf16>,
    %384 = vector.extract_strided_slice %382 {offsets = [0, 0], sizes = [64, 56], strides = [1, 1]} : vector<64x128xbf16> to vector<64x56xbf16>
    %c0_239 = arith.constant 0 : index
    %c8 = arith.constant 8 : index
    %385 = vector.load %arg25[%c0_239, %c8] : memref<192x128xbf16, #tpu.memory_space<vmem>>, vector<64x56xbf16>
    tpu.vector_store %arg25[%c0_239, %c8], %384 {strides = array<i32>} : memref<192x128xbf16, #tpu.memory_space<vmem>>, vector<64x56xbf16>,
    %386 = vector.extract_strided_slice %382 {offsets = [0, 8], sizes = [64, 56], strides = [1, 1]} : vector<64x128xbf16> to vector<64x56xbf16>
    %c128_240 = arith.constant 128 : index
    %c0_241 = arith.constant 0 : index
    %387 = vector.load %arg25[%c128_240, %c0_241] : memref<192x128xbf16, #tpu.memory_space<vmem>>, vector<64x56xbf16>
    tpu.vector_store %arg25[%c128_240, %c0_241], %386 {strides = array<i32>} : memref<192x128xbf16, #tpu.memory_space<vmem>>, vector<64x56xbf16>,
    %c24 = arith.constant 24 : index
    %c0_242 = arith.constant 0 : index
    %388 = vector.load %arg2[%c24, %c0_242] : memref<32x32xbf16, #tpu.memory_space<vmem>>, vector<8x8xbf16>
    %389 = vector.extract_strided_slice %382 {offsets = [0, 1], sizes = [64, 8], strides = [1, 1]} : vector<64x128xbf16> to vector<64x8xbf16>
    %cst_243 = arith.constant dense<0.000000e+00> : vector<64x8xf32>
    %390 = tpu.matmul %389, %388, %cst_243 {dimension_numbers = #tpu.dot_dimension_numbers<[1], [0], [0], [1], [0, 0, 1, 1], [], []>} : vector<64x8xbf16>, vector<8x8xbf16>, vector<64x8xf32> -> vector<64x8xf32>
    %391 = arith.truncf %390 : vector<64x8xf32> to vector<64x8xbf16>
    %392 = vector.extract_strided_slice %382 {offsets = [0, 55], sizes = [64, 8], strides = [1, 1]} : vector<64x128xbf16> to vector<64x8xbf16>
    %cst_244 = arith.constant dense<0.000000e+00> : vector<64x8xf32>
    %393 = tpu.matmul %392, %388, %cst_244 {dimension_numbers = #tpu.dot_dimension_numbers<[1], [0], [0], [1], [0, 0, 1, 1], [], []>} : vector<64x8xbf16>, vector<8x8xbf16>, vector<64x8xf32> -> vector<64x8xf32>
    %394 = arith.truncf %393 : vector<64x8xf32> to vector<64x8xbf16>
    %c0_245 = arith.constant 0 : index
    %c0_246 = arith.constant 0 : index
    %395 = vector.load %arg25[%c0_245, %c0_246] : memref<192x128xbf16, #tpu.memory_space<vmem>>, vector<64x8xbf16>
    tpu.vector_store %arg25[%c0_245, %c0_246], %391 {strides = array<i32>} : memref<192x128xbf16, #tpu.memory_space<vmem>>, vector<64x8xbf16>,
    %c128_247 = arith.constant 128 : index
    %c56 = arith.constant 56 : index
    %396 = vector.load %arg25[%c128_247, %c56] : memref<192x128xbf16, #tpu.memory_space<vmem>>, vector<64x8xbf16>
    tpu.vector_store %arg25[%c128_247, %c56], %394 {strides = array<i32>} : memref<192x128xbf16, #tpu.memory_space<vmem>>, vector<64x8xbf16>,
    %397 = vector.extract_strided_slice %382 {offsets = [0, 64], sizes = [64, 56], strides = [1, 1]} : vector<64x128xbf16> to vector<64x56xbf16>
    %c0_248 = arith.constant 0 : index
    %c72 = arith.constant 72 : index
    %398 = vector.load %arg25[%c0_248, %c72] : memref<192x128xbf16, #tpu.memory_space<vmem>>, vector<64x56xbf16>
    tpu.vector_store %arg25[%c0_248, %c72], %397 {strides = array<i32>} : memref<192x128xbf16, #tpu.memory_space<vmem>>, vector<64x56xbf16>,
    %399 = vector.extract_strided_slice %382 {offsets = [0, 72], sizes = [64, 56], strides = [1, 1]} : vector<64x128xbf16> to vector<64x56xbf16>
    %c128_249 = arith.constant 128 : index
    %c64_250 = arith.constant 64 : index
    %400 = vector.load %arg25[%c128_249, %c64_250] : memref<192x128xbf16, #tpu.memory_space<vmem>>, vector<64x56xbf16>
    tpu.vector_store %arg25[%c128_249, %c64_250], %399 {strides = array<i32>} : memref<192x128xbf16, #tpu.memory_space<vmem>>, vector<64x56xbf16>,
    %c24_251 = arith.constant 24 : index
    %c0_252 = arith.constant 0 : index
    %401 = vector.load %arg2[%c24_251, %c0_252] : memref<32x32xbf16, #tpu.memory_space<vmem>>, vector<8x8xbf16>
    %402 = vector.extract_strided_slice %382 {offsets = [0, 65], sizes = [64, 8], strides = [1, 1]} : vector<64x128xbf16> to vector<64x8xbf16>
    %cst_253 = arith.constant dense<0.000000e+00> : vector<64x8xf32>
    %403 = tpu.matmul %402, %401, %cst_253 {dimension_numbers = #tpu.dot_dimension_numbers<[1], [0], [0], [1], [0, 0, 1, 1], [], []>} : vector<64x8xbf16>, vector<8x8xbf16>, vector<64x8xf32> -> vector<64x8xf32>
    %404 = arith.truncf %403 : vector<64x8xf32> to vector<64x8xbf16>
    %405 = vector.extract_strided_slice %382 {offsets = [0, 119], sizes = [64, 8], strides = [1, 1]} : vector<64x128xbf16> to vector<64x8xbf16>
    %cst_254 = arith.constant dense<0.000000e+00> : vector<64x8xf32>
    %406 = tpu.matmul %405, %401, %cst_254 {dimension_numbers = #tpu.dot_dimension_numbers<[1], [0], [0], [1], [0, 0, 1, 1], [], []>} : vector<64x8xbf16>, vector<8x8xbf16>, vector<64x8xf32> -> vector<64x8xf32>
    %407 = arith.truncf %406 : vector<64x8xf32> to vector<64x8xbf16>
    %c0_255 = arith.constant 0 : index
    %c64_256 = arith.constant 64 : index
    %408 = vector.load %arg25[%c0_255, %c64_256] : memref<192x128xbf16, #tpu.memory_space<vmem>>, vector<64x8xbf16>
    tpu.vector_store %arg25[%c0_255, %c64_256], %404 {strides = array<i32>} : memref<192x128xbf16, #tpu.memory_space<vmem>>, vector<64x8xbf16>,
    %c128_257 = arith.constant 128 : index
    %c120 = arith.constant 120 : index
    %409 = vector.load %arg25[%c128_257, %c120] : memref<192x128xbf16, #tpu.memory_space<vmem>>, vector<64x8xbf16>
    tpu.vector_store %arg25[%c128_257, %c120], %407 {strides = array<i32>} : memref<192x128xbf16, #tpu.memory_space<vmem>>, vector<64x8xbf16>,
    %c0_258 = arith.constant 0 : index
    %c0_259 = arith.constant 0 : index
    %410 = vector.load %arg12[%c0_258, %c0_259] : memref<64x192xbf16, #tpu.memory_space<vmem>>, vector<64x192xbf16>
    %c0_260 = arith.constant 0 : index
    %c0_261 = arith.constant 0 : index
    %411 = vector.load %arg25[%c0_260, %c0_261] : memref<192x128xbf16, #tpu.memory_space<vmem>>, vector<192x128xbf16>
    %cst_262 = arith.constant dense<0.000000e+00> : vector<64x128xf32>
    %412 = tpu.matmul %410, %411, %cst_262 {dimension_numbers = #tpu.dot_dimension_numbers<[1], [0], [0], [1], [0, 0, 1, 1], [], []>} : vector<64x192xbf16>, vector<192x128xbf16>, vector<64x128xf32> -> vector<64x128xf32>
    %cst_263 = arith.constant 2.000000e+01 : f32
    %413 = vector.broadcast %cst_263 : f32 to vector<64x128xf32>
    %414 = arith.minimumf %412, %413 : vector<64x128xf32>
    %415 = math.exp %414 : vector<64x128xf32>
    %cst_264 = arith.constant 2.000000e+00 : f32
    %416 = vector.broadcast %cst_264 : f32 to vector<64x128xf32>
    %417 = arith.addf %415, %416 : vector<64x128xf32>
    %418 = arith.mulf %415, %417 : vector<64x128xf32>
    %cst_265 = arith.constant 2.000000e+00 : f32
    %419 = vector.broadcast %cst_265 : f32 to vector<64x128xf32>
    %420 = arith.addf %418, %419 : vector<64x128xf32>
    %421 = tpu.reciprocal %420 {approx = true} : vector<64x128xf32> -> vector<64x128xf32>
    %422 = arith.mulf %418, %421 : vector<64x128xf32>
    %423 = arith.mulf %412, %422 : vector<64x128xf32>
    %424 = arith.truncf %423 : vector<64x128xf32> to vector<64x128xbf16>
    %c64_266 = arith.constant 64 : index
    %c0_267 = arith.constant 0 : index
    %425 = vector.load %arg25[%c64_266, %c0_267] : memref<192x128xbf16, #tpu.memory_space<vmem>>, vector<64x128xbf16>
    tpu.vector_store %arg25[%c64_266, %c0_267], %424 {strides = array<i32>} : memref<192x128xbf16, #tpu.memory_space<vmem>>, vector<64x128xbf16>,
    %426 = vector.extract_strided_slice %424 {offsets = [0, 0], sizes = [64, 56], strides = [1, 1]} : vector<64x128xbf16> to vector<64x56xbf16>
    %c0_268 = arith.constant 0 : index
    %c8_269 = arith.constant 8 : index
    %427 = vector.load %arg25[%c0_268, %c8_269] : memref<192x128xbf16, #tpu.memory_space<vmem>>, vector<64x56xbf16>
    tpu.vector_store %arg25[%c0_268, %c8_269], %426 {strides = array<i32>} : memref<192x128xbf16, #tpu.memory_space<vmem>>, vector<64x56xbf16>,
    %428 = vector.extract_strided_slice %424 {offsets = [0, 8], sizes = [64, 56], strides = [1, 1]} : vector<64x128xbf16> to vector<64x56xbf16>
    %c128_270 = arith.constant 128 : index
    %c0_271 = arith.constant 0 : index
    %429 = vector.load %arg25[%c128_270, %c0_271] : memref<192x128xbf16, #tpu.memory_space<vmem>>, vector<64x56xbf16>
    tpu.vector_store %arg25[%c128_270, %c0_271], %428 {strides = array<i32>} : memref<192x128xbf16, #tpu.memory_space<vmem>>, vector<64x56xbf16>,
    %c24_272 = arith.constant 24 : index
    %c0_273 = arith.constant 0 : index
    %430 = vector.load %arg2[%c24_272, %c0_273] : memref<32x32xbf16, #tpu.memory_space<vmem>>, vector<8x8xbf16>
    %431 = vector.extract_strided_slice %424 {offsets = [0, 1], sizes = [64, 8], strides = [1, 1]} : vector<64x128xbf16> to vector<64x8xbf16>
    %cst_274 = arith.constant dense<0.000000e+00> : vector<64x8xf32>
    %432 = tpu.matmul %431, %430, %cst_274 {dimension_numbers = #tpu.dot_dimension_numbers<[1], [0], [0], [1], [0, 0, 1, 1], [], []>} : vector<64x8xbf16>, vector<8x8xbf16>, vector<64x8xf32> -> vector<64x8xf32>
    %433 = arith.truncf %432 : vector<64x8xf32> to vector<64x8xbf16>
    %434 = vector.extract_strided_slice %424 {offsets = [0, 55], sizes = [64, 8], strides = [1, 1]} : vector<64x128xbf16> to vector<64x8xbf16>
    %cst_275 = arith.constant dense<0.000000e+00> : vector<64x8xf32>
    %435 = tpu.matmul %434, %430, %cst_275 {dimension_numbers = #tpu.dot_dimension_numbers<[1], [0], [0], [1], [0, 0, 1, 1], [], []>} : vector<64x8xbf16>, vector<8x8xbf16>, vector<64x8xf32> -> vector<64x8xf32>
    %436 = arith.truncf %435 : vector<64x8xf32> to vector<64x8xbf16>
    %c0_276 = arith.constant 0 : index
    %c0_277 = arith.constant 0 : index
    %437 = vector.load %arg25[%c0_276, %c0_277] : memref<192x128xbf16, #tpu.memory_space<vmem>>, vector<64x8xbf16>
    tpu.vector_store %arg25[%c0_276, %c0_277], %433 {strides = array<i32>} : memref<192x128xbf16, #tpu.memory_space<vmem>>, vector<64x8xbf16>,
    %c128_278 = arith.constant 128 : index
    %c56_279 = arith.constant 56 : index
    %438 = vector.load %arg25[%c128_278, %c56_279] : memref<192x128xbf16, #tpu.memory_space<vmem>>, vector<64x8xbf16>
    tpu.vector_store %arg25[%c128_278, %c56_279], %436 {strides = array<i32>} : memref<192x128xbf16, #tpu.memory_space<vmem>>, vector<64x8xbf16>,
    %439 = vector.extract_strided_slice %424 {offsets = [0, 64], sizes = [64, 56], strides = [1, 1]} : vector<64x128xbf16> to vector<64x56xbf16>
    %c0_280 = arith.constant 0 : index
    %c72_281 = arith.constant 72 : index
    %440 = vector.load %arg25[%c0_280, %c72_281] : memref<192x128xbf16, #tpu.memory_space<vmem>>, vector<64x56xbf16>
    tpu.vector_store %arg25[%c0_280, %c72_281], %439 {strides = array<i32>} : memref<192x128xbf16, #tpu.memory_space<vmem>>, vector<64x56xbf16>,
    %441 = vector.extract_strided_slice %424 {offsets = [0, 72], sizes = [64, 56], strides = [1, 1]} : vector<64x128xbf16> to vector<64x56xbf16>
    %c128_282 = arith.constant 128 : index
    %c64_283 = arith.constant 64 : index
    %442 = vector.load %arg25[%c128_282, %c64_283] : memref<192x128xbf16, #tpu.memory_space<vmem>>, vector<64x56xbf16>
    tpu.vector_store %arg25[%c128_282, %c64_283], %441 {strides = array<i32>} : memref<192x128xbf16, #tpu.memory_space<vmem>>, vector<64x56xbf16>,
    %c24_284 = arith.constant 24 : index
    %c0_285 = arith.constant 0 : index
    %443 = vector.load %arg2[%c24_284, %c0_285] : memref<32x32xbf16, #tpu.memory_space<vmem>>, vector<8x8xbf16>
    %444 = vector.extract_strided_slice %424 {offsets = [0, 65], sizes = [64, 8], strides = [1, 1]} : vector<64x128xbf16> to vector<64x8xbf16>
    %cst_286 = arith.constant dense<0.000000e+00> : vector<64x8xf32>
    %445 = tpu.matmul %444, %443, %cst_286 {dimension_numbers = #tpu.dot_dimension_numbers<[1], [0], [0], [1], [0, 0, 1, 1], [], []>} : vector<64x8xbf16>, vector<8x8xbf16>, vector<64x8xf32> -> vector<64x8xf32>
    %446 = arith.truncf %445 : vector<64x8xf32> to vector<64x8xbf16>
    %447 = vector.extract_strided_slice %424 {offsets = [0, 119], sizes = [64, 8], strides = [1, 1]} : vector<64x128xbf16> to vector<64x8xbf16>
    %cst_287 = arith.constant dense<0.000000e+00> : vector<64x8xf32>
    %448 = tpu.matmul %447, %443, %cst_287 {dimension_numbers = #tpu.dot_dimension_numbers<[1], [0], [0], [1], [0, 0, 1, 1], [], []>} : vector<64x8xbf16>, vector<8x8xbf16>, vector<64x8xf32> -> vector<64x8xf32>
    %449 = arith.truncf %448 : vector<64x8xf32> to vector<64x8xbf16>
    %c0_288 = arith.constant 0 : index
    %c64_289 = arith.constant 64 : index
    %450 = vector.load %arg25[%c0_288, %c64_289] : memref<192x128xbf16, #tpu.memory_space<vmem>>, vector<64x8xbf16>
    tpu.vector_store %arg25[%c0_288, %c64_289], %446 {strides = array<i32>} : memref<192x128xbf16, #tpu.memory_space<vmem>>, vector<64x8xbf16>,
    %c128_290 = arith.constant 128 : index
    %c120_291 = arith.constant 120 : index
    %451 = vector.load %arg25[%c128_290, %c120_291] : memref<192x128xbf16, #tpu.memory_space<vmem>>, vector<64x8xbf16>
    tpu.vector_store %arg25[%c128_290, %c120_291], %449 {strides = array<i32>} : memref<192x128xbf16, #tpu.memory_space<vmem>>, vector<64x8xbf16>,
    %c0_292 = arith.constant 0 : index
    %c0_293 = arith.constant 0 : index
    %452 = vector.load %arg13[%c0_292, %c0_293] : memref<64x192xbf16, #tpu.memory_space<vmem>>, vector<64x192xbf16>
    %c0_294 = arith.constant 0 : index
    %c0_295 = arith.constant 0 : index
    %453 = vector.load %arg25[%c0_294, %c0_295] : memref<192x128xbf16, #tpu.memory_space<vmem>>, vector<192x128xbf16>
    %cst_296 = arith.constant dense<0.000000e+00> : vector<64x128xf32>
    %454 = tpu.matmul %452, %453, %cst_296 {dimension_numbers = #tpu.dot_dimension_numbers<[1], [0], [0], [1], [0, 0, 1, 1], [], []>} : vector<64x192xbf16>, vector<192x128xbf16>, vector<64x128xf32> -> vector<64x128xf32>
    %cst_297 = arith.constant 2.000000e+01 : f32
    %455 = vector.broadcast %cst_297 : f32 to vector<64x128xf32>
    %456 = arith.minimumf %454, %455 : vector<64x128xf32>
    %457 = math.exp %456 : vector<64x128xf32>
    %cst_298 = arith.constant 2.000000e+00 : f32
    %458 = vector.broadcast %cst_298 : f32 to vector<64x128xf32>
    %459 = arith.addf %457, %458 : vector<64x128xf32>
    %460 = arith.mulf %457, %459 : vector<64x128xf32>
    %cst_299 = arith.constant 2.000000e+00 : f32
    %461 = vector.broadcast %cst_299 : f32 to vector<64x128xf32>
    %462 = arith.addf %460, %461 : vector<64x128xf32>
    %463 = tpu.reciprocal %462 {approx = true} : vector<64x128xf32> -> vector<64x128xf32>
    %464 = arith.mulf %460, %463 : vector<64x128xf32>
    %465 = arith.mulf %454, %464 : vector<64x128xf32>
    %cst_300 = arith.constant 0.000000e+00 : f32
    %466 = vector.broadcast %cst_300 : f32 to vector<1x128xf32>
    %cst_301 = arith.constant 0.000000e+00 : f32
    %467 = vector.broadcast %cst_301 : f32 to vector<1x128xf32>
    %468 = vector.extract_strided_slice %465 {offsets = [0, 0], sizes = [64, 64], strides = [1, 1]} : vector<64x128xf32> to vector<64x64xf32>
    %469 = vector.shape_cast %468 : vector<64x64xf32> to vector<1x64x64xf32>
    %cst_302 = arith.constant dense<0.000000e+00> : vector<1xf32>
    %470 = vector.multi_reduction <add>, %469, %cst_302 [1, 2] : vector<1x64x64xf32> to vector<1xf32>
    %471 = vector.shape_cast %470 : vector<1xf32> to vector<1x1x1xf32>
    %472 = vector.extract %471[0, 0, 0] : f32 from vector<1x1x1xf32>
    %cst_303 = arith.constant 2.44140625E-4 : f32
    %473 = arith.mulf %472, %cst_303 : f32
    %474 = arith.mulf %468, %468 : vector<64x64xf32>
    %475 = vector.shape_cast %474 : vector<64x64xf32> to vector<1x64x64xf32>
    %cst_304 = arith.constant dense<0.000000e+00> : vector<1xf32>
    %476 = vector.multi_reduction <add>, %475, %cst_304 [1, 2] : vector<1x64x64xf32> to vector<1xf32>
    %477 = vector.shape_cast %476 : vector<1xf32> to vector<1x1x1xf32>
    %478 = vector.extract %477[0, 0, 0] : f32 from vector<1x1x1xf32>
    %cst_305 = arith.constant 2.44140625E-4 : f32
    %479 = arith.mulf %478, %cst_305 : f32
    %480 = arith.mulf %473, %473 : f32
    %481 = arith.subf %479, %480 : f32
    %cst_306 = arith.constant 9.99999974E-6 : f32
    %482 = arith.addf %481, %cst_306 : f32
    %483 = math.rsqrt %482 : f32
    %c0_i32_307 = arith.constant 0 : i32
    %484 = vector.broadcast %c0_i32_307 : i32 to vector<1x128xi32>
    %485 = arith.cmpi sge, %2, %484 : vector<1x128xi32>
    %c64_i32_308 = arith.constant 64 : i32
    %486 = vector.broadcast %c64_i32_308 : i32 to vector<1x128xi32>
    %487 = arith.cmpi slt, %2, %486 : vector<1x128xi32>
    %488 = arith.andi %485, %487 : vector<1x128xi1>
    %489 = vector.broadcast %473 : f32 to vector<1x128xf32>
    %490 = arith.select %488, %489, %466 : vector<1x128xi1>, vector<1x128xf32>
    %491 = vector.broadcast %483 : f32 to vector<1x128xf32>
    %492 = arith.select %488, %491, %467 : vector<1x128xi1>, vector<1x128xf32>
    %493 = vector.extract_strided_slice %465 {offsets = [0, 64], sizes = [64, 64], strides = [1, 1]} : vector<64x128xf32> to vector<64x64xf32>
    %494 = vector.shape_cast %493 : vector<64x64xf32> to vector<1x64x64xf32>
    %cst_309 = arith.constant dense<0.000000e+00> : vector<1xf32>
    %495 = vector.multi_reduction <add>, %494, %cst_309 [1, 2] : vector<1x64x64xf32> to vector<1xf32>
    %496 = vector.shape_cast %495 : vector<1xf32> to vector<1x1x1xf32>
    %497 = vector.extract %496[0, 0, 0] : f32 from vector<1x1x1xf32>
    %cst_310 = arith.constant 2.44140625E-4 : f32
    %498 = arith.mulf %497, %cst_310 : f32
    %499 = arith.mulf %493, %493 : vector<64x64xf32>
    %500 = vector.shape_cast %499 : vector<64x64xf32> to vector<1x64x64xf32>
    %cst_311 = arith.constant dense<0.000000e+00> : vector<1xf32>
    %501 = vector.multi_reduction <add>, %500, %cst_311 [1, 2] : vector<1x64x64xf32> to vector<1xf32>
    %502 = vector.shape_cast %501 : vector<1xf32> to vector<1x1x1xf32>
    %503 = vector.extract %502[0, 0, 0] : f32 from vector<1x1x1xf32>
    %cst_312 = arith.constant 2.44140625E-4 : f32
    %504 = arith.mulf %503, %cst_312 : f32
    %505 = arith.mulf %498, %498 : f32
    %506 = arith.subf %504, %505 : f32
    %cst_313 = arith.constant 9.99999974E-6 : f32
    %507 = arith.addf %506, %cst_313 : f32
    %508 = math.rsqrt %507 : f32
    %c64_i32_314 = arith.constant 64 : i32
    %509 = vector.broadcast %c64_i32_314 : i32 to vector<1x128xi32>
    %510 = arith.cmpi sge, %2, %509 : vector<1x128xi32>
    %c128_i32_315 = arith.constant 128 : i32
    %511 = vector.broadcast %c128_i32_315 : i32 to vector<1x128xi32>
    %512 = arith.cmpi slt, %2, %511 : vector<1x128xi32>
    %513 = arith.andi %510, %512 : vector<1x128xi1>
    %514 = vector.broadcast %498 : f32 to vector<1x128xf32>
    %515 = arith.select %513, %514, %490 : vector<1x128xi1>, vector<1x128xf32>
    %516 = vector.broadcast %508 : f32 to vector<1x128xf32>
    %517 = arith.select %513, %516, %492 : vector<1x128xi1>, vector<1x128xf32>
    %518 = vector.broadcast %515 : vector<1x128xf32> to vector<64x128xf32>
    %519 = arith.subf %465, %518 : vector<64x128xf32>
    %520 = vector.broadcast %517 : vector<1x128xf32> to vector<64x128xf32>
    %521 = arith.mulf %519, %520 : vector<64x128xf32>
    %522 = arith.addf %521, %381 : vector<64x128xf32>
    %523 = arith.truncf %522 : vector<64x128xf32> to vector<64x128xbf16>
    %c64_316 = arith.constant 64 : index
    %c0_317 = arith.constant 0 : index
    %524 = vector.load %arg25[%c64_316, %c0_317] : memref<192x128xbf16, #tpu.memory_space<vmem>>, vector<64x128xbf16>
    tpu.vector_store %arg25[%c64_316, %c0_317], %523 {strides = array<i32>} : memref<192x128xbf16, #tpu.memory_space<vmem>>, vector<64x128xbf16>,
    %525 = vector.extract_strided_slice %523 {offsets = [0, 0], sizes = [64, 48], strides = [1, 1]} : vector<64x128xbf16> to vector<64x48xbf16>
    %c0_318 = arith.constant 0 : index
    %c16_319 = arith.constant 16 : index
    %526 = vector.load %arg25[%c0_318, %c16_319] : memref<192x128xbf16, #tpu.memory_space<vmem>>, vector<64x48xbf16>
    tpu.vector_store %arg25[%c0_318, %c16_319], %525 {strides = array<i32>} : memref<192x128xbf16, #tpu.memory_space<vmem>>, vector<64x48xbf16>,
    %527 = vector.extract_strided_slice %523 {offsets = [0, 16], sizes = [64, 48], strides = [1, 1]} : vector<64x128xbf16> to vector<64x48xbf16>
    %c128_320 = arith.constant 128 : index
    %c0_321 = arith.constant 0 : index
    %528 = vector.load %arg25[%c128_320, %c0_321] : memref<192x128xbf16, #tpu.memory_space<vmem>>, vector<64x48xbf16>
    tpu.vector_store %arg25[%c128_320, %c0_321], %527 {strides = array<i32>} : memref<192x128xbf16, #tpu.memory_space<vmem>>, vector<64x48xbf16>,
    %c16_322 = arith.constant 16 : index
    %c0_323 = arith.constant 0 : index
    %529 = vector.load %arg2[%c16_322, %c0_323] : memref<32x32xbf16, #tpu.memory_space<vmem>>, vector<16x16xbf16>
    %530 = vector.extract_strided_slice %523 {offsets = [0, 1], sizes = [64, 16], strides = [1, 1]} : vector<64x128xbf16> to vector<64x16xbf16>
    %cst_324 = arith.constant dense<0.000000e+00> : vector<64x16xf32>
    %531 = tpu.matmul %530, %529, %cst_324 {dimension_numbers = #tpu.dot_dimension_numbers<[1], [0], [0], [1], [0, 0, 1, 1], [], []>} : vector<64x16xbf16>, vector<16x16xbf16>, vector<64x16xf32> -> vector<64x16xf32>
    %532 = arith.truncf %531 : vector<64x16xf32> to vector<64x16xbf16>
    %533 = vector.extract_strided_slice %523 {offsets = [0, 47], sizes = [64, 16], strides = [1, 1]} : vector<64x128xbf16> to vector<64x16xbf16>
    %cst_325 = arith.constant dense<0.000000e+00> : vector<64x16xf32>
    %534 = tpu.matmul %533, %529, %cst_325 {dimension_numbers = #tpu.dot_dimension_numbers<[1], [0], [0], [1], [0, 0, 1, 1], [], []>} : vector<64x16xbf16>, vector<16x16xbf16>, vector<64x16xf32> -> vector<64x16xf32>
    %535 = arith.truncf %534 : vector<64x16xf32> to vector<64x16xbf16>
    %c0_326 = arith.constant 0 : index
    %c0_327 = arith.constant 0 : index
    %536 = vector.load %arg25[%c0_326, %c0_327] : memref<192x128xbf16, #tpu.memory_space<vmem>>, vector<64x16xbf16>
    tpu.vector_store %arg25[%c0_326, %c0_327], %532 {strides = array<i32>} : memref<192x128xbf16, #tpu.memory_space<vmem>>, vector<64x16xbf16>,
    %c128_328 = arith.constant 128 : index
    %c48 = arith.constant 48 : index
    %537 = vector.load %arg25[%c128_328, %c48] : memref<192x128xbf16, #tpu.memory_space<vmem>>, vector<64x16xbf16>
    tpu.vector_store %arg25[%c128_328, %c48], %535 {strides = array<i32>} : memref<192x128xbf16, #tpu.memory_space<vmem>>, vector<64x16xbf16>,
    %538 = vector.extract_strided_slice %523 {offsets = [0, 64], sizes = [64, 48], strides = [1, 1]} : vector<64x128xbf16> to vector<64x48xbf16>
    %c0_329 = arith.constant 0 : index
    %c80 = arith.constant 80 : index
    %539 = vector.load %arg25[%c0_329, %c80] : memref<192x128xbf16, #tpu.memory_space<vmem>>, vector<64x48xbf16>
    tpu.vector_store %arg25[%c0_329, %c80], %538 {strides = array<i32>} : memref<192x128xbf16, #tpu.memory_space<vmem>>, vector<64x48xbf16>,
    %540 = vector.extract_strided_slice %523 {offsets = [0, 80], sizes = [64, 48], strides = [1, 1]} : vector<64x128xbf16> to vector<64x48xbf16>
    %c128_330 = arith.constant 128 : index
    %c64_331 = arith.constant 64 : index
    %541 = vector.load %arg25[%c128_330, %c64_331] : memref<192x128xbf16, #tpu.memory_space<vmem>>, vector<64x48xbf16>
    tpu.vector_store %arg25[%c128_330, %c64_331], %540 {strides = array<i32>} : memref<192x128xbf16, #tpu.memory_space<vmem>>, vector<64x48xbf16>,
    %c16_332 = arith.constant 16 : index
    %c0_333 = arith.constant 0 : index
    %542 = vector.load %arg2[%c16_332, %c0_333] : memref<32x32xbf16, #tpu.memory_space<vmem>>, vector<16x16xbf16>
    %543 = vector.extract_strided_slice %523 {offsets = [0, 65], sizes = [64, 16], strides = [1, 1]} : vector<64x128xbf16> to vector<64x16xbf16>
    %cst_334 = arith.constant dense<0.000000e+00> : vector<64x16xf32>
    %544 = tpu.matmul %543, %542, %cst_334 {dimension_numbers = #tpu.dot_dimension_numbers<[1], [0], [0], [1], [0, 0, 1, 1], [], []>} : vector<64x16xbf16>, vector<16x16xbf16>, vector<64x16xf32> -> vector<64x16xf32>
    %545 = arith.truncf %544 : vector<64x16xf32> to vector<64x16xbf16>
    %546 = vector.extract_strided_slice %523 {offsets = [0, 111], sizes = [64, 16], strides = [1, 1]} : vector<64x128xbf16> to vector<64x16xbf16>
    %cst_335 = arith.constant dense<0.000000e+00> : vector<64x16xf32>
    %547 = tpu.matmul %546, %542, %cst_335 {dimension_numbers = #tpu.dot_dimension_numbers<[1], [0], [0], [1], [0, 0, 1, 1], [], []>} : vector<64x16xbf16>, vector<16x16xbf16>, vector<64x16xf32> -> vector<64x16xf32>
    %548 = arith.truncf %547 : vector<64x16xf32> to vector<64x16xbf16>
    %c0_336 = arith.constant 0 : index
    %c64_337 = arith.constant 64 : index
    %549 = vector.load %arg25[%c0_336, %c64_337] : memref<192x128xbf16, #tpu.memory_space<vmem>>, vector<64x16xbf16>
    tpu.vector_store %arg25[%c0_336, %c64_337], %545 {strides = array<i32>} : memref<192x128xbf16, #tpu.memory_space<vmem>>, vector<64x16xbf16>,
    %c128_338 = arith.constant 128 : index
    %c112 = arith.constant 112 : index
    %550 = vector.load %arg25[%c128_338, %c112] : memref<192x128xbf16, #tpu.memory_space<vmem>>, vector<64x16xbf16>
    tpu.vector_store %arg25[%c128_338, %c112], %548 {strides = array<i32>} : memref<192x128xbf16, #tpu.memory_space<vmem>>, vector<64x16xbf16>,
    %c0_339 = arith.constant 0 : index
    %c0_340 = arith.constant 0 : index
    %551 = vector.load %arg14[%c0_339, %c0_340] : memref<32x192xbf16, #tpu.memory_space<vmem>>, vector<32x192xbf16>
    %c0_341 = arith.constant 0 : index
    %c0_342 = arith.constant 0 : index
    %552 = vector.load %arg25[%c0_341, %c0_342] : memref<192x128xbf16, #tpu.memory_space<vmem>>, vector<192x128xbf16>
    %cst_343 = arith.constant dense<0.000000e+00> : vector<32x128xf32>
    %553 = tpu.matmul %551, %552, %cst_343 {dimension_numbers = #tpu.dot_dimension_numbers<[1], [0], [0], [1], [0, 0, 1, 1], [], []>} : vector<32x192xbf16>, vector<192x128xbf16>, vector<32x128xf32> -> vector<32x128xf32>
    %cst_344 = arith.constant 2.000000e+01 : f32
    %554 = vector.broadcast %cst_344 : f32 to vector<32x128xf32>
    %555 = arith.minimumf %553, %554 : vector<32x128xf32>
    %556 = math.exp %555 : vector<32x128xf32>
    %cst_345 = arith.constant 2.000000e+00 : f32
    %557 = vector.broadcast %cst_345 : f32 to vector<32x128xf32>
    %558 = arith.addf %556, %557 : vector<32x128xf32>
    %559 = arith.mulf %556, %558 : vector<32x128xf32>
    %cst_346 = arith.constant 2.000000e+00 : f32
    %560 = vector.broadcast %cst_346 : f32 to vector<32x128xf32>
    %561 = arith.addf %559, %560 : vector<32x128xf32>
    %562 = tpu.reciprocal %561 {approx = true} : vector<32x128xf32> -> vector<32x128xf32>
    %563 = arith.mulf %559, %562 : vector<32x128xf32>
    %564 = arith.mulf %553, %563 : vector<32x128xf32>
    %565 = arith.truncf %564 : vector<32x128xf32> to vector<32x128xbf16>
    %c32_347 = arith.constant 32 : index
    %c0_348 = arith.constant 0 : index
    %566 = vector.load %arg25[%c32_347, %c0_348] : memref<192x128xbf16, #tpu.memory_space<vmem>>, vector<32x128xbf16>
    tpu.vector_store %arg25[%c32_347, %c0_348], %565 {strides = array<i32>} : memref<192x128xbf16, #tpu.memory_space<vmem>>, vector<32x128xbf16>,
    %567 = vector.extract_strided_slice %565 {offsets = [0, 0], sizes = [32, 48], strides = [1, 1]} : vector<32x128xbf16> to vector<32x48xbf16>
    %c0_349 = arith.constant 0 : index
    %c16_350 = arith.constant 16 : index
    %568 = vector.load %arg25[%c0_349, %c16_350] : memref<192x128xbf16, #tpu.memory_space<vmem>>, vector<32x48xbf16>
    tpu.vector_store %arg25[%c0_349, %c16_350], %567 {strides = array<i32>} : memref<192x128xbf16, #tpu.memory_space<vmem>>, vector<32x48xbf16>,
    %569 = vector.extract_strided_slice %565 {offsets = [0, 16], sizes = [32, 48], strides = [1, 1]} : vector<32x128xbf16> to vector<32x48xbf16>
    %c64_351 = arith.constant 64 : index
    %c0_352 = arith.constant 0 : index
    %570 = vector.load %arg25[%c64_351, %c0_352] : memref<192x128xbf16, #tpu.memory_space<vmem>>, vector<32x48xbf16>
    tpu.vector_store %arg25[%c64_351, %c0_352], %569 {strides = array<i32>} : memref<192x128xbf16, #tpu.memory_space<vmem>>, vector<32x48xbf16>,
    %c16_353 = arith.constant 16 : index
    %c0_354 = arith.constant 0 : index
    %571 = vector.load %arg2[%c16_353, %c0_354] : memref<32x32xbf16, #tpu.memory_space<vmem>>, vector<16x16xbf16>
    %572 = vector.extract_strided_slice %565 {offsets = [0, 1], sizes = [32, 16], strides = [1, 1]} : vector<32x128xbf16> to vector<32x16xbf16>
    %cst_355 = arith.constant dense<0.000000e+00> : vector<32x16xf32>
    %573 = tpu.matmul %572, %571, %cst_355 {dimension_numbers = #tpu.dot_dimension_numbers<[1], [0], [0], [1], [0, 0, 1, 1], [], []>} : vector<32x16xbf16>, vector<16x16xbf16>, vector<32x16xf32> -> vector<32x16xf32>
    %574 = arith.truncf %573 : vector<32x16xf32> to vector<32x16xbf16>
    %575 = vector.extract_strided_slice %565 {offsets = [0, 47], sizes = [32, 16], strides = [1, 1]} : vector<32x128xbf16> to vector<32x16xbf16>
    %cst_356 = arith.constant dense<0.000000e+00> : vector<32x16xf32>
    %576 = tpu.matmul %575, %571, %cst_356 {dimension_numbers = #tpu.dot_dimension_numbers<[1], [0], [0], [1], [0, 0, 1, 1], [], []>} : vector<32x16xbf16>, vector<16x16xbf16>, vector<32x16xf32> -> vector<32x16xf32>
    %577 = arith.truncf %576 : vector<32x16xf32> to vector<32x16xbf16>
    %c0_357 = arith.constant 0 : index
    %c0_358 = arith.constant 0 : index
    %578 = vector.load %arg25[%c0_357, %c0_358] : memref<192x128xbf16, #tpu.memory_space<vmem>>, vector<32x16xbf16>
    tpu.vector_store %arg25[%c0_357, %c0_358], %574 {strides = array<i32>} : memref<192x128xbf16, #tpu.memory_space<vmem>>, vector<32x16xbf16>,
    %c64_359 = arith.constant 64 : index
    %c48_360 = arith.constant 48 : index
    %579 = vector.load %arg25[%c64_359, %c48_360] : memref<192x128xbf16, #tpu.memory_space<vmem>>, vector<32x16xbf16>
    tpu.vector_store %arg25[%c64_359, %c48_360], %577 {strides = array<i32>} : memref<192x128xbf16, #tpu.memory_space<vmem>>, vector<32x16xbf16>,
    %580 = vector.extract_strided_slice %565 {offsets = [0, 64], sizes = [32, 48], strides = [1, 1]} : vector<32x128xbf16> to vector<32x48xbf16>
    %c0_361 = arith.constant 0 : index
    %c80_362 = arith.constant 80 : index
    %581 = vector.load %arg25[%c0_361, %c80_362] : memref<192x128xbf16, #tpu.memory_space<vmem>>, vector<32x48xbf16>
    tpu.vector_store %arg25[%c0_361, %c80_362], %580 {strides = array<i32>} : memref<192x128xbf16, #tpu.memory_space<vmem>>, vector<32x48xbf16>,
    %582 = vector.extract_strided_slice %565 {offsets = [0, 80], sizes = [32, 48], strides = [1, 1]} : vector<32x128xbf16> to vector<32x48xbf16>
    %c64_363 = arith.constant 64 : index
    %c64_364 = arith.constant 64 : index
    %583 = vector.load %arg25[%c64_363, %c64_364] : memref<192x128xbf16, #tpu.memory_space<vmem>>, vector<32x48xbf16>
    tpu.vector_store %arg25[%c64_363, %c64_364], %582 {strides = array<i32>} : memref<192x128xbf16, #tpu.memory_space<vmem>>, vector<32x48xbf16>,
    %c16_365 = arith.constant 16 : index
    %c0_366 = arith.constant 0 : index
    %584 = vector.load %arg2[%c16_365, %c0_366] : memref<32x32xbf16, #tpu.memory_space<vmem>>, vector<16x16xbf16>
    %585 = vector.extract_strided_slice %565 {offsets = [0, 65], sizes = [32, 16], strides = [1, 1]} : vector<32x128xbf16> to vector<32x16xbf16>
    %cst_367 = arith.constant dense<0.000000e+00> : vector<32x16xf32>
    %586 = tpu.matmul %585, %584, %cst_367 {dimension_numbers = #tpu.dot_dimension_numbers<[1], [0], [0], [1], [0, 0, 1, 1], [], []>} : vector<32x16xbf16>, vector<16x16xbf16>, vector<32x16xf32> -> vector<32x16xf32>
    %587 = arith.truncf %586 : vector<32x16xf32> to vector<32x16xbf16>
    %588 = vector.extract_strided_slice %565 {offsets = [0, 111], sizes = [32, 16], strides = [1, 1]} : vector<32x128xbf16> to vector<32x16xbf16>
    %cst_368 = arith.constant dense<0.000000e+00> : vector<32x16xf32>
    %589 = tpu.matmul %588, %584, %cst_368 {dimension_numbers = #tpu.dot_dimension_numbers<[1], [0], [0], [1], [0, 0, 1, 1], [], []>} : vector<32x16xbf16>, vector<16x16xbf16>, vector<32x16xf32> -> vector<32x16xf32>
    %590 = arith.truncf %589 : vector<32x16xf32> to vector<32x16xbf16>
    %c0_369 = arith.constant 0 : index
    %c64_370 = arith.constant 64 : index
    %591 = vector.load %arg25[%c0_369, %c64_370] : memref<192x128xbf16, #tpu.memory_space<vmem>>, vector<32x16xbf16>
    tpu.vector_store %arg25[%c0_369, %c64_370], %587 {strides = array<i32>} : memref<192x128xbf16, #tpu.memory_space<vmem>>, vector<32x16xbf16>,
    %c64_371 = arith.constant 64 : index
    %c112_372 = arith.constant 112 : index
    %592 = vector.load %arg25[%c64_371, %c112_372] : memref<192x128xbf16, #tpu.memory_space<vmem>>, vector<32x16xbf16>
    tpu.vector_store %arg25[%c64_371, %c112_372], %590 {strides = array<i32>} : memref<192x128xbf16, #tpu.memory_space<vmem>>, vector<32x16xbf16>,
    %c0_373 = arith.constant 0 : index
    %c0_374 = arith.constant 0 : index
    %593 = vector.load %arg15[%c0_373, %c0_374] : memref<32x96xbf16, #tpu.memory_space<vmem>>, vector<32x96xbf16>
    %c0_375 = arith.constant 0 : index
    %c0_376 = arith.constant 0 : index
    %594 = vector.load %arg25[%c0_375, %c0_376] : memref<192x128xbf16, #tpu.memory_space<vmem>>, vector<96x128xbf16>
    %cst_377 = arith.constant dense<0.000000e+00> : vector<32x128xf32>
    %595 = tpu.matmul %593, %594, %cst_377 {dimension_numbers = #tpu.dot_dimension_numbers<[1], [0], [0], [1], [0, 0, 1, 1], [], []>} : vector<32x96xbf16>, vector<96x128xbf16>, vector<32x128xf32> -> vector<32x128xf32>
    %cst_378 = arith.constant 2.000000e+01 : f32
    %596 = vector.broadcast %cst_378 : f32 to vector<32x128xf32>
    %597 = arith.minimumf %595, %596 : vector<32x128xf32>
    %598 = math.exp %597 : vector<32x128xf32>
    %cst_379 = arith.constant 2.000000e+00 : f32
    %599 = vector.broadcast %cst_379 : f32 to vector<32x128xf32>
    %600 = arith.addf %598, %599 : vector<32x128xf32>
    %601 = arith.mulf %598, %600 : vector<32x128xf32>
    %cst_380 = arith.constant 2.000000e+00 : f32
    %602 = vector.broadcast %cst_380 : f32 to vector<32x128xf32>
    %603 = arith.addf %601, %602 : vector<32x128xf32>
    %604 = tpu.reciprocal %603 {approx = true} : vector<32x128xf32> -> vector<32x128xf32>
    %605 = arith.mulf %601, %604 : vector<32x128xf32>
    %606 = arith.mulf %595, %605 : vector<32x128xf32>
    %cst_381 = arith.constant 0.000000e+00 : f32
    %607 = vector.broadcast %cst_381 : f32 to vector<1x128xf32>
    %cst_382 = arith.constant 0.000000e+00 : f32
    %608 = vector.broadcast %cst_382 : f32 to vector<1x128xf32>
    %609 = vector.extract_strided_slice %606 {offsets = [0, 0], sizes = [32, 64], strides = [1, 1]} : vector<32x128xf32> to vector<32x64xf32>
    %610 = vector.shape_cast %609 : vector<32x64xf32> to vector<1x32x64xf32>
    %cst_383 = arith.constant dense<0.000000e+00> : vector<1xf32>
    %611 = vector.multi_reduction <add>, %610, %cst_383 [1, 2] : vector<1x32x64xf32> to vector<1xf32>
    %612 = vector.shape_cast %611 : vector<1xf32> to vector<1x1x1xf32>
    %613 = vector.extract %612[0, 0, 0] : f32 from vector<1x1x1xf32>
    %cst_384 = arith.constant 4.8828125E-4 : f32
    %614 = arith.mulf %613, %cst_384 : f32
    %615 = arith.mulf %609, %609 : vector<32x64xf32>
    %616 = vector.shape_cast %615 : vector<32x64xf32> to vector<1x32x64xf32>
    %cst_385 = arith.constant dense<0.000000e+00> : vector<1xf32>
    %617 = vector.multi_reduction <add>, %616, %cst_385 [1, 2] : vector<1x32x64xf32> to vector<1xf32>
    %618 = vector.shape_cast %617 : vector<1xf32> to vector<1x1x1xf32>
    %619 = vector.extract %618[0, 0, 0] : f32 from vector<1x1x1xf32>
    %cst_386 = arith.constant 4.8828125E-4 : f32
    %620 = arith.mulf %619, %cst_386 : f32
    %621 = arith.mulf %614, %614 : f32
    %622 = arith.subf %620, %621 : f32
    %cst_387 = arith.constant 9.99999974E-6 : f32
    %623 = arith.addf %622, %cst_387 : f32
    %624 = math.rsqrt %623 : f32
    %c0_i32_388 = arith.constant 0 : i32
    %625 = vector.broadcast %c0_i32_388 : i32 to vector<1x128xi32>
    %626 = arith.cmpi sge, %2, %625 : vector<1x128xi32>
    %c64_i32_389 = arith.constant 64 : i32
    %627 = vector.broadcast %c64_i32_389 : i32 to vector<1x128xi32>
    %628 = arith.cmpi slt, %2, %627 : vector<1x128xi32>
    %629 = arith.andi %626, %628 : vector<1x128xi1>
    %630 = vector.broadcast %614 : f32 to vector<1x128xf32>
    %631 = arith.select %629, %630, %607 : vector<1x128xi1>, vector<1x128xf32>
    %632 = vector.broadcast %624 : f32 to vector<1x128xf32>
    %633 = arith.select %629, %632, %608 : vector<1x128xi1>, vector<1x128xf32>
    %634 = vector.extract_strided_slice %606 {offsets = [0, 64], sizes = [32, 64], strides = [1, 1]} : vector<32x128xf32> to vector<32x64xf32>
    %635 = vector.shape_cast %634 : vector<32x64xf32> to vector<1x32x64xf32>
    %cst_390 = arith.constant dense<0.000000e+00> : vector<1xf32>
    %636 = vector.multi_reduction <add>, %635, %cst_390 [1, 2] : vector<1x32x64xf32> to vector<1xf32>
    %637 = vector.shape_cast %636 : vector<1xf32> to vector<1x1x1xf32>
    %638 = vector.extract %637[0, 0, 0] : f32 from vector<1x1x1xf32>
    %cst_391 = arith.constant 4.8828125E-4 : f32
    %639 = arith.mulf %638, %cst_391 : f32
    %640 = arith.mulf %634, %634 : vector<32x64xf32>
    %641 = vector.shape_cast %640 : vector<32x64xf32> to vector<1x32x64xf32>
    %cst_392 = arith.constant dense<0.000000e+00> : vector<1xf32>
    %642 = vector.multi_reduction <add>, %641, %cst_392 [1, 2] : vector<1x32x64xf32> to vector<1xf32>
    %643 = vector.shape_cast %642 : vector<1xf32> to vector<1x1x1xf32>
    %644 = vector.extract %643[0, 0, 0] : f32 from vector<1x1x1xf32>
    %cst_393 = arith.constant 4.8828125E-4 : f32
    %645 = arith.mulf %644, %cst_393 : f32
    %646 = arith.mulf %639, %639 : f32
    %647 = arith.subf %645, %646 : f32
    %cst_394 = arith.constant 9.99999974E-6 : f32
    %648 = arith.addf %647, %cst_394 : f32
    %649 = math.rsqrt %648 : f32
    %c64_i32_395 = arith.constant 64 : i32
    %650 = vector.broadcast %c64_i32_395 : i32 to vector<1x128xi32>
    %651 = arith.cmpi sge, %2, %650 : vector<1x128xi32>
    %c128_i32_396 = arith.constant 128 : i32
    %652 = vector.broadcast %c128_i32_396 : i32 to vector<1x128xi32>
    %653 = arith.cmpi slt, %2, %652 : vector<1x128xi32>
    %654 = arith.andi %651, %653 : vector<1x128xi1>
    %655 = vector.broadcast %639 : f32 to vector<1x128xf32>
    %656 = arith.select %654, %655, %631 : vector<1x128xi1>, vector<1x128xf32>
    %657 = vector.broadcast %649 : f32 to vector<1x128xf32>
    %658 = arith.select %654, %657, %633 : vector<1x128xi1>, vector<1x128xf32>
    %659 = vector.broadcast %656 : vector<1x128xf32> to vector<32x128xf32>
    %660 = arith.subf %606, %659 : vector<32x128xf32>
    %661 = vector.broadcast %658 : vector<1x128xf32> to vector<32x128xf32>
    %662 = arith.mulf %660, %661 : vector<32x128xf32>
    %c0_397 = arith.constant 0 : index
    %c0_398 = arith.constant 0 : index
    %663 = vector.load %arg16[%c0_397, %c0_398] : memref<32x64xbf16, #tpu.memory_space<vmem>>, vector<32x64xbf16>
    %cst_399 = arith.constant dense<0.000000e+00> : vector<32x128xf32>
    %664 = tpu.matmul %663, %523, %cst_399 {dimension_numbers = #tpu.dot_dimension_numbers<[1], [0], [0], [1], [0, 0, 1, 1], [], []>} : vector<32x64xbf16>, vector<64x128xbf16>, vector<32x128xf32> -> vector<32x128xf32>
    %665 = arith.addf %662, %664 : vector<32x128xf32>
    %666 = arith.truncf %665 : vector<32x128xf32> to vector<32x128xbf16>
    %c32_400 = arith.constant 32 : index
    %c0_401 = arith.constant 0 : index
    %667 = vector.load %arg25[%c32_400, %c0_401] : memref<192x128xbf16, #tpu.memory_space<vmem>>, vector<32x128xbf16>
    tpu.vector_store %arg25[%c32_400, %c0_401], %666 {strides = array<i32>} : memref<192x128xbf16, #tpu.memory_space<vmem>>, vector<32x128xbf16>,
    %668 = vector.extract_strided_slice %666 {offsets = [0, 0], sizes = [32, 32], strides = [1, 1]} : vector<32x128xbf16> to vector<32x32xbf16>
    %c0_402 = arith.constant 0 : index
    %c32_403 = arith.constant 32 : index
    %669 = vector.load %arg25[%c0_402, %c32_403] : memref<192x128xbf16, #tpu.memory_space<vmem>>, vector<32x32xbf16>
    tpu.vector_store %arg25[%c0_402, %c32_403], %668 {strides = array<i32>} : memref<192x128xbf16, #tpu.memory_space<vmem>>, vector<32x32xbf16>,
    %670 = vector.extract_strided_slice %666 {offsets = [0, 32], sizes = [32, 32], strides = [1, 1]} : vector<32x128xbf16> to vector<32x32xbf16>
    %c64_404 = arith.constant 64 : index
    %c0_405 = arith.constant 0 : index
    %671 = vector.load %arg25[%c64_404, %c0_405] : memref<192x128xbf16, #tpu.memory_space<vmem>>, vector<32x32xbf16>
    tpu.vector_store %arg25[%c64_404, %c0_405], %670 {strides = array<i32>} : memref<192x128xbf16, #tpu.memory_space<vmem>>, vector<32x32xbf16>,
    %c0_406 = arith.constant 0 : index
    %c0_407 = arith.constant 0 : index
    %672 = vector.load %arg2[%c0_406, %c0_407] : memref<32x32xbf16, #tpu.memory_space<vmem>>, vector<32x32xbf16>
    %673 = vector.extract_strided_slice %666 {offsets = [0, 1], sizes = [32, 32], strides = [1, 1]} : vector<32x128xbf16> to vector<32x32xbf16>
    %cst_408 = arith.constant dense<0.000000e+00> : vector<32x32xf32>
    %674 = tpu.matmul %673, %672, %cst_408 {dimension_numbers = #tpu.dot_dimension_numbers<[1], [0], [0], [1], [0, 0, 1, 1], [], []>} : vector<32x32xbf16>, vector<32x32xbf16>, vector<32x32xf32> -> vector<32x32xf32>
    %675 = arith.truncf %674 : vector<32x32xf32> to vector<32x32xbf16>
    %676 = vector.extract_strided_slice %666 {offsets = [0, 31], sizes = [32, 32], strides = [1, 1]} : vector<32x128xbf16> to vector<32x32xbf16>
    %cst_409 = arith.constant dense<0.000000e+00> : vector<32x32xf32>
    %677 = tpu.matmul %676, %672, %cst_409 {dimension_numbers = #tpu.dot_dimension_numbers<[1], [0], [0], [1], [0, 0, 1, 1], [], []>} : vector<32x32xbf16>, vector<32x32xbf16>, vector<32x32xf32> -> vector<32x32xf32>
    %678 = arith.truncf %677 : vector<32x32xf32> to vector<32x32xbf16>
    %c0_410 = arith.constant 0 : index
    %c0_411 = arith.constant 0 : index
    %679 = vector.load %arg25[%c0_410, %c0_411] : memref<192x128xbf16, #tpu.memory_space<vmem>>, vector<32x32xbf16>
    tpu.vector_store %arg25[%c0_410, %c0_411], %675 {strides = array<i32>} : memref<192x128xbf16, #tpu.memory_space<vmem>>, vector<32x32xbf16>,
    %c64_412 = arith.constant 64 : index
    %c32_413 = arith.constant 32 : index
    %680 = vector.load %arg25[%c64_412, %c32_413] : memref<192x128xbf16, #tpu.memory_space<vmem>>, vector<32x32xbf16>
    tpu.vector_store %arg25[%c64_412, %c32_413], %678 {strides = array<i32>} : memref<192x128xbf16, #tpu.memory_space<vmem>>, vector<32x32xbf16>,
    %681 = vector.extract_strided_slice %666 {offsets = [0, 64], sizes = [32, 32], strides = [1, 1]} : vector<32x128xbf16> to vector<32x32xbf16>
    %c0_414 = arith.constant 0 : index
    %c96 = arith.constant 96 : index
    %682 = vector.load %arg25[%c0_414, %c96] : memref<192x128xbf16, #tpu.memory_space<vmem>>, vector<32x32xbf16>
    tpu.vector_store %arg25[%c0_414, %c96], %681 {strides = array<i32>} : memref<192x128xbf16, #tpu.memory_space<vmem>>, vector<32x32xbf16>,
    %683 = vector.extract_strided_slice %666 {offsets = [0, 96], sizes = [32, 32], strides = [1, 1]} : vector<32x128xbf16> to vector<32x32xbf16>
    %c64_415 = arith.constant 64 : index
    %c64_416 = arith.constant 64 : index
    %684 = vector.load %arg25[%c64_415, %c64_416] : memref<192x128xbf16, #tpu.memory_space<vmem>>, vector<32x32xbf16>
    tpu.vector_store %arg25[%c64_415, %c64_416], %683 {strides = array<i32>} : memref<192x128xbf16, #tpu.memory_space<vmem>>, vector<32x32xbf16>,
    %c0_417 = arith.constant 0 : index
    %c0_418 = arith.constant 0 : index
    %685 = vector.load %arg2[%c0_417, %c0_418] : memref<32x32xbf16, #tpu.memory_space<vmem>>, vector<32x32xbf16>
    %686 = vector.extract_strided_slice %666 {offsets = [0, 65], sizes = [32, 32], strides = [1, 1]} : vector<32x128xbf16> to vector<32x32xbf16>
    %cst_419 = arith.constant dense<0.000000e+00> : vector<32x32xf32>
    %687 = tpu.matmul %686, %685, %cst_419 {dimension_numbers = #tpu.dot_dimension_numbers<[1], [0], [0], [1], [0, 0, 1, 1], [], []>} : vector<32x32xbf16>, vector<32x32xbf16>, vector<32x32xf32> -> vector<32x32xf32>
    %688 = arith.truncf %687 : vector<32x32xf32> to vector<32x32xbf16>
    %689 = vector.extract_strided_slice %666 {offsets = [0, 95], sizes = [32, 32], strides = [1, 1]} : vector<32x128xbf16> to vector<32x32xbf16>
    %cst_420 = arith.constant dense<0.000000e+00> : vector<32x32xf32>
    %690 = tpu.matmul %689, %685, %cst_420 {dimension_numbers = #tpu.dot_dimension_numbers<[1], [0], [0], [1], [0, 0, 1, 1], [], []>} : vector<32x32xbf16>, vector<32x32xbf16>, vector<32x32xf32> -> vector<32x32xf32>
    %691 = arith.truncf %690 : vector<32x32xf32> to vector<32x32xbf16>
    %c0_421 = arith.constant 0 : index
    %c64_422 = arith.constant 64 : index
    %692 = vector.load %arg25[%c0_421, %c64_422] : memref<192x128xbf16, #tpu.memory_space<vmem>>, vector<32x32xbf16>
    tpu.vector_store %arg25[%c0_421, %c64_422], %688 {strides = array<i32>} : memref<192x128xbf16, #tpu.memory_space<vmem>>, vector<32x32xbf16>,
    %c64_423 = arith.constant 64 : index
    %c96_424 = arith.constant 96 : index
    %693 = vector.load %arg25[%c64_423, %c96_424] : memref<192x128xbf16, #tpu.memory_space<vmem>>, vector<32x32xbf16>
    tpu.vector_store %arg25[%c64_423, %c96_424], %691 {strides = array<i32>} : memref<192x128xbf16, #tpu.memory_space<vmem>>, vector<32x32xbf16>,
    %c0_425 = arith.constant 0 : index
    %c0_426 = arith.constant 0 : index
    %694 = vector.load %arg17[%c0_425, %c0_426] : memref<16x96xbf16, #tpu.memory_space<vmem>>, vector<16x96xbf16>
    %c0_427 = arith.constant 0 : index
    %c0_428 = arith.constant 0 : index
    %695 = vector.load %arg25[%c0_427, %c0_428] : memref<192x128xbf16, #tpu.memory_space<vmem>>, vector<96x128xbf16>
    %cst_429 = arith.constant dense<0.000000e+00> : vector<16x128xf32>
    %696 = tpu.matmul %694, %695, %cst_429 {dimension_numbers = #tpu.dot_dimension_numbers<[1], [0], [0], [1], [0, 0, 1, 1], [], []>} : vector<16x96xbf16>, vector<96x128xbf16>, vector<16x128xf32> -> vector<16x128xf32>
    %c0_430 = arith.constant 0 : index
    %c0_431 = arith.constant 0 : index
    %697 = vector.load %arg18[%c0_430, %c0_431] : memref<16x1xf32, #tpu.memory_space<vmem>>, vector<16x1xf32>
    %698 = vector.broadcast %697 : vector<16x1xf32> to vector<16x128xf32>
    %699 = arith.addf %696, %698 : vector<16x128xf32>
    %cst_432 = arith.constant 2.000000e+01 : f32
    %700 = vector.broadcast %cst_432 : f32 to vector<16x128xf32>
    %701 = arith.minimumf %699, %700 : vector<16x128xf32>
    %702 = math.exp %701 : vector<16x128xf32>
    %cst_433 = arith.constant 2.000000e+00 : f32
    %703 = vector.broadcast %cst_433 : f32 to vector<16x128xf32>
    %704 = arith.addf %702, %703 : vector<16x128xf32>
    %705 = arith.mulf %702, %704 : vector<16x128xf32>
    %cst_434 = arith.constant 2.000000e+00 : f32
    %706 = vector.broadcast %cst_434 : f32 to vector<16x128xf32>
    %707 = arith.addf %705, %706 : vector<16x128xf32>
    %708 = tpu.reciprocal %707 {approx = true} : vector<16x128xf32> -> vector<16x128xf32>
    %709 = arith.mulf %705, %708 : vector<16x128xf32>
    %710 = arith.mulf %699, %709 : vector<16x128xf32>
    %711 = arith.truncf %710 : vector<16x128xf32> to vector<16x128xbf16>
    %c16_435 = arith.constant 16 : index
    %c0_436 = arith.constant 0 : index
    %712 = vector.load %arg25[%c16_435, %c0_436] : memref<192x128xbf16, #tpu.memory_space<vmem>>, vector<16x128xbf16>
    tpu.vector_store %arg25[%c16_435, %c0_436], %711 {strides = array<i32>} : memref<192x128xbf16, #tpu.memory_space<vmem>>, vector<16x128xbf16>,
    %713 = vector.extract_strided_slice %711 {offsets = [0, 0], sizes = [16, 32], strides = [1, 1]} : vector<16x128xbf16> to vector<16x32xbf16>
    %c0_437 = arith.constant 0 : index
    %c32_438 = arith.constant 32 : index
    %714 = vector.load %arg25[%c0_437, %c32_438] : memref<192x128xbf16, #tpu.memory_space<vmem>>, vector<16x32xbf16>
    tpu.vector_store %arg25[%c0_437, %c32_438], %713 {strides = array<i32>} : memref<192x128xbf16, #tpu.memory_space<vmem>>, vector<16x32xbf16>,
    %715 = vector.extract_strided_slice %711 {offsets = [0, 32], sizes = [16, 32], strides = [1, 1]} : vector<16x128xbf16> to vector<16x32xbf16>
    %c32_439 = arith.constant 32 : index
    %c0_440 = arith.constant 0 : index
    %716 = vector.load %arg25[%c32_439, %c0_440] : memref<192x128xbf16, #tpu.memory_space<vmem>>, vector<16x32xbf16>
    tpu.vector_store %arg25[%c32_439, %c0_440], %715 {strides = array<i32>} : memref<192x128xbf16, #tpu.memory_space<vmem>>, vector<16x32xbf16>,
    %c0_441 = arith.constant 0 : index
    %c0_442 = arith.constant 0 : index
    %717 = vector.load %arg2[%c0_441, %c0_442] : memref<32x32xbf16, #tpu.memory_space<vmem>>, vector<32x32xbf16>
    %718 = vector.extract_strided_slice %711 {offsets = [0, 1], sizes = [16, 32], strides = [1, 1]} : vector<16x128xbf16> to vector<16x32xbf16>
    %cst_443 = arith.constant dense<0.000000e+00> : vector<16x32xf32>
    %719 = tpu.matmul %718, %717, %cst_443 {dimension_numbers = #tpu.dot_dimension_numbers<[1], [0], [0], [1], [0, 0, 1, 1], [], []>} : vector<16x32xbf16>, vector<32x32xbf16>, vector<16x32xf32> -> vector<16x32xf32>
    %720 = arith.truncf %719 : vector<16x32xf32> to vector<16x32xbf16>
    %721 = vector.extract_strided_slice %711 {offsets = [0, 31], sizes = [16, 32], strides = [1, 1]} : vector<16x128xbf16> to vector<16x32xbf16>
    %cst_444 = arith.constant dense<0.000000e+00> : vector<16x32xf32>
    %722 = tpu.matmul %721, %717, %cst_444 {dimension_numbers = #tpu.dot_dimension_numbers<[1], [0], [0], [1], [0, 0, 1, 1], [], []>} : vector<16x32xbf16>, vector<32x32xbf16>, vector<16x32xf32> -> vector<16x32xf32>
    %723 = arith.truncf %722 : vector<16x32xf32> to vector<16x32xbf16>
    %c0_445 = arith.constant 0 : index
    %c0_446 = arith.constant 0 : index
    %724 = vector.load %arg25[%c0_445, %c0_446] : memref<192x128xbf16, #tpu.memory_space<vmem>>, vector<16x32xbf16>
    tpu.vector_store %arg25[%c0_445, %c0_446], %720 {strides = array<i32>} : memref<192x128xbf16, #tpu.memory_space<vmem>>, vector<16x32xbf16>,
    %c32_447 = arith.constant 32 : index
    %c32_448 = arith.constant 32 : index
    %725 = vector.load %arg25[%c32_447, %c32_448] : memref<192x128xbf16, #tpu.memory_space<vmem>>, vector<16x32xbf16>
    tpu.vector_store %arg25[%c32_447, %c32_448], %723 {strides = array<i32>} : memref<192x128xbf16, #tpu.memory_space<vmem>>, vector<16x32xbf16>,
    %726 = vector.extract_strided_slice %711 {offsets = [0, 64], sizes = [16, 32], strides = [1, 1]} : vector<16x128xbf16> to vector<16x32xbf16>
    %c0_449 = arith.constant 0 : index
    %c96_450 = arith.constant 96 : index
    %727 = vector.load %arg25[%c0_449, %c96_450] : memref<192x128xbf16, #tpu.memory_space<vmem>>, vector<16x32xbf16>
    tpu.vector_store %arg25[%c0_449, %c96_450], %726 {strides = array<i32>} : memref<192x128xbf16, #tpu.memory_space<vmem>>, vector<16x32xbf16>,
    %728 = vector.extract_strided_slice %711 {offsets = [0, 96], sizes = [16, 32], strides = [1, 1]} : vector<16x128xbf16> to vector<16x32xbf16>
    %c32_451 = arith.constant 32 : index
    %c64_452 = arith.constant 64 : index
    %729 = vector.load %arg25[%c32_451, %c64_452] : memref<192x128xbf16, #tpu.memory_space<vmem>>, vector<16x32xbf16>
    tpu.vector_store %arg25[%c32_451, %c64_452], %728 {strides = array<i32>} : memref<192x128xbf16, #tpu.memory_space<vmem>>, vector<16x32xbf16>,
    %c0_453 = arith.constant 0 : index
    %c0_454 = arith.constant 0 : index
    %730 = vector.load %arg2[%c0_453, %c0_454] : memref<32x32xbf16, #tpu.memory_space<vmem>>, vector<32x32xbf16>
    %731 = vector.extract_strided_slice %711 {offsets = [0, 65], sizes = [16, 32], strides = [1, 1]} : vector<16x128xbf16> to vector<16x32xbf16>
    %cst_455 = arith.constant dense<0.000000e+00> : vector<16x32xf32>
    %732 = tpu.matmul %731, %730, %cst_455 {dimension_numbers = #tpu.dot_dimension_numbers<[1], [0], [0], [1], [0, 0, 1, 1], [], []>} : vector<16x32xbf16>, vector<32x32xbf16>, vector<16x32xf32> -> vector<16x32xf32>
    %733 = arith.truncf %732 : vector<16x32xf32> to vector<16x32xbf16>
    %734 = vector.extract_strided_slice %711 {offsets = [0, 95], sizes = [16, 32], strides = [1, 1]} : vector<16x128xbf16> to vector<16x32xbf16>
    %cst_456 = arith.constant dense<0.000000e+00> : vector<16x32xf32>
    %735 = tpu.matmul %734, %730, %cst_456 {dimension_numbers = #tpu.dot_dimension_numbers<[1], [0], [0], [1], [0, 0, 1, 1], [], []>} : vector<16x32xbf16>, vector<32x32xbf16>, vector<16x32xf32> -> vector<16x32xf32>
    %736 = arith.truncf %735 : vector<16x32xf32> to vector<16x32xbf16>
    %c0_457 = arith.constant 0 : index
    %c64_458 = arith.constant 64 : index
    %737 = vector.load %arg25[%c0_457, %c64_458] : memref<192x128xbf16, #tpu.memory_space<vmem>>, vector<16x32xbf16>
    tpu.vector_store %arg25[%c0_457, %c64_458], %733 {strides = array<i32>} : memref<192x128xbf16, #tpu.memory_space<vmem>>, vector<16x32xbf16>,
    %c32_459 = arith.constant 32 : index
    %c96_460 = arith.constant 96 : index
    %738 = vector.load %arg25[%c32_459, %c96_460] : memref<192x128xbf16, #tpu.memory_space<vmem>>, vector<16x32xbf16>
    tpu.vector_store %arg25[%c32_459, %c96_460], %736 {strides = array<i32>} : memref<192x128xbf16, #tpu.memory_space<vmem>>, vector<16x32xbf16>,
    %c0_461 = arith.constant 0 : index
    %c0_462 = arith.constant 0 : index
    %739 = vector.load %arg19[%c0_461, %c0_462] : memref<16x48xbf16, #tpu.memory_space<vmem>>, vector<16x48xbf16>
    %c0_463 = arith.constant 0 : index
    %c0_464 = arith.constant 0 : index
    %740 = vector.load %arg25[%c0_463, %c0_464] : memref<192x128xbf16, #tpu.memory_space<vmem>>, vector<48x128xbf16>
    %cst_465 = arith.constant dense<0.000000e+00> : vector<16x128xf32>
    %741 = tpu.matmul %739, %740, %cst_465 {dimension_numbers = #tpu.dot_dimension_numbers<[1], [0], [0], [1], [0, 0, 1, 1], [], []>} : vector<16x48xbf16>, vector<48x128xbf16>, vector<16x128xf32> -> vector<16x128xf32>
    %c0_466 = arith.constant 0 : index
    %c0_467 = arith.constant 0 : index
    %742 = vector.load %arg20[%c0_466, %c0_467] : memref<16x1xf32, #tpu.memory_space<vmem>>, vector<16x1xf32>
    %743 = vector.broadcast %742 : vector<16x1xf32> to vector<16x128xf32>
    %744 = arith.addf %741, %743 : vector<16x128xf32>
    %cst_468 = arith.constant 2.000000e+01 : f32
    %745 = vector.broadcast %cst_468 : f32 to vector<16x128xf32>
    %746 = arith.minimumf %744, %745 : vector<16x128xf32>
    %747 = math.exp %746 : vector<16x128xf32>
    %cst_469 = arith.constant 2.000000e+00 : f32
    %748 = vector.broadcast %cst_469 : f32 to vector<16x128xf32>
    %749 = arith.addf %747, %748 : vector<16x128xf32>
    %750 = arith.mulf %747, %749 : vector<16x128xf32>
    %cst_470 = arith.constant 2.000000e+00 : f32
    %751 = vector.broadcast %cst_470 : f32 to vector<16x128xf32>
    %752 = arith.addf %750, %751 : vector<16x128xf32>
    %753 = tpu.reciprocal %752 {approx = true} : vector<16x128xf32> -> vector<16x128xf32>
    %754 = arith.mulf %750, %753 : vector<16x128xf32>
    %755 = arith.mulf %744, %754 : vector<16x128xf32>
    %c0_471 = arith.constant 0 : index
    %c0_472 = arith.constant 0 : index
    %756 = vector.load %arg21[%c0_471, %c0_472] : memref<16x32xbf16, #tpu.memory_space<vmem>>, vector<16x32xbf16>
    %cst_473 = arith.constant dense<0.000000e+00> : vector<16x128xf32>
    %757 = tpu.matmul %756, %666, %cst_473 {dimension_numbers = #tpu.dot_dimension_numbers<[1], [0], [0], [1], [0, 0, 1, 1], [], []>} : vector<16x32xbf16>, vector<32x128xbf16>, vector<16x128xf32> -> vector<16x128xf32>
    %758 = arith.addf %755, %757 : vector<16x128xf32>
    %c0_474 = arith.constant 0 : index
    %c0_475 = arith.constant 0 : index
    %759 = vector.load %arg22[%c0_474, %c0_475] : memref<11x16xbf16, #tpu.memory_space<vmem>>, vector<11x16xbf16>
    %760 = arith.truncf %758 : vector<16x128xf32> to vector<16x128xbf16>
    %cst_476 = arith.constant dense<0.000000e+00> : vector<11x128xf32>
    %761 = tpu.matmul %759, %760, %cst_476 {dimension_numbers = #tpu.dot_dimension_numbers<[1], [0], [0], [1], [0, 0, 1, 1], [], []>} : vector<11x16xbf16>, vector<16x128xbf16>, vector<11x128xf32> -> vector<11x128xf32>
    %c0_477 = arith.constant 0 : index
    %c0_478 = arith.constant 0 : index
    %762 = vector.load %arg23[%c0_477, %c0_478] : memref<11x1xf32, #tpu.memory_space<vmem>>, vector<11x1xf32>
    %763 = vector.broadcast %762 : vector<11x1xf32> to vector<11x128xf32>
    %764 = arith.addf %761, %763 : vector<11x128xf32>
    %c0_479 = arith.constant 0 : index
    %c0_480 = arith.constant 0 : index
    %c0_481 = arith.constant 0 : index
    %765 = vector.load %arg24[%c0_479, %c0_480, %c0_481] : memref<1x11x128xf32, #tpu.memory_space<vmem>>, vector<1x11x128xf32>
    %766 = vector.shape_cast %765 : vector<1x11x128xf32> to vector<11x128xf32>
    %767 = vector.shape_cast %764 : vector<11x128xf32> to vector<1x11x128xf32>
    tpu.vector_store %arg24[%c0_479, %c0_480, %c0_481], %767 {strides = array<i32>} : memref<1x11x128xf32, #tpu.memory_space<vmem>>, vector<1x11x128xf32>,
    return
  }
  func.func @transform_0(%arg0: i32) -> (i32, i32, i32) {
    %c0_i32 = arith.constant 0 : i32
    %c0_i32_0 = arith.constant 0 : i32
    %c0_i32_1 = arith.constant 0 : i32
    return %arg0, %c0_i32, %c0_i32_0 : i32, i32, i32
  }
  func.func @transform_1(%arg0: i32) -> (i32, i32) {
    %c0_i32 = arith.constant 0 : i32
    %c0_i32_0 = arith.constant 0 : i32
    %c0_i32_1 = arith.constant 0 : i32
    return %c0_i32, %c0_i32_0 : i32, i32
  }
  func.func @transform_2(%arg0: i32) -> (i32, i32) {
    %c0_i32 = arith.constant 0 : i32
    %c0_i32_0 = arith.constant 0 : i32
    %c0_i32_1 = arith.constant 0 : i32
    return %c0_i32, %c0_i32_0 : i32, i32
  }
  func.func @transform_3(%arg0: i32) -> (i32, i32) {
    %c0_i32 = arith.constant 0 : i32
    %c0_i32_0 = arith.constant 0 : i32
    %c0_i32_1 = arith.constant 0 : i32
    return %c0_i32, %c0_i32_0 : i32, i32
  }
  func.func @transform_4(%arg0: i32) -> (i32, i32) {
    %c0_i32 = arith.constant 0 : i32
    %c0_i32_0 = arith.constant 0 : i32
    %c0_i32_1 = arith.constant 0 : i32
    return %c0_i32, %c0_i32_0 : i32, i32
  }
  func.func @transform_5(%arg0: i32) -> (i32, i32) {
    %c0_i32 = arith.constant 0 : i32
    %c0_i32_0 = arith.constant 0 : i32
    %c0_i32_1 = arith.constant 0 : i32
    return %c0_i32, %c0_i32_0 : i32, i32
  }
  func.func @transform_6(%arg0: i32) -> (i32, i32) {
    %c0_i32 = arith.constant 0 : i32
    %c0_i32_0 = arith.constant 0 : i32
    %c0_i32_1 = arith.constant 0 : i32
    return %c0_i32, %c0_i32_0 : i32, i32
  }
  func.func @transform_7(%arg0: i32) -> (i32, i32) {
    %c0_i32 = arith.constant 0 : i32
    %c0_i32_0 = arith.constant 0 : i32
    %c0_i32_1 = arith.constant 0 : i32
    return %c0_i32, %c0_i32_0 : i32, i32
  }
  func.func @transform_8(%arg0: i32) -> (i32, i32) {
    %c0_i32 = arith.constant 0 : i32
    %c0_i32_0 = arith.constant 0 : i32
    %c0_i32_1 = arith.constant 0 : i32
    return %c0_i32, %c0_i32_0 : i32, i32
  }
  func.func @transform_9(%arg0: i32) -> (i32, i32) {
    %c0_i32 = arith.constant 0 : i32
    %c0_i32_0 = arith.constant 0 : i32
    %c0_i32_1 = arith.constant 0 : i32
    return %c0_i32, %c0_i32_0 : i32, i32
  }
  func.func @transform_10(%arg0: i32) -> (i32, i32) {
    %c0_i32 = arith.constant 0 : i32
    %c0_i32_0 = arith.constant 0 : i32
    %c0_i32_1 = arith.constant 0 : i32
    return %c0_i32, %c0_i32_0 : i32, i32
  }
  func.func @transform_11(%arg0: i32) -> (i32, i32) {
    %c0_i32 = arith.constant 0 : i32
    %c0_i32_0 = arith.constant 0 : i32
    %c0_i32_1 = arith.constant 0 : i32
    return %c0_i32, %c0_i32_0 : i32, i32
  }
  func.func @transform_12(%arg0: i32) -> (i32, i32) {
    %c0_i32 = arith.constant 0 : i32
    %c0_i32_0 = arith.constant 0 : i32
    %c0_i32_1 = arith.constant 0 : i32
    return %c0_i32, %c0_i32_0 : i32, i32
  }
  func.func @transform_13(%arg0: i32) -> (i32, i32) {
    %c0_i32 = arith.constant 0 : i32
    %c0_i32_0 = arith.constant 0 : i32
    %c0_i32_1 = arith.constant 0 : i32
    return %c0_i32, %c0_i32_0 : i32, i32
  }
  func.func @transform_14(%arg0: i32) -> (i32, i32) {
    %c0_i32 = arith.constant 0 : i32
    %c0_i32_0 = arith.constant 0 : i32
    %c0_i32_1 = arith.constant 0 : i32
    return %c0_i32, %c0_i32_0 : i32, i32
  }
  func.func @transform_15(%arg0: i32) -> (i32, i32) {
    %c0_i32 = arith.constant 0 : i32
    %c0_i32_0 = arith.constant 0 : i32
    %c0_i32_1 = arith.constant 0 : i32
    return %c0_i32, %c0_i32_0 : i32, i32
  }
  func.func @transform_16(%arg0: i32) -> (i32, i32) {
    %c0_i32 = arith.constant 0 : i32
    %c0_i32_0 = arith.constant 0 : i32
    %c0_i32_1 = arith.constant 0 : i32
    return %c0_i32, %c0_i32_0 : i32, i32
  }
  func.func @transform_17(%arg0: i32) -> (i32, i32) {
    %c0_i32 = arith.constant 0 : i32
    %c0_i32_0 = arith.constant 0 : i32
    %c0_i32_1 = arith.constant 0 : i32
    return %c0_i32, %c0_i32_0 : i32, i32
  }
  func.func @transform_18(%arg0: i32) -> (i32, i32) {
    %c0_i32 = arith.constant 0 : i32
    %c0_i32_0 = arith.constant 0 : i32
    %c0_i32_1 = arith.constant 0 : i32
    return %c0_i32, %c0_i32_0 : i32, i32
  }
  func.func @transform_19(%arg0: i32) -> (i32, i32) {
    %c0_i32 = arith.constant 0 : i32
    %c0_i32_0 = arith.constant 0 : i32
    %c0_i32_1 = arith.constant 0 : i32
    return %c0_i32, %c0_i32_0 : i32, i32
  }
  func.func @transform_20(%arg0: i32) -> (i32, i32) {
    %c0_i32 = arith.constant 0 : i32
    %c0_i32_0 = arith.constant 0 : i32
    %c0_i32_1 = arith.constant 0 : i32
    return %c0_i32, %c0_i32_0 : i32, i32
  }
  func.func @transform_21(%arg0: i32) -> (i32, i32) {
    %c0_i32 = arith.constant 0 : i32
    %c0_i32_0 = arith.constant 0 : i32
    %c0_i32_1 = arith.constant 0 : i32
    return %c0_i32, %c0_i32_0 : i32, i32
  }
  func.func @transform_22(%arg0: i32) -> (i32, i32) {
    %c0_i32 = arith.constant 0 : i32
    %c0_i32_0 = arith.constant 0 : i32
    %c0_i32_1 = arith.constant 0 : i32
    return %c0_i32, %c0_i32_0 : i32, i32
  }
  func.func @transform_23(%arg0: i32) -> (i32, i32, i32) {
    %c0_i32 = arith.constant 0 : i32
    %c0_i32_0 = arith.constant 0 : i32
    %c0_i32_1 = arith.constant 0 : i32
    return %arg0, %c0_i32, %c0_i32_0 : i32, i32, i32
  }
}

</mosaic_0001>

<llo_original>
// kernel: generator_tcn_forward.1
$region0: #{generator_tcn_forward.1}
  #allocation0 [shape = 'u32[]', space=smem, size = 0x4, offset = 0x4, fixed_abs, tag = 'smem constant byte address 0x4 - core index']
  #allocation1 [shape = 'u32[72,128]{1,0:T(1,128)}', space=vmem, size = 0x9000, scoped, tag = 'internal scratch']
  #allocation2 [shape = 'bf16[192,128]{1,0:T(8,128)(2,1)}', space=vmem, size = 0xc000, scoped, tag = 'scratch operand']
  %s0 = inlined_call_operand.vmem [shape: f32[2,16,128], index: 0, kind: input, shape index: {}]
  %s1 = inlined_call_operand.vmem [shape: bf16[32,32], index: 1, kind: input, shape index: {}]
  %s2 = inlined_call_operand.vmem [shape: bf16[64,48], index: 2, kind: input, shape index: {}]
  %s3 = inlined_call_operand.vmem [shape: f32[64,1], index: 3, kind: input, shape index: {}]
  %s4 = inlined_call_operand.vmem [shape: bf16[64,192], index: 4, kind: input, shape index: {}]
  %s5 = inlined_call_operand.vmem [shape: f32[64,1], index: 5, kind: input, shape index: {}]
  %s6 = inlined_call_operand.vmem [shape: bf16[64,16], index: 6, kind: input, shape index: {}]
  %s7 = inlined_call_operand.vmem [shape: bf16[64,192], index: 7, kind: input, shape index: {}]
  %s8 = inlined_call_operand.vmem [shape: bf16[64,192], index: 8, kind: input, shape index: {}]
  %s9 = inlined_call_operand.vmem [shape: bf16[64,192], index: 9, kind: input, shape index: {}]
  %s10 = inlined_call_operand.vmem [shape: bf16[64,192], index: 10, kind: input, shape index: {}]
  %s11 = inlined_call_operand.vmem [shape: bf16[64,192], index: 11, kind: input, shape index: {}]
  %s12 = inlined_call_operand.vmem [shape: bf16[64,192], index: 12, kind: input, shape index: {}]
  %s13 = inlined_call_operand.vmem [shape: bf16[32,192], index: 13, kind: input, shape index: {}]
  %s14 = inlined_call_operand.vmem [shape: bf16[32,96], index: 14, kind: input, shape index: {}]
  %s15 = inlined_call_operand.vmem [shape: bf16[32,64], index: 15, kind: input, shape index: {}]
  %s16 = inlined_call_operand.vmem [shape: bf16[16,96], index: 16, kind: input, shape index: {}]
  %s17 = inlined_call_operand.vmem [shape: f32[16,1], index: 17, kind: input, shape index: {}]
  %s18 = inlined_call_operand.vmem [shape: bf16[16,48], index: 18, kind: input, shape index: {}]
  %s19 = inlined_call_operand.vmem [shape: f32[16,1], index: 19, kind: input, shape index: {}]
  %s20 = inlined_call_operand.vmem [shape: bf16[16,32], index: 20, kind: input, shape index: {}]
  %s21 = inlined_call_operand.vmem [shape: bf16[11,16], index: 21, kind: input, shape index: {}]
  %s22 = inlined_call_operand.vmem [shape: f32[11,1], index: 22, kind: input, shape index: {}]
  %s23 = inlined_call_operand.vmem [shape: f32[2,11,128], index: 23, kind: output, shape index: {}]
  %s24 = sld [smem:[#allocation0]]
  $region125: #{generator_tcn_forward.1} parent=0
    _
  %s26 = ssub.s32 1, %s24
  %s27 = scalar_select 0, %s26, %s24
  loop: start=0, step=1, limit=4
  $region2: #{generator_tcn_forward.1} parent=0 // loop_pre_header
    _
  $region3: #{generator_tcn_forward.1} parent=0 // loop_header
    %s29 = sphi 0, %s33
    %p30 = scmp.ge.s32.totalorder %s29, 4
    %s39 = sphi 0, %s41
    %s42 = sphi 0, %s39
    %s43 = sphi 0, %s42
    %s59 = sphi 0, %s43
    %s63 = sphi 0, %s63
    %s65 = sphi 0, %s63
    %s66 = sphi 0, %s65
    %s80 = sphi 0, %s66
    %s84 = sphi 0, %s84
    %s86 = sphi 0, %s84
    %s87 = sphi 0, %s86
    %s101 = sphi 0, %s87
    %s105 = sphi 0, %s105
    %s107 = sphi 0, %s105
    %s108 = sphi 0, %s107
    %s122 = sphi 0, %s108
    %s126 = sphi 0, %s126
    %s128 = sphi 0, %s126
    %s129 = sphi 0, %s128
    %s143 = sphi 0, %s129
    %s147 = sphi 0, %s147
    %s149 = sphi 0, %s147
    %s150 = sphi 0, %s149
    %s164 = sphi 0, %s150
    %s168 = sphi 0, %s168
    %s170 = sphi 0, %s168
    %s171 = sphi 0, %s170
    %s185 = sphi 0, %s171
    %s189 = sphi 0, %s189
    %s191 = sphi 0, %s189
    %s192 = sphi 0, %s191
    %s206 = sphi 0, %s192
    %s210 = sphi 0, %s210
    %s212 = sphi 0, %s210
    %s213 = sphi 0, %s212
    %s227 = sphi 0, %s213
    %s231 = sphi 0, %s231
    %s233 = sphi 0, %s231
    %s234 = sphi 0, %s233
    %s248 = sphi 0, %s234
    %s252 = sphi 0, %s252
    %s254 = sphi 0, %s252
    %s255 = sphi 0, %s254
    %s269 = sphi 0, %s255
    %s273 = sphi 0, %s273
    %s275 = sphi 0, %s273
    %s276 = sphi 0, %s275
    %s290 = sphi 0, %s276
    %s294 = sphi 0, %s294
    %s296 = sphi 0, %s294
    %s297 = sphi 0, %s296
    %s311 = sphi 0, %s297
    %s315 = sphi 0, %s315
    %s317 = sphi 0, %s315
    %s318 = sphi 0, %s317
    %s332 = sphi 0, %s318
    %s336 = sphi 0, %s336
    %s338 = sphi 0, %s336
    %s339 = sphi 0, %s338
    %s353 = sphi 0, %s339
    %s357 = sphi 0, %s357
    %s359 = sphi 0, %s357
    %s360 = sphi 0, %s359
    %s374 = sphi 0, %s360
    %s378 = sphi 0, %s378
    %s380 = sphi 0, %s378
    %s381 = sphi 0, %s380
    %s395 = sphi 0, %s381
    %s399 = sphi 0, %s399
    %s401 = sphi 0, %s399
    %s402 = sphi 0, %s401
    %s416 = sphi 0, %s402
    %s420 = sphi 0, %s420
    %s422 = sphi 0, %s420
    %s423 = sphi 0, %s422
    %s437 = sphi 0, %s423
    %s441 = sphi 0, %s441
    %s443 = sphi 0, %s441
    %s444 = sphi 0, %s443
    %s458 = sphi 0, %s444
    %s462 = sphi 0, %s462
    %s464 = sphi 0, %s462
    %s465 = sphi 0, %s464
    %s479 = sphi 0, %s465
    %s483 = sphi 0, %s483
    %s485 = sphi 0, %s483
    %s486 = sphi 0, %s485
    %s500 = sphi 0, %s486
    %s504 = sphi 0, %s504
    %s506 = sphi 0, %s504
    %s507 = sphi 0, %s506
    %s521 = sphi 0, %s507
    %s527 = sphi 0, %s529
    %s530 = sphi 0, %s527
    %s531 = sphi 0, %s530
    %s547 = sphi 0, %s531
  $region4: #{generator_tcn_forward.1} parent=0 // loop_header_branch
    %32 = sbr.rel (%p30) target = $region8
  $region5: #{generator_tcn_forward.1} parent=0 // loop_body
    %s34 = ssub.s32 %s29, 1
    %s35 = ssub.s32 %s29, 2
    %s36 = sadd.s32 %s29, 1
    %s37 = ssub.s32 %s29, %s36
    %p38 = scmp.eq.s32.totalorder %s37, 0
    %s40 = sadd.s32 %s39, 1
    %s41 = scalar_select %p38, %s39, %s40
    %p44 = pneg %p38
    %p45 = scmp.eq.s32.totalorder %s29, 1
    %p46 = por %p44, %p45
    %p47 = scmp.ne.s32.totalorder %s39, %s42
    %p48 = scmp.eq.s32.totalorder %s29, 0
    %p49 = por %p47, %p48
    %p50 = scmp.ne.s32.totalorder %s39, %s42
    %p51 = scmp.eq.s32.totalorder %s34, 1
    %p52 = por %p50, %p51
    %p53 = scmp.ne.s32.totalorder %s42, %s43
    %p54 = scmp.eq.s32.totalorder %s34, 0
    %p55 = por %p53, %p54
    %p56 = scmp.ne.s32.totalorder %s42, %s43
    %p57 = scmp.eq.s32.totalorder %s35, 1
    %p58 = por %p56, %p57
    %p60 = scmp.ne.s32.totalorder %s43, %s59
    %p61 = scmp.eq.s32.totalorder %s35, 0
    %p62 = por %p60, %p61
    %s64 = sadd.s32 %s63, 1
    %p67 = scmp.eq.s32.totalorder %s29, 1
    %p68 = scmp.ne.s32.totalorder %s63, %s65
    %p69 = scmp.eq.s32.totalorder %s29, 0
    %p70 = por %p68, %p69
    %p71 = scmp.ne.s32.totalorder %s63, %s65
    %p72 = scmp.eq.s32.totalorder %s34, 1
    %p73 = por %p71, %p72
    %p74 = scmp.ne.s32.totalorder %s65, %s66
    %p75 = scmp.eq.s32.totalorder %s34, 0
    %p76 = por %p74, %p75
    %p77 = scmp.ne.s32.totalorder %s65, %s66
    %p78 = scmp.eq.s32.totalorder %s35, 1
    %p79 = por %p77, %p78
    %p81 = scmp.ne.s32.totalorder %s66, %s80
    %p82 = scmp.eq.s32.totalorder %s35, 0
    %p83 = por %p81, %p82
    %s85 = sadd.s32 %s84, 1
    %p88 = scmp.eq.s32.totalorder %s29, 1
    %p89 = scmp.ne.s32.totalorder %s84, %s86
    %p90 = scmp.eq.s32.totalorder %s29, 0
    %p91 = por %p89, %p90
    %p92 = scmp.ne.s32.totalorder %s84, %s86
    %p93 = scmp.eq.s32.totalorder %s34, 1
    %p94 = por %p92, %p93
    %p95 = scmp.ne.s32.totalorder %s86, %s87
    %p96 = scmp.eq.s32.totalorder %s34, 0
    %p97 = por %p95, %p96
    %p98 = scmp.ne.s32.totalorder %s86, %s87
    %p99 = scmp.eq.s32.totalorder %s35, 1
    %p100 = por %p98, %p99
    %p102 = scmp.ne.s32.totalorder %s87, %s101
    %p103 = scmp.eq.s32.totalorder %s35, 0
    %p104 = por %p102, %p103
    %s106 = sadd.s32 %s105, 1
    %p109 = scmp.eq.s32.totalorder %s29, 1
    %p110 = scmp.ne.s32.totalorder %s105, %s107
    %p111 = scmp.eq.s32.totalorder %s29, 0
    %p112 = por %p110, %p111
    %p113 = scmp.ne.s32.totalorder %s105, %s107
    %p114 = scmp.eq.s32.totalorder %s34, 1
    %p115 = por %p113, %p114
    %p116 = scmp.ne.s32.totalorder %s107, %s108
    %p117 = scmp.eq.s32.totalorder %s34, 0
    %p118 = por %p116, %p117
    %p119 = scmp.ne.s32.totalorder %s107, %s108
    %p120 = scmp.eq.s32.totalorder %s35, 1
    %p121 = por %p119, %p120
    %p123 = scmp.ne.s32.totalorder %s108, %s122
    %p124 = scmp.eq.s32.totalorder %s35, 0
    %p125 = por %p123, %p124
    %s127 = sadd.s32 %s126, 1
    %p130 = scmp.eq.s32.totalorder %s29, 1
    %p131 = scmp.ne.s32.totalorder %s126, %s128
    %p132 = scmp.eq.s32.totalorder %s29, 0
    %p133 = por %p131, %p132
    %p134 = scmp.ne.s32.totalorder %s126, %s128
    %p135 = scmp.eq.s32.totalorder %s34, 1
    %p136 = por %p134, %p135
    %p137 = scmp.ne.s32.totalorder %s128, %s129
    %p138 = scmp.eq.s32.totalorder %s34, 0
    %p139 = por %p137, %p138
    %p140 = scmp.ne.s32.totalorder %s128, %s129
    %p141 = scmp.eq.s32.totalorder %s35, 1
    %p142 = por %p140, %p141
    %p144 = scmp.ne.s32.totalorder %s129, %s143
    %p145 = scmp.eq.s32.totalorder %s35, 0
    %p146 = por %p144, %p145
    %s148 = sadd.s32 %s147, 1
    %p151 = scmp.eq.s32.totalorder %s29, 1
    %p152 = scmp.ne.s32.totalorder %s147, %s149
    %p153 = scmp.eq.s32.totalorder %s29, 0
    %p154 = por %p152, %p153
    %p155 = scmp.ne.s32.totalorder %s147, %s149
    %p156 = scmp.eq.s32.totalorder %s34, 1
    %p157 = por %p155, %p156
    %p158 = scmp.ne.s32.totalorder %s149, %s150
    %p159 = scmp.eq.s32.totalorder %s34, 0
    %p160 = por %p158, %p159
    %p161 = scmp.ne.s32.totalorder %s149, %s150
    %p162 = scmp.eq.s32.totalorder %s35, 1
    %p163 = por %p161, %p162
    %p165 = scmp.ne.s32.totalorder %s150, %s164
    %p166 = scmp.eq.s32.totalorder %s35, 0
    %p167 = por %p165, %p166
    %s169 = sadd.s32 %s168, 1
    %p172 = scmp.eq.s32.totalorder %s29, 1
    %p173 = scmp.ne.s32.totalorder %s168, %s170
    %p174 = scmp.eq.s32.totalorder %s29, 0
    %p175 = por %p173, %p174
    %p176 = scmp.ne.s32.totalorder %s168, %s170
    %p177 = scmp.eq.s32.totalorder %s34, 1
    %p178 = por %p176, %p177
    %p179 = scmp.ne.s32.totalorder %s170, %s171
    %p180 = scmp.eq.s32.totalorder %s34, 0
    %p181 = por %p179, %p180
    %p182 = scmp.ne.s32.totalorder %s170, %s171
    %p183 = scmp.eq.s32.totalorder %s35, 1
    %p184 = por %p182, %p183
    %p186 = scmp.ne.s32.totalorder %s171, %s185
    %p187 = scmp.eq.s32.totalorder %s35, 0
    %p188 = por %p186, %p187
    %s190 = sadd.s32 %s189, 1
    %p193 = scmp.eq.s32.totalorder %s29, 1
    %p194 = scmp.ne.s32.totalorder %s189, %s191
    %p195 = scmp.eq.s32.totalorder %s29, 0
    %p196 = por %p194, %p195
    %p197 = scmp.ne.s32.totalorder %s189, %s191
    %p198 = scmp.eq.s32.totalorder %s34, 1
    %p199 = por %p197, %p198
    %p200 = scmp.ne.s32.totalorder %s191, %s192
    %p201 = scmp.eq.s32.totalorder %s34, 0
    %p202 = por %p200, %p201
    %p203 = scmp.ne.s32.totalorder %s191, %s192
    %p204 = scmp.eq.s32.totalorder %s35, 1
    %p205 = por %p203, %p204
    %p207 = scmp.ne.s32.totalorder %s192, %s206
    %p208 = scmp.eq.s32.totalorder %s35, 0
    %p209 = por %p207, %p208
    %s211 = sadd.s32 %s210, 1
    %p214 = scmp.eq.s32.totalorder %s29, 1
    %p215 = scmp.ne.s32.totalorder %s210, %s212
    %p216 = scmp.eq.s32.totalorder %s29, 0
    %p217 = por %p215, %p216
    %p218 = scmp.ne.s32.totalorder %s210, %s212
    %p219 = scmp.eq.s32.totalorder %s34, 1
    %p220 = por %p218, %p219
    %p221 = scmp.ne.s32.totalorder %s212, %s213
    %p222 = scmp.eq.s32.totalorder %s34, 0
    %p223 = por %p221, %p222
    %p224 = scmp.ne.s32.totalorder %s212, %s213
    %p225 = scmp.eq.s32.totalorder %s35, 1
    %p226 = por %p224, %p225
    %p228 = scmp.ne.s32.totalorder %s213, %s227
    %p229 = scmp.eq.s32.totalorder %s35, 0
    %p230 = por %p228, %p229
    %s232 = sadd.s32 %s231, 1
    %p235 = scmp.eq.s32.totalorder %s29, 1
    %p236 = scmp.ne.s32.totalorder %s231, %s233
    %p237 = scmp.eq.s32.totalorder %s29, 0
    %p238 = por %p236, %p237
    %p239 = scmp.ne.s32.totalorder %s231, %s233
    %p240 = scmp.eq.s32.totalorder %s34, 1
    %p241 = por %p239, %p240
    %p242 = scmp.ne.s32.totalorder %s233, %s234
    %p243 = scmp.eq.s32.totalorder %s34, 0
    %p244 = por %p242, %p243
    %p245 = scmp.ne.s32.totalorder %s233, %s234
    %p246 = scmp.eq.s32.totalorder %s35, 1
    %p247 = por %p245, %p246
    %p249 = scmp.ne.s32.totalorder %s234, %s248
    %p250 = scmp.eq.s32.totalorder %s35, 0
    %p251 = por %p249, %p250
    %s253 = sadd.s32 %s252, 1
    %p256 = scmp.eq.s32.totalorder %s29, 1
    %p257 = scmp.ne.s32.totalorder %s252, %s254
    %p258 = scmp.eq.s32.totalorder %s29, 0
    %p259 = por %p257, %p258
    %p260 = scmp.ne.s32.totalorder %s252, %s254
    %p261 = scmp.eq.s32.totalorder %s34, 1
    %p262 = por %p260, %p261
    %p263 = scmp.ne.s32.totalorder %s254, %s255
    %p264 = scmp.eq.s32.totalorder %s34, 0
    %p265 = por %p263, %p264
    %p266 = scmp.ne.s32.totalorder %s254, %s255
    %p267 = scmp.eq.s32.totalorder %s35, 1
    %p268 = por %p266, %p267
    %p270 = scmp.ne.s32.totalorder %s255, %s269
    %p271 = scmp.eq.s32.totalorder %s35, 0
    %p272 = por %p270, %p271
    %s274 = sadd.s32 %s273, 1
    %p277 = scmp.eq.s32.totalorder %s29, 1
    %p278 = scmp.ne.s32.totalorder %s273, %s275
    %p279 = scmp.eq.s32.totalorder %s29, 0
    %p280 = por %p278, %p279
    %p281 = scmp.ne.s32.totalorder %s273, %s275
    %p282 = scmp.eq.s32.totalorder %s34, 1
    %p283 = por %p281, %p282
    %p284 = scmp.ne.s32.totalorder %s275, %s276
    %p285 = scmp.eq.s32.totalorder %s34, 0
    %p286 = por %p284, %p285
    %p287 = scmp.ne.s32.totalorder %s275, %s276
    %p288 = scmp.eq.s32.totalorder %s35, 1
    %p289 = por %p287, %p288
    %p291 = scmp.ne.s32.totalorder %s276, %s290
    %p292 = scmp.eq.s32.totalorder %s35, 0
    %p293 = por %p291, %p292
    %s295 = sadd.s32 %s294, 1
    %p298 = scmp.eq.s32.totalorder %s29, 1
    %p299 = scmp.ne.s32.totalorder %s294, %s296
    %p300 = scmp.eq.s32.totalorder %s29, 0
    %p301 = por %p299, %p300
    %p302 = scmp.ne.s32.totalorder %s294, %s296
    %p303 = scmp.eq.s32.totalorder %s34, 1
    %p304 = por %p302, %p303
    %p305 = scmp.ne.s32.totalorder %s296, %s297
    %p306 = scmp.eq.s32.totalorder %s34, 0
    %p307 = por %p305, %p306
    %p308 = scmp.ne.s32.totalorder %s296, %s297
    %p309 = scmp.eq.s32.totalorder %s35, 1
    %p310 = por %p308, %p309
    %p312 = scmp.ne.s32.totalorder %s297, %s311
    %p313 = scmp.eq.s32.totalorder %s35, 0
    %p314 = por %p312, %p313
    %s316 = sadd.s32 %s315, 1
    %p319 = scmp.eq.s32.totalorder %s29, 1
    %p320 = scmp.ne.s32.totalorder %s315, %s317
    %p321 = scmp.eq.s32.totalorder %s29, 0
    %p322 = por %p320, %p321
    %p323 = scmp.ne.s32.totalorder %s315, %s317
    %p324 = scmp.eq.s32.totalorder %s34, 1
    %p325 = por %p323, %p324
    %p326 = scmp.ne.s32.totalorder %s317, %s318
    %p327 = scmp.eq.s32.totalorder %s34, 0
    %p328 = por %p326, %p327
    %p329 = scmp.ne.s32.totalorder %s317, %s318
    %p330 = scmp.eq.s32.totalorder %s35, 1
    %p331 = por %p329, %p330
    %p333 = scmp.ne.s32.totalorder %s318, %s332
    %p334 = scmp.eq.s32.totalorder %s35, 0
    %p335 = por %p333, %p334
    %s337 = sadd.s32 %s336, 1
    %p340 = scmp.eq.s32.totalorder %s29, 1
    %p341 = scmp.ne.s32.totalorder %s336, %s338
    %p342 = scmp.eq.s32.totalorder %s29, 0
    %p343 = por %p341, %p342
    %p344 = scmp.ne.s32.totalorder %s336, %s338
    %p345 = scmp.eq.s32.totalorder %s34, 1
    %p346 = por %p344, %p345
    %p347 = scmp.ne.s32.totalorder %s338, %s339
    %p348 = scmp.eq.s32.totalorder %s34, 0
    %p349 = por %p347, %p348
    %p350 = scmp.ne.s32.totalorder %s338, %s339
    %p351 = scmp.eq.s32.totalorder %s35, 1
    %p352 = por %p350, %p351
    %p354 = scmp.ne.s32.totalorder %s339, %s353
    %p355 = scmp.eq.s32.totalorder %s35, 0
    %p356 = por %p354, %p355
    %s358 = sadd.s32 %s357, 1
    %p361 = scmp.eq.s32.totalorder %s29, 1
    %p362 = scmp.ne.s32.totalorder %s357, %s359
    %p363 = scmp.eq.s32.totalorder %s29, 0
    %p364 = por %p362, %p363
    %p365 = scmp.ne.s32.totalorder %s357, %s359
    %p366 = scmp.eq.s32.totalorder %s34, 1
    %p367 = por %p365, %p366
    %p368 = scmp.ne.s32.totalorder %s359, %s360
    %p369 = scmp.eq.s32.totalorder %s34, 0
    %p370 = por %p368, %p369
    %p371 = scmp.ne.s32.totalorder %s359, %s360
    %p372 = scmp.eq.s32.totalorder %s35, 1
    %p373 = por %p371, %p372
    %p375 = scmp.ne.s32.totalorder %s360, %s374
    %p376 = scmp.eq.s32.totalorder %s35, 0
    %p377 = por %p375, %p376
    %s379 = sadd.s32 %s378, 1
    %p382 = scmp.eq.s32.totalorder %s29, 1
    %p383 = scmp.ne.s32.totalorder %s378, %s380
    %p384 = scmp.eq.s32.totalorder %s29, 0
    %p385 = por %p383, %p384
    %p386 = scmp.ne.s32.totalorder %s378, %s380
    %p387 = scmp.eq.s32.totalorder %s34, 1
    %p388 = por %p386, %p387
    %p389 = scmp.ne.s32.totalorder %s380, %s381
    %p390 = scmp.eq.s32.totalorder %s34, 0
    %p391 = por %p389, %p390
    %p392 = scmp.ne.s32.totalorder %s380, %s381
    %p393 = scmp.eq.s32.totalorder %s35, 1
    %p394 = por %p392, %p393
    %p396 = scmp.ne.s32.totalorder %s381, %s395
    %p397 = scmp.eq.s32.totalorder %s35, 0
    %p398 = por %p396, %p397
    %s400 = sadd.s32 %s399, 1
    %p403 = scmp.eq.s32.totalorder %s29, 1
    %p404 = scmp.ne.s32.totalorder %s399, %s401
    %p405 = scmp.eq.s32.totalorder %s29, 0
    %p406 = por %p404, %p405
    %p407 = scmp.ne.s32.totalorder %s399, %s401
    %p408 = scmp.eq.s32.totalorder %s34, 1
    %p409 = por %p407, %p408
    %p410 = scmp.ne.s32.totalorder %s401, %s402
    %p411 = scmp.eq.s32.totalorder %s34, 0
    %p412 = por %p410, %p411
    %p413 = scmp.ne.s32.totalorder %s401, %s402
    %p414 = scmp.eq.s32.totalorder %s35, 1
    %p415 = por %p413, %p414
    %p417 = scmp.ne.s32.totalorder %s402, %s416
    %p418 = scmp.eq.s32.totalorder %s35, 0
    %p419 = por %p417, %p418
    %s421 = sadd.s32 %s420, 1
    %p424 = scmp.eq.s32.totalorder %s29, 1
    %p425 = scmp.ne.s32.totalorder %s420, %s422
    %p426 = scmp.eq.s32.totalorder %s29, 0
    %p427 = por %p425, %p426
    %p428 = scmp.ne.s32.totalorder %s420, %s422
    %p429 = scmp.eq.s32.totalorder %s34, 1
    %p430 = por %p428, %p429
    %p431 = scmp.ne.s32.totalorder %s422, %s423
    %p432 = scmp.eq.s32.totalorder %s34, 0
    %p433 = por %p431, %p432
    %p434 = scmp.ne.s32.totalorder %s422, %s423
    %p435 = scmp.eq.s32.totalorder %s35, 1
    %p436 = por %p434, %p435
    %p438 = scmp.ne.s32.totalorder %s423, %s437
    %p439 = scmp.eq.s32.totalorder %s35, 0
    %p440 = por %p438, %p439
    %s442 = sadd.s32 %s441, 1
    %p445 = scmp.eq.s32.totalorder %s29, 1
    %p446 = scmp.ne.s32.totalorder %s441, %s443
    %p447 = scmp.eq.s32.totalorder %s29, 0
    %p448 = por %p446, %p447
    %p449 = scmp.ne.s32.totalorder %s441, %s443
    %p450 = scmp.eq.s32.totalorder %s34, 1
    %p451 = por %p449, %p450
    %p452 = scmp.ne.s32.totalorder %s443, %s444
    %p453 = scmp.eq.s32.totalorder %s34, 0
    %p454 = por %p452, %p453
    %p455 = scmp.ne.s32.totalorder %s443, %s444
    %p456 = scmp.eq.s32.totalorder %s35, 1
    %p457 = por %p455, %p456
    %p459 = scmp.ne.s32.totalorder %s444, %s458
    %p460 = scmp.eq.s32.totalorder %s35, 0
    %p461 = por %p459, %p460
    %s463 = sadd.s32 %s462, 1
    %p466 = scmp.eq.s32.totalorder %s29, 1
    %p467 = scmp.ne.s32.totalorder %s462, %s464
    %p468 = scmp.eq.s32.totalorder %s29, 0
    %p469 = por %p467, %p468
    %p470 = scmp.ne.s32.totalorder %s462, %s464
    %p471 = scmp.eq.s32.totalorder %s34, 1
    %p472 = por %p470, %p471
    %p473 = scmp.ne.s32.totalorder %s464, %s465
    %p474 = scmp.eq.s32.totalorder %s34, 0
    %p475 = por %p473, %p474
    %p476 = scmp.ne.s32.totalorder %s464, %s465
    %p477 = scmp.eq.s32.totalorder %s35, 1
    %p478 = por %p476, %p477
    %p480 = scmp.ne.s32.totalorder %s465, %s479
    %p481 = scmp.eq.s32.totalorder %s35, 0
    %p482 = por %p480, %p481
    %s484 = sadd.s32 %s483, 1
    %p487 = scmp.eq.s32.totalorder %s29, 1
    %p488 = scmp.ne.s32.totalorder %s483, %s485
    %p489 = scmp.eq.s32.totalorder %s29, 0
    %p490 = por %p488, %p489
    %p491 = scmp.ne.s32.totalorder %s483, %s485
    %p492 = scmp.eq.s32.totalorder %s34, 1
    %p493 = por %p491, %p492
    %p494 = scmp.ne.s32.totalorder %s485, %s486
    %p495 = scmp.eq.s32.totalorder %s34, 0
    %p496 = por %p494, %p495
    %p497 = scmp.ne.s32.totalorder %s485, %s486
    %p498 = scmp.eq.s32.totalorder %s35, 1
    %p499 = por %p497, %p498
    %p501 = scmp.ne.s32.totalorder %s486, %s500
    %p502 = scmp.eq.s32.totalorder %s35, 0
    %p503 = por %p501, %p502
    %s505 = sadd.s32 %s504, 1
    %p508 = scmp.eq.s32.totalorder %s29, 1
    %p509 = scmp.ne.s32.totalorder %s504, %s506
    %p510 = scmp.eq.s32.totalorder %s29, 0
    %p511 = por %p509, %p510
    %p512 = scmp.ne.s32.totalorder %s504, %s506
    %p513 = scmp.eq.s32.totalorder %s34, 1
    %p514 = por %p512, %p513
    %p515 = scmp.ne.s32.totalorder %s506, %s507
    %p516 = scmp.eq.s32.totalorder %s34, 0
    %p517 = por %p515, %p516
    %p518 = scmp.ne.s32.totalorder %s506, %s507
    %p519 = scmp.eq.s32.totalorder %s35, 1
    %p520 = por %p518, %p519
    %p522 = scmp.ne.s32.totalorder %s507, %s521
    %p523 = scmp.eq.s32.totalorder %s35, 0
    %p524 = por %p522, %p523
    %s525 = ssub.s32 %s29, %s36
    %p526 = scmp.eq.s32.totalorder %s525, 0
    %s528 = sadd.s32 %s527, 1
    %s529 = scalar_select %p526, %s527, %s528
    %p532 = pneg %p526
    %p533 = scmp.eq.s32.totalorder %s29, 1
    %p534 = por %p532, %p533
    %p535 = scmp.ne.s32.totalorder %s527, %s530
    %p536 = scmp.eq.s32.totalorder %s29, 0
    %p537 = por %p535, %p536
    %p538 = scmp.ne.s32.totalorder %s527, %s530
    %p539 = scmp.eq.s32.totalorder %s34, 1
    %p540 = por %p538, %p539
    %p541 = scmp.ne.s32.totalorder %s530, %s531
    %p542 = scmp.eq.s32.totalorder %s34, 0
    %p543 = por %p541, %p542
    %p544 = scmp.ne.s32.totalorder %s530, %s531
    %p545 = scmp.eq.s32.totalorder %s35, 1
    %p546 = por %p544, %p545
    %p548 = scmp.ne.s32.totalorder %s531, %s547
    %p549 = scmp.eq.s32.totalorder %s35, 0
    %p550 = por %p548, %p549
    %p551 = scmp.le.s32.totalorder 1, %s29
    %p552 = scmp.lt.s32.totalorder %s29, 3
    %p553 = pnand %p551, %p552
    %p554 = pneg %p553
    // Predicated region
    $region9: #{generator_tcn_forward.1} parent=5 // pred_check
      _
    $region10: #{generator_tcn_forward.1} parent=5 // pred_check_branch
      %556 = sbr.rel (%p553) target = $region12
    $region11: #{generator_tcn_forward.1} parent=5 // pred_region
      %s557 = ssub.s32 %s29, 1
      // Predicated region
      $region13: #{generator_tcn_forward.1} parent=11 // pred_check
        %p558 = pneg %p76
      $region14: #{generator_tcn_forward.1} parent=11 // pred_check_branch
        %560 = sbr.rel (%p558) target = $region16
      $region15: #{generator_tcn_forward.1} parent=11 // pred_region
        _
      $region16: #{generator_tcn_forward.1} parent=11 // pred_fallthru
        _
      // Predicated region
      $region17: #{generator_tcn_forward.1} parent=11 // pred_check
        %p561 = pneg %p97
      $region18: #{generator_tcn_forward.1} parent=11 // pred_check_branch
        %563 = sbr.rel (%p561) target = $region20
      $region19: #{generator_tcn_forward.1} parent=11 // pred_region
        _
      $region20: #{generator_tcn_forward.1} parent=11 // pred_fallthru
        _
      // Predicated region
      $region21: #{generator_tcn_forward.1} parent=11 // pred_check
        %p564 = pneg %p118
      $region22: #{generator_tcn_forward.1} parent=11 // pred_check_branch
        %566 = sbr.rel (%p564) target = $region24
      $region23: #{generator_tcn_forward.1} parent=11 // pred_region
        _
      $region24: #{generator_tcn_forward.1} parent=11 // pred_fallthru
        _
      // Predicated region
      $region25: #{generator_tcn_forward.1} parent=11 // pred_check
        %p567 = pneg %p139
      $region26: #{generator_tcn_forward.1} parent=11 // pred_check_branch
        %569 = sbr.rel (%p567) target = $region28
      $region27: #{generator_tcn_forward.1} parent=11 // pred_region
        _
      $region28: #{generator_tcn_forward.1} parent=11 // pred_fallthru
        _
      // Predicated region
      $region29: #{generator_tcn_forward.1} parent=11 // pred_check
        %p570 = pneg %p160
      $region30: #{generator_tcn_forward.1} parent=11 // pred_check_branch
        %572 = sbr.rel (%p570) target = $region32
      $region31: #{generator_tcn_forward.1} parent=11 // pred_region
        _
      $region32: #{generator_tcn_forward.1} parent=11 // pred_fallthru
        _
      // Predicated region
      $region33: #{generator_tcn_forward.1} parent=11 // pred_check
        %p573 = pneg %p181
      $region34: #{generator_tcn_forward.1} parent=11 // pred_check_branch
        %575 = sbr.rel (%p573) target = $region36
      $region35: #{generator_tcn_forward.1} parent=11 // pred_region
        _
      $region36: #{generator_tcn_forward.1} parent=11 // pred_fallthru
        _
      // Predicated region
      $region37: #{generator_tcn_forward.1} parent=11 // pred_check
        %p576 = pneg %p202
      $region38: #{generator_tcn_forward.1} parent=11 // pred_check_branch
        %578 = sbr.rel (%p576) target = $region40
      $region39: #{generator_tcn_forward.1} parent=11 // pred_region
        _
      $region40: #{generator_tcn_forward.1} parent=11 // pred_fallthru
        _
      // Predicated region
      $region41: #{generator_tcn_forward.1} parent=11 // pred_check
        %p579 = pneg %p223
      $region42: #{generator_tcn_forward.1} parent=11 // pred_check_branch
        %581 = sbr.rel (%p579) target = $region44
      $region43: #{generator_tcn_forward.1} parent=11 // pred_region
        _
      $region44: #{generator_tcn_forward.1} parent=11 // pred_fallthru
        _
      // Predicated region
      $region45: #{generator_tcn_forward.1} parent=11 // pred_check
        %p582 = pneg %p244
      $region46: #{generator_tcn_forward.1} parent=11 // pred_check_branch
        %584 = sbr.rel (%p582) target = $region48
      $region47: #{generator_tcn_forward.1} parent=11 // pred_region
        _
      $region48: #{generator_tcn_forward.1} parent=11 // pred_fallthru
        _
      // Predicated region
      $region49: #{generator_tcn_forward.1} parent=11 // pred_check
        %p585 = pneg %p265
      $region50: #{generator_tcn_forward.1} parent=11 // pred_check_branch
        %587 = sbr.rel (%p585) target = $region52
      $region51: #{generator_tcn_forward.1} parent=11 // pred_region
        _
      $region52: #{generator_tcn_forward.1} parent=11 // pred_fallthru
        _
      // Predicated region
      $region53: #{generator_tcn_forward.1} parent=11 // pred_check
        %p588 = pneg %p286
      $region54: #{generator_tcn_forward.1} parent=11 // pred_check_branch
        %590 = sbr.rel (%p588) target = $region56
      $region55: #{generator_tcn_forward.1} parent=11 // pred_region
        _
      $region56: #{generator_tcn_forward.1} parent=11 // pred_fallthru
        _
      // Predicated region
      $region57: #{generator_tcn_forward.1} parent=11 // pred_check
        %p591 = pneg %p307
      $region58: #{generator_tcn_forward.1} parent=11 // pred_check_branch
        %593 = sbr.rel (%p591) target = $region60
      $region59: #{generator_tcn_forward.1} parent=11 // pred_region
        _
      $region60: #{generator_tcn_forward.1} parent=11 // pred_fallthru
        _
      // Predicated region
      $region61: #{generator_tcn_forward.1} parent=11 // pred_check
        %p594 = pneg %p328
      $region62: #{generator_tcn_forward.1} parent=11 // pred_check_branch
        %596 = sbr.rel (%p594) target = $region64
      $region63: #{generator_tcn_forward.1} parent=11 // pred_region
        _
      $region64: #{generator_tcn_forward.1} parent=11 // pred_fallthru
        _
      // Predicated region
      $region65: #{generator_tcn_forward.1} parent=11 // pred_check
        %p597 = pneg %p349
      $region66: #{generator_tcn_forward.1} parent=11 // pred_check_branch
        %599 = sbr.rel (%p597) target = $region68
      $region67: #{generator_tcn_forward.1} parent=11 // pred_region
        _
      $region68: #{generator_tcn_forward.1} parent=11 // pred_fallthru
        _
      // Predicated region
      $region69: #{generator_tcn_forward.1} parent=11 // pred_check
        %p600 = pneg %p370
      $region70: #{generator_tcn_forward.1} parent=11 // pred_check_branch
        %602 = sbr.rel (%p600) target = $region72
      $region71: #{generator_tcn_forward.1} parent=11 // pred_region
        _
      $region72: #{generator_tcn_forward.1} parent=11 // pred_fallthru
        _
      // Predicated region
      $region73: #{generator_tcn_forward.1} parent=11 // pred_check
        %p603 = pneg %p391
      $region74: #{generator_tcn_forward.1} parent=11 // pred_check_branch
        %605 = sbr.rel (%p603) target = $region76
      $region75: #{generator_tcn_forward.1} parent=11 // pred_region
        _
      $region76: #{generator_tcn_forward.1} parent=11 // pred_fallthru
        _
      // Predicated region
      $region77: #{generator_tcn_forward.1} parent=11 // pred_check
        %p606 = pneg %p412
      $region78: #{generator_tcn_forward.1} parent=11 // pred_check_branch
        %608 = sbr.rel (%p606) target = $region80
      $region79: #{generator_tcn_forward.1} parent=11 // pred_region
        _
      $region80: #{generator_tcn_forward.1} parent=11 // pred_fallthru
        _
      // Predicated region
      $region81: #{generator_tcn_forward.1} parent=11 // pred_check
        %p609 = pneg %p433
      $region82: #{generator_tcn_forward.1} parent=11 // pred_check_branch
        %611 = sbr.rel (%p609) target = $region84
      $region83: #{generator_tcn_forward.1} parent=11 // pred_region
        _
      $region84: #{generator_tcn_forward.1} parent=11 // pred_fallthru
        _
      // Predicated region
      $region85: #{generator_tcn_forward.1} parent=11 // pred_check
        %p612 = pneg %p454
      $region86: #{generator_tcn_forward.1} parent=11 // pred_check_branch
        %614 = sbr.rel (%p612) target = $region88
      $region87: #{generator_tcn_forward.1} parent=11 // pred_region
        _
      $region88: #{generator_tcn_forward.1} parent=11 // pred_fallthru
        _
      // Predicated region
      $region89: #{generator_tcn_forward.1} parent=11 // pred_check
        %p615 = pneg %p475
      $region90: #{generator_tcn_forward.1} parent=11 // pred_check_branch
        %617 = sbr.rel (%p615) target = $region92
      $region91: #{generator_tcn_forward.1} parent=11 // pred_region
        _
      $region92: #{generator_tcn_forward.1} parent=11 // pred_fallthru
        _
      // Predicated region
      $region93: #{generator_tcn_forward.1} parent=11 // pred_check
        %p618 = pneg %p496
      $region94: #{generator_tcn_forward.1} parent=11 // pred_check_branch
        %620 = sbr.rel (%p618) target = $region96
      $region95: #{generator_tcn_forward.1} parent=11 // pred_region
        _
      $region96: #{generator_tcn_forward.1} parent=11 // pred_fallthru
        _
      // Predicated region
      $region97: #{generator_tcn_forward.1} parent=11 // pred_check
        %p621 = pneg %p517
      $region98: #{generator_tcn_forward.1} parent=11 // pred_check_branch
        %623 = sbr.rel (%p621) target = $region100
      $region99: #{generator_tcn_forward.1} parent=11 // pred_region
        _
      $region100: #{generator_tcn_forward.1} parent=11 // pred_fallthru
        _
    $region12: #{generator_tcn_forward.1} parent=5 // pred_fallthru
      _
    %p624 = scmp.lt.s32.totalorder %s29, 2
    // Predicated region
    $region101: #{generator_tcn_forward.1} parent=5 // pred_check
      %p625 = pneg %p624
    $region102: #{generator_tcn_forward.1} parent=5 // pred_check_branch
      %627 = sbr.rel (%p625) target = $region104
    $region103: #{generator_tcn_forward.1} parent=5 // pred_region
      // Predicated region
      $region105: #{generator_tcn_forward.1} parent=103 // pred_check
        %p628 = pneg %p49
      $region106: #{generator_tcn_forward.1} parent=103 // pred_check_branch
        %630 = sbr.rel (%p628) target = $region108
      $region107: #{generator_tcn_forward.1} parent=103 // pred_region
        %p631 = scmp.lt.s32.totalorder %s29, 1
        %s632 = scalar_select %p631, %s29, 1
        %s633 = smul.addr %s632, 2
        %s634 = smul.addr %s633, 8
        %s635 = scalar_lea.vmem %s0, %s634
      $region108: #{generator_tcn_forward.1} parent=103 // pred_fallthru
        _
    $region104: #{generator_tcn_forward.1} parent=5 // pred_fallthru
      _
    %p636 = scmp.le.s32.totalorder 1, %s29
    %p637 = scmp.lt.s32.totalorder %s29, 3
    %p638 = pnand %p636, %p637
    %p639 = pneg %p638
    // Predicated region
    $region109: #{generator_tcn_forward.1} parent=5 // pred_check
      _
    $region110: #{generator_tcn_forward.1} parent=5 // pred_check_branch
      %641 = sbr.rel (%p638) target = $region112
    $region111: #{generator_tcn_forward.1} parent=5 // pred_region
      %s642 = ssub.s32 %s29, 1
      %p643 = scmp.lt.s32.totalorder %s34, 1
      %s644 = scalar_select %p643, %s34, 1
      %s645 = smul.addr %s644, 2
      %s646 = smul.addr %s645, 8
      %s647 = scalar_lea.vmem %s0, %s646
      %p648 = pneg %p55
      %p649 = pneg %p52
      %p650 = pneg %p76
      %p651 = pneg %p73
      %p652 = pneg %p97
      %p653 = pneg %p94
      %p654 = pneg %p118
      %p655 = pneg %p115
      %p656 = pneg %p139
      %p657 = pneg %p136
      %p658 = pneg %p160
      %p659 = pneg %p157
      %p660 = pneg %p181
      %p661 = pneg %p178
      %p662 = pneg %p202
      %p663 = pneg %p199
      %p664 = pneg %p223
      %p665 = pneg %p220
      %p666 = pneg %p244
      %p667 = pneg %p241
      %p668 = pneg %p265
      %p669 = pneg %p262
      %p670 = pneg %p286
      %p671 = pneg %p283
      %p672 = pneg %p307
      %p673 = pneg %p304
      %p674 = pneg %p328
      %p675 = pneg %p325
      %p676 = pneg %p349
      %p677 = pneg %p346
      %p678 = pneg %p370
      %p679 = pneg %p367
      %p680 = pneg %p391
      %p681 = pneg %p388
      %p682 = pneg %p412
      %p683 = pneg %p409
      %p684 = pneg %p433
      %p685 = pneg %p430
      %p686 = pneg %p454
      %p687 = pneg %p451
      %p688 = pneg %p475
      %p689 = pneg %p472
      %p690 = pneg %p496
      %p691 = pneg %p493
      %p692 = pneg %p517
      %p693 = pneg %p514
      %p694 = pneg %p543
      %p695 = pneg %p540
      %p696 = scmp.lt.s32.totalorder %s34, 1
      %s697 = scalar_select %p696, %s34, 1
      %s698 = smul.addr %s697, 2
      %s699 = smul.addr %s698, 8
      %s700 = scalar_lea.vmem %s23, %s699
      %p701 = scmp.lt.s32.totalorder %s34, 1
      %s702 = scalar_select %p701, %s34, 1
      %s703 = smul.addr %s702, 2
      %s704 = smul.addr %s703, 8
      %s705 = scalar_lea.vmem %s0, %s704
      %p706 = scmp.lt.s32.totalorder %s34, 1
      %s707 = scalar_select %p706, %s34, 1
      %s708 = smul.addr %s707, 2
      %s709 = smul.addr %s708, 8
      %s710 = scalar_lea.vmem %s23, %s709
      %v712 = vld [vmem:[%s705] sm:$0xff]
      %v713 = vld [vmem:[%s705 + $0x8] sm:$0xff]
      %v714 = vlaneseq
      %v715 = vand.u32 %v714, 127
      %v716 = vpack.c.bf16 %v712, %v712
      %v717 = vpack.c.bf16 %v713, %v713
      %718 = vst [vmem:[#allocation2 + $0x8] sm:$0xf] %v716
      %719 = vst [vmem:[#allocation2 + $0xc] sm:$0xf] %v717
      %722 = vrot.lane.b32.xlu0 %v716, 1
      %v723 = vpop.permute.xlu0 %722
      %724 = vrot.lane.b32.xlu0 %v717, 1
      %v725 = vpop.permute.xlu0 %724
      %vm728 = vcmask 519176
      %729 = vst.msk [vmem:[#allocation2] sm:$0xf] %vm728, %v723
      %730 = vst.msk [vmem:[#allocation2 + $0x4] sm:$0xf] %vm728, %v725
      %731 = vrot.lane.b32.xlu0 %v716, 127
      %v732 = vpop.permute.xlu0 %731
      %733 = vrot.lane.b32.xlu0 %v717, 127
      %v734 = vpop.permute.xlu0 %733
      %vm737 = vcmask 510976
      %738 = vst.msk [vmem:[#allocation2 + $0x10] sm:$0xf] %vm737, %v732
      %739 = vst.msk [vmem:[#allocation2 + $0x14] sm:$0xf] %vm737, %v734
      %vm740 = vcmask 3072
      %741 = vst.msk [vmem:[#allocation2] sm:$0xf] %vm740, %v732
      %742 = vst.msk [vmem:[#allocation2 + $0x4] sm:$0xf] %vm740, %v734
      %vm743 = vcmask 519672
      %744 = vst.msk [vmem:[#allocation2 + $0x10] sm:$0xf] %vm743, %v723
      %745 = vst.msk [vmem:[#allocation2 + $0x14] sm:$0xf] %vm743, %v725
      %vm746 = vcmask 1043976
      %747 = vst.msk [vmem:[#allocation2] sm:$0xf] %vm746, %v723
      %748 = vst.msk [vmem:[#allocation2 + $0x4] sm:$0xf] %vm746, %v725
      %vm749 = vcmask 1035776
      %750 = vst.msk [vmem:[#allocation2 + $0x10] sm:$0xf] %vm749, %v732
      %751 = vst.msk [vmem:[#allocation2 + $0x14] sm:$0xf] %vm749, %v734
      %vm752 = vcmask 527872
      %753 = vst.msk [vmem:[#allocation2] sm:$0xf] %vm752, %v732
      %754 = vst.msk [vmem:[#allocation2 + $0x4] sm:$0xf] %vm752, %v734
      %vm755 = vcmask 1044472
      %756 = vst.msk [vmem:[#allocation2 + $0x10] sm:$0xf] %vm755, %v723
      %757 = vst.msk [vmem:[#allocation2 + $0x14] sm:$0xf] %vm755, %v725
      %v758 = vld [vmem:[%s2] sm:$0xf]
      %v759 = vld [vmem:[%s2 + $0x4] sm:$0xf]
      %v760 = vld [vmem:[%s2 + $0x8] sm:$0xf]
      %v761 = vld [vmem:[%s2 + $0xc] sm:$0xf]
      %v762 = vld [vmem:[%s2 + $0x10] sm:$0xf]
      %v763 = vld [vmem:[%s2 + $0x14] sm:$0xf]
      %v764 = vld [vmem:[%s2 + $0x18] sm:$0xf]
      %v765 = vld [vmem:[%s2 + $0x1c] sm:$0xf]
      %v766 = vld [vmem:[#allocation2] sm:$0xf]
      %v767 = vld [vmem:[#allocation2 + $0x4] sm:$0xf]
      %v768 = vld [vmem:[#allocation2 + $0x8] sm:$0xf]
      %v769 = vld [vmem:[#allocation2 + $0xc] sm:$0xf]
      %v770 = vld [vmem:[#allocation2 + $0x10] sm:$0xf]
      %v771 = vld [vmem:[#allocation2 + $0x14] sm:$0xf]
      %v772 = vld [vmem:[%s3] sm:$0xff]
      %v773 = vld [vmem:[%s3 + $0x8] sm:$0xff]
      %v774 = vld [vmem:[%s3 + $0x10] sm:$0xff]
      %v775 = vld [vmem:[%s3 + $0x18] sm:$0xff]
      %v776 = vld [vmem:[%s3 + $0x20] sm:$0xff]
      %v777 = vld [vmem:[%s3 + $0x28] sm:$0xff]
      %v778 = vld [vmem:[%s3 + $0x30] sm:$0xff]
      %v779 = vld [vmem:[%s3 + $0x38] sm:$0xff]
      %781 = vset.pattern.permute.xlu0 0
      %782 = vperm.xlu0 %781, %v772
      %v783 = vpop.permute.xlu0 %782
      %786 = vset.pattern.permute.xlu0 0
      %787 = vperm.xlu0 %786, %v773
      %v788 = vpop.permute.xlu0 %787
      %791 = vset.pattern.permute.xlu0 0
      %792 = vperm.xlu0 %791, %v774
      %v793 = vpop.permute.xlu0 %792
      %796 = vset.pattern.permute.xlu0 0
      %797 = vperm.xlu0 %796, %v775
      %v798 = vpop.permute.xlu0 %797
      %801 = vset.pattern.permute.xlu0 0
      %802 = vperm.xlu0 %801, %v776
      %v803 = vpop.permute.xlu0 %802
      %806 = vset.pattern.permute.xlu0 0
      %807 = vperm.xlu0 %806, %v777
      %v808 = vpop.permute.xlu0 %807
      %811 = vset.pattern.permute.xlu0 0
      %812 = vperm.xlu0 %811, %v778
      %v813 = vpop.permute.xlu0 %812
      %816 = vset.pattern.permute.xlu0 0
      %817 = vperm.xlu0 %816, %v779
      %v818 = vpop.permute.xlu0 %817
      %v828 = vunpack.c.l.b16 %v758
      %v829 = vunpack.c.l.b16 %v759
      %v830 = vunpack.c.l.b16 %v760
      %v831 = vunpack.c.l.b16 %v761
      %v832 = vunpack.c.l.b16 %v762
      %v833 = vunpack.c.l.b16 %v763
      %v834 = vunpack.c.l.b16 %v764
      %v835 = vunpack.c.l.b16 %v765
      %v836 = vpack.c.b16 %v829, %v828
      %v837 = vpack.c.b16 %v831, %v830
      %v838 = vpack.c.b16 %v833, %v832
      %v839 = vpack.c.b16 %v835, %v834
      %v846 = vunpack.c.l.b16 %v766
      %v847 = vunpack.c.l.b16 %v767
      %v848 = vunpack.c.l.b16 %v768
      %v849 = vunpack.c.l.b16 %v769
      %v850 = vunpack.c.l.b16 %v770
      %v851 = vunpack.c.l.b16 %v771
      %v852 = vpack.c.b16 %v847, %v846
      %v853 = vpack.c.b16 %v849, %v848
      %v854 = vpack.c.b16 %v851, %v850
      %vm858 = vcmask 392192
      %v860 = vsel %vm858, %v836, 0
      %v863 = vsel %vm858, %v837, 0
      %v866 = vsel %vm858, %v838, 0
      %v869 = vsel %vm858, %v839, 0
      %871 = vmatpush.bf16.msra.mxu0 0
      %872 = vmatpush.bf16.msra.mxu0 0
      %873 = vmatpush.bf16.msra.mxu0 0
      %874 = vmatpush.bf16.msra.mxu0 0
      %875 = vmatpush.bf16.msra.mxu0 0
      %876 = vmatpush.bf16.msra.mxu0 %v854
      %877 = vmatpush.bf16.msra.mxu0 %v853
      %878 = vmatpush.bf16.msra.mxu0 %v852
      %879 = vmatmul.bf16.gmra.mxu0 %v860
      %v880 = vpop.f32.mrf.mxu0
      %v881 = vadd.f32 %v783, %v880
      %v882 = vpop.f32.mrf.mxu0
      %v883 = vadd.f32 %v788, %v882
      %884 = vmatmul.bf16.gmra.mxu0 %v863
      %v885 = vpop.f32.mrf.mxu0
      %v886 = vadd.f32 %v793, %v885
      %v887 = vpop.f32.mrf.mxu0
      %v888 = vadd.f32 %v798, %v887
      %889 = vmatmul.bf16.gmra.mxu0 %v866
      %v890 = vpop.f32.mrf.mxu0
      %v891 = vadd.f32 %v803, %v890
      %v892 = vpop.f32.mrf.mxu0
      %v893 = vadd.f32 %v808, %v892
      %894 = vmatmul.bf16.gmra.mxu0 %v869
      %v895 = vpop.f32.mrf.mxu0
      %v896 = vadd.f32 %v813, %v895
      %v897 = vpop.f32.mrf.mxu0
      %v898 = vadd.f32 %v818, %v897
      %899 = vdwg.mxu0
      %v900 = vmin.f32 %v881, 20.0
      %v901 = vmin.f32 %v883, 20.0
      %v902 = vmin.f32 %v886, 20.0
      %v903 = vmin.f32 %v888, 20.0
      %v904 = vmin.f32 %v891, 20.0
      %v905 = vmin.f32 %v893, 20.0
      %v906 = vmin.f32 %v896, 20.0
      %v907 = vmin.f32 %v898, 20.0
      %v908 = vmul.f32 %v900, 1.442695
      %v909 = vpow.pop %v908
      %v910 = vmul.f32 %v901, 1.442695
      %v911 = vpow.pop %v910
      %v912 = vmul.f32 %v902, 1.442695
      %v913 = vpow.pop %v912
      %v914 = vmul.f32 %v903, 1.442695
      %v915 = vpow.pop %v914
      %v916 = vmul.f32 %v904, 1.442695
      %v917 = vpow.pop %v916
      %v918 = vmul.f32 %v905, 1.442695
      %v919 = vpow.pop %v918
      %v920 = vmul.f32 %v906, 1.442695
      %v921 = vpow.pop %v920
      %v922 = vmul.f32 %v907, 1.442695
      %v923 = vpow.pop %v922
      %v924 = vadd.f32 %v909, 2.0
      %v925 = vadd.f32 %v911, 2.0
      %v926 = vadd.f32 %v913, 2.0
      %v927 = vadd.f32 %v915, 2.0
      %v928 = vadd.f32 %v917, 2.0
      %v929 = vadd.f32 %v919, 2.0
      %v930 = vadd.f32 %v921, 2.0
      %v931 = vadd.f32 %v923, 2.0
      %v932 = vmul.f32 %v909, %v924
      %v933 = vmul.f32 %v911, %v925
      %v934 = vmul.f32 %v913, %v926
      %v935 = vmul.f32 %v915, %v927
      %v936 = vmul.f32 %v917, %v928
      %v937 = vmul.f32 %v919, %v929
      %v938 = vmul.f32 %v921, %v930
      %v939 = vmul.f32 %v923, %v931
      %v940 = vadd.f32 %v932, 2.0
      %v941 = vadd.f32 %v933, 2.0
      %v942 = vadd.f32 %v934, 2.0
      %v943 = vadd.f32 %v935, 2.0
      %v944 = vadd.f32 %v936, 2.0
      %v945 = vadd.f32 %v937, 2.0
      %v946 = vadd.f32 %v938, 2.0
      %v947 = vadd.f32 %v939, 2.0
      %v948 = vrcp.pop %v940
      %v949 = vrcp.pop %v941
      %v950 = vrcp.pop %v942
      %v951 = vrcp.pop %v943
      %v952 = vrcp.pop %v944
      %v953 = vrcp.pop %v945
      %v954 = vrcp.pop %v946
      %v955 = vrcp.pop %v947
      %v956 = vmul.f32 %v932, %v948
      %v957 = vmul.f32 %v933, %v949
      %v958 = vmul.f32 %v934, %v950
      %v959 = vmul.f32 %v935, %v951
      %v960 = vmul.f32 %v936, %v952
      %v961 = vmul.f32 %v937, %v953
      %v962 = vmul.f32 %v938, %v954
      %v963 = vmul.f32 %v939, %v955
      %v964 = vmul.f32 %v881, %v956
      %v965 = vmul.f32 %v883, %v957
      %v966 = vmul.f32 %v886, %v958
      %v967 = vmul.f32 %v888, %v959
      %v968 = vmul.f32 %v891, %v960
      %v969 = vmul.f32 %v893, %v961
      %v970 = vmul.f32 %v896, %v962
      %v971 = vmul.f32 %v898, %v963
      %v972 = vpack.c.bf16 %v964, %v964
      %v973 = vpack.c.bf16 %v965, %v965
      %v974 = vpack.c.bf16 %v966, %v966
      %v975 = vpack.c.bf16 %v967, %v967
      %v976 = vpack.c.bf16 %v968, %v968
      %v977 = vpack.c.bf16 %v969, %v969
      %v978 = vpack.c.bf16 %v970, %v970
      %v979 = vpack.c.bf16 %v971, %v971
      %980 = vst [vmem:[#allocation2 + $0x20] sm:$0xf] %v972
      %981 = vst [vmem:[#allocation2 + $0x24] sm:$0xf] %v973
      %982 = vst [vmem:[#allocation2 + $0x28] sm:$0xf] %v974
      %983 = vst [vmem:[#allocation2 + $0x2c] sm:$0xf] %v975
      %984 = vst [vmem:[#allocation2 + $0x30] sm:$0xf] %v976
      %985 = vst [vmem:[#allocation2 + $0x34] sm:$0xf] %v977
      %986 = vst [vmem:[#allocation2 + $0x38] sm:$0xf] %v978
      %987 = vst [vmem:[#allocation2 + $0x3c] sm:$0xf] %v979
      %996 = vrot.lane.b32.xlu0 %v972, 1
      %v997 = vpop.permute.xlu0 %996
      %998 = vrot.lane.b32.xlu0 %v973, 1
      %v999 = vpop.permute.xlu0 %998
      %1000 = vrot.lane.b32.xlu0 %v974, 1
      %v1001 = vpop.permute.xlu0 %1000
      %1002 = vrot.lane.b32.xlu0 %v975, 1
      %v1003 = vpop.permute.xlu0 %1002
      %1004 = vrot.lane.b32.xlu0 %v976, 1
      %v1005 = vpop.permute.xlu0 %1004
      %1006 = vrot.lane.b32.xlu0 %v977, 1
      %v1007 = vpop.permute.xlu0 %1006
      %1008 = vrot.lane.b32.xlu0 %v978, 1
      %v1009 = vpop.permute.xlu0 %1008
      %1010 = vrot.lane.b32.xlu0 %v979, 1
      %v1011 = vpop.permute.xlu0 %1010
      %1020 = vst.msk [vmem:[#allocation2] sm:$0xf] %vm728, %v997
      %1021 = vst.msk [vmem:[#allocation2 + $0x4] sm:$0xf] %vm728, %v999
      %1022 = vst.msk [vmem:[#allocation2 + $0x8] sm:$0xf] %vm728, %v1001
      %1023 = vst.msk [vmem:[#allocation2 + $0xc] sm:$0xf] %vm728, %v1003
      %1024 = vst.msk [vmem:[#allocation2 + $0x10] sm:$0xf] %vm728, %v1005
      %1025 = vst.msk [vmem:[#allocation2 + $0x14] sm:$0xf] %vm728, %v1007
      %1026 = vst.msk [vmem:[#allocation2 + $0x18] sm:$0xf] %vm728, %v1009
      %1027 = vst.msk [vmem:[#allocation2 + $0x1c] sm:$0xf] %vm728, %v1011
      %1028 = vrot.lane.b32.xlu0 %v972, 127
      %v1029 = vpop.permute.xlu0 %1028
      %1030 = vrot.lane.b32.xlu0 %v973, 127
      %v1031 = vpop.permute.xlu0 %1030
      %1032 = vrot.lane.b32.xlu0 %v974, 127
      %v1033 = vpop.permute.xlu0 %1032
      %1034 = vrot.lane.b32.xlu0 %v975, 127
      %v1035 = vpop.permute.xlu0 %1034
      %1036 = vrot.lane.b32.xlu0 %v976, 127
      %v1037 = vpop.permute.xlu0 %1036
      %1038 = vrot.lane.b32.xlu0 %v977, 127
      %v1039 = vpop.permute.xlu0 %1038
      %1040 = vrot.lane.b32.xlu0 %v978, 127
      %v1041 = vpop.permute.xlu0 %1040
      %1042 = vrot.lane.b32.xlu0 %v979, 127
      %v1043 = vpop.permute.xlu0 %1042
      %1052 = vst.msk [vmem:[#allocation2 + $0x40] sm:$0xf] %vm737, %v1029
      %1053 = vst.msk [vmem:[#allocation2 + $0x44] sm:$0xf] %vm737, %v1031
      %1054 = vst.msk [vmem:[#allocation2 + $0x48] sm:$0xf] %vm737, %v1033
      %1055 = vst.msk [vmem:[#allocation2 + $0x4c] sm:$0xf] %vm737, %v1035
      %1056 = vst.msk [vmem:[#allocation2 + $0x50] sm:$0xf] %vm737, %v1037
      %1057 = vst.msk [vmem:[#allocation2 + $0x54] sm:$0xf] %vm737, %v1039
      %1058 = vst.msk [vmem:[#allocation2 + $0x58] sm:$0xf] %vm737, %v1041
      %1059 = vst.msk [vmem:[#allocation2 + $0x5c] sm:$0xf] %vm737, %v1043
      %1060 = vst.msk [vmem:[#allocation2] sm:$0xf] %vm740, %v1029
      %1061 = vst.msk [vmem:[#allocation2 + $0x4] sm:$0xf] %vm740, %v1031
      %1062 = vst.msk [vmem:[#allocation2 + $0x8] sm:$0xf] %vm740, %v1033
      %1063 = vst.msk [vmem:[#allocation2 + $0xc] sm:$0xf] %vm740, %v1035
      %1064 = vst.msk [vmem:[#allocation2 + $0x10] sm:$0xf] %vm740, %v1037
      %1065 = vst.msk [vmem:[#allocation2 + $0x14] sm:$0xf] %vm740, %v1039
      %1066 = vst.msk [vmem:[#allocation2 + $0x18] sm:$0xf] %vm740, %v1041
      %1067 = vst.msk [vmem:[#allocation2 + $0x1c] sm:$0xf] %vm740, %v1043
      %1068 = vst.msk [vmem:[#allocation2 + $0x40] sm:$0xf] %vm743, %v997
      %1069 = vst.msk [vmem:[#allocation2 + $0x44] sm:$0xf] %vm743, %v999
      %1070 = vst.msk [vmem:[#allocation2 + $0x48] sm:$0xf] %vm743, %v1001
      %1071 = vst.msk [vmem:[#allocation2 + $0x4c] sm:$0xf] %vm743, %v1003
      %1072 = vst.msk [vmem:[#allocation2 + $0x50] sm:$0xf] %vm743, %v1005
      %1073 = vst.msk [vmem:[#allocation2 + $0x54] sm:$0xf] %vm743, %v1007
      %1074 = vst.msk [vmem:[#allocation2 + $0x58] sm:$0xf] %vm743, %v1009
      %1075 = vst.msk [vmem:[#allocation2 + $0x5c] sm:$0xf] %vm743, %v1011
      %1076 = vst.msk [vmem:[#allocation2] sm:$0xf] %vm746, %v997
      %1077 = vst.msk [vmem:[#allocation2 + $0x4] sm:$0xf] %vm746, %v999
      %1078 = vst.msk [vmem:[#allocation2 + $0x8] sm:$0xf] %vm746, %v1001
      %1079 = vst.msk [vmem:[#allocation2 + $0xc] sm:$0xf] %vm746, %v1003
      %1080 = vst.msk [vmem:[#allocation2 + $0x10] sm:$0xf] %vm746, %v1005
      %1081 = vst.msk [vmem:[#allocation2 + $0x14] sm:$0xf] %vm746, %v1007
      %1082 = vst.msk [vmem:[#allocation2 + $0x18] sm:$0xf] %vm746, %v1009
      %1083 = vst.msk [vmem:[#allocation2 + $0x1c] sm:$0xf] %vm746, %v1011
      %1084 = vst.msk [vmem:[#allocation2 + $0x40] sm:$0xf] %vm749, %v1029
      %1085 = vst.msk [vmem:[#allocation2 + $0x44] sm:$0xf] %vm749, %v1031
      %1086 = vst.msk [vmem:[#allocation2 + $0x48] sm:$0xf] %vm749, %v1033
      %1087 = vst.msk [vmem:[#allocation2 + $0x4c] sm:$0xf] %vm749, %v1035
      %1088 = vst.msk [vmem:[#allocation2 + $0x50] sm:$0xf] %vm749, %v1037
      %1089 = vst.msk [vmem:[#allocation2 + $0x54] sm:$0xf] %vm749, %v1039
      %1090 = vst.msk [vmem:[#allocation2 + $0x58] sm:$0xf] %vm749, %v1041
      %1091 = vst.msk [vmem:[#allocation2 + $0x5c] sm:$0xf] %vm749, %v1043
      %1092 = vst.msk [vmem:[#allocation2] sm:$0xf] %vm752, %v1029
      %1093 = vst.msk [vmem:[#allocation2 + $0x4] sm:$0xf] %vm752, %v1031
      %1094 = vst.msk [vmem:[#allocation2 + $0x8] sm:$0xf] %vm752, %v1033
      %1095 = vst.msk [vmem:[#allocation2 + $0xc] sm:$0xf] %vm752, %v1035
      %1096 = vst.msk [vmem:[#allocation2 + $0x10] sm:$0xf] %vm752, %v1037
      %1097 = vst.msk [vmem:[#allocation2 + $0x14] sm:$0xf] %vm752, %v1039
      %1098 = vst.msk [vmem:[#allocation2 + $0x18] sm:$0xf] %vm752, %v1041
      %1099 = vst.msk [vmem:[#allocation2 + $0x1c] sm:$0xf] %vm752, %v1043
      %1100 = vst.msk [vmem:[#allocation2 + $0x40] sm:$0xf] %vm755, %v997
      %1101 = vst.msk [vmem:[#allocation2 + $0x44] sm:$0xf] %vm755, %v999
      %1102 = vst.msk [vmem:[#allocation2 + $0x48] sm:$0xf] %vm755, %v1001
      %1103 = vst.msk [vmem:[#allocation2 + $0x4c] sm:$0xf] %vm755, %v1003
      %1104 = vst.msk [vmem:[#allocation2 + $0x50] sm:$0xf] %vm755, %v1005
      %1105 = vst.msk [vmem:[#allocation2 + $0x54] sm:$0xf] %vm755, %v1007
      %1106 = vst.msk [vmem:[#allocation2 + $0x58] sm:$0xf] %vm755, %v1009
      %1107 = vst.msk [vmem:[#allocation2 + $0x5c] sm:$0xf] %vm755, %v1011
      %v1108 = vld [vmem:[%s4] sm:$0xff]
      %v1109 = vld [vmem:[%s4 + $0x8] sm:$0xff]
      %v1110 = vld [vmem:[%s4 + $0x10] sm:$0xff]
      %v1111 = vld [vmem:[%s4 + $0x18] sm:$0xff]
      %v1112 = vld [vmem:[%s4 + $0x20] sm:$0xff]
      %v1113 = vld [vmem:[%s4 + $0x28] sm:$0xff]
      %v1114 = vld [vmem:[%s4 + $0x30] sm:$0xff]
      %v1115 = vld [vmem:[%s4 + $0x38] sm:$0xff]
      %v1116 = vld [vmem:[#allocation2] sm:$0xf]
      %v1117 = vld [vmem:[#allocation2 + $0x4] sm:$0xf]
      %v1118 = vld [vmem:[#allocation2 + $0x8] sm:$0xf]
      %v1119 = vld [vmem:[#allocation2 + $0xc] sm:$0xf]
      %v1120 = vld [vmem:[#allocation2 + $0x10] sm:$0xf]
      %v1121 = vld [vmem:[#allocation2 + $0x14] sm:$0xf]
      %v1122 = vld [vmem:[#allocation2 + $0x18] sm:$0xf]
      %v1123 = vld [vmem:[#allocation2 + $0x1c] sm:$0xf]
      %v1124 = vld [vmem:[#allocation2 + $0x20] sm:$0xf]
      %v1125 = vld [vmem:[#allocation2 + $0x24] sm:$0xf]
      %v1126 = vld [vmem:[#allocation2 + $0x28] sm:$0xf]
      %v1127 = vld [vmem:[#allocation2 + $0x2c] sm:$0xf]
      %v1128 = vld [vmem:[#allocation2 + $0x30] sm:$0xf]
      %v1129 = vld [vmem:[#allocation2 + $0x34] sm:$0xf]
      %v1130 = vld [vmem:[#allocation2 + $0x38] sm:$0xf]
      %v1131 = vld [vmem:[#allocation2 + $0x3c] sm:$0xf]
      %v1132 = vld [vmem:[#allocation2 + $0x40] sm:$0xf]
      %v1133 = vld [vmem:[#allocation2 + $0x44] sm:$0xf]
      %v1134 = vld [vmem:[#allocation2 + $0x48] sm:$0xf]
      %v1135 = vld [vmem:[#allocation2 + $0x4c] sm:$0xf]
      %v1136 = vld [vmem:[#allocation2 + $0x50] sm:$0xf]
      %v1137 = vld [vmem:[#allocation2 + $0x54] sm:$0xf]
      %v1138 = vld [vmem:[#allocation2 + $0x58] sm:$0xf]
      %v1139 = vld [vmem:[#allocation2 + $0x5c] sm:$0xf]
      %v1140 = vld [vmem:[%s5] sm:$0xff]
      %v1141 = vld [vmem:[%s5 + $0x8] sm:$0xff]
      %v1142 = vld [vmem:[%s5 + $0x10] sm:$0xff]
      %v1143 = vld [vmem:[%s5 + $0x18] sm:$0xff]
      %v1144 = vld [vmem:[%s5 + $0x20] sm:$0xff]
      %v1145 = vld [vmem:[%s5 + $0x28] sm:$0xff]
      %v1146 = vld [vmem:[%s5 + $0x30] sm:$0xff]
      %v1147 = vld [vmem:[%s5 + $0x38] sm:$0xff]
      %1149 = vset.pattern.permute.xlu0 0
      %1150 = vperm.xlu0 %1149, %v1140
      %v1151 = vpop.permute.xlu0 %1150
      %1154 = vset.pattern.permute.xlu0 0
      %1155 = vperm.xlu0 %1154, %v1141
      %v1156 = vpop.permute.xlu0 %1155
      %1159 = vset.pattern.permute.xlu0 0
      %1160 = vperm.xlu0 %1159, %v1142
      %v1161 = vpop.permute.xlu0 %1160
      %1164 = vset.pattern.permute.xlu0 0
      %1165 = vperm.xlu0 %1164, %v1143
      %v1166 = vpop.permute.xlu0 %1165
      %1169 = vset.pattern.permute.xlu0 0
      %1170 = vperm.xlu0 %1169, %v1144
      %v1171 = vpop.permute.xlu0 %1170
      %1174 = vset.pattern.permute.xlu0 0
      %1175 = vperm.xlu0 %1174, %v1145
      %v1176 = vpop.permute.xlu0 %1175
      %1179 = vset.pattern.permute.xlu0 0
      %1180 = vperm.xlu0 %1179, %v1146
      %v1181 = vpop.permute.xlu0 %1180
      %1184 = vset.pattern.permute.xlu0 0
      %1185 = vperm.xlu0 %1184, %v1147
      %v1186 = vpop.permute.xlu0 %1185
      %v1196 = vunpack.c.l.b16 %v1108
      %v1197 = vunpack.c.h.b16 %v1108
      %v1198 = vunpack.c.l.b16 %v1109
      %v1199 = vunpack.c.h.b16 %v1109
      %v1200 = vunpack.c.l.b16 %v1110
      %v1201 = vunpack.c.h.b16 %v1110
      %v1202 = vunpack.c.l.b16 %v1111
      %v1203 = vunpack.c.h.b16 %v1111
      %v1204 = vunpack.c.l.b16 %v1112
      %v1205 = vunpack.c.h.b16 %v1112
      %v1206 = vunpack.c.l.b16 %v1113
      %v1207 = vunpack.c.h.b16 %v1113
      %v1208 = vunpack.c.l.b16 %v1114
      %v1209 = vunpack.c.h.b16 %v1114
      %v1210 = vunpack.c.l.b16 %v1115
      %v1211 = vunpack.c.h.b16 %v1115
      %v1212 = vpack.c.b16 %v1198, %v1196
      %v1213 = vpack.c.b16 %v1199, %v1197
      %v1214 = vpack.c.b16 %v1202, %v1200
      %v1215 = vpack.c.b16 %v1203, %v1201
      %v1216 = vpack.c.b16 %v1206, %v1204
      %v1217 = vpack.c.b16 %v1207, %v1205
      %v1218 = vpack.c.b16 %v1210, %v1208
      %v1219 = vpack.c.b16 %v1211, %v1209
      %v1248 = vunpack.c.l.b16 %v1116
      %v1249 = vunpack.c.l.b16 %v1117
      %v1250 = vunpack.c.l.b16 %v1118
      %v1251 = vunpack.c.l.b16 %v1119
      %v1252 = vunpack.c.l.b16 %v1120
      %v1253 = vunpack.c.l.b16 %v1121
      %v1254 = vunpack.c.l.b16 %v1122
      %v1255 = vunpack.c.l.b16 %v1123
      %v1256 = vunpack.c.l.b16 %v1124
      %v1257 = vunpack.c.l.b16 %v1125
      %v1258 = vunpack.c.l.b16 %v1126
      %v1259 = vunpack.c.l.b16 %v1127
      %v1260 = vunpack.c.l.b16 %v1128
      %v1261 = vunpack.c.l.b16 %v1129
      %v1262 = vunpack.c.l.b16 %v1130
      %v1263 = vunpack.c.l.b16 %v1131
      %v1264 = vunpack.c.l.b16 %v1132
      %v1265 = vunpack.c.l.b16 %v1133
      %v1266 = vunpack.c.l.b16 %v1134
      %v1267 = vunpack.c.l.b16 %v1135
      %v1268 = vunpack.c.l.b16 %v1136
      %v1269 = vunpack.c.l.b16 %v1137
      %v1270 = vunpack.c.l.b16 %v1138
      %v1271 = vunpack.c.l.b16 %v1139
      %v1272 = vpack.c.b16 %v1249, %v1248
      %v1273 = vpack.c.b16 %v1251, %v1250
      %v1274 = vpack.c.b16 %v1253, %v1252
      %v1275 = vpack.c.b16 %v1255, %v1254
      %v1276 = vpack.c.b16 %v1257, %v1256
      %v1277 = vpack.c.b16 %v1259, %v1258
      %v1278 = vpack.c.b16 %v1261, %v1260
      %v1279 = vpack.c.b16 %v1263, %v1262
      %v1280 = vpack.c.b16 %v1265, %v1264
      %v1281 = vpack.c.b16 %v1267, %v1266
      %v1282 = vpack.c.b16 %v1269, %v1268
      %v1283 = vpack.c.b16 %v1271, %v1270
      %vm1296 = vcmask 523264
      %v1298 = vsel %vm1296, %v1213, 0
      %v1301 = vsel %vm1296, %v1215, 0
      %v1304 = vsel %vm1296, %v1217, 0
      %v1307 = vsel %vm1296, %v1219, 0
      %1309 = vmatpush.bf16.msra.mxu0 %v1279
      %1310 = vmatpush.bf16.msra.mxu0 %v1278
      %1311 = vmatpush.bf16.msra.mxu0 %v1277
      %1312 = vmatpush.bf16.msra.mxu0 %v1276
      %1313 = vmatpush.bf16.msra.mxu0 %v1275
      %1314 = vmatpush.bf16.msra.mxu0 %v1274
      %1315 = vmatpush.bf16.msra.mxu0 %v1273
      %1316 = vmatpush.bf16.msra.mxu0 %v1272
      %1317 = vmatmul.bf16.gmra.mxu0 %v1212
      %v1318 = vpop.f32.mrf.mxu0
      %v1319 = vadd.f32 %v1151, %v1318
      %v1320 = vpop.f32.mrf.mxu0
      %v1321 = vadd.f32 %v1156, %v1320
      %1322 = vmatmul.bf16.gmra.mxu0 %v1214
      %v1323 = vpop.f32.mrf.mxu0
      %v1324 = vadd.f32 %v1161, %v1323
      %v1325 = vpop.f32.mrf.mxu0
      %v1326 = vadd.f32 %v1166, %v1325
      %1327 = vmatmul.bf16.gmra.mxu0 %v1216
      %v1328 = vpop.f32.mrf.mxu0
      %v1329 = vadd.f32 %v1171, %v1328
      %v1330 = vpop.f32.mrf.mxu0
      %v1331 = vadd.f32 %v1176, %v1330
      %1332 = vmatmul.bf16.gmra.mxu0 %v1218
      %v1333 = vpop.f32.mrf.mxu0
      %v1334 = vadd.f32 %v1181, %v1333
      %v1335 = vpop.f32.mrf.mxu0
      %v1336 = vadd.f32 %v1186, %v1335
      %1337 = vdwg.mxu0
      %1338 = vmatpush.bf16.msra.mxu0 0
      %1339 = vmatpush.bf16.msra.mxu0 0
      %1340 = vmatpush.bf16.msra.mxu0 0
      %1341 = vmatpush.bf16.msra.mxu0 0
      %1342 = vmatpush.bf16.msra.mxu0 %v1283
      %1343 = vmatpush.bf16.msra.mxu0 %v1282
      %1344 = vmatpush.bf16.msra.mxu0 %v1281
      %1345 = vmatpush.bf16.msra.mxu0 %v1280
      %1346 = vmatmul.bf16.gmra.mxu0 %v1298
      %v1347 = vpop.f32.mrf.mxu0
      %v1348 = vadd.f32 %v1319, %v1347
      %v1349 = vpop.f32.mrf.mxu0
      %v1350 = vadd.f32 %v1321, %v1349
      %1351 = vmatmul.bf16.gmra.mxu0 %v1301
      %v1352 = vpop.f32.mrf.mxu0
      %v1353 = vadd.f32 %v1324, %v1352
      %v1354 = vpop.f32.mrf.mxu0
      %v1355 = vadd.f32 %v1326, %v1354
      %1356 = vmatmul.bf16.gmra.mxu0 %v1304
      %v1357 = vpop.f32.mrf.mxu0
      %v1358 = vadd.f32 %v1329, %v1357
      %v1359 = vpop.f32.mrf.mxu0
      %v1360 = vadd.f32 %v1331, %v1359
      %1361 = vmatmul.bf16.gmra.mxu0 %v1307
      %v1362 = vpop.f32.mrf.mxu0
      %v1363 = vadd.f32 %v1334, %v1362
      %v1364 = vpop.f32.mrf.mxu0
      %v1365 = vadd.f32 %v1336, %v1364
      %1366 = vdwg.mxu0
      %v1367 = vmin.f32 %v1348, 20.0
      %v1368 = vmin.f32 %v1350, 20.0
      %v1369 = vmin.f32 %v1353, 20.0
      %v1370 = vmin.f32 %v1355, 20.0
      %v1371 = vmin.f32 %v1358, 20.0
      %v1372 = vmin.f32 %v1360, 20.0
      %v1373 = vmin.f32 %v1363, 20.0
      %v1374 = vmin.f32 %v1365, 20.0
      %v1375 = vmul.f32 %v1367, 1.442695
      %v1376 = vpow.pop %v1375
      %v1377 = vmul.f32 %v1368, 1.442695
      %v1378 = vpow.pop %v1377
      %v1379 = vmul.f32 %v1369, 1.442695
      %v1380 = vpow.pop %v1379
      %v1381 = vmul.f32 %v1370, 1.442695
      %v1382 = vpow.pop %v1381
      %v1383 = vmul.f32 %v1371, 1.442695
      %v1384 = vpow.pop %v1383
      %v1385 = vmul.f32 %v1372, 1.442695
      %v1386 = vpow.pop %v1385
      %v1387 = vmul.f32 %v1373, 1.442695
      %v1388 = vpow.pop %v1387
      %v1389 = vmul.f32 %v1374, 1.442695
      %v1390 = vpow.pop %v1389
      %v1391 = vadd.f32 %v1376, 2.0
      %v1392 = vadd.f32 %v1378, 2.0
      %v1393 = vadd.f32 %v1380, 2.0
      %v1394 = vadd.f32 %v1382, 2.0
      %v1395 = vadd.f32 %v1384, 2.0
      %v1396 = vadd.f32 %v1386, 2.0
      %v1397 = vadd.f32 %v1388, 2.0
      %v1398 = vadd.f32 %v1390, 2.0
      %v1399 = vmul.f32 %v1376, %v1391
      %v1400 = vmul.f32 %v1378, %v1392
      %v1401 = vmul.f32 %v1380, %v1393
      %v1402 = vmul.f32 %v1382, %v1394
      %v1403 = vmul.f32 %v1384, %v1395
      %v1404 = vmul.f32 %v1386, %v1396
      %v1405 = vmul.f32 %v1388, %v1397
      %v1406 = vmul.f32 %v1390, %v1398
      %v1407 = vadd.f32 %v1399, 2.0
      %v1408 = vadd.f32 %v1400, 2.0
      %v1409 = vadd.f32 %v1401, 2.0
      %v1410 = vadd.f32 %v1402, 2.0
      %v1411 = vadd.f32 %v1403, 2.0
      %v1412 = vadd.f32 %v1404, 2.0
      %v1413 = vadd.f32 %v1405, 2.0
      %v1414 = vadd.f32 %v1406, 2.0
      %v1415 = vrcp.pop %v1407
      %v1416 = vrcp.pop %v1408
      %v1417 = vrcp.pop %v1409
      %v1418 = vrcp.pop %v1410
      %v1419 = vrcp.pop %v1411
      %v1420 = vrcp.pop %v1412
      %v1421 = vrcp.pop %v1413
      %v1422 = vrcp.pop %v1414
      %v1423 = vmul.f32 %v1399, %v1415
      %v1424 = vmul.f32 %v1400, %v1416
      %v1425 = vmul.f32 %v1401, %v1417
      %v1426 = vmul.f32 %v1402, %v1418
      %v1427 = vmul.f32 %v1403, %v1419
      %v1428 = vmul.f32 %v1404, %v1420
      %v1429 = vmul.f32 %v1405, %v1421
      %v1430 = vmul.f32 %v1406, %v1422
      %v1431 = vmul.f32 %v1348, %v1423
      %v1432 = vmul.f32 %v1350, %v1424
      %v1433 = vmul.f32 %v1353, %v1425
      %v1434 = vmul.f32 %v1355, %v1426
      %v1435 = vmul.f32 %v1358, %v1427
      %v1436 = vmul.f32 %v1360, %v1428
      %v1437 = vmul.f32 %v1363, %v1429
      %v1438 = vmul.f32 %v1365, %v1430
      %v1439 = vld [vmem:[%s6] sm:$0xf]
      %v1440 = vld [vmem:[%s6 + $0x4] sm:$0xf]
      %v1441 = vld [vmem:[%s6 + $0x8] sm:$0xf]
      %v1442 = vld [vmem:[%s6 + $0xc] sm:$0xf]
      %v1443 = vld [vmem:[%s6 + $0x10] sm:$0xf]
      %v1444 = vld [vmem:[%s6 + $0x14] sm:$0xf]
      %v1445 = vld [vmem:[%s6 + $0x18] sm:$0xf]
      %v1446 = vld [vmem:[%s6 + $0x1c] sm:$0xf]
      %v1455 = vunpack.c.l.b16 %v1439
      %v1456 = vunpack.c.l.b16 %v1440
      %v1457 = vunpack.c.l.b16 %v1441
      %v1458 = vunpack.c.l.b16 %v1442
      %v1459 = vunpack.c.l.b16 %v1443
      %v1460 = vunpack.c.l.b16 %v1444
      %v1461 = vunpack.c.l.b16 %v1445
      %v1462 = vunpack.c.l.b16 %v1446
      %v1463 = vpack.c.b16 %v1456, %v1455
      %v1464 = vpack.c.b16 %v1458, %v1457
      %v1465 = vpack.c.b16 %v1460, %v1459
      %v1466 = vpack.c.b16 %v1462, %v1461
      %v1467 = vunpack.c.l.b16 %v716
      %v1468 = vunpack.c.l.b16 %v717
      %v1469 = vpack.c.b16 %v1468, %v1467
      %vm1471 = vcmask 130048
      %v1473 = vsel %vm1471, %v1463, 0
      %v1476 = vsel %vm1471, %v1464, 0
      %v1479 = vsel %vm1471, %v1465, 0
      %v1482 = vsel %vm1471, %v1466, 0
      %1484 = vmatpush.bf16.msra.mxu0 0
      %1485 = vmatpush.bf16.msra.mxu0 0
      %1486 = vmatpush.bf16.msra.mxu0 0
      %1487 = vmatpush.bf16.msra.mxu0 0
      %1488 = vmatpush.bf16.msra.mxu0 0
      %1489 = vmatpush.bf16.msra.mxu0 0
      %1490 = vmatpush.bf16.msra.mxu0 0
      %1491 = vmatpush.bf16.msra.mxu0 %v1469
      %1492 = vmatmul.bf16.gmra.mxu0 %v1473
      %v1493 = vpop.f32.mrf.mxu0
      %v1494 = vadd.f32 0.0, %v1493
      %v1495 = vpop.f32.mrf.mxu0
      %v1496 = vadd.f32 0.0, %v1495
      %1497 = vmatmul.bf16.gmra.mxu0 %v1476
      %v1498 = vpop.f32.mrf.mxu0
      %v1499 = vadd.f32 0.0, %v1498
      %v1500 = vpop.f32.mrf.mxu0
      %v1501 = vadd.f32 0.0, %v1500
      %1502 = vmatmul.bf16.gmra.mxu0 %v1479
      %v1503 = vpop.f32.mrf.mxu0
      %v1504 = vadd.f32 0.0, %v1503
      %v1505 = vpop.f32.mrf.mxu0
      %v1506 = vadd.f32 0.0, %v1505
      %1507 = vmatmul.bf16.gmra.mxu0 %v1482
      %v1508 = vpop.f32.mrf.mxu0
      %v1509 = vadd.f32 0.0, %v1508
      %v1510 = vpop.f32.mrf.mxu0
      %v1511 = vadd.f32 0.0, %v1510
      %1512 = vdwg.mxu0
      %v1513 = vadd.f32 %v1431, %v1494
      %v1514 = vadd.f32 %v1432, %v1496
      %v1515 = vadd.f32 %v1433, %v1499
      %v1516 = vadd.f32 %v1434, %v1501
      %v1517 = vadd.f32 %v1435, %v1504
      %v1518 = vadd.f32 %v1436, %v1506
      %v1519 = vadd.f32 %v1437, %v1509
      %v1520 = vadd.f32 %v1438, %v1511
      %v1521 = vpack.c.bf16 %v1513, %v1513
      %v1522 = vpack.c.bf16 %v1514, %v1514
      %v1523 = vpack.c.bf16 %v1515, %v1515
      %v1524 = vpack.c.bf16 %v1516, %v1516
      %v1525 = vpack.c.bf16 %v1517, %v1517
      %v1526 = vpack.c.bf16 %v1518, %v1518
      %v1527 = vpack.c.bf16 %v1519, %v1519
      %v1528 = vpack.c.bf16 %v1520, %v1520
      %1529 = vst [vmem:[#allocation2 + $0x20] sm:$0xf] %v1521
      %1530 = vst [vmem:[#allocation2 + $0x24] sm:$0xf] %v1522
      %1531 = vst [vmem:[#allocation2 + $0x28] sm:$0xf] %v1523
      %1532 = vst [vmem:[#allocation2 + $0x2c] sm:$0xf] %v1524
      %1533 = vst [vmem:[#allocation2 + $0x30] sm:$0xf] %v1525
      %1534 = vst [vmem:[#allocation2 + $0x34] sm:$0xf] %v1526
      %1535 = vst [vmem:[#allocation2 + $0x38] sm:$0xf] %v1527
      %1536 = vst [vmem:[#allocation2 + $0x3c] sm:$0xf] %v1528
      %1545 = vrot.lane.b32.xlu0 %v1521, 2
      %v1546 = vpop.permute.xlu0 %1545
      %1547 = vrot.lane.b32.xlu0 %v1522, 2
      %v1548 = vpop.permute.xlu0 %1547
      %1549 = vrot.lane.b32.xlu0 %v1523, 2
      %v1550 = vpop.permute.xlu0 %1549
      %1551 = vrot.lane.b32.xlu0 %v1524, 2
      %v1552 = vpop.permute.xlu0 %1551
      %1553 = vrot.lane.b32.xlu0 %v1525, 2
      %v1554 = vpop.permute.xlu0 %1553
      %1555 = vrot.lane.b32.xlu0 %v1526, 2
      %v1556 = vpop.permute.xlu0 %1555
      %1557 = vrot.lane.b32.xlu0 %v1527, 2
      %v1558 = vpop.permute.xlu0 %1557
      %1559 = vrot.lane.b32.xlu0 %v1528, 2
      %v1560 = vpop.permute.xlu0 %1559
      %vm1569 = vcmask 519184
      %1570 = vst.msk [vmem:[#allocation2] sm:$0xf] %vm1569, %v1546
      %1571 = vst.msk [vmem:[#allocation2 + $0x4] sm:$0xf] %vm1569, %v1548
      %1572 = vst.msk [vmem:[#allocation2 + $0x8] sm:$0xf] %vm1569, %v1550
      %1573 = vst.msk [vmem:[#allocation2 + $0xc] sm:$0xf] %vm1569, %v1552
      %1574 = vst.msk [vmem:[#allocation2 + $0x10] sm:$0xf] %vm1569, %v1554
      %1575 = vst.msk [vmem:[#allocation2 + $0x14] sm:$0xf] %vm1569, %v1556
      %1576 = vst.msk [vmem:[#allocation2 + $0x18] sm:$0xf] %vm1569, %v1558
      %1577 = vst.msk [vmem:[#allocation2 + $0x1c] sm:$0xf] %vm1569, %v1560
      %1578 = vrot.lane.b32.xlu0 %v1521, 126
      %v1579 = vpop.permute.xlu0 %1578
      %1580 = vrot.lane.b32.xlu0 %v1522, 126
      %v1581 = vpop.permute.xlu0 %1580
      %1582 = vrot.lane.b32.xlu0 %v1523, 126
      %v1583 = vpop.permute.xlu0 %1582
      %1584 = vrot.lane.b32.xlu0 %v1524, 126
      %v1585 = vpop.permute.xlu0 %1584
      %1586 = vrot.lane.b32.xlu0 %v1525, 126
      %v1587 = vpop.permute.xlu0 %1586
      %1588 = vrot.lane.b32.xlu0 %v1526, 126
      %v1589 = vpop.permute.xlu0 %1588
      %1590 = vrot.lane.b32.xlu0 %v1527, 126
      %v1591 = vpop.permute.xlu0 %1590
      %1592 = vrot.lane.b32.xlu0 %v1528, 126
      %v1593 = vpop.permute.xlu0 %1592
      %vm1602 = vcmask 502784
      %1603 = vst.msk [vmem:[#allocation2 + $0x40] sm:$0xf] %vm1602, %v1579
      %1604 = vst.msk [vmem:[#allocation2 + $0x44] sm:$0xf] %vm1602, %v1581
      %1605 = vst.msk [vmem:[#allocation2 + $0x48] sm:$0xf] %vm1602, %v1583
      %1606 = vst.msk [vmem:[#allocation2 + $0x4c] sm:$0xf] %vm1602, %v1585
      %1607 = vst.msk [vmem:[#allocation2 + $0x50] sm:$0xf] %vm1602, %v1587
      %1608 = vst.msk [vmem:[#allocation2 + $0x54] sm:$0xf] %vm1602, %v1589
      %1609 = vst.msk [vmem:[#allocation2 + $0x58] sm:$0xf] %vm1602, %v1591
      %1610 = vst.msk [vmem:[#allocation2 + $0x5c] sm:$0xf] %vm1602, %v1593
      %1611 = vst.msk [vmem:[#allocation2] sm:$0xf] %vm740, %v1579
      %1612 = vst.msk [vmem:[#allocation2 + $0x4] sm:$0xf] %vm740, %v1581
      %1613 = vst.msk [vmem:[#allocation2 + $0x8] sm:$0xf] %vm740, %v1583
      %1614 = vst.msk [vmem:[#allocation2 + $0xc] sm:$0xf] %vm740, %v1585
      %1615 = vst.msk [vmem:[#allocation2 + $0x10] sm:$0xf] %vm740, %v1587
      %1616 = vst.msk [vmem:[#allocation2 + $0x14] sm:$0xf] %vm740, %v1589
      %1617 = vst.msk [vmem:[#allocation2 + $0x18] sm:$0xf] %vm740, %v1591
      %1618 = vst.msk [vmem:[#allocation2 + $0x1c] sm:$0xf] %vm740, %v1593
      %vm1619 = vcmask 511472
      %1620 = vst.msk [vmem:[#allocation2 + $0x40] sm:$0xf] %vm1619, %v1521
      %1621 = vst.msk [vmem:[#allocation2 + $0x44] sm:$0xf] %vm1619, %v1522
      %1622 = vst.msk [vmem:[#allocation2 + $0x48] sm:$0xf] %vm1619, %v1523
      %1623 = vst.msk [vmem:[#allocation2 + $0x4c] sm:$0xf] %vm1619, %v1524
      %1624 = vst.msk [vmem:[#allocation2 + $0x50] sm:$0xf] %vm1619, %v1525
      %1625 = vst.msk [vmem:[#allocation2 + $0x54] sm:$0xf] %vm1619, %v1526
      %1626 = vst.msk [vmem:[#allocation2 + $0x58] sm:$0xf] %vm1619, %v1527
      %1627 = vst.msk [vmem:[#allocation2 + $0x5c] sm:$0xf] %vm1619, %v1528
      %vm1628 = vcmask 11272
      %1629 = vst.msk [vmem:[#allocation2] sm:$0xf] %vm1628, %v1521
      %1630 = vst.msk [vmem:[#allocation2 + $0x4] sm:$0xf] %vm1628, %v1522
      %1631 = vst.msk [vmem:[#allocation2 + $0x8] sm:$0xf] %vm1628, %v1523
      %1632 = vst.msk [vmem:[#allocation2 + $0xc] sm:$0xf] %vm1628, %v1524
      %1633 = vst.msk [vmem:[#allocation2 + $0x10] sm:$0xf] %vm1628, %v1525
      %1634 = vst.msk [vmem:[#allocation2 + $0x14] sm:$0xf] %vm1628, %v1526
      %1635 = vst.msk [vmem:[#allocation2 + $0x18] sm:$0xf] %vm1628, %v1527
      %1636 = vst.msk [vmem:[#allocation2 + $0x1c] sm:$0xf] %vm1628, %v1528
      %1637 = vst.msk [vmem:[#allocation2 + $0x40] sm:$0xf] %vm743, %v1546
      %1638 = vst.msk [vmem:[#allocation2 + $0x44] sm:$0xf] %vm743, %v1548
      %1639 = vst.msk [vmem:[#allocation2 + $0x48] sm:$0xf] %vm743, %v1550
      %1640 = vst.msk [vmem:[#allocation2 + $0x4c] sm:$0xf] %vm743, %v1552
      %1641 = vst.msk [vmem:[#allocation2 + $0x50] sm:$0xf] %vm743, %v1554
      %1642 = vst.msk [vmem:[#allocation2 + $0x54] sm:$0xf] %vm743, %v1556
      %1643 = vst.msk [vmem:[#allocation2 + $0x58] sm:$0xf] %vm743, %v1558
      %1644 = vst.msk [vmem:[#allocation2 + $0x5c] sm:$0xf] %vm743, %v1560
      %vm1645 = vcmask 1043984
      %1646 = vst.msk [vmem:[#allocation2] sm:$0xf] %vm1645, %v1546
      %1647 = vst.msk [vmem:[#allocation2 + $0x4] sm:$0xf] %vm1645, %v1548
      %1648 = vst.msk [vmem:[#allocation2 + $0x8] sm:$0xf] %vm1645, %v1550
      %1649 = vst.msk [vmem:[#allocation2 + $0xc] sm:$0xf] %vm1645, %v1552
      %1650 = vst.msk [vmem:[#allocation2 + $0x10] sm:$0xf] %vm1645, %v1554
      %1651 = vst.msk [vmem:[#allocation2 + $0x14] sm:$0xf] %vm1645, %v1556
      %1652 = vst.msk [vmem:[#allocation2 + $0x18] sm:$0xf] %vm1645, %v1558
      %1653 = vst.msk [vmem:[#allocation2 + $0x1c] sm:$0xf] %vm1645, %v1560
      %vm1654 = vcmask 1027584
      %1655 = vst.msk [vmem:[#allocation2 + $0x40] sm:$0xf] %vm1654, %v1579
      %1656 = vst.msk [vmem:[#allocation2 + $0x44] sm:$0xf] %vm1654, %v1581
      %1657 = vst.msk [vmem:[#allocation2 + $0x48] sm:$0xf] %vm1654, %v1583
      %1658 = vst.msk [vmem:[#allocation2 + $0x4c] sm:$0xf] %vm1654, %v1585
      %1659 = vst.msk [vmem:[#allocation2 + $0x50] sm:$0xf] %vm1654, %v1587
      %1660 = vst.msk [vmem:[#allocation2 + $0x54] sm:$0xf] %vm1654, %v1589
      %1661 = vst.msk [vmem:[#allocation2 + $0x58] sm:$0xf] %vm1654, %v1591
      %1662 = vst.msk [vmem:[#allocation2 + $0x5c] sm:$0xf] %vm1654, %v1593
      %1663 = vst.msk [vmem:[#allocation2] sm:$0xf] %vm752, %v1579
      %1664 = vst.msk [vmem:[#allocation2 + $0x4] sm:$0xf] %vm752, %v1581
      %1665 = vst.msk [vmem:[#allocation2 + $0x8] sm:$0xf] %vm752, %v1583
      %1666 = vst.msk [vmem:[#allocation2 + $0xc] sm:$0xf] %vm752, %v1585
      %1667 = vst.msk [vmem:[#allocation2 + $0x10] sm:$0xf] %vm752, %v1587
      %1668 = vst.msk [vmem:[#allocation2 + $0x14] sm:$0xf] %vm752, %v1589
      %1669 = vst.msk [vmem:[#allocation2 + $0x18] sm:$0xf] %vm752, %v1591
      %1670 = vst.msk [vmem:[#allocation2 + $0x1c] sm:$0xf] %vm752, %v1593
      %vm1671 = vcmask 1036272
      %1672 = vst.msk [vmem:[#allocation2 + $0x40] sm:$0xf] %vm1671, %v1521
      %1673 = vst.msk [vmem:[#allocation2 + $0x44] sm:$0xf] %vm1671, %v1522
      %1674 = vst.msk [vmem:[#allocation2 + $0x48] sm:$0xf] %vm1671, %v1523
      %1675 = vst.msk [vmem:[#allocation2 + $0x4c] sm:$0xf] %vm1671, %v1524
      %1676 = vst.msk [vmem:[#allocation2 + $0x50] sm:$0xf] %vm1671, %v1525
      %1677 = vst.msk [vmem:[#allocation2 + $0x54] sm:$0xf] %vm1671, %v1526
      %1678 = vst.msk [vmem:[#allocation2 + $0x58] sm:$0xf] %vm1671, %v1527
      %1679 = vst.msk [vmem:[#allocation2 + $0x5c] sm:$0xf] %vm1671, %v1528
      %vm1680 = vcmask 536072
      %1681 = vst.msk [vmem:[#allocation2] sm:$0xf] %vm1680, %v1521
      %1682 = vst.msk [vmem:[#allocation2 + $0x4] sm:$0xf] %vm1680, %v1522
      %1683 = vst.msk [vmem:[#allocation2 + $0x8] sm:$0xf] %vm1680, %v1523
      %1684 = vst.msk [vmem:[#allocation2 + $0xc] sm:$0xf] %vm1680, %v1524
      %1685 = vst.msk [vmem:[#allocation2 + $0x10] sm:$0xf] %vm1680, %v1525
      %1686 = vst.msk [vmem:[#allocation2 + $0x14] sm:$0xf] %vm1680, %v1526
      %1687 = vst.msk [vmem:[#allocation2 + $0x18] sm:$0xf] %vm1680, %v1527
      %1688 = vst.msk [vmem:[#allocation2 + $0x1c] sm:$0xf] %vm1680, %v1528
      %1689 = vst.msk [vmem:[#allocation2 + $0x40] sm:$0xf] %vm755, %v1546
      %1690 = vst.msk [vmem:[#allocation2 + $0x44] sm:$0xf] %vm755, %v1548
      %1691 = vst.msk [vmem:[#allocation2 + $0x48] sm:$0xf] %vm755, %v1550
      %1692 = vst.msk [vmem:[#allocation2 + $0x4c] sm:$0xf] %vm755, %v1552
      %1693 = vst.msk [vmem:[#allocation2 + $0x50] sm:$0xf] %vm755, %v1554
      %1694 = vst.msk [vmem:[#allocation2 + $0x54] sm:$0xf] %vm755, %v1556
      %1695 = vst.msk [vmem:[#allocation2 + $0x58] sm:$0xf] %vm755, %v1558
      %1696 = vst.msk [vmem:[#allocation2 + $0x5c] sm:$0xf] %vm755, %v1560
      %v1697 = vld [vmem:[%s7] sm:$0xff]
      %v1698 = vld [vmem:[%s7 + $0x8] sm:$0xff]
      %v1699 = vld [vmem:[%s7 + $0x10] sm:$0xff]
      %v1700 = vld [vmem:[%s7 + $0x18] sm:$0xff]
      %v1701 = vld [vmem:[%s7 + $0x20] sm:$0xff]
      %v1702 = vld [vmem:[%s7 + $0x28] sm:$0xff]
      %v1703 = vld [vmem:[%s7 + $0x30] sm:$0xff]
      %v1704 = vld [vmem:[%s7 + $0x38] sm:$0xff]
      %v1705 = vld [vmem:[#allocation2] sm:$0xf]
      %v1706 = vld [vmem:[#allocation2 + $0x4] sm:$0xf]
      %v1707 = vld [vmem:[#allocation2 + $0x8] sm:$0xf]
      %v1708 = vld [vmem:[#allocation2 + $0xc] sm:$0xf]
      %v1709 = vld [vmem:[#allocation2 + $0x10] sm:$0xf]
      %v1710 = vld [vmem:[#allocation2 + $0x14] sm:$0xf]
      %v1711 = vld [vmem:[#allocation2 + $0x18] sm:$0xf]
      %v1712 = vld [vmem:[#allocation2 + $0x1c] sm:$0xf]
      %v1713 = vld [vmem:[#allocation2 + $0x20] sm:$0xf]
      %v1714 = vld [vmem:[#allocation2 + $0x24] sm:$0xf]
      %v1715 = vld [vmem:[#allocation2 + $0x28] sm:$0xf]
      %v1716 = vld [vmem:[#allocation2 + $0x2c] sm:$0xf]
      %v1717 = vld [vmem:[#allocation2 + $0x30] sm:$0xf]
      %v1718 = vld [vmem:[#allocation2 + $0x34] sm:$0xf]
      %v1719 = vld [vmem:[#allocation2 + $0x38] sm:$0xf]
      %v1720 = vld [vmem:[#allocation2 + $0x3c] sm:$0xf]
      %v1721 = vld [vmem:[#allocation2 + $0x40] sm:$0xf]
      %v1722 = vld [vmem:[#allocation2 + $0x44] sm:$0xf]
      %v1723 = vld [vmem:[#allocation2 + $0x48] sm:$0xf]
      %v1724 = vld [vmem:[#allocation2 + $0x4c] sm:$0xf]
      %v1725 = vld [vmem:[#allocation2 + $0x50] sm:$0xf]
      %v1726 = vld [vmem:[#allocation2 + $0x54] sm:$0xf]
      %v1727 = vld [vmem:[#allocation2 + $0x58] sm:$0xf]
      %v1728 = vld [vmem:[#allocation2 + $0x5c] sm:$0xf]
      %v1737 = vunpack.c.l.b16 %v1697
      %v1738 = vunpack.c.h.b16 %v1697
      %v1739 = vunpack.c.l.b16 %v1698
      %v1740 = vunpack.c.h.b16 %v1698
      %v1741 = vunpack.c.l.b16 %v1699
      %v1742 = vunpack.c.h.b16 %v1699
      %v1743 = vunpack.c.l.b16 %v1700
      %v1744 = vunpack.c.h.b16 %v1700
      %v1745 = vunpack.c.l.b16 %v1701
      %v1746 = vunpack.c.h.b16 %v1701
      %v1747 = vunpack.c.l.b16 %v1702
      %v1748 = vunpack.c.h.b16 %v1702
      %v1749 = vunpack.c.l.b16 %v1703
      %v1750 = vunpack.c.h.b16 %v1703
      %v1751 = vunpack.c.l.b16 %v1704
      %v1752 = vunpack.c.h.b16 %v1704
      %v1753 = vpack.c.b16 %v1739, %v1737
      %v1754 = vpack.c.b16 %v1740, %v1738
      %v1755 = vpack.c.b16 %v1743, %v1741
      %v1756 = vpack.c.b16 %v1744, %v1742
      %v1757 = vpack.c.b16 %v1747, %v1745
      %v1758 = vpack.c.b16 %v1748, %v1746
      %v1759 = vpack.c.b16 %v1751, %v1749
      %v1760 = vpack.c.b16 %v1752, %v1750
      %v1789 = vunpack.c.l.b16 %v1705
      %v1790 = vunpack.c.l.b16 %v1706
      %v1791 = vunpack.c.l.b16 %v1707
      %v1792 = vunpack.c.l.b16 %v1708
      %v1793 = vunpack.c.l.b16 %v1709
      %v1794 = vunpack.c.l.b16 %v1710
      %v1795 = vunpack.c.l.b16 %v1711
      %v1796 = vunpack.c.l.b16 %v1712
      %v1797 = vunpack.c.l.b16 %v1713
      %v1798 = vunpack.c.l.b16 %v1714
      %v1799 = vunpack.c.l.b16 %v1715
      %v1800 = vunpack.c.l.b16 %v1716
      %v1801 = vunpack.c.l.b16 %v1717
      %v1802 = vunpack.c.l.b16 %v1718
      %v1803 = vunpack.c.l.b16 %v1719
      %v1804 = vunpack.c.l.b16 %v1720
      %v1805 = vunpack.c.l.b16 %v1721
      %v1806 = vunpack.c.l.b16 %v1722
      %v1807 = vunpack.c.l.b16 %v1723
      %v1808 = vunpack.c.l.b16 %v1724
      %v1809 = vunpack.c.l.b16 %v1725
      %v1810 = vunpack.c.l.b16 %v1726
      %v1811 = vunpack.c.l.b16 %v1727
      %v1812 = vunpack.c.l.b16 %v1728
      %v1813 = vpack.c.b16 %v1790, %v1789
      %v1814 = vpack.c.b16 %v1792, %v1791
      %v1815 = vpack.c.b16 %v1794, %v1793
      %v1816 = vpack.c.b16 %v1796, %v1795
      %v1817 = vpack.c.b16 %v1798, %v1797
      %v1818 = vpack.c.b16 %v1800, %v1799
      %v1819 = vpack.c.b16 %v1802, %v1801
      %v1820 = vpack.c.b16 %v1804, %v1803
      %v1821 = vpack.c.b16 %v1806, %v1805
      %v1822 = vpack.c.b16 %v1808, %v1807
      %v1823 = vpack.c.b16 %v1810, %v1809
      %v1824 = vpack.c.b16 %v1812, %v1811
      %v1838 = vsel %vm1296, %v1754, 0
      %v1841 = vsel %vm1296, %v1756, 0
      %v1844 = vsel %vm1296, %v1758, 0
      %v1847 = vsel %vm1296, %v1760, 0
      %1849 = vmatpush.bf16.msra.mxu0 %v1820
      %1850 = vmatpush.bf16.msra.mxu0 %v1819
      %1851 = vmatpush.bf16.msra.mxu0 %v1818
      %1852 = vmatpush.bf16.msra.mxu0 %v1817
      %1853 = vmatpush.bf16.msra.mxu0 %v1816
      %1854 = vmatpush.bf16.msra.mxu0 %v1815
      %1855 = vmatpush.bf16.msra.mxu0 %v1814
      %1856 = vmatpush.bf16.msra.mxu0 %v1813
      %1857 = vmatmul.bf16.gmra.mxu0 %v1753
      %v1858 = vpop.f32.mrf.mxu0
      %v1859 = vadd.f32 0.0, %v1858
      %v1860 = vpop.f32.mrf.mxu0
      %v1861 = vadd.f32 0.0, %v1860
      %1862 = vmatmul.bf16.gmra.mxu0 %v1755
      %v1863 = vpop.f32.mrf.mxu0
      %v1864 = vadd.f32 0.0, %v1863
      %v1865 = vpop.f32.mrf.mxu0
      %v1866 = vadd.f32 0.0, %v1865
      %1867 = vmatmul.bf16.gmra.mxu0 %v1757
      %v1868 = vpop.f32.mrf.mxu0
      %v1869 = vadd.f32 0.0, %v1868
      %v1870 = vpop.f32.mrf.mxu0
      %v1871 = vadd.f32 0.0, %v1870
      %1872 = vmatmul.bf16.gmra.mxu0 %v1759
      %v1873 = vpop.f32.mrf.mxu0
      %v1874 = vadd.f32 0.0, %v1873
      %v1875 = vpop.f32.mrf.mxu0
      %v1876 = vadd.f32 0.0, %v1875
      %1877 = vdwg.mxu0
      %1878 = vmatpush.bf16.msra.mxu0 0
      %1879 = vmatpush.bf16.msra.mxu0 0
      %1880 = vmatpush.bf16.msra.mxu0 0
      %1881 = vmatpush.bf16.msra.mxu0 0
      %1882 = vmatpush.bf16.msra.mxu0 %v1824
      %1883 = vmatpush.bf16.msra.mxu0 %v1823
      %1884 = vmatpush.bf16.msra.mxu0 %v1822
      %1885 = vmatpush.bf16.msra.mxu0 %v1821
      %1886 = vmatmul.bf16.gmra.mxu0 %v1838
      %v1887 = vpop.f32.mrf.mxu0
      %v1888 = vadd.f32 %v1859, %v1887
      %v1889 = vpop.f32.mrf.mxu0
      %v1890 = vadd.f32 %v1861, %v1889
      %1891 = vmatmul.bf16.gmra.mxu0 %v1841
      %v1892 = vpop.f32.mrf.mxu0
      %v1893 = vadd.f32 %v1864, %v1892
      %v1894 = vpop.f32.mrf.mxu0
      %v1895 = vadd.f32 %v1866, %v1894
      %1896 = vmatmul.bf16.gmra.mxu0 %v1844
      %v1897 = vpop.f32.mrf.mxu0
      %v1898 = vadd.f32 %v1869, %v1897
      %v1899 = vpop.f32.mrf.mxu0
      %v1900 = vadd.f32 %v1871, %v1899
      %1901 = vmatmul.bf16.gmra.mxu0 %v1847
      %v1902 = vpop.f32.mrf.mxu0
      %v1903 = vadd.f32 %v1874, %v1902
      %v1904 = vpop.f32.mrf.mxu0
      %v1905 = vadd.f32 %v1876, %v1904
      %1906 = vdwg.mxu0
      %v1907 = vmin.f32 %v1888, 20.0
      %v1908 = vmin.f32 %v1890, 20.0
      %v1909 = vmin.f32 %v1893, 20.0
      %v1910 = vmin.f32 %v1895, 20.0
      %v1911 = vmin.f32 %v1898, 20.0
      %v1912 = vmin.f32 %v1900, 20.0
      %v1913 = vmin.f32 %v1903, 20.0
      %v1914 = vmin.f32 %v1905, 20.0
      %v1915 = vmul.f32 %v1907, 1.442695
      %v1916 = vpow.pop %v1915
      %v1917 = vmul.f32 %v1908, 1.442695
      %v1918 = vpow.pop %v1917
      %v1919 = vmul.f32 %v1909, 1.442695
      %v1920 = vpow.pop %v1919
      %v1921 = vmul.f32 %v1910, 1.442695
      %v1922 = vpow.pop %v1921
      %v1923 = vmul.f32 %v1911, 1.442695
      %v1924 = vpow.pop %v1923
      %v1925 = vmul.f32 %v1912, 1.442695
      %v1926 = vpow.pop %v1925
      %v1927 = vmul.f32 %v1913, 1.442695
      %v1928 = vpow.pop %v1927
      %v1929 = vmul.f32 %v1914, 1.442695
      %v1930 = vpow.pop %v1929
      %v1931 = vadd.f32 %v1916, 2.0
      %v1932 = vadd.f32 %v1918, 2.0
      %v1933 = vadd.f32 %v1920, 2.0
      %v1934 = vadd.f32 %v1922, 2.0
      %v1935 = vadd.f32 %v1924, 2.0
      %v1936 = vadd.f32 %v1926, 2.0
      %v1937 = vadd.f32 %v1928, 2.0
      %v1938 = vadd.f32 %v1930, 2.0
      %v1939 = vmul.f32 %v1916, %v1931
      %v1940 = vmul.f32 %v1918, %v1932
      %v1941 = vmul.f32 %v1920, %v1933
      %v1942 = vmul.f32 %v1922, %v1934
      %v1943 = vmul.f32 %v1924, %v1935
      %v1944 = vmul.f32 %v1926, %v1936
      %v1945 = vmul.f32 %v1928, %v1937
      %v1946 = vmul.f32 %v1930, %v1938
      %v1947 = vadd.f32 %v1939, 2.0
      %v1948 = vadd.f32 %v1940, 2.0
      %v1949 = vadd.f32 %v1941, 2.0
      %v1950 = vadd.f32 %v1942, 2.0
      %v1951 = vadd.f32 %v1943, 2.0
      %v1952 = vadd.f32 %v1944, 2.0
      %v1953 = vadd.f32 %v1945, 2.0
      %v1954 = vadd.f32 %v1946, 2.0
      %v1955 = vrcp.pop %v1947
      %v1956 = vrcp.pop %v1948
      %v1957 = vrcp.pop %v1949
      %v1958 = vrcp.pop %v1950
      %v1959 = vrcp.pop %v1951
      %v1960 = vrcp.pop %v1952
      %v1961 = vrcp.pop %v1953
      %v1962 = vrcp.pop %v1954
      %v1963 = vmul.f32 %v1939, %v1955
      %v1964 = vmul.f32 %v1940, %v1956
      %v1965 = vmul.f32 %v1941, %v1957
      %v1966 = vmul.f32 %v1942, %v1958
      %v1967 = vmul.f32 %v1943, %v1959
      %v1968 = vmul.f32 %v1944, %v1960
      %v1969 = vmul.f32 %v1945, %v1961
      %v1970 = vmul.f32 %v1946, %v1962
      %v1971 = vmul.f32 %v1888, %v1963
      %v1972 = vmul.f32 %v1890, %v1964
      %v1973 = vmul.f32 %v1893, %v1965
      %v1974 = vmul.f32 %v1895, %v1966
      %v1975 = vmul.f32 %v1898, %v1967
      %v1976 = vmul.f32 %v1900, %v1968
      %v1977 = vmul.f32 %v1903, %v1969
      %v1978 = vmul.f32 %v1905, %v1970
      %v1979 = vpack.c.bf16 %v1971, %v1971
      %v1980 = vpack.c.bf16 %v1972, %v1972
      %v1981 = vpack.c.bf16 %v1973, %v1973
      %v1982 = vpack.c.bf16 %v1974, %v1974
      %v1983 = vpack.c.bf16 %v1975, %v1975
      %v1984 = vpack.c.bf16 %v1976, %v1976
      %v1985 = vpack.c.bf16 %v1977, %v1977
      %v1986 = vpack.c.bf16 %v1978, %v1978
      %1987 = vst [vmem:[#allocation2 + $0x20] sm:$0xf] %v1979
      %1988 = vst [vmem:[#allocation2 + $0x24] sm:$0xf] %v1980
      %1989 = vst [vmem:[#allocation2 + $0x28] sm:$0xf] %v1981
      %1990 = vst [vmem:[#allocation2 + $0x2c] sm:$0xf] %v1982
      %1991 = vst [vmem:[#allocation2 + $0x30] sm:$0xf] %v1983
      %1992 = vst [vmem:[#allocation2 + $0x34] sm:$0xf] %v1984
      %1993 = vst [vmem:[#allocation2 + $0x38] sm:$0xf] %v1985
      %1994 = vst [vmem:[#allocation2 + $0x3c] sm:$0xf] %v1986
      %2003 = vrot.lane.b32.xlu0 %v1979, 2
      %v2004 = vpop.permute.xlu0 %2003
      %2005 = vrot.lane.b32.xlu0 %v1980, 2
      %v2006 = vpop.permute.xlu0 %2005
      %2007 = vrot.lane.b32.xlu0 %v1981, 2
      %v2008 = vpop.permute.xlu0 %2007
      %2009 = vrot.lane.b32.xlu0 %v1982, 2
      %v2010 = vpop.permute.xlu0 %2009
      %2011 = vrot.lane.b32.xlu0 %v1983, 2
      %v2012 = vpop.permute.xlu0 %2011
      %2013 = vrot.lane.b32.xlu0 %v1984, 2
      %v2014 = vpop.permute.xlu0 %2013
      %2015 = vrot.lane.b32.xlu0 %v1985, 2
      %v2016 = vpop.permute.xlu0 %2015
      %2017 = vrot.lane.b32.xlu0 %v1986, 2
      %v2018 = vpop.permute.xlu0 %2017
      %2027 = vst.msk [vmem:[#allocation2] sm:$0xf] %vm1569, %v2004
      %2028 = vst.msk [vmem:[#allocation2 + $0x4] sm:$0xf] %vm1569, %v2006
      %2029 = vst.msk [vmem:[#allocation2 + $0x8] sm:$0xf] %vm1569, %v2008
      %2030 = vst.msk [vmem:[#allocation2 + $0xc] sm:$0xf] %vm1569, %v2010
      %2031 = vst.msk [vmem:[#allocation2 + $0x10] sm:$0xf] %vm1569, %v2012
      %2032 = vst.msk [vmem:[#allocation2 + $0x14] sm:$0xf] %vm1569, %v2014
      %2033 = vst.msk [vmem:[#allocation2 + $0x18] sm:$0xf] %vm1569, %v2016
      %2034 = vst.msk [vmem:[#allocation2 + $0x1c] sm:$0xf] %vm1569, %v2018
      %2035 = vrot.lane.b32.xlu0 %v1979, 126
      %v2036 = vpop.permute.xlu0 %2035
      %2037 = vrot.lane.b32.xlu0 %v1980, 126
      %v2038 = vpop.permute.xlu0 %2037
      %2039 = vrot.lane.b32.xlu0 %v1981, 126
      %v2040 = vpop.permute.xlu0 %2039
      %2041 = vrot.lane.b32.xlu0 %v1982, 126
      %v2042 = vpop.permute.xlu0 %2041
      %2043 = vrot.lane.b32.xlu0 %v1983, 126
      %v2044 = vpop.permute.xlu0 %2043
      %2045 = vrot.lane.b32.xlu0 %v1984, 126
      %v2046 = vpop.permute.xlu0 %2045
      %2047 = vrot.lane.b32.xlu0 %v1985, 126
      %v2048 = vpop.permute.xlu0 %2047
      %2049 = vrot.lane.b32.xlu0 %v1986, 126
      %v2050 = vpop.permute.xlu0 %2049
      %2059 = vst.msk [vmem:[#allocation2 + $0x40] sm:$0xf] %vm1602, %v2036
      %2060 = vst.msk [vmem:[#allocation2 + $0x44] sm:$0xf] %vm1602, %v2038
      %2061 = vst.msk [vmem:[#allocation2 + $0x48] sm:$0xf] %vm1602, %v2040
      %2062 = vst.msk [vmem:[#allocation2 + $0x4c] sm:$0xf] %vm1602, %v2042
      %2063 = vst.msk [vmem:[#allocation2 + $0x50] sm:$0xf] %vm1602, %v2044
      %2064 = vst.msk [vmem:[#allocation2 + $0x54] sm:$0xf] %vm1602, %v2046
      %2065 = vst.msk [vmem:[#allocation2 + $0x58] sm:$0xf] %vm1602, %v2048
      %2066 = vst.msk [vmem:[#allocation2 + $0x5c] sm:$0xf] %vm1602, %v2050
      %2067 = vst.msk [vmem:[#allocation2] sm:$0xf] %vm740, %v2036
      %2068 = vst.msk [vmem:[#allocation2 + $0x4] sm:$0xf] %vm740, %v2038
      %2069 = vst.msk [vmem:[#allocation2 + $0x8] sm:$0xf] %vm740, %v2040
      %2070 = vst.msk [vmem:[#allocation2 + $0xc] sm:$0xf] %vm740, %v2042
      %2071 = vst.msk [vmem:[#allocation2 + $0x10] sm:$0xf] %vm740, %v2044
      %2072 = vst.msk [vmem:[#allocation2 + $0x14] sm:$0xf] %vm740, %v2046
      %2073 = vst.msk [vmem:[#allocation2 + $0x18] sm:$0xf] %vm740, %v2048
      %2074 = vst.msk [vmem:[#allocation2 + $0x1c] sm:$0xf] %vm740, %v2050
      %2075 = vst.msk [vmem:[#allocation2 + $0x40] sm:$0xf] %vm1619, %v1979
      %2076 = vst.msk [vmem:[#allocation2 + $0x44] sm:$0xf] %vm1619, %v1980
      %2077 = vst.msk [vmem:[#allocation2 + $0x48] sm:$0xf] %vm1619, %v1981
      %2078 = vst.msk [vmem:[#allocation2 + $0x4c] sm:$0xf] %vm1619, %v1982
      %2079 = vst.msk [vmem:[#allocation2 + $0x50] sm:$0xf] %vm1619, %v1983
      %2080 = vst.msk [vmem:[#allocation2 + $0x54] sm:$0xf] %vm1619, %v1984
      %2081 = vst.msk [vmem:[#allocation2 + $0x58] sm:$0xf] %vm1619, %v1985
      %2082 = vst.msk [vmem:[#allocation2 + $0x5c] sm:$0xf] %vm1619, %v1986
      %2083 = vst.msk [vmem:[#allocation2] sm:$0xf] %vm1628, %v1979
      %2084 = vst.msk [vmem:[#allocation2 + $0x4] sm:$0xf] %vm1628, %v1980
      %2085 = vst.msk [vmem:[#allocation2 + $0x8] sm:$0xf] %vm1628, %v1981
      %2086 = vst.msk [vmem:[#allocation2 + $0xc] sm:$0xf] %vm1628, %v1982
      %2087 = vst.msk [vmem:[#allocation2 + $0x10] sm:$0xf] %vm1628, %v1983
      %2088 = vst.msk [vmem:[#allocation2 + $0x14] sm:$0xf] %vm1628, %v1984
      %2089 = vst.msk [vmem:[#allocation2 + $0x18] sm:$0xf] %vm1628, %v1985
      %2090 = vst.msk [vmem:[#allocation2 + $0x1c] sm:$0xf] %vm1628, %v1986
      %2091 = vst.msk [vmem:[#allocation2 + $0x40] sm:$0xf] %vm743, %v2004
      %2092 = vst.msk [vmem:[#allocation2 + $0x44] sm:$0xf] %vm743, %v2006
      %2093 = vst.msk [vmem:[#allocation2 + $0x48] sm:$0xf] %vm743, %v2008
      %2094 = vst.msk [vmem:[#allocation2 + $0x4c] sm:$0xf] %vm743, %v2010
      %2095 = vst.msk [vmem:[#allocation2 + $0x50] sm:$0xf] %vm743, %v2012
      %2096 = vst.msk [vmem:[#allocation2 + $0x54] sm:$0xf] %vm743, %v2014
      %2097 = vst.msk [vmem:[#allocation2 + $0x58] sm:$0xf] %vm743, %v2016
      %2098 = vst.msk [vmem:[#allocation2 + $0x5c] sm:$0xf] %vm743, %v2018
      %2099 = vst.msk [vmem:[#allocation2] sm:$0xf] %vm1645, %v2004
      %2100 = vst.msk [vmem:[#allocation2 + $0x4] sm:$0xf] %vm1645, %v2006
      %2101 = vst.msk [vmem:[#allocation2 + $0x8] sm:$0xf] %vm1645, %v2008
      %2102 = vst.msk [vmem:[#allocation2 + $0xc] sm:$0xf] %vm1645, %v2010
      %2103 = vst.msk [vmem:[#allocation2 + $0x10] sm:$0xf] %vm1645, %v2012
      %2104 = vst.msk [vmem:[#allocation2 + $0x14] sm:$0xf] %vm1645, %v2014
      %2105 = vst.msk [vmem:[#allocation2 + $0x18] sm:$0xf] %vm1645, %v2016
      %2106 = vst.msk [vmem:[#allocation2 + $0x1c] sm:$0xf] %vm1645, %v2018
      %2107 = vst.msk [vmem:[#allocation2 + $0x40] sm:$0xf] %vm1654, %v2036
      %2108 = vst.msk [vmem:[#allocation2 + $0x44] sm:$0xf] %vm1654, %v2038
      %2109 = vst.msk [vmem:[#allocation2 + $0x48] sm:$0xf] %vm1654, %v2040
      %2110 = vst.msk [vmem:[#allocation2 + $0x4c] sm:$0xf] %vm1654, %v2042
      %2111 = vst.msk [vmem:[#allocation2 + $0x50] sm:$0xf] %vm1654, %v2044
      %2112 = vst.msk [vmem:[#allocation2 + $0x54] sm:$0xf] %vm1654, %v2046
      %2113 = vst.msk [vmem:[#allocation2 + $0x58] sm:$0xf] %vm1654, %v2048
      %2114 = vst.msk [vmem:[#allocation2 + $0x5c] sm:$0xf] %vm1654, %v2050
      %2115 = vst.msk [vmem:[#allocation2] sm:$0xf] %vm752, %v2036
      %2116 = vst.msk [vmem:[#allocation2 + $0x4] sm:$0xf] %vm752, %v2038
      %2117 = vst.msk [vmem:[#allocation2 + $0x8] sm:$0xf] %vm752, %v2040
      %2118 = vst.msk [vmem:[#allocation2 + $0xc] sm:$0xf] %vm752, %v2042
      %2119 = vst.msk [vmem:[#allocation2 + $0x10] sm:$0xf] %vm752, %v2044
      %2120 = vst.msk [vmem:[#allocation2 + $0x14] sm:$0xf] %vm752, %v2046
      %2121 = vst.msk [vmem:[#allocation2 + $0x18] sm:$0xf] %vm752, %v2048
      %2122 = vst.msk [vmem:[#allocation2 + $0x1c] sm:$0xf] %vm752, %v2050
      %2123 = vst.msk [vmem:[#allocation2 + $0x40] sm:$0xf] %vm1671, %v1979
      %2124 = vst.msk [vmem:[#allocation2 + $0x44] sm:$0xf] %vm1671, %v1980
      %2125 = vst.msk [vmem:[#allocation2 + $0x48] sm:$0xf] %vm1671, %v1981
      %2126 = vst.msk [vmem:[#allocation2 + $0x4c] sm:$0xf] %vm1671, %v1982
      %2127 = vst.msk [vmem:[#allocation2 + $0x50] sm:$0xf] %vm1671, %v1983
      %2128 = vst.msk [vmem:[#allocation2 + $0x54] sm:$0xf] %vm1671, %v1984
      %2129 = vst.msk [vmem:[#allocation2 + $0x58] sm:$0xf] %vm1671, %v1985
      %2130 = vst.msk [vmem:[#allocation2 + $0x5c] sm:$0xf] %vm1671, %v1986
      %2131 = vst.msk [vmem:[#allocation2] sm:$0xf] %vm1680, %v1979
      %2132 = vst.msk [vmem:[#allocation2 + $0x4] sm:$0xf] %vm1680, %v1980
      %2133 = vst.msk [vmem:[#allocation2 + $0x8] sm:$0xf] %vm1680, %v1981
      %2134 = vst.msk [vmem:[#allocation2 + $0xc] sm:$0xf] %vm1680, %v1982
      %2135 = vst.msk [vmem:[#allocation2 + $0x10] sm:$0xf] %vm1680, %v1983
      %2136 = vst.msk [vmem:[#allocation2 + $0x14] sm:$0xf] %vm1680, %v1984
      %2137 = vst.msk [vmem:[#allocation2 + $0x18] sm:$0xf] %vm1680, %v1985
      %2138 = vst.msk [vmem:[#allocation2 + $0x1c] sm:$0xf] %vm1680, %v1986
      %2139 = vst.msk [vmem:[#allocation2 + $0x40] sm:$0xf] %vm755, %v2004
      %2140 = vst.msk [vmem:[#allocation2 + $0x44] sm:$0xf] %vm755, %v2006
      %2141 = vst.msk [vmem:[#allocation2 + $0x48] sm:$0xf] %vm755, %v2008
      %2142 = vst.msk [vmem:[#allocation2 + $0x4c] sm:$0xf] %vm755, %v2010
      %2143 = vst.msk [vmem:[#allocation2 + $0x50] sm:$0xf] %vm755, %v2012
      %2144 = vst.msk [vmem:[#allocation2 + $0x54] sm:$0xf] %vm755, %v2014
      %2145 = vst.msk [vmem:[#allocation2 + $0x58] sm:$0xf] %vm755, %v2016
      %2146 = vst.msk [vmem:[#allocation2 + $0x5c] sm:$0xf] %vm755, %v2018
      %v2147 = vld [vmem:[%s8] sm:$0xff]
      %v2148 = vld [vmem:[%s8 + $0x8] sm:$0xff]
      %v2149 = vld [vmem:[%s8 + $0x10] sm:$0xff]
      %v2150 = vld [vmem:[%s8 + $0x18] sm:$0xff]
      %v2151 = vld [vmem:[%s8 + $0x20] sm:$0xff]
      %v2152 = vld [vmem:[%s8 + $0x28] sm:$0xff]
      %v2153 = vld [vmem:[%s8 + $0x30] sm:$0xff]
      %v2154 = vld [vmem:[%s8 + $0x38] sm:$0xff]
      %v2155 = vld [vmem:[#allocation2] sm:$0xf]
      %v2156 = vld [vmem:[#allocation2 + $0x4] sm:$0xf]
      %v2157 = vld [vmem:[#allocation2 + $0x8] sm:$0xf]
      %v2158 = vld [vmem:[#allocation2 + $0xc] sm:$0xf]
      %v2159 = vld [vmem:[#allocation2 + $0x10] sm:$0xf]
      %v2160 = vld [vmem:[#allocation2 + $0x14] sm:$0xf]
      %v2161 = vld [vmem:[#allocation2 + $0x18] sm:$0xf]
      %v2162 = vld [vmem:[#allocation2 + $0x1c] sm:$0xf]
      %v2163 = vld [vmem:[#allocation2 + $0x20] sm:$0xf]
      %v2164 = vld [vmem:[#allocation2 + $0x24] sm:$0xf]
      %v2165 = vld [vmem:[#allocation2 + $0x28] sm:$0xf]
      %v2166 = vld [vmem:[#allocation2 + $0x2c] sm:$0xf]
      %v2167 = vld [vmem:[#allocation2 + $0x30] sm:$0xf]
      %v2168 = vld [vmem:[#allocation2 + $0x34] sm:$0xf]
      %v2169 = vld [vmem:[#allocation2 + $0x38] sm:$0xf]
      %v2170 = vld [vmem:[#allocation2 + $0x3c] sm:$0xf]
      %v2171 = vld [vmem:[#allocation2 + $0x40] sm:$0xf]
      %v2172 = vld [vmem:[#allocation2 + $0x44] sm:$0xf]
      %v2173 = vld [vmem:[#allocation2 + $0x48] sm:$0xf]
      %v2174 = vld [vmem:[#allocation2 + $0x4c] sm:$0xf]
      %v2175 = vld [vmem:[#allocation2 + $0x50] sm:$0xf]
      %v2176 = vld [vmem:[#allocation2 + $0x54] sm:$0xf]
      %v2177 = vld [vmem:[#allocation2 + $0x58] sm:$0xf]
      %v2178 = vld [vmem:[#allocation2 + $0x5c] sm:$0xf]
      %v2187 = vunpack.c.l.b16 %v2147
      %v2188 = vunpack.c.h.b16 %v2147
      %v2189 = vunpack.c.l.b16 %v2148
      %v2190 = vunpack.c.h.b16 %v2148
      %v2191 = vunpack.c.l.b16 %v2149
      %v2192 = vunpack.c.h.b16 %v2149
      %v2193 = vunpack.c.l.b16 %v2150
      %v2194 = vunpack.c.h.b16 %v2150
      %v2195 = vunpack.c.l.b16 %v2151
      %v2196 = vunpack.c.h.b16 %v2151
      %v2197 = vunpack.c.l.b16 %v2152
      %v2198 = vunpack.c.h.b16 %v2152
      %v2199 = vunpack.c.l.b16 %v2153
      %v2200 = vunpack.c.h.b16 %v2153
      %v2201 = vunpack.c.l.b16 %v2154
      %v2202 = vunpack.c.h.b16 %v2154
      %v2203 = vpack.c.b16 %v2189, %v2187
      %v2204 = vpack.c.b16 %v2190, %v2188
      %v2205 = vpack.c.b16 %v2193, %v2191
      %v2206 = vpack.c.b16 %v2194, %v2192
      %v2207 = vpack.c.b16 %v2197, %v2195
      %v2208 = vpack.c.b16 %v2198, %v2196
      %v2209 = vpack.c.b16 %v2201, %v2199
      %v2210 = vpack.c.b16 %v2202, %v2200
      %v2239 = vunpack.c.l.b16 %v2155
      %v2240 = vunpack.c.l.b16 %v2156
      %v2241 = vunpack.c.l.b16 %v2157
      %v2242 = vunpack.c.l.b16 %v2158
      %v2243 = vunpack.c.l.b16 %v2159
      %v2244 = vunpack.c.l.b16 %v2160
      %v2245 = vunpack.c.l.b16 %v2161
      %v2246 = vunpack.c.l.b16 %v2162
      %v2247 = vunpack.c.l.b16 %v2163
      %v2248 = vunpack.c.l.b16 %v2164
      %v2249 = vunpack.c.l.b16 %v2165
      %v2250 = vunpack.c.l.b16 %v2166
      %v2251 = vunpack.c.l.b16 %v2167
      %v2252 = vunpack.c.l.b16 %v2168
      %v2253 = vunpack.c.l.b16 %v2169
      %v2254 = vunpack.c.l.b16 %v2170
      %v2255 = vunpack.c.l.b16 %v2171
      %v2256 = vunpack.c.l.b16 %v2172
      %v2257 = vunpack.c.l.b16 %v2173
      %v2258 = vunpack.c.l.b16 %v2174
      %v2259 = vunpack.c.l.b16 %v2175
      %v2260 = vunpack.c.l.b16 %v2176
      %v2261 = vunpack.c.l.b16 %v2177
      %v2262 = vunpack.c.l.b16 %v2178
      %v2263 = vpack.c.b16 %v2240, %v2239
      %v2264 = vpack.c.b16 %v2242, %v2241
      %v2265 = vpack.c.b16 %v2244, %v2243
      %v2266 = vpack.c.b16 %v2246, %v2245
      %v2267 = vpack.c.b16 %v2248, %v2247
      %v2268 = vpack.c.b16 %v2250, %v2249
      %v2269 = vpack.c.b16 %v2252, %v2251
      %v2270 = vpack.c.b16 %v2254, %v2253
      %v2271 = vpack.c.b16 %v2256, %v2255
      %v2272 = vpack.c.b16 %v2258, %v2257
      %v2273 = vpack.c.b16 %v2260, %v2259
      %v2274 = vpack.c.b16 %v2262, %v2261
      %v2288 = vsel %vm1296, %v2204, 0
      %v2291 = vsel %vm1296, %v2206, 0
      %v2294 = vsel %vm1296, %v2208, 0
      %v2297 = vsel %vm1296, %v2210, 0
      %2299 = vmatpush.bf16.msra.mxu0 %v2270
      %2300 = vmatpush.bf16.msra.mxu0 %v2269
      %2301 = vmatpush.bf16.msra.mxu0 %v2268
      %2302 = vmatpush.bf16.msra.mxu0 %v2267
      %2303 = vmatpush.bf16.msra.mxu0 %v2266
      %2304 = vmatpush.bf16.msra.mxu0 %v2265
      %2305 = vmatpush.bf16.msra.mxu0 %v2264
      %2306 = vmatpush.bf16.msra.mxu0 %v2263
      %2307 = vmatmul.bf16.gmra.mxu0 %v2203
      %v2308 = vpop.f32.mrf.mxu0
      %v2309 = vadd.f32 0.0, %v2308
      %v2310 = vpop.f32.mrf.mxu0
      %v2311 = vadd.f32 0.0, %v2310
      %2312 = vmatmul.bf16.gmra.mxu0 %v2205
      %v2313 = vpop.f32.mrf.mxu0
      %v2314 = vadd.f32 0.0, %v2313
      %v2315 = vpop.f32.mrf.mxu0
      %v2316 = vadd.f32 0.0, %v2315
      %2317 = vmatmul.bf16.gmra.mxu0 %v2207
      %v2318 = vpop.f32.mrf.mxu0
      %v2319 = vadd.f32 0.0, %v2318
      %v2320 = vpop.f32.mrf.mxu0
      %v2321 = vadd.f32 0.0, %v2320
      %2322 = vmatmul.bf16.gmra.mxu0 %v2209
      %v2323 = vpop.f32.mrf.mxu0
      %v2324 = vadd.f32 0.0, %v2323
      %v2325 = vpop.f32.mrf.mxu0
      %v2326 = vadd.f32 0.0, %v2325
      %2327 = vdwg.mxu0
      %2328 = vmatpush.bf16.msra.mxu0 0
      %2329 = vmatpush.bf16.msra.mxu0 0
      %2330 = vmatpush.bf16.msra.mxu0 0
      %2331 = vmatpush.bf16.msra.mxu0 0
      %2332 = vmatpush.bf16.msra.mxu0 %v2274
      %2333 = vmatpush.bf16.msra.mxu0 %v2273
      %2334 = vmatpush.bf16.msra.mxu0 %v2272
      %2335 = vmatpush.bf16.msra.mxu0 %v2271
      %2336 = vmatmul.bf16.gmra.mxu0 %v2288
      %v2337 = vpop.f32.mrf.mxu0
      %v2338 = vadd.f32 %v2309, %v2337
      %v2339 = vpop.f32.mrf.mxu0
      %v2340 = vadd.f32 %v2311, %v2339
      %2341 = vmatmul.bf16.gmra.mxu0 %v2291
      %v2342 = vpop.f32.mrf.mxu0
      %v2343 = vadd.f32 %v2314, %v2342
      %v2344 = vpop.f32.mrf.mxu0
      %v2345 = vadd.f32 %v2316, %v2344
      %2346 = vmatmul.bf16.gmra.mxu0 %v2294
      %v2347 = vpop.f32.mrf.mxu0
      %v2348 = vadd.f32 %v2319, %v2347
      %v2349 = vpop.f32.mrf.mxu0
      %v2350 = vadd.f32 %v2321, %v2349
      %2351 = vmatmul.bf16.gmra.mxu0 %v2297
      %v2352 = vpop.f32.mrf.mxu0
      %v2353 = vadd.f32 %v2324, %v2352
      %v2354 = vpop.f32.mrf.mxu0
      %v2355 = vadd.f32 %v2326, %v2354
      %2356 = vdwg.mxu0
      %v2357 = vmin.f32 %v2338, 20.0
      %v2358 = vmin.f32 %v2340, 20.0
      %v2359 = vmin.f32 %v2343, 20.0
      %v2360 = vmin.f32 %v2345, 20.0
      %v2361 = vmin.f32 %v2348, 20.0
      %v2362 = vmin.f32 %v2350, 20.0
      %v2363 = vmin.f32 %v2353, 20.0
      %v2364 = vmin.f32 %v2355, 20.0
      %v2365 = vmul.f32 %v2357, 1.442695
      %v2366 = vpow.pop %v2365
      %v2367 = vmul.f32 %v2358, 1.442695
      %v2368 = vpow.pop %v2367
      %v2369 = vmul.f32 %v2359, 1.442695
      %v2370 = vpow.pop %v2369
      %v2371 = vmul.f32 %v2360, 1.442695
      %v2372 = vpow.pop %v2371
      %v2373 = vmul.f32 %v2361, 1.442695
      %v2374 = vpow.pop %v2373
      %v2375 = vmul.f32 %v2362, 1.442695
      %v2376 = vpow.pop %v2375
      %v2377 = vmul.f32 %v2363, 1.442695
      %v2378 = vpow.pop %v2377
      %v2379 = vmul.f32 %v2364, 1.442695
      %v2380 = vpow.pop %v2379
      %v2381 = vadd.f32 %v2366, 2.0
      %v2382 = vadd.f32 %v2368, 2.0
      %v2383 = vadd.f32 %v2370, 2.0
      %v2384 = vadd.f32 %v2372, 2.0
      %v2385 = vadd.f32 %v2374, 2.0
      %v2386 = vadd.f32 %v2376, 2.0
      %v2387 = vadd.f32 %v2378, 2.0
      %v2388 = vadd.f32 %v2380, 2.0
      %v2389 = vmul.f32 %v2366, %v2381
      %v2390 = vmul.f32 %v2368, %v2382
      %v2391 = vmul.f32 %v2370, %v2383
      %v2392 = vmul.f32 %v2372, %v2384
      %v2393 = vmul.f32 %v2374, %v2385
      %v2394 = vmul.f32 %v2376, %v2386
      %v2395 = vmul.f32 %v2378, %v2387
      %v2396 = vmul.f32 %v2380, %v2388
      %v2397 = vadd.f32 %v2389, 2.0
      %v2398 = vadd.f32 %v2390, 2.0
      %v2399 = vadd.f32 %v2391, 2.0
      %v2400 = vadd.f32 %v2392, 2.0
      %v2401 = vadd.f32 %v2393, 2.0
      %v2402 = vadd.f32 %v2394, 2.0
      %v2403 = vadd.f32 %v2395, 2.0
      %v2404 = vadd.f32 %v2396, 2.0
      %v2405 = vrcp.pop %v2397
      %v2406 = vrcp.pop %v2398
      %v2407 = vrcp.pop %v2399
      %v2408 = vrcp.pop %v2400
      %v2409 = vrcp.pop %v2401
      %v2410 = vrcp.pop %v2402
      %v2411 = vrcp.pop %v2403
      %v2412 = vrcp.pop %v2404
      %v2413 = vmul.f32 %v2389, %v2405
      %v2414 = vmul.f32 %v2390, %v2406
      %v2415 = vmul.f32 %v2391, %v2407
      %v2416 = vmul.f32 %v2392, %v2408
      %v2417 = vmul.f32 %v2393, %v2409
      %v2418 = vmul.f32 %v2394, %v2410
      %v2419 = vmul.f32 %v2395, %v2411
      %v2420 = vmul.f32 %v2396, %v2412
      %v2421 = vmul.f32 %v2338, %v2413
      %v2422 = vmul.f32 %v2340, %v2414
      %v2423 = vmul.f32 %v2343, %v2415
      %v2424 = vmul.f32 %v2345, %v2416
      %v2425 = vmul.f32 %v2348, %v2417
      %v2426 = vmul.f32 %v2350, %v2418
      %v2427 = vmul.f32 %v2353, %v2419
      %v2428 = vmul.f32 %v2355, %v2420
      %v2429 = vsel %vm1296, %v2421, 0.0
      %v2430 = vsel %vm1296, %v2422, 0.0
      %v2431 = vadd.f32 %v2429, %v2430
      %v2432 = vsel %vm1296, %v2423, 0.0
      %v2433 = vadd.f32 %v2431, %v2432
      %v2434 = vsel %vm1296, %v2424, 0.0
      %v2435 = vadd.f32 %v2433, %v2434
      %v2436 = vsel %vm1296, %v2425, 0.0
      %v2437 = vadd.f32 %v2435, %v2436
      %v2438 = vsel %vm1296, %v2426, 0.0
      %v2439 = vadd.f32 %v2437, %v2438
      %v2440 = vsel %vm1296, %v2427, 0.0
      %v2441 = vadd.f32 %v2439, %v2440
      %v2442 = vsel %vm1296, %v2428, 0.0
      %v2443 = vadd.f32 %v2441, %v2442
      %2444 = vadd.xlane.f32.xlu0 %v2443
      %v2445 = vpop.xlane.xlu0 %2444
      %v2446 = vrot.slane %v2445, 4
      %v2447 = vadd.f32 %v2445, %v2446
      %v2448 = vrot.slane %v2447, 2
      %v2449 = vadd.f32 %v2447, %v2448
      %v2450 = vrot.slane %v2449, 1
      %v2451 = vadd.f32 %v2449, %v2450
      %s2452 = vtos %v2451
      %s2453 = smul.f32 %s2452, 0.00024414063
      %v2454 = vmul.f32 %v2421, %v2421
      %v2455 = vmul.f32 %v2422, %v2422
      %v2456 = vmul.f32 %v2423, %v2423
      %v2457 = vmul.f32 %v2424, %v2424
      %v2458 = vmul.f32 %v2425, %v2425
      %v2459 = vmul.f32 %v2426, %v2426
      %v2460 = vmul.f32 %v2427, %v2427
      %v2461 = vmul.f32 %v2428, %v2428
      %v2462 = vsel %vm1296, %v2454, 0.0
      %v2463 = vsel %vm1296, %v2455, 0.0
      %v2464 = vadd.f32 %v2462, %v2463
      %v2465 = vsel %vm1296, %v2456, 0.0
      %v2466 = vadd.f32 %v2464, %v2465
      %v2467 = vsel %vm1296, %v2457, 0.0
      %v2468 = vadd.f32 %v2466, %v2467
      %v2469 = vsel %vm1296, %v2458, 0.0
      %v2470 = vadd.f32 %v2468, %v2469
      %v2471 = vsel %vm1296, %v2459, 0.0
      %v2472 = vadd.f32 %v2470, %v2471
      %v2473 = vsel %vm1296, %v2460, 0.0
      %v2474 = vadd.f32 %v2472, %v2473
      %v2475 = vsel %vm1296, %v2461, 0.0
      %v2476 = vadd.f32 %v2474, %v2475
      %2477 = vadd.xlane.f32.xlu0 %v2476
      %v2478 = vpop.xlane.xlu0 %2477
      %v2479 = vrot.slane %v2478, 4
      %v2480 = vadd.f32 %v2478, %v2479
      %v2481 = vrot.slane %v2480, 2
      %v2482 = vadd.f32 %v2480, %v2481
      %v2483 = vrot.slane %v2482, 1
      %v2484 = vadd.f32 %v2482, %v2483
      %s2485 = vtos %v2484
      %s2486 = smul.f32 %s2485, 0.00024414063
      %s2487 = smul.f32 %s2453, %s2453
      %s2488 = ssub.f32 %s2486, %s2487
      %s2489 = sadd.f32 %s2488, 1e-05
      %v2490 = vstv %s2489
      %v2491 = vrsqrt.pop %v2490
      %v2492 = vmul.f32 %v2491, %v2490
      %v2493 = vmul.f32 %v2492, %v2491
      %v2494 = vmul.f32 0.5, %v2493
      %v2495 = vsub.f32 1.5, %v2494
      %v2496 = vmul.f32 %v2491, %v2495
      %vm2497 = vweird.f32 %v2490
      %vm2498 = vweird.f32 %v2491
      %vm2499 = vmor %vm2497, %vm2498
      %v2500 = vsel %vm2499, %v2491, %v2496
      %s2501 = vtos %v2500
      %vm2502 = vcmp.ge.s32.totalorder %v715, 0
      %vm2503 = vcmp.lt.s32.totalorder %v715, 64
      %vm2504 = vmand %vm2502, %vm2503
      %v2505 = vstv %s2453
      %v2506 = vsel %vm2504, %v2505, 0.0
      %v2507 = vstv %s2501
      %v2508 = vsel %vm2504, %v2507, 0.0
      %2517 = vrot.lane.b32.xlu0 %v2421, 64
      %v2518 = vpop.permute.xlu0 %2517
      %2519 = vrot.lane.b32.xlu0 %v2422, 64
      %v2520 = vpop.permute.xlu0 %2519
      %2521 = vrot.lane.b32.xlu0 %v2423, 64
      %v2522 = vpop.permute.xlu0 %2521
      %2523 = vrot.lane.b32.xlu0 %v2424, 64
      %v2524 = vpop.permute.xlu0 %2523
      %2525 = vrot.lane.b32.xlu0 %v2425, 64
      %v2526 = vpop.permute.xlu0 %2525
      %2527 = vrot.lane.b32.xlu0 %v2426, 64
      %v2528 = vpop.permute.xlu0 %2527
      %2529 = vrot.lane.b32.xlu0 %v2427, 64
      %v2530 = vpop.permute.xlu0 %2529
      %2531 = vrot.lane.b32.xlu0 %v2428, 64
      %v2532 = vpop.permute.xlu0 %2531
      %v2541 = vsel %vm1296, %v2518, 0.0
      %v2542 = vsel %vm1296, %v2520, 0.0
      %v2543 = vadd.f32 %v2541, %v2542
      %v2544 = vsel %vm1296, %v2522, 0.0
      %v2545 = vadd.f32 %v2543, %v2544
      %v2546 = vsel %vm1296, %v2524, 0.0
      %v2547 = vadd.f32 %v2545, %v2546
      %v2548 = vsel %vm1296, %v2526, 0.0
      %v2549 = vadd.f32 %v2547, %v2548
      %v2550 = vsel %vm1296, %v2528, 0.0
      %v2551 = vadd.f32 %v2549, %v2550
      %v2552 = vsel %vm1296, %v2530, 0.0
      %v2553 = vadd.f32 %v2551, %v2552
      %v2554 = vsel %vm1296, %v2532, 0.0
      %v2555 = vadd.f32 %v2553, %v2554
      %2556 = vadd.xlane.f32.xlu0 %v2555
      %v2557 = vpop.xlane.xlu0 %2556
      %v2558 = vrot.slane %v2557, 4
      %v2559 = vadd.f32 %v2557, %v2558
      %v2560 = vrot.slane %v2559, 2
      %v2561 = vadd.f32 %v2559, %v2560
      %v2562 = vrot.slane %v2561, 1
      %v2563 = vadd.f32 %v2561, %v2562
      %s2564 = vtos %v2563
      %s2565 = smul.f32 %s2564, 0.00024414063
      %2574 = vrot.lane.b32.xlu0 %v2454, 64
      %v2575 = vpop.permute.xlu0 %2574
      %2576 = vrot.lane.b32.xlu0 %v2455, 64
      %v2577 = vpop.permute.xlu0 %2576
      %2578 = vrot.lane.b32.xlu0 %v2456, 64
      %v2579 = vpop.permute.xlu0 %2578
      %2580 = vrot.lane.b32.xlu0 %v2457, 64
      %v2581 = vpop.permute.xlu0 %2580
      %2582 = vrot.lane.b32.xlu0 %v2458, 64
      %v2583 = vpop.permute.xlu0 %2582
      %2584 = vrot.lane.b32.xlu0 %v2459, 64
      %v2585 = vpop.permute.xlu0 %2584
      %2586 = vrot.lane.b32.xlu0 %v2460, 64
      %v2587 = vpop.permute.xlu0 %2586
      %2588 = vrot.lane.b32.xlu0 %v2461, 64
      %v2589 = vpop.permute.xlu0 %2588
      %v2598 = vsel %vm1296, %v2575, 0.0
      %v2599 = vsel %vm1296, %v2577, 0.0
      %v2600 = vadd.f32 %v2598, %v2599
      %v2601 = vsel %vm1296, %v2579, 0.0
      %v2602 = vadd.f32 %v2600, %v2601
      %v2603 = vsel %vm1296, %v2581, 0.0
      %v2604 = vadd.f32 %v2602, %v2603
      %v2605 = vsel %vm1296, %v2583, 0.0
      %v2606 = vadd.f32 %v2604, %v2605
      %v2607 = vsel %vm1296, %v2585, 0.0
      %v2608 = vadd.f32 %v2606, %v2607
      %v2609 = vsel %vm1296, %v2587, 0.0
      %v2610 = vadd.f32 %v2608, %v2609
      %v2611 = vsel %vm1296, %v2589, 0.0
      %v2612 = vadd.f32 %v2610, %v2611
      %2613 = vadd.xlane.f32.xlu0 %v2612
      %v2614 = vpop.xlane.xlu0 %2613
      %v2615 = vrot.slane %v2614, 4
      %v2616 = vadd.f32 %v2614, %v2615
      %v2617 = vrot.slane %v2616, 2
      %v2618 = vadd.f32 %v2616, %v2617
      %v2619 = vrot.slane %v2618, 1
      %v2620 = vadd.f32 %v2618, %v2619
      %s2621 = vtos %v2620
      %s2622 = smul.f32 %s2621, 0.00024414063
      %s2623 = smul.f32 %s2565, %s2565
      %s2624 = ssub.f32 %s2622, %s2623
      %s2625 = sadd.f32 %s2624, 1e-05
      %v2626 = vstv %s2625
      %v2627 = vrsqrt.pop %v2626
      %v2628 = vmul.f32 %v2627, %v2626
      %v2629 = vmul.f32 %v2628, %v2627
      %v2630 = vmul.f32 0.5, %v2629
      %v2631 = vsub.f32 1.5, %v2630
      %v2632 = vmul.f32 %v2627, %v2631
      %vm2633 = vweird.f32 %v2626
      %vm2634 = vweird.f32 %v2627
      %vm2635 = vmor %vm2633, %vm2634
      %v2636 = vsel %vm2635, %v2627, %v2632
      %s2637 = vtos %v2636
      %vm2638 = vcmp.ge.s32.totalorder %v715, 64
      %vm2639 = vcmp.lt.s32.totalorder %v715, 128
      %vm2640 = vmand %vm2638, %vm2639
      %v2641 = vstv %s2565
      %v2642 = vsel %vm2640, %v2641, %v2506
      %v2643 = vstv %s2637
      %v2644 = vsel %vm2640, %v2643, %v2508
      %v2645 = vsub.f32 %v2421, %v2642
      %v2646 = vsub.f32 %v2422, %v2642
      %v2647 = vsub.f32 %v2423, %v2642
      %v2648 = vsub.f32 %v2424, %v2642
      %v2649 = vsub.f32 %v2425, %v2642
      %v2650 = vsub.f32 %v2426, %v2642
      %v2651 = vsub.f32 %v2427, %v2642
      %v2652 = vsub.f32 %v2428, %v2642
      %v2653 = vmul.f32 %v2645, %v2644
      %v2654 = vmul.f32 %v2646, %v2644
      %v2655 = vmul.f32 %v2647, %v2644
      %v2656 = vmul.f32 %v2648, %v2644
      %v2657 = vmul.f32 %v2649, %v2644
      %v2658 = vmul.f32 %v2650, %v2644
      %v2659 = vmul.f32 %v2651, %v2644
      %v2660 = vmul.f32 %v2652, %v2644
      %v2661 = vadd.f32 %v2653, %v1513
      %v2662 = vadd.f32 %v2654, %v1514
      %v2663 = vadd.f32 %v2655, %v1515
      %v2664 = vadd.f32 %v2656, %v1516
      %v2665 = vadd.f32 %v2657, %v1517
      %v2666 = vadd.f32 %v2658, %v1518
      %v2667 = vadd.f32 %v2659, %v1519
      %v2668 = vadd.f32 %v2660, %v1520
      %v2669 = vpack.c.bf16 %v2661, %v2661
      %v2670 = vpack.c.bf16 %v2662, %v2662
      %v2671 = vpack.c.bf16 %v2663, %v2663
      %v2672 = vpack.c.bf16 %v2664, %v2664
      %v2673 = vpack.c.bf16 %v2665, %v2665
      %v2674 = vpack.c.bf16 %v2666, %v2666
      %v2675 = vpack.c.bf16 %v2667, %v2667
      %v2676 = vpack.c.bf16 %v2668, %v2668
      %2677 = vst [vmem:[#allocation2 + $0x20] sm:$0xf] %v2669
      %2678 = vst [vmem:[#allocation2 + $0x24] sm:$0xf] %v2670
      %2679 = vst [vmem:[#allocation2 + $0x28] sm:$0xf] %v2671
      %2680 = vst [vmem:[#allocation2 + $0x2c] sm:$0xf] %v2672
      %2681 = vst [vmem:[#allocation2 + $0x30] sm:$0xf] %v2673
      %2682 = vst [vmem:[#allocation2 + $0x34] sm:$0xf] %v2674
      %2683 = vst [vmem:[#allocation2 + $0x38] sm:$0xf] %v2675
      %2684 = vst [vmem:[#allocation2 + $0x3c] sm:$0xf] %v2676
      %2693 = vrot.lane.b32.xlu0 %v2669, 4
      %v2694 = vpop.permute.xlu0 %2693
      %2695 = vrot.lane.b32.xlu0 %v2670, 4
      %v2696 = vpop.permute.xlu0 %2695
      %2697 = vrot.lane.b32.xlu0 %v2671, 4
      %v2698 = vpop.permute.xlu0 %2697
      %2699 = vrot.lane.b32.xlu0 %v2672, 4
      %v2700 = vpop.permute.xlu0 %2699
      %2701 = vrot.lane.b32.xlu0 %v2673, 4
      %v2702 = vpop.permute.xlu0 %2701
      %2703 = vrot.lane.b32.xlu0 %v2674, 4
      %v2704 = vpop.permute.xlu0 %2703
      %2705 = vrot.lane.b32.xlu0 %v2675, 4
      %v2706 = vpop.permute.xlu0 %2705
      %2707 = vrot.lane.b32.xlu0 %v2676, 4
      %v2708 = vpop.permute.xlu0 %2707
      %vm2717 = vcmask 519200
      %2718 = vst.msk [vmem:[#allocation2] sm:$0xf] %vm2717, %v2694
      %2719 = vst.msk [vmem:[#allocation2 + $0x4] sm:$0xf] %vm2717, %v2696
      %2720 = vst.msk [vmem:[#allocation2 + $0x8] sm:$0xf] %vm2717, %v2698
      %2721 = vst.msk [vmem:[#allocation2 + $0xc] sm:$0xf] %vm2717, %v2700
      %2722 = vst.msk [vmem:[#allocation2 + $0x10] sm:$0xf] %vm2717, %v2702
      %2723 = vst.msk [vmem:[#allocation2 + $0x14] sm:$0xf] %vm2717, %v2704
      %2724 = vst.msk [vmem:[#allocation2 + $0x18] sm:$0xf] %vm2717, %v2706
      %2725 = vst.msk [vmem:[#allocation2 + $0x1c] sm:$0xf] %vm2717, %v2708
      %2726 = vrot.lane.b32.xlu0 %v2669, 124
      %v2727 = vpop.permute.xlu0 %2726
      %2728 = vrot.lane.b32.xlu0 %v2670, 124
      %v2729 = vpop.permute.xlu0 %2728
      %2730 = vrot.lane.b32.xlu0 %v2671, 124
      %v2731 = vpop.permute.xlu0 %2730
      %2732 = vrot.lane.b32.xlu0 %v2672, 124
      %v2733 = vpop.permute.xlu0 %2732
      %2734 = vrot.lane.b32.xlu0 %v2673, 124
      %v2735 = vpop.permute.xlu0 %2734
      %2736 = vrot.lane.b32.xlu0 %v2674, 124
      %v2737 = vpop.permute.xlu0 %2736
      %2738 = vrot.lane.b32.xlu0 %v2675, 124
      %v2739 = vpop.permute.xlu0 %2738
      %2740 = vrot.lane.b32.xlu0 %v2676, 124
      %v2741 = vpop.permute.xlu0 %2740
      %vm2750 = vcmask 486400
      %2751 = vst.msk [vmem:[#allocation2 + $0x40] sm:$0xf] %vm2750, %v2727
      %2752 = vst.msk [vmem:[#allocation2 + $0x44] sm:$0xf] %vm2750, %v2729
      %2753 = vst.msk [vmem:[#allocation2 + $0x48] sm:$0xf] %vm2750, %v2731
      %2754 = vst.msk [vmem:[#allocation2 + $0x4c] sm:$0xf] %vm2750, %v2733
      %2755 = vst.msk [vmem:[#allocation2 + $0x50] sm:$0xf] %vm2750, %v2735
      %2756 = vst.msk [vmem:[#allocation2 + $0x54] sm:$0xf] %vm2750, %v2737
      %2757 = vst.msk [vmem:[#allocation2 + $0x58] sm:$0xf] %vm2750, %v2739
      %2758 = vst.msk [vmem:[#allocation2 + $0x5c] sm:$0xf] %vm2750, %v2741
      %2759 = vst.msk [vmem:[#allocation2] sm:$0xf] %vm740, %v2727
      %2760 = vst.msk [vmem:[#allocation2 + $0x4] sm:$0xf] %vm740, %v2729
      %2761 = vst.msk [vmem:[#allocation2 + $0x8] sm:$0xf] %vm740, %v2731
      %2762 = vst.msk [vmem:[#allocation2 + $0xc] sm:$0xf] %vm740, %v2733
      %2763 = vst.msk [vmem:[#allocation2 + $0x10] sm:$0xf] %vm740, %v2735
      %2764 = vst.msk [vmem:[#allocation2 + $0x14] sm:$0xf] %vm740, %v2737
      %2765 = vst.msk [vmem:[#allocation2 + $0x18] sm:$0xf] %vm740, %v2739
      %2766 = vst.msk [vmem:[#allocation2 + $0x1c] sm:$0xf] %vm740, %v2741
      %2767 = vrot.lane.b32.xlu0 %v2669, 126
      %v2768 = vpop.permute.xlu0 %2767
      %2769 = vrot.lane.b32.xlu0 %v2670, 126
      %v2770 = vpop.permute.xlu0 %2769
      %2771 = vrot.lane.b32.xlu0 %v2671, 126
      %v2772 = vpop.permute.xlu0 %2771
      %2773 = vrot.lane.b32.xlu0 %v2672, 126
      %v2774 = vpop.permute.xlu0 %2773
      %2775 = vrot.lane.b32.xlu0 %v2673, 126
      %v2776 = vpop.permute.xlu0 %2775
      %2777 = vrot.lane.b32.xlu0 %v2674, 126
      %v2778 = vpop.permute.xlu0 %2777
      %2779 = vrot.lane.b32.xlu0 %v2675, 126
      %v2780 = vpop.permute.xlu0 %2779
      %2781 = vrot.lane.b32.xlu0 %v2676, 126
      %v2782 = vpop.permute.xlu0 %2781
      %vm2791 = vcmask 495072
      %2792 = vst.msk [vmem:[#allocation2 + $0x40] sm:$0xf] %vm2791, %v2768
      %2793 = vst.msk [vmem:[#allocation2 + $0x44] sm:$0xf] %vm2791, %v2770
      %2794 = vst.msk [vmem:[#allocation2 + $0x48] sm:$0xf] %vm2791, %v2772
      %2795 = vst.msk [vmem:[#allocation2 + $0x4c] sm:$0xf] %vm2791, %v2774
      %2796 = vst.msk [vmem:[#allocation2 + $0x50] sm:$0xf] %vm2791, %v2776
      %2797 = vst.msk [vmem:[#allocation2 + $0x54] sm:$0xf] %vm2791, %v2778
      %2798 = vst.msk [vmem:[#allocation2 + $0x58] sm:$0xf] %vm2791, %v2780
      %2799 = vst.msk [vmem:[#allocation2 + $0x5c] sm:$0xf] %vm2791, %v2782
      %2800 = vst.msk [vmem:[#allocation2] sm:$0xf] %vm1628, %v2768
      %2801 = vst.msk [vmem:[#allocation2 + $0x4] sm:$0xf] %vm1628, %v2770
      %2802 = vst.msk [vmem:[#allocation2 + $0x8] sm:$0xf] %vm1628, %v2772
      %2803 = vst.msk [vmem:[#allocation2 + $0xc] sm:$0xf] %vm1628, %v2774
      %2804 = vst.msk [vmem:[#allocation2 + $0x10] sm:$0xf] %vm1628, %v2776
      %2805 = vst.msk [vmem:[#allocation2 + $0x14] sm:$0xf] %vm1628, %v2778
      %2806 = vst.msk [vmem:[#allocation2 + $0x18] sm:$0xf] %vm1628, %v2780
      %2807 = vst.msk [vmem:[#allocation2 + $0x1c] sm:$0xf] %vm1628, %v2782
      %vm2808 = vcmask 503272
      %2809 = vst.msk [vmem:[#allocation2 + $0x40] sm:$0xf] %vm2808, %v2669
      %2810 = vst.msk [vmem:[#allocation2 + $0x44] sm:$0xf] %vm2808, %v2670
      %2811 = vst.msk [vmem:[#allocation2 + $0x48] sm:$0xf] %vm2808, %v2671
      %2812 = vst.msk [vmem:[#allocation2 + $0x4c] sm:$0xf] %vm2808, %v2672
      %2813 = vst.msk [vmem:[#allocation2 + $0x50] sm:$0xf] %vm2808, %v2673
      %2814 = vst.msk [vmem:[#allocation2 + $0x54] sm:$0xf] %vm2808, %v2674
      %2815 = vst.msk [vmem:[#allocation2 + $0x58] sm:$0xf] %vm2808, %v2675
      %2816 = vst.msk [vmem:[#allocation2 + $0x5c] sm:$0xf] %vm2808, %v2676
      %vm2817 = vcmask 19472
      %2818 = vst.msk [vmem:[#allocation2] sm:$0xf] %vm2817, %v2669
      %2819 = vst.msk [vmem:[#allocation2 + $0x4] sm:$0xf] %vm2817, %v2670
      %2820 = vst.msk [vmem:[#allocation2 + $0x8] sm:$0xf] %vm2817, %v2671
      %2821 = vst.msk [vmem:[#allocation2 + $0xc] sm:$0xf] %vm2817, %v2672
      %2822 = vst.msk [vmem:[#allocation2 + $0x10] sm:$0xf] %vm2817, %v2673
      %2823 = vst.msk [vmem:[#allocation2 + $0x14] sm:$0xf] %vm2817, %v2674
      %2824 = vst.msk [vmem:[#allocation2 + $0x18] sm:$0xf] %vm2817, %v2675
      %2825 = vst.msk [vmem:[#allocation2 + $0x1c] sm:$0xf] %vm2817, %v2676
      %2826 = vrot.lane.b32.xlu0 %v2669, 2
      %v2827 = vpop.permute.xlu0 %2826
      %2828 = vrot.lane.b32.xlu0 %v2670, 2
      %v2829 = vpop.permute.xlu0 %2828
      %2830 = vrot.lane.b32.xlu0 %v2671, 2
      %v2831 = vpop.permute.xlu0 %2830
      %2832 = vrot.lane.b32.xlu0 %v2672, 2
      %v2833 = vpop.permute.xlu0 %2832
      %2834 = vrot.lane.b32.xlu0 %v2673, 2
      %v2835 = vpop.permute.xlu0 %2834
      %2836 = vrot.lane.b32.xlu0 %v2674, 2
      %v2837 = vpop.permute.xlu0 %2836
      %2838 = vrot.lane.b32.xlu0 %v2675, 2
      %v2839 = vpop.permute.xlu0 %2838
      %2840 = vrot.lane.b32.xlu0 %v2676, 2
      %v2841 = vpop.permute.xlu0 %2840
      %2850 = vst.msk [vmem:[#allocation2 + $0x40] sm:$0xf] %vm1619, %v2827
      %2851 = vst.msk [vmem:[#allocation2 + $0x44] sm:$0xf] %vm1619, %v2829
      %2852 = vst.msk [vmem:[#allocation2 + $0x48] sm:$0xf] %vm1619, %v2831
      %2853 = vst.msk [vmem:[#allocation2 + $0x4c] sm:$0xf] %vm1619, %v2833
      %2854 = vst.msk [vmem:[#allocation2 + $0x50] sm:$0xf] %vm1619, %v2835
      %2855 = vst.msk [vmem:[#allocation2 + $0x54] sm:$0xf] %vm1619, %v2837
      %2856 = vst.msk [vmem:[#allocation2 + $0x58] sm:$0xf] %vm1619, %v2839
      %2857 = vst.msk [vmem:[#allocation2 + $0x5c] sm:$0xf] %vm1619, %v2841
      %vm2858 = vcmask 27672
      %2859 = vst.msk [vmem:[#allocation2] sm:$0xf] %vm2858, %v2827
      %2860 = vst.msk [vmem:[#allocation2 + $0x4] sm:$0xf] %vm2858, %v2829
      %2861 = vst.msk [vmem:[#allocation2 + $0x8] sm:$0xf] %vm2858, %v2831
      %2862 = vst.msk [vmem:[#allocation2 + $0xc] sm:$0xf] %vm2858, %v2833
      %2863 = vst.msk [vmem:[#allocation2 + $0x10] sm:$0xf] %vm2858, %v2835
      %2864 = vst.msk [vmem:[#allocation2 + $0x14] sm:$0xf] %vm2858, %v2837
      %2865 = vst.msk [vmem:[#allocation2 + $0x18] sm:$0xf] %vm2858, %v2839
      %2866 = vst.msk [vmem:[#allocation2 + $0x1c] sm:$0xf] %vm2858, %v2841
      %2867 = vst.msk [vmem:[#allocation2 + $0x40] sm:$0xf] %vm743, %v2694
      %2868 = vst.msk [vmem:[#allocation2 + $0x44] sm:$0xf] %vm743, %v2696
      %2869 = vst.msk [vmem:[#allocation2 + $0x48] sm:$0xf] %vm743, %v2698
      %2870 = vst.msk [vmem:[#allocation2 + $0x4c] sm:$0xf] %vm743, %v2700
      %2871 = vst.msk [vmem:[#allocation2 + $0x50] sm:$0xf] %vm743, %v2702
      %2872 = vst.msk [vmem:[#allocation2 + $0x54] sm:$0xf] %vm743, %v2704
      %2873 = vst.msk [vmem:[#allocation2 + $0x58] sm:$0xf] %vm743, %v2706
      %2874 = vst.msk [vmem:[#allocation2 + $0x5c] sm:$0xf] %vm743, %v2708
      %vm2875 = vcmask 1044000
      %2876 = vst.msk [vmem:[#allocation2] sm:$0xf] %vm2875, %v2694
      %2877 = vst.msk [vmem:[#allocation2 + $0x4] sm:$0xf] %vm2875, %v2696
      %2878 = vst.msk [vmem:[#allocation2 + $0x8] sm:$0xf] %vm2875, %v2698
      %2879 = vst.msk [vmem:[#allocation2 + $0xc] sm:$0xf] %vm2875, %v2700
      %2880 = vst.msk [vmem:[#allocation2 + $0x10] sm:$0xf] %vm2875, %v2702
      %2881 = vst.msk [vmem:[#allocation2 + $0x14] sm:$0xf] %vm2875, %v2704
      %2882 = vst.msk [vmem:[#allocation2 + $0x18] sm:$0xf] %vm2875, %v2706
      %2883 = vst.msk [vmem:[#allocation2 + $0x1c] sm:$0xf] %vm2875, %v2708
      %vm2884 = vcmask 1011200
      %2885 = vst.msk [vmem:[#allocation2 + $0x40] sm:$0xf] %vm2884, %v2727
      %2886 = vst.msk [vmem:[#allocation2 + $0x44] sm:$0xf] %vm2884, %v2729
      %2887 = vst.msk [vmem:[#allocation2 + $0x48] sm:$0xf] %vm2884, %v2731
      %2888 = vst.msk [vmem:[#allocation2 + $0x4c] sm:$0xf] %vm2884, %v2733
      %2889 = vst.msk [vmem:[#allocation2 + $0x50] sm:$0xf] %vm2884, %v2735
      %2890 = vst.msk [vmem:[#allocation2 + $0x54] sm:$0xf] %vm2884, %v2737
      %2891 = vst.msk [vmem:[#allocation2 + $0x58] sm:$0xf] %vm2884, %v2739
      %2892 = vst.msk [vmem:[#allocation2 + $0x5c] sm:$0xf] %vm2884, %v2741
      %2893 = vst.msk [vmem:[#allocation2] sm:$0xf] %vm752, %v2727
      %2894 = vst.msk [vmem:[#allocation2 + $0x4] sm:$0xf] %vm752, %v2729
      %2895 = vst.msk [vmem:[#allocation2 + $0x8] sm:$0xf] %vm752, %v2731
      %2896 = vst.msk [vmem:[#allocation2 + $0xc] sm:$0xf] %vm752, %v2733
      %2897 = vst.msk [vmem:[#allocation2 + $0x10] sm:$0xf] %vm752, %v2735
      %2898 = vst.msk [vmem:[#allocation2 + $0x14] sm:$0xf] %vm752, %v2737
      %2899 = vst.msk [vmem:[#allocation2 + $0x18] sm:$0xf] %vm752, %v2739
      %2900 = vst.msk [vmem:[#allocation2 + $0x1c] sm:$0xf] %vm752, %v2741
      %vm2901 = vcmask 1019872
      %2902 = vst.msk [vmem:[#allocation2 + $0x40] sm:$0xf] %vm2901, %v2768
      %2903 = vst.msk [vmem:[#allocation2 + $0x44] sm:$0xf] %vm2901, %v2770
      %2904 = vst.msk [vmem:[#allocation2 + $0x48] sm:$0xf] %vm2901, %v2772
      %2905 = vst.msk [vmem:[#allocation2 + $0x4c] sm:$0xf] %vm2901, %v2774
      %2906 = vst.msk [vmem:[#allocation2 + $0x50] sm:$0xf] %vm2901, %v2776
      %2907 = vst.msk [vmem:[#allocation2 + $0x54] sm:$0xf] %vm2901, %v2778
      %2908 = vst.msk [vmem:[#allocation2 + $0x58] sm:$0xf] %vm2901, %v2780
      %2909 = vst.msk [vmem:[#allocation2 + $0x5c] sm:$0xf] %vm2901, %v2782
      %2910 = vst.msk [vmem:[#allocation2] sm:$0xf] %vm1680, %v2768
      %2911 = vst.msk [vmem:[#allocation2 + $0x4] sm:$0xf] %vm1680, %v2770
      %2912 = vst.msk [vmem:[#allocation2 + $0x8] sm:$0xf] %vm1680, %v2772
      %2913 = vst.msk [vmem:[#allocation2 + $0xc] sm:$0xf] %vm1680, %v2774
      %2914 = vst.msk [vmem:[#allocation2 + $0x10] sm:$0xf] %vm1680, %v2776
      %2915 = vst.msk [vmem:[#allocation2 + $0x14] sm:$0xf] %vm1680, %v2778
      %2916 = vst.msk [vmem:[#allocation2 + $0x18] sm:$0xf] %vm1680, %v2780
      %2917 = vst.msk [vmem:[#allocation2 + $0x1c] sm:$0xf] %vm1680, %v2782
      %vm2918 = vcmask 1028072
      %2919 = vst.msk [vmem:[#allocation2 + $0x40] sm:$0xf] %vm2918, %v2669
      %2920 = vst.msk [vmem:[#allocation2 + $0x44] sm:$0xf] %vm2918, %v2670
      %2921 = vst.msk [vmem:[#allocation2 + $0x48] sm:$0xf] %vm2918, %v2671
      %2922 = vst.msk [vmem:[#allocation2 + $0x4c] sm:$0xf] %vm2918, %v2672
      %2923 = vst.msk [vmem:[#allocation2 + $0x50] sm:$0xf] %vm2918, %v2673
      %2924 = vst.msk [vmem:[#allocation2 + $0x54] sm:$0xf] %vm2918, %v2674
      %2925 = vst.msk [vmem:[#allocation2 + $0x58] sm:$0xf] %vm2918, %v2675
      %2926 = vst.msk [vmem:[#allocation2 + $0x5c] sm:$0xf] %vm2918, %v2676
      %vm2927 = vcmask 544272
      %2928 = vst.msk [vmem:[#allocation2] sm:$0xf] %vm2927, %v2669
      %2929 = vst.msk [vmem:[#allocation2 + $0x4] sm:$0xf] %vm2927, %v2670
      %2930 = vst.msk [vmem:[#allocation2 + $0x8] sm:$0xf] %vm2927, %v2671
      %2931 = vst.msk [vmem:[#allocation2 + $0xc] sm:$0xf] %vm2927, %v2672
      %2932 = vst.msk [vmem:[#allocation2 + $0x10] sm:$0xf] %vm2927, %v2673
      %2933 = vst.msk [vmem:[#allocation2 + $0x14] sm:$0xf] %vm2927, %v2674
      %2934 = vst.msk [vmem:[#allocation2 + $0x18] sm:$0xf] %vm2927, %v2675
      %2935 = vst.msk [vmem:[#allocation2 + $0x1c] sm:$0xf] %vm2927, %v2676
      %2936 = vst.msk [vmem:[#allocation2 + $0x40] sm:$0xf] %vm1671, %v2827
      %2937 = vst.msk [vmem:[#allocation2 + $0x44] sm:$0xf] %vm1671, %v2829
      %2938 = vst.msk [vmem:[#allocation2 + $0x48] sm:$0xf] %vm1671, %v2831
      %2939 = vst.msk [vmem:[#allocation2 + $0x4c] sm:$0xf] %vm1671, %v2833
      %2940 = vst.msk [vmem:[#allocation2 + $0x50] sm:$0xf] %vm1671, %v2835
      %2941 = vst.msk [vmem:[#allocation2 + $0x54] sm:$0xf] %vm1671, %v2837
      %2942 = vst.msk [vmem:[#allocation2 + $0x58] sm:$0xf] %vm1671, %v2839
      %2943 = vst.msk [vmem:[#allocation2 + $0x5c] sm:$0xf] %vm1671, %v2841
      %vm2944 = vcmask 552472
      %2945 = vst.msk [vmem:[#allocation2] sm:$0xf] %vm2944, %v2827
      %2946 = vst.msk [vmem:[#allocation2 + $0x4] sm:$0xf] %vm2944, %v2829
      %2947 = vst.msk [vmem:[#allocation2 + $0x8] sm:$0xf] %vm2944, %v2831
      %2948 = vst.msk [vmem:[#allocation2 + $0xc] sm:$0xf] %vm2944, %v2833
      %2949 = vst.msk [vmem:[#allocation2 + $0x10] sm:$0xf] %vm2944, %v2835
      %2950 = vst.msk [vmem:[#allocation2 + $0x14] sm:$0xf] %vm2944, %v2837
      %2951 = vst.msk [vmem:[#allocation2 + $0x18] sm:$0xf] %vm2944, %v2839
      %2952 = vst.msk [vmem:[#allocation2 + $0x1c] sm:$0xf] %vm2944, %v2841
      %2953 = vst.msk [vmem:[#allocation2 + $0x40] sm:$0xf] %vm755, %v2694
      %2954 = vst.msk [vmem:[#allocation2 + $0x44] sm:$0xf] %vm755, %v2696
      %2955 = vst.msk [vmem:[#allocation2 + $0x48] sm:$0xf] %vm755, %v2698
      %2956 = vst.msk [vmem:[#allocation2 + $0x4c] sm:$0xf] %vm755, %v2700
      %2957 = vst.msk [vmem:[#allocation2 + $0x50] sm:$0xf] %vm755, %v2702
      %2958 = vst.msk [vmem:[#allocation2 + $0x54] sm:$0xf] %vm755, %v2704
      %2959 = vst.msk [vmem:[#allocation2 + $0x58] sm:$0xf] %vm755, %v2706
      %2960 = vst.msk [vmem:[#allocation2 + $0x5c] sm:$0xf] %vm755, %v2708
      %v2961 = vld [vmem:[%s9] sm:$0xff]
      %v2962 = vld [vmem:[%s9 + $0x8] sm:$0xff]
      %v2963 = vld [vmem:[%s9 + $0x10] sm:$0xff]
      %v2964 = vld [vmem:[%s9 + $0x18] sm:$0xff]
      %v2965 = vld [vmem:[%s9 + $0x20] sm:$0xff]
      %v2966 = vld [vmem:[%s9 + $0x28] sm:$0xff]
      %v2967 = vld [vmem:[%s9 + $0x30] sm:$0xff]
      %v2968 = vld [vmem:[%s9 + $0x38] sm:$0xff]
      %v2969 = vld [vmem:[#allocation2] sm:$0xf]
      %v2970 = vld [vmem:[#allocation2 + $0x4] sm:$0xf]
      %v2971 = vld [vmem:[#allocation2 + $0x8] sm:$0xf]
      %v2972 = vld [vmem:[#allocation2 + $0xc] sm:$0xf]
      %v2973 = vld [vmem:[#allocation2 + $0x10] sm:$0xf]
      %v2974 = vld [vmem:[#allocation2 + $0x14] sm:$0xf]
      %v2975 = vld [vmem:[#allocation2 + $0x18] sm:$0xf]
      %v2976 = vld [vmem:[#allocation2 + $0x1c] sm:$0xf]
      %v2977 = vld [vmem:[#allocation2 + $0x20] sm:$0xf]
      %v2978 = vld [vmem:[#allocation2 + $0x24] sm:$0xf]
      %v2979 = vld [vmem:[#allocation2 + $0x28] sm:$0xf]
      %v2980 = vld [vmem:[#allocation2 + $0x2c] sm:$0xf]
      %v2981 = vld [vmem:[#allocation2 + $0x30] sm:$0xf]
      %v2982 = vld [vmem:[#allocation2 + $0x34] sm:$0xf]
      %v2983 = vld [vmem:[#allocation2 + $0x38] sm:$0xf]
      %v2984 = vld [vmem:[#allocation2 + $0x3c] sm:$0xf]
      %v2985 = vld [vmem:[#allocation2 + $0x40] sm:$0xf]
      %v2986 = vld [vmem:[#allocation2 + $0x44] sm:$0xf]
      %v2987 = vld [vmem:[#allocation2 + $0x48] sm:$0xf]
      %v2988 = vld [vmem:[#allocation2 + $0x4c] sm:$0xf]
      %v2989 = vld [vmem:[#allocation2 + $0x50] sm:$0xf]
      %v2990 = vld [vmem:[#allocation2 + $0x54] sm:$0xf]
      %v2991 = vld [vmem:[#allocation2 + $0x58] sm:$0xf]
      %v2992 = vld [vmem:[#allocation2 + $0x5c] sm:$0xf]
      %v3001 = vunpack.c.l.b16 %v2961
      %v3002 = vunpack.c.h.b16 %v2961
      %v3003 = vunpack.c.l.b16 %v2962
      %v3004 = vunpack.c.h.b16 %v2962
      %v3005 = vunpack.c.l.b16 %v2963
      %v3006 = vunpack.c.h.b16 %v2963
      %v3007 = vunpack.c.l.b16 %v2964
      %v3008 = vunpack.c.h.b16 %v2964
      %v3009 = vunpack.c.l.b16 %v2965
      %v3010 = vunpack.c.h.b16 %v2965
      %v3011 = vunpack.c.l.b16 %v2966
      %v3012 = vunpack.c.h.b16 %v2966
      %v3013 = vunpack.c.l.b16 %v2967
      %v3014 = vunpack.c.h.b16 %v2967
      %v3015 = vunpack.c.l.b16 %v2968
      %v3016 = vunpack.c.h.b16 %v2968
      %v3017 = vpack.c.b16 %v3003, %v3001
      %v3018 = vpack.c.b16 %v3004, %v3002
      %v3019 = vpack.c.b16 %v3007, %v3005
      %v3020 = vpack.c.b16 %v3008, %v3006
      %v3021 = vpack.c.b16 %v3011, %v3009
      %v3022 = vpack.c.b16 %v3012, %v3010
      %v3023 = vpack.c.b16 %v3015, %v3013
      %v3024 = vpack.c.b16 %v3016, %v3014
      %v3053 = vunpack.c.l.b16 %v2969
      %v3054 = vunpack.c.l.b16 %v2970
      %v3055 = vunpack.c.l.b16 %v2971
      %v3056 = vunpack.c.l.b16 %v2972
      %v3057 = vunpack.c.l.b16 %v2973
      %v3058 = vunpack.c.l.b16 %v2974
      %v3059 = vunpack.c.l.b16 %v2975
      %v3060 = vunpack.c.l.b16 %v2976
      %v3061 = vunpack.c.l.b16 %v2977
      %v3062 = vunpack.c.l.b16 %v2978
      %v3063 = vunpack.c.l.b16 %v2979
      %v3064 = vunpack.c.l.b16 %v2980
      %v3065 = vunpack.c.l.b16 %v2981
      %v3066 = vunpack.c.l.b16 %v2982
      %v3067 = vunpack.c.l.b16 %v2983
      %v3068 = vunpack.c.l.b16 %v2984
      %v3069 = vunpack.c.l.b16 %v2985
      %v3070 = vunpack.c.l.b16 %v2986
      %v3071 = vunpack.c.l.b16 %v2987
      %v3072 = vunpack.c.l.b16 %v2988
      %v3073 = vunpack.c.l.b16 %v2989
      %v3074 = vunpack.c.l.b16 %v2990
      %v3075 = vunpack.c.l.b16 %v2991
      %v3076 = vunpack.c.l.b16 %v2992
      %v3077 = vpack.c.b16 %v3054, %v3053
      %v3078 = vpack.c.b16 %v3056, %v3055
      %v3079 = vpack.c.b16 %v3058, %v3057
      %v3080 = vpack.c.b16 %v3060, %v3059
      %v3081 = vpack.c.b16 %v3062, %v3061
      %v3082 = vpack.c.b16 %v3064, %v3063
      %v3083 = vpack.c.b16 %v3066, %v3065
      %v3084 = vpack.c.b16 %v3068, %v3067
      %v3085 = vpack.c.b16 %v3070, %v3069
      %v3086 = vpack.c.b16 %v3072, %v3071
      %v3087 = vpack.c.b16 %v3074, %v3073
      %v3088 = vpack.c.b16 %v3076, %v3075
      %v3102 = vsel %vm1296, %v3018, 0
      %v3105 = vsel %vm1296, %v3020, 0
      %v3108 = vsel %vm1296, %v3022, 0
      %v3111 = vsel %vm1296, %v3024, 0
      %3113 = vmatpush.bf16.msra.mxu0 %v3084
      %3114 = vmatpush.bf16.msra.mxu0 %v3083
      %3115 = vmatpush.bf16.msra.mxu0 %v3082
      %3116 = vmatpush.bf16.msra.mxu0 %v3081
      %3117 = vmatpush.bf16.msra.mxu0 %v3080
      %3118 = vmatpush.bf16.msra.mxu0 %v3079
      %3119 = vmatpush.bf16.msra.mxu0 %v3078
      %3120 = vmatpush.bf16.msra.mxu0 %v3077
      %3121 = vmatmul.bf16.gmra.mxu0 %v3017
      %v3122 = vpop.f32.mrf.mxu0
      %v3123 = vadd.f32 0.0, %v3122
      %v3124 = vpop.f32.mrf.mxu0
      %v3125 = vadd.f32 0.0, %v3124
      %3126 = vmatmul.bf16.gmra.mxu0 %v3019
      %v3127 = vpop.f32.mrf.mxu0
      %v3128 = vadd.f32 0.0, %v3127
      %v3129 = vpop.f32.mrf.mxu0
      %v3130 = vadd.f32 0.0, %v3129
      %3131 = vmatmul.bf16.gmra.mxu0 %v3021
      %v3132 = vpop.f32.mrf.mxu0
      %v3133 = vadd.f32 0.0, %v3132
      %v3134 = vpop.f32.mrf.mxu0
      %v3135 = vadd.f32 0.0, %v3134
      %3136 = vmatmul.bf16.gmra.mxu0 %v3023
      %v3137 = vpop.f32.mrf.mxu0
      %v3138 = vadd.f32 0.0, %v3137
      %v3139 = vpop.f32.mrf.mxu0
      %v3140 = vadd.f32 0.0, %v3139
      %3141 = vdwg.mxu0
      %3142 = vmatpush.bf16.msra.mxu0 0
      %3143 = vmatpush.bf16.msra.mxu0 0
      %3144 = vmatpush.bf16.msra.mxu0 0
      %3145 = vmatpush.bf16.msra.mxu0 0
      %3146 = vmatpush.bf16.msra.mxu0 %v3088
      %3147 = vmatpush.bf16.msra.mxu0 %v3087
      %3148 = vmatpush.bf16.msra.mxu0 %v3086
      %3149 = vmatpush.bf16.msra.mxu0 %v3085
      %3150 = vmatmul.bf16.gmra.mxu0 %v3102
      %v3151 = vpop.f32.mrf.mxu0
      %v3152 = vadd.f32 %v3123, %v3151
      %v3153 = vpop.f32.mrf.mxu0
      %v3154 = vadd.f32 %v3125, %v3153
      %3155 = vmatmul.bf16.gmra.mxu0 %v3105
      %v3156 = vpop.f32.mrf.mxu0
      %v3157 = vadd.f32 %v3128, %v3156
      %v3158 = vpop.f32.mrf.mxu0
      %v3159 = vadd.f32 %v3130, %v3158
      %3160 = vmatmul.bf16.gmra.mxu0 %v3108
      %v3161 = vpop.f32.mrf.mxu0
      %v3162 = vadd.f32 %v3133, %v3161
      %v3163 = vpop.f32.mrf.mxu0
      %v3164 = vadd.f32 %v3135, %v3163
      %3165 = vmatmul.bf16.gmra.mxu0 %v3111
      %v3166 = vpop.f32.mrf.mxu0
      %v3167 = vadd.f32 %v3138, %v3166
      %v3168 = vpop.f32.mrf.mxu0
      %v3169 = vadd.f32 %v3140, %v3168
      %3170 = vdwg.mxu0
      %v3171 = vmin.f32 %v3152, 20.0
      %v3172 = vmin.f32 %v3154, 20.0
      %v3173 = vmin.f32 %v3157, 20.0
      %v3174 = vmin.f32 %v3159, 20.0
      %v3175 = vmin.f32 %v3162, 20.0
      %v3176 = vmin.f32 %v3164, 20.0
      %v3177 = vmin.f32 %v3167, 20.0
      %v3178 = vmin.f32 %v3169, 20.0
      %v3179 = vmul.f32 %v3171, 1.442695
      %v3180 = vpow.pop %v3179
      %v3181 = vmul.f32 %v3172, 1.442695
      %v3182 = vpow.pop %v3181
      %v3183 = vmul.f32 %v3173, 1.442695
      %v3184 = vpow.pop %v3183
      %v3185 = vmul.f32 %v3174, 1.442695
      %v3186 = vpow.pop %v3185
      %v3187 = vmul.f32 %v3175, 1.442695
      %v3188 = vpow.pop %v3187
      %v3189 = vmul.f32 %v3176, 1.442695
      %v3190 = vpow.pop %v3189
      %v3191 = vmul.f32 %v3177, 1.442695
      %v3192 = vpow.pop %v3191
      %v3193 = vmul.f32 %v3178, 1.442695
      %v3194 = vpow.pop %v3193
      %v3195 = vadd.f32 %v3180, 2.0
      %v3196 = vadd.f32 %v3182, 2.0
      %v3197 = vadd.f32 %v3184, 2.0
      %v3198 = vadd.f32 %v3186, 2.0
      %v3199 = vadd.f32 %v3188, 2.0
      %v3200 = vadd.f32 %v3190, 2.0
      %v3201 = vadd.f32 %v3192, 2.0
      %v3202 = vadd.f32 %v3194, 2.0
      %v3203 = vmul.f32 %v3180, %v3195
      %v3204 = vmul.f32 %v3182, %v3196
      %v3205 = vmul.f32 %v3184, %v3197
      %v3206 = vmul.f32 %v3186, %v3198
      %v3207 = vmul.f32 %v3188, %v3199
      %v3208 = vmul.f32 %v3190, %v3200
      %v3209 = vmul.f32 %v3192, %v3201
      %v3210 = vmul.f32 %v3194, %v3202
      %v3211 = vadd.f32 %v3203, 2.0
      %v3212 = vadd.f32 %v3204, 2.0
      %v3213 = vadd.f32 %v3205, 2.0
      %v3214 = vadd.f32 %v3206, 2.0
      %v3215 = vadd.f32 %v3207, 2.0
      %v3216 = vadd.f32 %v3208, 2.0
      %v3217 = vadd.f32 %v3209, 2.0
      %v3218 = vadd.f32 %v3210, 2.0
      %v3219 = vrcp.pop %v3211
      %v3220 = vrcp.pop %v3212
      %v3221 = vrcp.pop %v3213
      %v3222 = vrcp.pop %v3214
      %v3223 = vrcp.pop %v3215
      %v3224 = vrcp.pop %v3216
      %v3225 = vrcp.pop %v3217
      %v3226 = vrcp.pop %v3218
      %v3227 = vmul.f32 %v3203, %v3219
      %v3228 = vmul.f32 %v3204, %v3220
      %v3229 = vmul.f32 %v3205, %v3221
      %v3230 = vmul.f32 %v3206, %v3222
      %v3231 = vmul.f32 %v3207, %v3223
      %v3232 = vmul.f32 %v3208, %v3224
      %v3233 = vmul.f32 %v3209, %v3225
      %v3234 = vmul.f32 %v3210, %v3226
      %v3235 = vmul.f32 %v3152, %v3227
      %v3236 = vmul.f32 %v3154, %v3228
      %v3237 = vmul.f32 %v3157, %v3229
      %v3238 = vmul.f32 %v3159, %v3230
      %v3239 = vmul.f32 %v3162, %v3231
      %v3240 = vmul.f32 %v3164, %v3232
      %v3241 = vmul.f32 %v3167, %v3233
      %v3242 = vmul.f32 %v3169, %v3234
      %v3243 = vpack.c.bf16 %v3235, %v3235
      %v3244 = vpack.c.bf16 %v3236, %v3236
      %v3245 = vpack.c.bf16 %v3237, %v3237
      %v3246 = vpack.c.bf16 %v3238, %v3238
      %v3247 = vpack.c.bf16 %v3239, %v3239
      %v3248 = vpack.c.bf16 %v3240, %v3240
      %v3249 = vpack.c.bf16 %v3241, %v3241
      %v3250 = vpack.c.bf16 %v3242, %v3242
      %3251 = vst [vmem:[#allocation2 + $0x20] sm:$0xf] %v3243
      %3252 = vst [vmem:[#allocation2 + $0x24] sm:$0xf] %v3244
      %3253 = vst [vmem:[#allocation2 + $0x28] sm:$0xf] %v3245
      %3254 = vst [vmem:[#allocation2 + $0x2c] sm:$0xf] %v3246
      %3255 = vst [vmem:[#allocation2 + $0x30] sm:$0xf] %v3247
      %3256 = vst [vmem:[#allocation2 + $0x34] sm:$0xf] %v3248
      %3257 = vst [vmem:[#allocation2 + $0x38] sm:$0xf] %v3249
      %3258 = vst [vmem:[#allocation2 + $0x3c] sm:$0xf] %v3250
      %3267 = vrot.lane.b32.xlu0 %v3243, 4
      %v3268 = vpop.permute.xlu0 %3267
      %3269 = vrot.lane.b32.xlu0 %v3244, 4
      %v3270 = vpop.permute.xlu0 %3269
      %3271 = vrot.lane.b32.xlu0 %v3245, 4
      %v3272 = vpop.permute.xlu0 %3271
      %3273 = vrot.lane.b32.xlu0 %v3246, 4
      %v3274 = vpop.permute.xlu0 %3273
      %3275 = vrot.lane.b32.xlu0 %v3247, 4
      %v3276 = vpop.permute.xlu0 %3275
      %3277 = vrot.lane.b32.xlu0 %v3248, 4
      %v3278 = vpop.permute.xlu0 %3277
      %3279 = vrot.lane.b32.xlu0 %v3249, 4
      %v3280 = vpop.permute.xlu0 %3279
      %3281 = vrot.lane.b32.xlu0 %v3250, 4
      %v3282 = vpop.permute.xlu0 %3281
      %3291 = vst.msk [vmem:[#allocation2] sm:$0xf] %vm2717, %v3268
      %3292 = vst.msk [vmem:[#allocation2 + $0x4] sm:$0xf] %vm2717, %v3270
      %3293 = vst.msk [vmem:[#allocation2 + $0x8] sm:$0xf] %vm2717, %v3272
      %3294 = vst.msk [vmem:[#allocation2 + $0xc] sm:$0xf] %vm2717, %v3274
      %3295 = vst.msk [vmem:[#allocation2 + $0x10] sm:$0xf] %vm2717, %v3276
      %3296 = vst.msk [vmem:[#allocation2 + $0x14] sm:$0xf] %vm2717, %v3278
      %3297 = vst.msk [vmem:[#allocation2 + $0x18] sm:$0xf] %vm2717, %v3280
      %3298 = vst.msk [vmem:[#allocation2 + $0x1c] sm:$0xf] %vm2717, %v3282
      %3299 = vrot.lane.b32.xlu0 %v3243, 124
      %v3300 = vpop.permute.xlu0 %3299
      %3301 = vrot.lane.b32.xlu0 %v3244, 124
      %v3302 = vpop.permute.xlu0 %3301
      %3303 = vrot.lane.b32.xlu0 %v3245, 124
      %v3304 = vpop.permute.xlu0 %3303
      %3305 = vrot.lane.b32.xlu0 %v3246, 124
      %v3306 = vpop.permute.xlu0 %3305
      %3307 = vrot.lane.b32.xlu0 %v3247, 124
      %v3308 = vpop.permute.xlu0 %3307
      %3309 = vrot.lane.b32.xlu0 %v3248, 124
      %v3310 = vpop.permute.xlu0 %3309
      %3311 = vrot.lane.b32.xlu0 %v3249, 124
      %v3312 = vpop.permute.xlu0 %3311
      %3313 = vrot.lane.b32.xlu0 %v3250, 124
      %v3314 = vpop.permute.xlu0 %3313
      %3323 = vst.msk [vmem:[#allocation2 + $0x40] sm:$0xf] %vm2750, %v3300
      %3324 = vst.msk [vmem:[#allocation2 + $0x44] sm:$0xf] %vm2750, %v3302
      %3325 = vst.msk [vmem:[#allocation2 + $0x48] sm:$0xf] %vm2750, %v3304
      %3326 = vst.msk [vmem:[#allocation2 + $0x4c] sm:$0xf] %vm2750, %v3306
      %3327 = vst.msk [vmem:[#allocation2 + $0x50] sm:$0xf] %vm2750, %v3308
      %3328 = vst.msk [vmem:[#allocation2 + $0x54] sm:$0xf] %vm2750, %v3310
      %3329 = vst.msk [vmem:[#allocation2 + $0x58] sm:$0xf] %vm2750, %v3312
      %3330 = vst.msk [vmem:[#allocation2 + $0x5c] sm:$0xf] %vm2750, %v3314
      %3331 = vst.msk [vmem:[#allocation2] sm:$0xf] %vm740, %v3300
      %3332 = vst.msk [vmem:[#allocation2 + $0x4] sm:$0xf] %vm740, %v3302
      %3333 = vst.msk [vmem:[#allocation2 + $0x8] sm:$0xf] %vm740, %v3304
      %3334 = vst.msk [vmem:[#allocation2 + $0xc] sm:$0xf] %vm740, %v3306
      %3335 = vst.msk [vmem:[#allocation2 + $0x10] sm:$0xf] %vm740, %v3308
      %3336 = vst.msk [vmem:[#allocation2 + $0x14] sm:$0xf] %vm740, %v3310
      %3337 = vst.msk [vmem:[#allocation2 + $0x18] sm:$0xf] %vm740, %v3312
      %3338 = vst.msk [vmem:[#allocation2 + $0x1c] sm:$0xf] %vm740, %v3314
      %3339 = vrot.lane.b32.xlu0 %v3243, 126
      %v3340 = vpop.permute.xlu0 %3339
      %3341 = vrot.lane.b32.xlu0 %v3244, 126
      %v3342 = vpop.permute.xlu0 %3341
      %3343 = vrot.lane.b32.xlu0 %v3245, 126
      %v3344 = vpop.permute.xlu0 %3343
      %3345 = vrot.lane.b32.xlu0 %v3246, 126
      %v3346 = vpop.permute.xlu0 %3345
      %3347 = vrot.lane.b32.xlu0 %v3247, 126
      %v3348 = vpop.permute.xlu0 %3347
      %3349 = vrot.lane.b32.xlu0 %v3248, 126
      %v3350 = vpop.permute.xlu0 %3349
      %3351 = vrot.lane.b32.xlu0 %v3249, 126
      %v3352 = vpop.permute.xlu0 %3351
      %3353 = vrot.lane.b32.xlu0 %v3250, 126
      %v3354 = vpop.permute.xlu0 %3353
      %3363 = vst.msk [vmem:[#allocation2 + $0x40] sm:$0xf] %vm2791, %v3340
      %3364 = vst.msk [vmem:[#allocation2 + $0x44] sm:$0xf] %vm2791, %v3342
      %3365 = vst.msk [vmem:[#allocation2 + $0x48] sm:$0xf] %vm2791, %v3344
      %3366 = vst.msk [vmem:[#allocation2 + $0x4c] sm:$0xf] %vm2791, %v3346
      %3367 = vst.msk [vmem:[#allocation2 + $0x50] sm:$0xf] %vm2791, %v3348
      %3368 = vst.msk [vmem:[#allocation2 + $0x54] sm:$0xf] %vm2791, %v3350
      %3369 = vst.msk [vmem:[#allocation2 + $0x58] sm:$0xf] %vm2791, %v3352
      %3370 = vst.msk [vmem:[#allocation2 + $0x5c] sm:$0xf] %vm2791, %v3354
      %3371 = vst.msk [vmem:[#allocation2] sm:$0xf] %vm1628, %v3340
      %3372 = vst.msk [vmem:[#allocation2 + $0x4] sm:$0xf] %vm1628, %v3342
      %3373 = vst.msk [vmem:[#allocation2 + $0x8] sm:$0xf] %vm1628, %v3344
      %3374 = vst.msk [vmem:[#allocation2 + $0xc] sm:$0xf] %vm1628, %v3346
      %3375 = vst.msk [vmem:[#allocation2 + $0x10] sm:$0xf] %vm1628, %v3348
      %3376 = vst.msk [vmem:[#allocation2 + $0x14] sm:$0xf] %vm1628, %v3350
      %3377 = vst.msk [vmem:[#allocation2 + $0x18] sm:$0xf] %vm1628, %v3352
      %3378 = vst.msk [vmem:[#allocation2 + $0x1c] sm:$0xf] %vm1628, %v3354
      %3379 = vst.msk [vmem:[#allocation2 + $0x40] sm:$0xf] %vm2808, %v3243
      %3380 = vst.msk [vmem:[#allocation2 + $0x44] sm:$0xf] %vm2808, %v3244
      %3381 = vst.msk [vmem:[#allocation2 + $0x48] sm:$0xf] %vm2808, %v3245
      %3382 = vst.msk [vmem:[#allocation2 + $0x4c] sm:$0xf] %vm2808, %v3246
      %3383 = vst.msk [vmem:[#allocation2 + $0x50] sm:$0xf] %vm2808, %v3247
      %3384 = vst.msk [vmem:[#allocation2 + $0x54] sm:$0xf] %vm2808, %v3248
      %3385 = vst.msk [vmem:[#allocation2 + $0x58] sm:$0xf] %vm2808, %v3249
      %3386 = vst.msk [vmem:[#allocation2 + $0x5c] sm:$0xf] %vm2808, %v3250
      %3387 = vst.msk [vmem:[#allocation2] sm:$0xf] %vm2817, %v3243
      %3388 = vst.msk [vmem:[#allocation2 + $0x4] sm:$0xf] %vm2817, %v3244
      %3389 = vst.msk [vmem:[#allocation2 + $0x8] sm:$0xf] %vm2817, %v3245
      %3390 = vst.msk [vmem:[#allocation2 + $0xc] sm:$0xf] %vm2817, %v3246
      %3391 = vst.msk [vmem:[#allocation2 + $0x10] sm:$0xf] %vm2817, %v3247
      %3392 = vst.msk [vmem:[#allocation2 + $0x14] sm:$0xf] %vm2817, %v3248
      %3393 = vst.msk [vmem:[#allocation2 + $0x18] sm:$0xf] %vm2817, %v3249
      %3394 = vst.msk [vmem:[#allocation2 + $0x1c] sm:$0xf] %vm2817, %v3250
      %3395 = vrot.lane.b32.xlu0 %v3243, 2
      %v3396 = vpop.permute.xlu0 %3395
      %3397 = vrot.lane.b32.xlu0 %v3244, 2
      %v3398 = vpop.permute.xlu0 %3397
      %3399 = vrot.lane.b32.xlu0 %v3245, 2
      %v3400 = vpop.permute.xlu0 %3399
      %3401 = vrot.lane.b32.xlu0 %v3246, 2
      %v3402 = vpop.permute.xlu0 %3401
      %3403 = vrot.lane.b32.xlu0 %v3247, 2
      %v3404 = vpop.permute.xlu0 %3403
      %3405 = vrot.lane.b32.xlu0 %v3248, 2
      %v3406 = vpop.permute.xlu0 %3405
      %3407 = vrot.lane.b32.xlu0 %v3249, 2
      %v3408 = vpop.permute.xlu0 %3407
      %3409 = vrot.lane.b32.xlu0 %v3250, 2
      %v3410 = vpop.permute.xlu0 %3409
      %3419 = vst.msk [vmem:[#allocation2 + $0x40] sm:$0xf] %vm1619, %v3396
      %3420 = vst.msk [vmem:[#allocation2 + $0x44] sm:$0xf] %vm1619, %v3398
      %3421 = vst.msk [vmem:[#allocation2 + $0x48] sm:$0xf] %vm1619, %v3400
      %3422 = vst.msk [vmem:[#allocation2 + $0x4c] sm:$0xf] %vm1619, %v3402
      %3423 = vst.msk [vmem:[#allocation2 + $0x50] sm:$0xf] %vm1619, %v3404
      %3424 = vst.msk [vmem:[#allocation2 + $0x54] sm:$0xf] %vm1619, %v3406
      %3425 = vst.msk [vmem:[#allocation2 + $0x58] sm:$0xf] %vm1619, %v3408
      %3426 = vst.msk [vmem:[#allocation2 + $0x5c] sm:$0xf] %vm1619, %v3410
      %3427 = vst.msk [vmem:[#allocation2] sm:$0xf] %vm2858, %v3396
      %3428 = vst.msk [vmem:[#allocation2 + $0x4] sm:$0xf] %vm2858, %v3398
      %3429 = vst.msk [vmem:[#allocation2 + $0x8] sm:$0xf] %vm2858, %v3400
      %3430 = vst.msk [vmem:[#allocation2 + $0xc] sm:$0xf] %vm2858, %v3402
      %3431 = vst.msk [vmem:[#allocation2 + $0x10] sm:$0xf] %vm2858, %v3404
      %3432 = vst.msk [vmem:[#allocation2 + $0x14] sm:$0xf] %vm2858, %v3406
      %3433 = vst.msk [vmem:[#allocation2 + $0x18] sm:$0xf] %vm2858, %v3408
      %3434 = vst.msk [vmem:[#allocation2 + $0x1c] sm:$0xf] %vm2858, %v3410
      %3435 = vst.msk [vmem:[#allocation2 + $0x40] sm:$0xf] %vm743, %v3268
      %3436 = vst.msk [vmem:[#allocation2 + $0x44] sm:$0xf] %vm743, %v3270
      %3437 = vst.msk [vmem:[#allocation2 + $0x48] sm:$0xf] %vm743, %v3272
      %3438 = vst.msk [vmem:[#allocation2 + $0x4c] sm:$0xf] %vm743, %v3274
      %3439 = vst.msk [vmem:[#allocation2 + $0x50] sm:$0xf] %vm743, %v3276
      %3440 = vst.msk [vmem:[#allocation2 + $0x54] sm:$0xf] %vm743, %v3278
      %3441 = vst.msk [vmem:[#allocation2 + $0x58] sm:$0xf] %vm743, %v3280
      %3442 = vst.msk [vmem:[#allocation2 + $0x5c] sm:$0xf] %vm743, %v3282
      %3443 = vst.msk [vmem:[#allocation2] sm:$0xf] %vm2875, %v3268
      %3444 = vst.msk [vmem:[#allocation2 + $0x4] sm:$0xf] %vm2875, %v3270
      %3445 = vst.msk [vmem:[#allocation2 + $0x8] sm:$0xf] %vm2875, %v3272
      %3446 = vst.msk [vmem:[#allocation2 + $0xc] sm:$0xf] %vm2875, %v3274
      %3447 = vst.msk [vmem:[#allocation2 + $0x10] sm:$0xf] %vm2875, %v3276
      %3448 = vst.msk [vmem:[#allocation2 + $0x14] sm:$0xf] %vm2875, %v3278
      %3449 = vst.msk [vmem:[#allocation2 + $0x18] sm:$0xf] %vm2875, %v3280
      %3450 = vst.msk [vmem:[#allocation2 + $0x1c] sm:$0xf] %vm2875, %v3282
      %3451 = vst.msk [vmem:[#allocation2 + $0x40] sm:$0xf] %vm2884, %v3300
      %3452 = vst.msk [vmem:[#allocation2 + $0x44] sm:$0xf] %vm2884, %v3302
      %3453 = vst.msk [vmem:[#allocation2 + $0x48] sm:$0xf] %vm2884, %v3304
      %3454 = vst.msk [vmem:[#allocation2 + $0x4c] sm:$0xf] %vm2884, %v3306
      %3455 = vst.msk [vmem:[#allocation2 + $0x50] sm:$0xf] %vm2884, %v3308
      %3456 = vst.msk [vmem:[#allocation2 + $0x54] sm:$0xf] %vm2884, %v3310
      %3457 = vst.msk [vmem:[#allocation2 + $0x58] sm:$0xf] %vm2884, %v3312
      %3458 = vst.msk [vmem:[#allocation2 + $0x5c] sm:$0xf] %vm2884, %v3314
      %3459 = vst.msk [vmem:[#allocation2] sm:$0xf] %vm752, %v3300
      %3460 = vst.msk [vmem:[#allocation2 + $0x4] sm:$0xf] %vm752, %v3302
      %3461 = vst.msk [vmem:[#allocation2 + $0x8] sm:$0xf] %vm752, %v3304
      %3462 = vst.msk [vmem:[#allocation2 + $0xc] sm:$0xf] %vm752, %v3306
      %3463 = vst.msk [vmem:[#allocation2 + $0x10] sm:$0xf] %vm752, %v3308
      %3464 = vst.msk [vmem:[#allocation2 + $0x14] sm:$0xf] %vm752, %v3310
      %3465 = vst.msk [vmem:[#allocation2 + $0x18] sm:$0xf] %vm752, %v3312
      %3466 = vst.msk [vmem:[#allocation2 + $0x1c] sm:$0xf] %vm752, %v3314
      %3467 = vst.msk [vmem:[#allocation2 + $0x40] sm:$0xf] %vm2901, %v3340
      %3468 = vst.msk [vmem:[#allocation2 + $0x44] sm:$0xf] %vm2901, %v3342
      %3469 = vst.msk [vmem:[#allocation2 + $0x48] sm:$0xf] %vm2901, %v3344
      %3470 = vst.msk [vmem:[#allocation2 + $0x4c] sm:$0xf] %vm2901, %v3346
      %3471 = vst.msk [vmem:[#allocation2 + $0x50] sm:$0xf] %vm2901, %v3348
      %3472 = vst.msk [vmem:[#allocation2 + $0x54] sm:$0xf] %vm2901, %v3350
      %3473 = vst.msk [vmem:[#allocation2 + $0x58] sm:$0xf] %vm2901, %v3352
      %3474 = vst.msk [vmem:[#allocation2 + $0x5c] sm:$0xf] %vm2901, %v3354
      %3475 = vst.msk [vmem:[#allocation2] sm:$0xf] %vm1680, %v3340
      %3476 = vst.msk [vmem:[#allocation2 + $0x4] sm:$0xf] %vm1680, %v3342
      %3477 = vst.msk [vmem:[#allocation2 + $0x8] sm:$0xf] %vm1680, %v3344
      %3478 = vst.msk [vmem:[#allocation2 + $0xc] sm:$0xf] %vm1680, %v3346
      %3479 = vst.msk [vmem:[#allocation2 + $0x10] sm:$0xf] %vm1680, %v3348
      %3480 = vst.msk [vmem:[#allocation2 + $0x14] sm:$0xf] %vm1680, %v3350
      %3481 = vst.msk [vmem:[#allocation2 + $0x18] sm:$0xf] %vm1680, %v3352
      %3482 = vst.msk [vmem:[#allocation2 + $0x1c] sm:$0xf] %vm1680, %v3354
      %3483 = vst.msk [vmem:[#allocation2 + $0x40] sm:$0xf] %vm2918, %v3243
      %3484 = vst.msk [vmem:[#allocation2 + $0x44] sm:$0xf] %vm2918, %v3244
      %3485 = vst.msk [vmem:[#allocation2 + $0x48] sm:$0xf] %vm2918, %v3245
      %3486 = vst.msk [vmem:[#allocation2 + $0x4c] sm:$0xf] %vm2918, %v3246
      %3487 = vst.msk [vmem:[#allocation2 + $0x50] sm:$0xf] %vm2918, %v3247
      %3488 = vst.msk [vmem:[#allocation2 + $0x54] sm:$0xf] %vm2918, %v3248
      %3489 = vst.msk [vmem:[#allocation2 + $0x58] sm:$0xf] %vm2918, %v3249
      %3490 = vst.msk [vmem:[#allocation2 + $0x5c] sm:$0xf] %vm2918, %v3250
      %3491 = vst.msk [vmem:[#allocation2] sm:$0xf] %vm2927, %v3243
      %3492 = vst.msk [vmem:[#allocation2 + $0x4] sm:$0xf] %vm2927, %v3244
      %3493 = vst.msk [vmem:[#allocation2 + $0x8] sm:$0xf] %vm2927, %v3245
      %3494 = vst.msk [vmem:[#allocation2 + $0xc] sm:$0xf] %vm2927, %v3246
      %3495 = vst.msk [vmem:[#allocation2 + $0x10] sm:$0xf] %vm2927, %v3247
      %3496 = vst.msk [vmem:[#allocation2 + $0x14] sm:$0xf] %vm2927, %v3248
      %3497 = vst.msk [vmem:[#allocation2 + $0x18] sm:$0xf] %vm2927, %v3249
      %3498 = vst.msk [vmem:[#allocation2 + $0x1c] sm:$0xf] %vm2927, %v3250
      %3499 = vst.msk [vmem:[#allocation2 + $0x40] sm:$0xf] %vm1671, %v3396
      %3500 = vst.msk [vmem:[#allocation2 + $0x44] sm:$0xf] %vm1671, %v3398
      %3501 = vst.msk [vmem:[#allocation2 + $0x48] sm:$0xf] %vm1671, %v3400
      %3502 = vst.msk [vmem:[#allocation2 + $0x4c] sm:$0xf] %vm1671, %v3402
      %3503 = vst.msk [vmem:[#allocation2 + $0x50] sm:$0xf] %vm1671, %v3404
      %3504 = vst.msk [vmem:[#allocation2 + $0x54] sm:$0xf] %vm1671, %v3406
      %3505 = vst.msk [vmem:[#allocation2 + $0x58] sm:$0xf] %vm1671, %v3408
      %3506 = vst.msk [vmem:[#allocation2 + $0x5c] sm:$0xf] %vm1671, %v3410
      %3507 = vst.msk [vmem:[#allocation2] sm:$0xf] %vm2944, %v3396
      %3508 = vst.msk [vmem:[#allocation2 + $0x4] sm:$0xf] %vm2944, %v3398
      %3509 = vst.msk [vmem:[#allocation2 + $0x8] sm:$0xf] %vm2944, %v3400
      %3510 = vst.msk [vmem:[#allocation2 + $0xc] sm:$0xf] %vm2944, %v3402
      %3511 = vst.msk [vmem:[#allocation2 + $0x10] sm:$0xf] %vm2944, %v3404
      %3512 = vst.msk [vmem:[#allocation2 + $0x14] sm:$0xf] %vm2944, %v3406
      %3513 = vst.msk [vmem:[#allocation2 + $0x18] sm:$0xf] %vm2944, %v3408
      %3514 = vst.msk [vmem:[#allocation2 + $0x1c] sm:$0xf] %vm2944, %v3410
      %3515 = vst.msk [vmem:[#allocation2 + $0x40] sm:$0xf] %vm755, %v3268
      %3516 = vst.msk [vmem:[#allocation2 + $0x44] sm:$0xf] %vm755, %v3270
      %3517 = vst.msk [vmem:[#allocation2 + $0x48] sm:$0xf] %vm755, %v3272
      %3518 = vst.msk [vmem:[#allocation2 + $0x4c] sm:$0xf] %vm755, %v3274
      %3519 = vst.msk [vmem:[#allocation2 + $0x50] sm:$0xf] %vm755, %v3276
      %3520 = vst.msk [vmem:[#allocation2 + $0x54] sm:$0xf] %vm755, %v3278
      %3521 = vst.msk [vmem:[#allocation2 + $0x58] sm:$0xf] %vm755, %v3280
      %3522 = vst.msk [vmem:[#allocation2 + $0x5c] sm:$0xf] %vm755, %v3282
      %v3523 = vld [vmem:[%s10] sm:$0xff]
      %v3524 = vld [vmem:[%s10 + $0x8] sm:$0xff]
      %v3525 = vld [vmem:[%s10 + $0x10] sm:$0xff]
      %v3526 = vld [vmem:[%s10 + $0x18] sm:$0xff]
      %v3527 = vld [vmem:[%s10 + $0x20] sm:$0xff]
      %v3528 = vld [vmem:[%s10 + $0x28] sm:$0xff]
      %v3529 = vld [vmem:[%s10 + $0x30] sm:$0xff]
      %v3530 = vld [vmem:[%s10 + $0x38] sm:$0xff]
      %v3531 = vld [vmem:[#allocation2] sm:$0xf]
      %v3532 = vld [vmem:[#allocation2 + $0x4] sm:$0xf]
      %v3533 = vld [vmem:[#allocation2 + $0x8] sm:$0xf]
      %v3534 = vld [vmem:[#allocation2 + $0xc] sm:$0xf]
      %v3535 = vld [vmem:[#allocation2 + $0x10] sm:$0xf]
      %v3536 = vld [vmem:[#allocation2 + $0x14] sm:$0xf]
      %v3537 = vld [vmem:[#allocation2 + $0x18] sm:$0xf]
      %v3538 = vld [vmem:[#allocation2 + $0x1c] sm:$0xf]
      %v3539 = vld [vmem:[#allocation2 + $0x20] sm:$0xf]
      %v3540 = vld [vmem:[#allocation2 + $0x24] sm:$0xf]
      %v3541 = vld [vmem:[#allocation2 + $0x28] sm:$0xf]
      %v3542 = vld [vmem:[#allocation2 + $0x2c] sm:$0xf]
      %v3543 = vld [vmem:[#allocation2 + $0x30] sm:$0xf]
      %v3544 = vld [vmem:[#allocation2 + $0x34] sm:$0xf]
      %v3545 = vld [vmem:[#allocation2 + $0x38] sm:$0xf]
      %v3546 = vld [vmem:[#allocation2 + $0x3c] sm:$0xf]
      %v3547 = vld [vmem:[#allocation2 + $0x40] sm:$0xf]
      %v3548 = vld [vmem:[#allocation2 + $0x44] sm:$0xf]
      %v3549 = vld [vmem:[#allocation2 + $0x48] sm:$0xf]
      %v3550 = vld [vmem:[#allocation2 + $0x4c] sm:$0xf]
      %v3551 = vld [vmem:[#allocation2 + $0x50] sm:$0xf]
      %v3552 = vld [vmem:[#allocation2 + $0x54] sm:$0xf]
      %v3553 = vld [vmem:[#allocation2 + $0x58] sm:$0xf]
      %v3554 = vld [vmem:[#allocation2 + $0x5c] sm:$0xf]
      %v3563 = vunpack.c.l.b16 %v3523
      %v3564 = vunpack.c.h.b16 %v3523
      %v3565 = vunpack.c.l.b16 %v3524
      %v3566 = vunpack.c.h.b16 %v3524
      %v3567 = vunpack.c.l.b16 %v3525
      %v3568 = vunpack.c.h.b16 %v3525
      %v3569 = vunpack.c.l.b16 %v3526
      %v3570 = vunpack.c.h.b16 %v3526
      %v3571 = vunpack.c.l.b16 %v3527
      %v3572 = vunpack.c.h.b16 %v3527
      %v3573 = vunpack.c.l.b16 %v3528
      %v3574 = vunpack.c.h.b16 %v3528
      %v3575 = vunpack.c.l.b16 %v3529
      %v3576 = vunpack.c.h.b16 %v3529
      %v3577 = vunpack.c.l.b16 %v3530
      %v3578 = vunpack.c.h.b16 %v3530
      %v3579 = vpack.c.b16 %v3565, %v3563
      %v3580 = vpack.c.b16 %v3566, %v3564
      %v3581 = vpack.c.b16 %v3569, %v3567
      %v3582 = vpack.c.b16 %v3570, %v3568
      %v3583 = vpack.c.b16 %v3573, %v3571
      %v3584 = vpack.c.b16 %v3574, %v3572
      %v3585 = vpack.c.b16 %v3577, %v3575
      %v3586 = vpack.c.b16 %v3578, %v3576
      %v3615 = vunpack.c.l.b16 %v3531
      %v3616 = vunpack.c.l.b16 %v3532
      %v3617 = vunpack.c.l.b16 %v3533
      %v3618 = vunpack.c.l.b16 %v3534
      %v3619 = vunpack.c.l.b16 %v3535
      %v3620 = vunpack.c.l.b16 %v3536
      %v3621 = vunpack.c.l.b16 %v3537
      %v3622 = vunpack.c.l.b16 %v3538
      %v3623 = vunpack.c.l.b16 %v3539
      %v3624 = vunpack.c.l.b16 %v3540
      %v3625 = vunpack.c.l.b16 %v3541
      %v3626 = vunpack.c.l.b16 %v3542
      %v3627 = vunpack.c.l.b16 %v3543
      %v3628 = vunpack.c.l.b16 %v3544
      %v3629 = vunpack.c.l.b16 %v3545
      %v3630 = vunpack.c.l.b16 %v3546
      %v3631 = vunpack.c.l.b16 %v3547
      %v3632 = vunpack.c.l.b16 %v3548
      %v3633 = vunpack.c.l.b16 %v3549
      %v3634 = vunpack.c.l.b16 %v3550
      %v3635 = vunpack.c.l.b16 %v3551
      %v3636 = vunpack.c.l.b16 %v3552
      %v3637 = vunpack.c.l.b16 %v3553
      %v3638 = vunpack.c.l.b16 %v3554
      %v3639 = vpack.c.b16 %v3616, %v3615
      %v3640 = vpack.c.b16 %v3618, %v3617
      %v3641 = vpack.c.b16 %v3620, %v3619
      %v3642 = vpack.c.b16 %v3622, %v3621
      %v3643 = vpack.c.b16 %v3624, %v3623
      %v3644 = vpack.c.b16 %v3626, %v3625
      %v3645 = vpack.c.b16 %v3628, %v3627
      %v3646 = vpack.c.b16 %v3630, %v3629
      %v3647 = vpack.c.b16 %v3632, %v3631
      %v3648 = vpack.c.b16 %v3634, %v3633
      %v3649 = vpack.c.b16 %v3636, %v3635
      %v3650 = vpack.c.b16 %v3638, %v3637
      %v3664 = vsel %vm1296, %v3580, 0
      %v3667 = vsel %vm1296, %v3582, 0
      %v3670 = vsel %vm1296, %v3584, 0
      %v3673 = vsel %vm1296, %v3586, 0
      %3675 = vmatpush.bf16.msra.mxu0 %v3646
      %3676 = vmatpush.bf16.msra.mxu0 %v3645
      %3677 = vmatpush.bf16.msra.mxu0 %v3644
      %3678 = vmatpush.bf16.msra.mxu0 %v3643
      %3679 = vmatpush.bf16.msra.mxu0 %v3642
      %3680 = vmatpush.bf16.msra.mxu0 %v3641
      %3681 = vmatpush.bf16.msra.mxu0 %v3640
      %3682 = vmatpush.bf16.msra.mxu0 %v3639
      %3683 = vmatmul.bf16.gmra.mxu0 %v3579
      %v3684 = vpop.f32.mrf.mxu0
      %v3685 = vadd.f32 0.0, %v3684
      %v3686 = vpop.f32.mrf.mxu0
      %v3687 = vadd.f32 0.0, %v3686
      %3688 = vmatmul.bf16.gmra.mxu0 %v3581
      %v3689 = vpop.f32.mrf.mxu0
      %v3690 = vadd.f32 0.0, %v3689
      %v3691 = vpop.f32.mrf.mxu0
      %v3692 = vadd.f32 0.0, %v3691
      %3693 = vmatmul.bf16.gmra.mxu0 %v3583
      %v3694 = vpop.f32.mrf.mxu0
      %v3695 = vadd.f32 0.0, %v3694
      %v3696 = vpop.f32.mrf.mxu0
      %v3697 = vadd.f32 0.0, %v3696
      %3698 = vmatmul.bf16.gmra.mxu0 %v3585
      %v3699 = vpop.f32.mrf.mxu0
      %v3700 = vadd.f32 0.0, %v3699
      %v3701 = vpop.f32.mrf.mxu0
      %v3702 = vadd.f32 0.0, %v3701
      %3703 = vdwg.mxu0
      %3704 = vmatpush.bf16.msra.mxu0 0
      %3705 = vmatpush.bf16.msra.mxu0 0
      %3706 = vmatpush.bf16.msra.mxu0 0
      %3707 = vmatpush.bf16.msra.mxu0 0
      %3708 = vmatpush.bf16.msra.mxu0 %v3650
      %3709 = vmatpush.bf16.msra.mxu0 %v3649
      %3710 = vmatpush.bf16.msra.mxu0 %v3648
      %3711 = vmatpush.bf16.msra.mxu0 %v3647
      %3712 = vmatmul.bf16.gmra.mxu0 %v3664
      %v3713 = vpop.f32.mrf.mxu0
      %v3714 = vadd.f32 %v3685, %v3713
      %v3715 = vpop.f32.mrf.mxu0
      %v3716 = vadd.f32 %v3687, %v3715
      %3717 = vmatmul.bf16.gmra.mxu0 %v3667
      %v3718 = vpop.f32.mrf.mxu0
      %v3719 = vadd.f32 %v3690, %v3718
      %v3720 = vpop.f32.mrf.mxu0
      %v3721 = vadd.f32 %v3692, %v3720
      %3722 = vmatmul.bf16.gmra.mxu0 %v3670
      %v3723 = vpop.f32.mrf.mxu0
      %v3724 = vadd.f32 %v3695, %v3723
      %v3725 = vpop.f32.mrf.mxu0
      %v3726 = vadd.f32 %v3697, %v3725
      %3727 = vmatmul.bf16.gmra.mxu0 %v3673
      %v3728 = vpop.f32.mrf.mxu0
      %v3729 = vadd.f32 %v3700, %v3728
      %v3730 = vpop.f32.mrf.mxu0
      %v3731 = vadd.f32 %v3702, %v3730
      %3732 = vdwg.mxu0
      %v3733 = vmin.f32 %v3714, 20.0
      %v3734 = vmin.f32 %v3716, 20.0
      %v3735 = vmin.f32 %v3719, 20.0
      %v3736 = vmin.f32 %v3721, 20.0
      %v3737 = vmin.f32 %v3724, 20.0
      %v3738 = vmin.f32 %v3726, 20.0
      %v3739 = vmin.f32 %v3729, 20.0
      %v3740 = vmin.f32 %v3731, 20.0
      %v3741 = vmul.f32 %v3733, 1.442695
      %v3742 = vpow.pop %v3741
      %v3743 = vmul.f32 %v3734, 1.442695
      %v3744 = vpow.pop %v3743
      %v3745 = vmul.f32 %v3735, 1.442695
      %v3746 = vpow.pop %v3745
      %v3747 = vmul.f32 %v3736, 1.442695
      %v3748 = vpow.pop %v3747
      %v3749 = vmul.f32 %v3737, 1.442695
      %v3750 = vpow.pop %v3749
      %v3751 = vmul.f32 %v3738, 1.442695
      %v3752 = vpow.pop %v3751
      %v3753 = vmul.f32 %v3739, 1.442695
      %v3754 = vpow.pop %v3753
      %v3755 = vmul.f32 %v3740, 1.442695
      %v3756 = vpow.pop %v3755
      %v3757 = vadd.f32 %v3742, 2.0
      %v3758 = vadd.f32 %v3744, 2.0
      %v3759 = vadd.f32 %v3746, 2.0
      %v3760 = vadd.f32 %v3748, 2.0
      %v3761 = vadd.f32 %v3750, 2.0
      %v3762 = vadd.f32 %v3752, 2.0
      %v3763 = vadd.f32 %v3754, 2.0
      %v3764 = vadd.f32 %v3756, 2.0
      %v3765 = vmul.f32 %v3742, %v3757
      %v3766 = vmul.f32 %v3744, %v3758
      %v3767 = vmul.f32 %v3746, %v3759
      %v3768 = vmul.f32 %v3748, %v3760
      %v3769 = vmul.f32 %v3750, %v3761
      %v3770 = vmul.f32 %v3752, %v3762
      %v3771 = vmul.f32 %v3754, %v3763
      %v3772 = vmul.f32 %v3756, %v3764
      %v3773 = vadd.f32 %v3765, 2.0
      %v3774 = vadd.f32 %v3766, 2.0
      %v3775 = vadd.f32 %v3767, 2.0
      %v3776 = vadd.f32 %v3768, 2.0
      %v3777 = vadd.f32 %v3769, 2.0
      %v3778 = vadd.f32 %v3770, 2.0
      %v3779 = vadd.f32 %v3771, 2.0
      %v3780 = vadd.f32 %v3772, 2.0
      %v3781 = vrcp.pop %v3773
      %v3782 = vrcp.pop %v3774
      %v3783 = vrcp.pop %v3775
      %v3784 = vrcp.pop %v3776
      %v3785 = vrcp.pop %v3777
      %v3786 = vrcp.pop %v3778
      %v3787 = vrcp.pop %v3779
      %v3788 = vrcp.pop %v3780
      %v3789 = vmul.f32 %v3765, %v3781
      %v3790 = vmul.f32 %v3766, %v3782
      %v3791 = vmul.f32 %v3767, %v3783
      %v3792 = vmul.f32 %v3768, %v3784
      %v3793 = vmul.f32 %v3769, %v3785
      %v3794 = vmul.f32 %v3770, %v3786
      %v3795 = vmul.f32 %v3771, %v3787
      %v3796 = vmul.f32 %v3772, %v3788
      %v3797 = vmul.f32 %v3714, %v3789
      %v3798 = vmul.f32 %v3716, %v3790
      %v3799 = vmul.f32 %v3719, %v3791
      %v3800 = vmul.f32 %v3721, %v3792
      %v3801 = vmul.f32 %v3724, %v3793
      %v3802 = vmul.f32 %v3726, %v3794
      %v3803 = vmul.f32 %v3729, %v3795
      %v3804 = vmul.f32 %v3731, %v3796
      %v3805 = vsel %vm1296, %v3797, 0.0
      %v3806 = vsel %vm1296, %v3798, 0.0
      %v3807 = vadd.f32 %v3805, %v3806
      %v3808 = vsel %vm1296, %v3799, 0.0
      %v3809 = vadd.f32 %v3807, %v3808
      %v3810 = vsel %vm1296, %v3800, 0.0
      %v3811 = vadd.f32 %v3809, %v3810
      %v3812 = vsel %vm1296, %v3801, 0.0
      %v3813 = vadd.f32 %v3811, %v3812
      %v3814 = vsel %vm1296, %v3802, 0.0
      %v3815 = vadd.f32 %v3813, %v3814
      %v3816 = vsel %vm1296, %v3803, 0.0
      %v3817 = vadd.f32 %v3815, %v3816
      %v3818 = vsel %vm1296, %v3804, 0.0
      %v3819 = vadd.f32 %v3817, %v3818
      %3820 = vadd.xlane.f32.xlu0 %v3819
      %v3821 = vpop.xlane.xlu0 %3820
      %v3822 = vrot.slane %v3821, 4
      %v3823 = vadd.f32 %v3821, %v3822
      %v3824 = vrot.slane %v3823, 2
      %v3825 = vadd.f32 %v3823, %v3824
      %v3826 = vrot.slane %v3825, 1
      %v3827 = vadd.f32 %v3825, %v3826
      %s3828 = vtos %v3827
      %s3829 = smul.f32 %s3828, 0.00024414063
      %v3830 = vmul.f32 %v3797, %v3797
      %v3831 = vmul.f32 %v3798, %v3798
      %v3832 = vmul.f32 %v3799, %v3799
      %v3833 = vmul.f32 %v3800, %v3800
      %v3834 = vmul.f32 %v3801, %v3801
      %v3835 = vmul.f32 %v3802, %v3802
      %v3836 = vmul.f32 %v3803, %v3803
      %v3837 = vmul.f32 %v3804, %v3804
      %v3838 = vsel %vm1296, %v3830, 0.0
      %v3839 = vsel %vm1296, %v3831, 0.0
      %v3840 = vadd.f32 %v3838, %v3839
      %v3841 = vsel %vm1296, %v3832, 0.0
      %v3842 = vadd.f32 %v3840, %v3841
      %v3843 = vsel %vm1296, %v3833, 0.0
      %v3844 = vadd.f32 %v3842, %v3843
      %v3845 = vsel %vm1296, %v3834, 0.0
      %v3846 = vadd.f32 %v3844, %v3845
      %v3847 = vsel %vm1296, %v3835, 0.0
      %v3848 = vadd.f32 %v3846, %v3847
      %v3849 = vsel %vm1296, %v3836, 0.0
      %v3850 = vadd.f32 %v3848, %v3849
      %v3851 = vsel %vm1296, %v3837, 0.0
      %v3852 = vadd.f32 %v3850, %v3851
      %3853 = vadd.xlane.f32.xlu0 %v3852
      %v3854 = vpop.xlane.xlu0 %3853
      %v3855 = vrot.slane %v3854, 4
      %v3856 = vadd.f32 %v3854, %v3855
      %v3857 = vrot.slane %v3856, 2
      %v3858 = vadd.f32 %v3856, %v3857
      %v3859 = vrot.slane %v3858, 1
      %v3860 = vadd.f32 %v3858, %v3859
      %s3861 = vtos %v3860
      %s3862 = smul.f32 %s3861, 0.00024414063
      %s3863 = smul.f32 %s3829, %s3829
      %s3864 = ssub.f32 %s3862, %s3863
      %s3865 = sadd.f32 %s3864, 1e-05
      %v3866 = vstv %s3865
      %v3867 = vrsqrt.pop %v3866
      %v3868 = vmul.f32 %v3867, %v3866
      %v3869 = vmul.f32 %v3868, %v3867
      %v3870 = vmul.f32 0.5, %v3869
      %v3871 = vsub.f32 1.5, %v3870
      %v3872 = vmul.f32 %v3867, %v3871
      %vm3873 = vweird.f32 %v3866
      %vm3874 = vweird.f32 %v3867
      %vm3875 = vmor %vm3873, %vm3874
      %v3876 = vsel %vm3875, %v3867, %v3872
      %s3877 = vtos %v3876
      %v3878 = vstv %s3829
      %v3879 = vsel %vm2504, %v3878, 0.0
      %v3880 = vstv %s3877
      %v3881 = vsel %vm2504, %v3880, 0.0
      %3890 = vrot.lane.b32.xlu0 %v3797, 64
      %v3891 = vpop.permute.xlu0 %3890
      %3892 = vrot.lane.b32.xlu0 %v3798, 64
      %v3893 = vpop.permute.xlu0 %3892
      %3894 = vrot.lane.b32.xlu0 %v3799, 64
      %v3895 = vpop.permute.xlu0 %3894
      %3896 = vrot.lane.b32.xlu0 %v3800, 64
      %v3897 = vpop.permute.xlu0 %3896
      %3898 = vrot.lane.b32.xlu0 %v3801, 64
      %v3899 = vpop.permute.xlu0 %3898
      %3900 = vrot.lane.b32.xlu0 %v3802, 64
      %v3901 = vpop.permute.xlu0 %3900
      %3902 = vrot.lane.b32.xlu0 %v3803, 64
      %v3903 = vpop.permute.xlu0 %3902
      %3904 = vrot.lane.b32.xlu0 %v3804, 64
      %v3905 = vpop.permute.xlu0 %3904
      %v3914 = vsel %vm1296, %v3891, 0.0
      %v3915 = vsel %vm1296, %v3893, 0.0
      %v3916 = vadd.f32 %v3914, %v3915
      %v3917 = vsel %vm1296, %v3895, 0.0
      %v3918 = vadd.f32 %v3916, %v3917
      %v3919 = vsel %vm1296, %v3897, 0.0
      %v3920 = vadd.f32 %v3918, %v3919
      %v3921 = vsel %vm1296, %v3899, 0.0
      %v3922 = vadd.f32 %v3920, %v3921
      %v3923 = vsel %vm1296, %v3901, 0.0
      %v3924 = vadd.f32 %v3922, %v3923
      %v3925 = vsel %vm1296, %v3903, 0.0
      %v3926 = vadd.f32 %v3924, %v3925
      %v3927 = vsel %vm1296, %v3905, 0.0
      %v3928 = vadd.f32 %v3926, %v3927
      %3929 = vadd.xlane.f32.xlu0 %v3928
      %v3930 = vpop.xlane.xlu0 %3929
      %v3931 = vrot.slane %v3930, 4
      %v3932 = vadd.f32 %v3930, %v3931
      %v3933 = vrot.slane %v3932, 2
      %v3934 = vadd.f32 %v3932, %v3933
      %v3935 = vrot.slane %v3934, 1
      %v3936 = vadd.f32 %v3934, %v3935
      %s3937 = vtos %v3936
      %s3938 = smul.f32 %s3937, 0.00024414063
      %3947 = vrot.lane.b32.xlu0 %v3830, 64
      %v3948 = vpop.permute.xlu0 %3947
      %3949 = vrot.lane.b32.xlu0 %v3831, 64
      %v3950 = vpop.permute.xlu0 %3949
      %3951 = vrot.lane.b32.xlu0 %v3832, 64
      %v3952 = vpop.permute.xlu0 %3951
      %3953 = vrot.lane.b32.xlu0 %v3833, 64
      %v3954 = vpop.permute.xlu0 %3953
      %3955 = vrot.lane.b32.xlu0 %v3834, 64
      %v3956 = vpop.permute.xlu0 %3955
      %3957 = vrot.lane.b32.xlu0 %v3835, 64
      %v3958 = vpop.permute.xlu0 %3957
      %3959 = vrot.lane.b32.xlu0 %v3836, 64
      %v3960 = vpop.permute.xlu0 %3959
      %3961 = vrot.lane.b32.xlu0 %v3837, 64
      %v3962 = vpop.permute.xlu0 %3961
      %v3971 = vsel %vm1296, %v3948, 0.0
      %v3972 = vsel %vm1296, %v3950, 0.0
      %v3973 = vadd.f32 %v3971, %v3972
      %v3974 = vsel %vm1296, %v3952, 0.0
      %v3975 = vadd.f32 %v3973, %v3974
      %v3976 = vsel %vm1296, %v3954, 0.0
      %v3977 = vadd.f32 %v3975, %v3976
      %v3978 = vsel %vm1296, %v3956, 0.0
      %v3979 = vadd.f32 %v3977, %v3978
      %v3980 = vsel %vm1296, %v3958, 0.0
      %v3981 = vadd.f32 %v3979, %v3980
      %v3982 = vsel %vm1296, %v3960, 0.0
      %v3983 = vadd.f32 %v3981, %v3982
      %v3984 = vsel %vm1296, %v3962, 0.0
      %v3985 = vadd.f32 %v3983, %v3984
      %3986 = vadd.xlane.f32.xlu0 %v3985
      %v3987 = vpop.xlane.xlu0 %3986
      %v3988 = vrot.slane %v3987, 4
      %v3989 = vadd.f32 %v3987, %v3988
      %v3990 = vrot.slane %v3989, 2
      %v3991 = vadd.f32 %v3989, %v3990
      %v3992 = vrot.slane %v3991, 1
      %v3993 = vadd.f32 %v3991, %v3992
      %s3994 = vtos %v3993
      %s3995 = smul.f32 %s3994, 0.00024414063
      %s3996 = smul.f32 %s3938, %s3938
      %s3997 = ssub.f32 %s3995, %s3996
      %s3998 = sadd.f32 %s3997, 1e-05
      %v3999 = vstv %s3998
      %v4000 = vrsqrt.pop %v3999
      %v4001 = vmul.f32 %v4000, %v3999
      %v4002 = vmul.f32 %v4001, %v4000
      %v4003 = vmul.f32 0.5, %v4002
      %v4004 = vsub.f32 1.5, %v4003
      %v4005 = vmul.f32 %v4000, %v4004
      %vm4006 = vweird.f32 %v3999
      %vm4007 = vweird.f32 %v4000
      %vm4008 = vmor %vm4006, %vm4007
      %v4009 = vsel %vm4008, %v4000, %v4005
      %s4010 = vtos %v4009
      %v4011 = vstv %s3938
      %v4012 = vsel %vm2640, %v4011, %v3879
      %v4013 = vstv %s4010
      %v4014 = vsel %vm2640, %v4013, %v3881
      %v4015 = vsub.f32 %v3797, %v4012
      %v4016 = vsub.f32 %v3798, %v4012
      %v4017 = vsub.f32 %v3799, %v4012
      %v4018 = vsub.f32 %v3800, %v4012
      %v4019 = vsub.f32 %v3801, %v4012
      %v4020 = vsub.f32 %v3802, %v4012
      %v4021 = vsub.f32 %v3803, %v4012
      %v4022 = vsub.f32 %v3804, %v4012
      %v4023 = vmul.f32 %v4015, %v4014
      %v4024 = vmul.f32 %v4016, %v4014
      %v4025 = vmul.f32 %v4017, %v4014
      %v4026 = vmul.f32 %v4018, %v4014
      %v4027 = vmul.f32 %v4019, %v4014
      %v4028 = vmul.f32 %v4020, %v4014
      %v4029 = vmul.f32 %v4021, %v4014
      %v4030 = vmul.f32 %v4022, %v4014
      %v4031 = vadd.f32 %v4023, %v2661
      %v4032 = vadd.f32 %v4024, %v2662
      %v4033 = vadd.f32 %v4025, %v2663
      %v4034 = vadd.f32 %v4026, %v2664
      %v4035 = vadd.f32 %v4027, %v2665
      %v4036 = vadd.f32 %v4028, %v2666
      %v4037 = vadd.f32 %v4029, %v2667
      %v4038 = vadd.f32 %v4030, %v2668
      %v4039 = vpack.c.bf16 %v4031, %v4031
      %v4040 = vpack.c.bf16 %v4032, %v4032
      %v4041 = vpack.c.bf16 %v4033, %v4033
      %v4042 = vpack.c.bf16 %v4034, %v4034
      %v4043 = vpack.c.bf16 %v4035, %v4035
      %v4044 = vpack.c.bf16 %v4036, %v4036
      %v4045 = vpack.c.bf16 %v4037, %v4037
      %v4046 = vpack.c.bf16 %v4038, %v4038
      %4047 = vst [vmem:[#allocation2 + $0x20] sm:$0xf] %v4039
      %4048 = vst [vmem:[#allocation2 + $0x24] sm:$0xf] %v4040
      %4049 = vst [vmem:[#allocation2 + $0x28] sm:$0xf] %v4041
      %4050 = vst [vmem:[#allocation2 + $0x2c] sm:$0xf] %v4042
      %4051 = vst [vmem:[#allocation2 + $0x30] sm:$0xf] %v4043
      %4052 = vst [vmem:[#allocation2 + $0x34] sm:$0xf] %v4044
      %4053 = vst [vmem:[#allocation2 + $0x38] sm:$0xf] %v4045
      %4054 = vst [vmem:[#allocation2 + $0x3c] sm:$0xf] %v4046
      %4063 = vrot.lane.b32.xlu0 %v4039, 8
      %v4064 = vpop.permute.xlu0 %4063
      %4065 = vrot.lane.b32.xlu0 %v4040, 8
      %v4066 = vpop.permute.xlu0 %4065
      %4067 = vrot.lane.b32.xlu0 %v4041, 8
      %v4068 = vpop.permute.xlu0 %4067
      %4069 = vrot.lane.b32.xlu0 %v4042, 8
      %v4070 = vpop.permute.xlu0 %4069
      %4071 = vrot.lane.b32.xlu0 %v4043, 8
      %v4072 = vpop.permute.xlu0 %4071
      %4073 = vrot.lane.b32.xlu0 %v4044, 8
      %v4074 = vpop.permute.xlu0 %4073
      %4075 = vrot.lane.b32.xlu0 %v4045, 8
      %v4076 = vpop.permute.xlu0 %4075
      %4077 = vrot.lane.b32.xlu0 %v4046, 8
      %v4078 = vpop.permute.xlu0 %4077
      %vm4087 = vcmask 519232
      %4088 = vst.msk [vmem:[#allocation2] sm:$0xf] %vm4087, %v4064
      %4089 = vst.msk [vmem:[#allocation2 + $0x4] sm:$0xf] %vm4087, %v4066
      %4090 = vst.msk [vmem:[#allocation2 + $0x8] sm:$0xf] %vm4087, %v4068
      %4091 = vst.msk [vmem:[#allocation2 + $0xc] sm:$0xf] %vm4087, %v4070
      %4092 = vst.msk [vmem:[#allocation2 + $0x10] sm:$0xf] %vm4087, %v4072
      %4093 = vst.msk [vmem:[#allocation2 + $0x14] sm:$0xf] %vm4087, %v4074
      %4094 = vst.msk [vmem:[#allocation2 + $0x18] sm:$0xf] %vm4087, %v4076
      %4095 = vst.msk [vmem:[#allocation2 + $0x1c] sm:$0xf] %vm4087, %v4078
      %4096 = vrot.lane.b32.xlu0 %v4039, 120
      %v4097 = vpop.permute.xlu0 %4096
      %4098 = vrot.lane.b32.xlu0 %v4040, 120
      %v4099 = vpop.permute.xlu0 %4098
      %4100 = vrot.lane.b32.xlu0 %v4041, 120
      %v4101 = vpop.permute.xlu0 %4100
      %4102 = vrot.lane.b32.xlu0 %v4042, 120
      %v4103 = vpop.permute.xlu0 %4102
      %4104 = vrot.lane.b32.xlu0 %v4043, 120
      %v4105 = vpop.permute.xlu0 %4104
      %4106 = vrot.lane.b32.xlu0 %v4044, 120
      %v4107 = vpop.permute.xlu0 %4106
      %4108 = vrot.lane.b32.xlu0 %v4045, 120
      %v4109 = vpop.permute.xlu0 %4108
      %4110 = vrot.lane.b32.xlu0 %v4046, 120
      %v4111 = vpop.permute.xlu0 %4110
      %vm4120 = vcmask 453632
      %4121 = vst.msk [vmem:[#allocation2 + $0x40] sm:$0xf] %vm4120, %v4097
      %4122 = vst.msk [vmem:[#allocation2 + $0x44] sm:$0xf] %vm4120, %v4099
      %4123 = vst.msk [vmem:[#allocation2 + $0x48] sm:$0xf] %vm4120, %v4101
      %4124 = vst.msk [vmem:[#allocation2 + $0x4c] sm:$0xf] %vm4120, %v4103
      %4125 = vst.msk [vmem:[#allocation2 + $0x50] sm:$0xf] %vm4120, %v4105
      %4126 = vst.msk [vmem:[#allocation2 + $0x54] sm:$0xf] %vm4120, %v4107
      %4127 = vst.msk [vmem:[#allocation2 + $0x58] sm:$0xf] %vm4120, %v4109
      %4128 = vst.msk [vmem:[#allocation2 + $0x5c] sm:$0xf] %vm4120, %v4111
      %v4129 = vld [vmem:[%s1 + $0xc] sm:$0xf]
      %v4130 = vunpack.c.l.b16 %v4039
      %v4131 = vunpack.c.l.b16 %v4040
      %v4132 = vunpack.c.l.b16 %v4041
      %v4133 = vunpack.c.l.b16 %v4042
      %v4134 = vunpack.c.l.b16 %v4043
      %v4135 = vunpack.c.l.b16 %v4044
      %v4136 = vunpack.c.l.b16 %v4045
      %v4137 = vunpack.c.l.b16 %v4046
      %v4138 = vpack.c.b16 %v4131, %v4130
      %v4139 = vpack.c.b16 %v4133, %v4132
      %v4140 = vpack.c.b16 %v4135, %v4134
      %v4141 = vpack.c.b16 %v4137, %v4136
      %4142 = vrot.lane.b32.xlu0 %v4138, 127
      %v4143 = vpop.permute.xlu0 %4142
      %4144 = vrot.lane.b32.xlu0 %v4139, 127
      %v4145 = vpop.permute.xlu0 %4144
      %4146 = vrot.lane.b32.xlu0 %v4140, 127
      %v4147 = vpop.permute.xlu0 %4146
      %4148 = vrot.lane.b32.xlu0 %v4141, 127
      %v4149 = vpop.permute.xlu0 %4148
      %vm4150 = vcmask 64512
      %v4152 = vsel %vm4150, %v4143, 0
      %v4155 = vsel %vm4150, %v4145, 0
      %v4158 = vsel %vm4150, %v4147, 0
      %v4161 = vsel %vm4150, %v4149, 0
      %vm4163 = vcmask 1043456
      %v4165 = vsel %vm4163, %v4129, 0
      %4167 = vmatpush.bf16.msra.mxu0 0
      %4168 = vmatpush.bf16.msra.mxu0 0
      %4169 = vmatpush.bf16.msra.mxu0 0
      %4170 = vmatpush.bf16.msra.mxu0 0
      %4171 = vmatpush.bf16.msra.mxu0 0
      %4172 = vmatpush.bf16.msra.mxu0 0
      %4173 = vmatpush.bf16.msra.mxu0 0
      %4174 = vmatpush.bf16.msra.mxu0 %v4165
      %4175 = vmatmul.bf16.gmra.mxu0 %v4152
      %v4176 = vpop.f32.mrf.mxu0
      %v4177 = vadd.f32 0.0, %v4176
      %v4178 = vpop.f32.mrf.mxu0
      %v4179 = vadd.f32 0.0, %v4178
      %4180 = vmatmul.bf16.gmra.mxu0 %v4155
      %v4181 = vpop.f32.mrf.mxu0
      %v4182 = vadd.f32 0.0, %v4181
      %v4183 = vpop.f32.mrf.mxu0
      %v4184 = vadd.f32 0.0, %v4183
      %4185 = vmatmul.bf16.gmra.mxu0 %v4158
      %v4186 = vpop.f32.mrf.mxu0
      %v4187 = vadd.f32 0.0, %v4186
      %v4188 = vpop.f32.mrf.mxu0
      %v4189 = vadd.f32 0.0, %v4188
      %4190 = vmatmul.bf16.gmra.mxu0 %v4161
      %v4191 = vpop.f32.mrf.mxu0
      %v4192 = vadd.f32 0.0, %v4191
      %v4193 = vpop.f32.mrf.mxu0
      %v4194 = vadd.f32 0.0, %v4193
      %4195 = vdwg.mxu0
      %v4196 = vpack.c.bf16 %v4177, %v4177
      %v4197 = vpack.c.bf16 %v4179, %v4179
      %v4198 = vpack.c.bf16 %v4182, %v4182
      %v4199 = vpack.c.bf16 %v4184, %v4184
      %v4200 = vpack.c.bf16 %v4187, %v4187
      %v4201 = vpack.c.bf16 %v4189, %v4189
      %v4202 = vpack.c.bf16 %v4192, %v4192
      %v4203 = vpack.c.bf16 %v4194, %v4194
      %4204 = vrot.lane.b32.xlu0 %v4138, 73
      %v4205 = vpop.permute.xlu0 %4204
      %4206 = vrot.lane.b32.xlu0 %v4139, 73
      %v4207 = vpop.permute.xlu0 %4206
      %4208 = vrot.lane.b32.xlu0 %v4140, 73
      %v4209 = vpop.permute.xlu0 %4208
      %4210 = vrot.lane.b32.xlu0 %v4141, 73
      %v4211 = vpop.permute.xlu0 %4210
      %v4213 = vsel %vm4150, %v4205, 0
      %v4216 = vsel %vm4150, %v4207, 0
      %v4219 = vsel %vm4150, %v4209, 0
      %v4222 = vsel %vm4150, %v4211, 0
      %4224 = vmatpush.bf16.msra.mxu0 0
      %4225 = vmatpush.bf16.msra.mxu0 0
      %4226 = vmatpush.bf16.msra.mxu0 0
      %4227 = vmatpush.bf16.msra.mxu0 0
      %4228 = vmatpush.bf16.msra.mxu0 0
      %4229 = vmatpush.bf16.msra.mxu0 0
      %4230 = vmatpush.bf16.msra.mxu0 0
      %4231 = vmatpush.bf16.msra.mxu0 %v4165
      %4232 = vmatmul.bf16.gmra.mxu0 %v4213
      %v4233 = vpop.f32.mrf.mxu0
      %v4234 = vadd.f32 0.0, %v4233
      %v4235 = vpop.f32.mrf.mxu0
      %v4236 = vadd.f32 0.0, %v4235
      %4237 = vmatmul.bf16.gmra.mxu0 %v4216
      %v4238 = vpop.f32.mrf.mxu0
      %v4239 = vadd.f32 0.0, %v4238
      %v4240 = vpop.f32.mrf.mxu0
      %v4241 = vadd.f32 0.0, %v4240
      %4242 = vmatmul.bf16.gmra.mxu0 %v4219
      %v4243 = vpop.f32.mrf.mxu0
      %v4244 = vadd.f32 0.0, %v4243
      %v4245 = vpop.f32.mrf.mxu0
      %v4246 = vadd.f32 0.0, %v4245
      %4247 = vmatmul.bf16.gmra.mxu0 %v4222
      %v4248 = vpop.f32.mrf.mxu0
      %v4249 = vadd.f32 0.0, %v4248
      %v4250 = vpop.f32.mrf.mxu0
      %v4251 = vadd.f32 0.0, %v4250
      %4252 = vdwg.mxu0
      %v4253 = vpack.c.bf16 %v4234, %v4234
      %v4254 = vpack.c.bf16 %v4236, %v4236
      %v4255 = vpack.c.bf16 %v4239, %v4239
      %v4256 = vpack.c.bf16 %v4241, %v4241
      %v4257 = vpack.c.bf16 %v4244, %v4244
      %v4258 = vpack.c.bf16 %v4246, %v4246
      %v4259 = vpack.c.bf16 %v4249, %v4249
      %v4260 = vpack.c.bf16 %v4251, %v4251
      %vm4261 = vcmask 60416
      %4262 = vst.msk [vmem:[#allocation2] sm:$0xf] %vm4261, %v4196
      %4263 = vst.msk [vmem:[#allocation2 + $0x4] sm:$0xf] %vm4261, %v4197
      %4264 = vst.msk [vmem:[#allocation2 + $0x8] sm:$0xf] %vm4261, %v4198
      %4265 = vst.msk [vmem:[#allocation2 + $0xc] sm:$0xf] %vm4261, %v4199
      %4266 = vst.msk [vmem:[#allocation2 + $0x10] sm:$0xf] %vm4261, %v4200
      %4267 = vst.msk [vmem:[#allocation2 + $0x14] sm:$0xf] %vm4261, %v4201
      %4268 = vst.msk [vmem:[#allocation2 + $0x18] sm:$0xf] %vm4261, %v4202
      %4269 = vst.msk [vmem:[#allocation2 + $0x1c] sm:$0xf] %vm4261, %v4203
      %4278 = vrot.lane.b32.xlu0 %v4253, 56
      %v4279 = vpop.permute.xlu0 %4278
      %4280 = vrot.lane.b32.xlu0 %v4254, 56
      %v4281 = vpop.permute.xlu0 %4280
      %4282 = vrot.lane.b32.xlu0 %v4255, 56
      %v4283 = vpop.permute.xlu0 %4282
      %4284 = vrot.lane.b32.xlu0 %v4256, 56
      %v4285 = vpop.permute.xlu0 %4284
      %4286 = vrot.lane.b32.xlu0 %v4257, 56
      %v4287 = vpop.permute.xlu0 %4286
      %4288 = vrot.lane.b32.xlu0 %v4258, 56
      %v4289 = vpop.permute.xlu0 %4288
      %4290 = vrot.lane.b32.xlu0 %v4259, 56
      %v4291 = vpop.permute.xlu0 %4290
      %4292 = vrot.lane.b32.xlu0 %v4260, 56
      %v4293 = vpop.permute.xlu0 %4292
      %vm4302 = vcmask 519616
      %4303 = vst.msk [vmem:[#allocation2 + $0x40] sm:$0xf] %vm4302, %v4279
      %4304 = vst.msk [vmem:[#allocation2 + $0x44] sm:$0xf] %vm4302, %v4281
      %4305 = vst.msk [vmem:[#allocation2 + $0x48] sm:$0xf] %vm4302, %v4283
      %4306 = vst.msk [vmem:[#allocation2 + $0x4c] sm:$0xf] %vm4302, %v4285
      %4307 = vst.msk [vmem:[#allocation2 + $0x50] sm:$0xf] %vm4302, %v4287
      %4308 = vst.msk [vmem:[#allocation2 + $0x54] sm:$0xf] %vm4302, %v4289
      %4309 = vst.msk [vmem:[#allocation2 + $0x58] sm:$0xf] %vm4302, %v4291
      %4310 = vst.msk [vmem:[#allocation2 + $0x5c] sm:$0xf] %vm4302, %v4293
      %vm4311 = vcmask 1044032
      %4312 = vst.msk [vmem:[#allocation2] sm:$0xf] %vm4311, %v4064
      %4313 = vst.msk [vmem:[#allocation2 + $0x4] sm:$0xf] %vm4311, %v4066
      %4314 = vst.msk [vmem:[#allocation2 + $0x8] sm:$0xf] %vm4311, %v4068
      %4315 = vst.msk [vmem:[#allocation2 + $0xc] sm:$0xf] %vm4311, %v4070
      %4316 = vst.msk [vmem:[#allocation2 + $0x10] sm:$0xf] %vm4311, %v4072
      %4317 = vst.msk [vmem:[#allocation2 + $0x14] sm:$0xf] %vm4311, %v4074
      %4318 = vst.msk [vmem:[#allocation2 + $0x18] sm:$0xf] %vm4311, %v4076
      %4319 = vst.msk [vmem:[#allocation2 + $0x1c] sm:$0xf] %vm4311, %v4078
      %vm4320 = vcmask 978432
      %4321 = vst.msk [vmem:[#allocation2 + $0x40] sm:$0xf] %vm4320, %v4097
      %4322 = vst.msk [vmem:[#allocation2 + $0x44] sm:$0xf] %vm4320, %v4099
      %4323 = vst.msk [vmem:[#allocation2 + $0x48] sm:$0xf] %vm4320, %v4101
      %4324 = vst.msk [vmem:[#allocation2 + $0x4c] sm:$0xf] %vm4320, %v4103
      %4325 = vst.msk [vmem:[#allocation2 + $0x50] sm:$0xf] %vm4320, %v4105
      %4326 = vst.msk [vmem:[#allocation2 + $0x54] sm:$0xf] %vm4320, %v4107
      %4327 = vst.msk [vmem:[#allocation2 + $0x58] sm:$0xf] %vm4320, %v4109
      %4328 = vst.msk [vmem:[#allocation2 + $0x5c] sm:$0xf] %vm4320, %v4111
      %v4329 = vld [vmem:[%s1 + $0xc] sm:$0xf]
      %4330 = vrot.lane.b32.xlu0 %v4138, 63
      %v4331 = vpop.permute.xlu0 %4330
      %4332 = vrot.lane.b32.xlu0 %v4139, 63
      %v4333 = vpop.permute.xlu0 %4332
      %4334 = vrot.lane.b32.xlu0 %v4140, 63
      %v4335 = vpop.permute.xlu0 %4334
      %4336 = vrot.lane.b32.xlu0 %v4141, 63
      %v4337 = vpop.permute.xlu0 %4336
      %v4339 = vsel %vm4150, %v4331, 0
      %v4342 = vsel %vm4150, %v4333, 0
      %v4345 = vsel %vm4150, %v4335, 0
      %v4348 = vsel %vm4150, %v4337, 0
      %v4351 = vsel %vm4163, %v4329, 0
      %4353 = vmatpush.bf16.msra.mxu0 0
      %4354 = vmatpush.bf16.msra.mxu0 0
      %4355 = vmatpush.bf16.msra.mxu0 0
      %4356 = vmatpush.bf16.msra.mxu0 0
      %4357 = vmatpush.bf16.msra.mxu0 0
      %4358 = vmatpush.bf16.msra.mxu0 0
      %4359 = vmatpush.bf16.msra.mxu0 0
      %4360 = vmatpush.bf16.msra.mxu0 %v4351
      %4361 = vmatmul.bf16.gmra.mxu0 %v4339
      %v4362 = vpop.f32.mrf.mxu0
      %v4363 = vadd.f32 0.0, %v4362
      %v4364 = vpop.f32.mrf.mxu0
      %v4365 = vadd.f32 0.0, %v4364
      %4366 = vmatmul.bf16.gmra.mxu0 %v4342
      %v4367 = vpop.f32.mrf.mxu0
      %v4368 = vadd.f32 0.0, %v4367
      %v4369 = vpop.f32.mrf.mxu0
      %v4370 = vadd.f32 0.0, %v4369
      %4371 = vmatmul.bf16.gmra.mxu0 %v4345
      %v4372 = vpop.f32.mrf.mxu0
      %v4373 = vadd.f32 0.0, %v4372
      %v4374 = vpop.f32.mrf.mxu0
      %v4375 = vadd.f32 0.0, %v4374
      %4376 = vmatmul.bf16.gmra.mxu0 %v4348
      %v4377 = vpop.f32.mrf.mxu0
      %v4378 = vadd.f32 0.0, %v4377
      %v4379 = vpop.f32.mrf.mxu0
      %v4380 = vadd.f32 0.0, %v4379
      %4381 = vdwg.mxu0
      %v4382 = vpack.c.bf16 %v4363, %v4363
      %v4383 = vpack.c.bf16 %v4365, %v4365
      %v4384 = vpack.c.bf16 %v4368, %v4368
      %v4385 = vpack.c.bf16 %v4370, %v4370
      %v4386 = vpack.c.bf16 %v4373, %v4373
      %v4387 = vpack.c.bf16 %v4375, %v4375
      %v4388 = vpack.c.bf16 %v4378, %v4378
      %v4389 = vpack.c.bf16 %v4380, %v4380
      %4390 = vrot.lane.b32.xlu0 %v4138, 9
      %v4391 = vpop.permute.xlu0 %4390
      %4392 = vrot.lane.b32.xlu0 %v4139, 9
      %v4393 = vpop.permute.xlu0 %4392
      %4394 = vrot.lane.b32.xlu0 %v4140, 9
      %v4395 = vpop.permute.xlu0 %4394
      %4396 = vrot.lane.b32.xlu0 %v4141, 9
      %v4397 = vpop.permute.xlu0 %4396
      %v4399 = vsel %vm4150, %v4391, 0
      %v4402 = vsel %vm4150, %v4393, 0
      %v4405 = vsel %vm4150, %v4395, 0
      %v4408 = vsel %vm4150, %v4397, 0
      %4410 = vmatpush.bf16.msra.mxu0 0
      %4411 = vmatpush.bf16.msra.mxu0 0
      %4412 = vmatpush.bf16.msra.mxu0 0
      %4413 = vmatpush.bf16.msra.mxu0 0
      %4414 = vmatpush.bf16.msra.mxu0 0
      %4415 = vmatpush.bf16.msra.mxu0 0
      %4416 = vmatpush.bf16.msra.mxu0 0
      %4417 = vmatpush.bf16.msra.mxu0 %v4351
      %4418 = vmatmul.bf16.gmra.mxu0 %v4399
      %v4419 = vpop.f32.mrf.mxu0
      %v4420 = vadd.f32 0.0, %v4419
      %v4421 = vpop.f32.mrf.mxu0
      %v4422 = vadd.f32 0.0, %v4421
      %4423 = vmatmul.bf16.gmra.mxu0 %v4402
      %v4424 = vpop.f32.mrf.mxu0
      %v4425 = vadd.f32 0.0, %v4424
      %v4426 = vpop.f32.mrf.mxu0
      %v4427 = vadd.f32 0.0, %v4426
      %4428 = vmatmul.bf16.gmra.mxu0 %v4405
      %v4429 = vpop.f32.mrf.mxu0
      %v4430 = vadd.f32 0.0, %v4429
      %v4431 = vpop.f32.mrf.mxu0
      %v4432 = vadd.f32 0.0, %v4431
      %4433 = vmatmul.bf16.gmra.mxu0 %v4408
      %v4434 = vpop.f32.mrf.mxu0
      %v4435 = vadd.f32 0.0, %v4434
      %v4436 = vpop.f32.mrf.mxu0
      %v4437 = vadd.f32 0.0, %v4436
      %4438 = vdwg.mxu0
      %v4439 = vpack.c.bf16 %v4420, %v4420
      %v4440 = vpack.c.bf16 %v4422, %v4422
      %v4441 = vpack.c.bf16 %v4425, %v4425
      %v4442 = vpack.c.bf16 %v4427, %v4427
      %v4443 = vpack.c.bf16 %v4430, %v4430
      %v4444 = vpack.c.bf16 %v4432, %v4432
      %v4445 = vpack.c.bf16 %v4435, %v4435
      %v4446 = vpack.c.bf16 %v4437, %v4437
      %4455 = vrot.lane.b32.xlu0 %v4382, 64
      %v4456 = vpop.permute.xlu0 %4455
      %4457 = vrot.lane.b32.xlu0 %v4383, 64
      %v4458 = vpop.permute.xlu0 %4457
      %4459 = vrot.lane.b32.xlu0 %v4384, 64
      %v4460 = vpop.permute.xlu0 %4459
      %4461 = vrot.lane.b32.xlu0 %v4385, 64
      %v4462 = vpop.permute.xlu0 %4461
      %4463 = vrot.lane.b32.xlu0 %v4386, 64
      %v4464 = vpop.permute.xlu0 %4463
      %4465 = vrot.lane.b32.xlu0 %v4387, 64
      %v4466 = vpop.permute.xlu0 %4465
      %4467 = vrot.lane.b32.xlu0 %v4388, 64
      %v4468 = vpop.permute.xlu0 %4467
      %4469 = vrot.lane.b32.xlu0 %v4389, 64
      %v4470 = vpop.permute.xlu0 %4469
      %vm4479 = vcmask 585216
      %4480 = vst.msk [vmem:[#allocation2] sm:$0xf] %vm4479, %v4456
      %4481 = vst.msk [vmem:[#allocation2 + $0x4] sm:$0xf] %vm4479, %v4458
      %4482 = vst.msk [vmem:[#allocation2 + $0x8] sm:$0xf] %vm4479, %v4460
      %4483 = vst.msk [vmem:[#allocation2 + $0xc] sm:$0xf] %vm4479, %v4462
      %4484 = vst.msk [vmem:[#allocation2 + $0x10] sm:$0xf] %vm4479, %v4464
      %4485 = vst.msk [vmem:[#allocation2 + $0x14] sm:$0xf] %vm4479, %v4466
      %4486 = vst.msk [vmem:[#allocation2 + $0x18] sm:$0xf] %vm4479, %v4468
      %4487 = vst.msk [vmem:[#allocation2 + $0x1c] sm:$0xf] %vm4479, %v4470
      %4496 = vrot.lane.b32.xlu0 %v4439, 120
      %v4497 = vpop.permute.xlu0 %4496
      %4498 = vrot.lane.b32.xlu0 %v4440, 120
      %v4499 = vpop.permute.xlu0 %4498
      %4500 = vrot.lane.b32.xlu0 %v4441, 120
      %v4501 = vpop.permute.xlu0 %4500
      %4502 = vrot.lane.b32.xlu0 %v4442, 120
      %v4503 = vpop.permute.xlu0 %4502
      %4504 = vrot.lane.b32.xlu0 %v4443, 120
      %v4505 = vpop.permute.xlu0 %4504
      %4506 = vrot.lane.b32.xlu0 %v4444, 120
      %v4507 = vpop.permute.xlu0 %4506
      %4508 = vrot.lane.b32.xlu0 %v4445, 120
      %v4509 = vpop.permute.xlu0 %4508
      %4510 = vrot.lane.b32.xlu0 %v4446, 120
      %v4511 = vpop.permute.xlu0 %4510
      %vm4520 = vcmask 1044416
      %4521 = vst.msk [vmem:[#allocation2 + $0x40] sm:$0xf] %vm4520, %v4497
      %4522 = vst.msk [vmem:[#allocation2 + $0x44] sm:$0xf] %vm4520, %v4499
      %4523 = vst.msk [vmem:[#allocation2 + $0x48] sm:$0xf] %vm4520, %v4501
      %4524 = vst.msk [vmem:[#allocation2 + $0x4c] sm:$0xf] %vm4520, %v4503
      %4525 = vst.msk [vmem:[#allocation2 + $0x50] sm:$0xf] %vm4520, %v4505
      %4526 = vst.msk [vmem:[#allocation2 + $0x54] sm:$0xf] %vm4520, %v4507
      %4527 = vst.msk [vmem:[#allocation2 + $0x58] sm:$0xf] %vm4520, %v4509
      %4528 = vst.msk [vmem:[#allocation2 + $0x5c] sm:$0xf] %vm4520, %v4511
      %v4529 = vld [vmem:[%s11] sm:$0xff]
      %v4530 = vld [vmem:[%s11 + $0x8] sm:$0xff]
      %v4531 = vld [vmem:[%s11 + $0x10] sm:$0xff]
      %v4532 = vld [vmem:[%s11 + $0x18] sm:$0xff]
      %v4533 = vld [vmem:[%s11 + $0x20] sm:$0xff]
      %v4534 = vld [vmem:[%s11 + $0x28] sm:$0xff]
      %v4535 = vld [vmem:[%s11 + $0x30] sm:$0xff]
      %v4536 = vld [vmem:[%s11 + $0x38] sm:$0xff]
      %v4537 = vld [vmem:[#allocation2] sm:$0xf]
      %v4538 = vld [vmem:[#allocation2 + $0x4] sm:$0xf]
      %v4539 = vld [vmem:[#allocation2 + $0x8] sm:$0xf]
      %v4540 = vld [vmem:[#allocation2 + $0xc] sm:$0xf]
      %v4541 = vld [vmem:[#allocation2 + $0x10] sm:$0xf]
      %v4542 = vld [vmem:[#allocation2 + $0x14] sm:$0xf]
      %v4543 = vld [vmem:[#allocation2 + $0x18] sm:$0xf]
      %v4544 = vld [vmem:[#allocation2 + $0x1c] sm:$0xf]
      %v4545 = vld [vmem:[#allocation2 + $0x20] sm:$0xf]
      %v4546 = vld [vmem:[#allocation2 + $0x24] sm:$0xf]
      %v4547 = vld [vmem:[#allocation2 + $0x28] sm:$0xf]
      %v4548 = vld [vmem:[#allocation2 + $0x2c] sm:$0xf]
      %v4549 = vld [vmem:[#allocation2 + $0x30] sm:$0xf]
      %v4550 = vld [vmem:[#allocation2 + $0x34] sm:$0xf]
      %v4551 = vld [vmem:[#allocation2 + $0x38] sm:$0xf]
      %v4552 = vld [vmem:[#allocation2 + $0x3c] sm:$0xf]
      %v4553 = vld [vmem:[#allocation2 + $0x40] sm:$0xf]
      %v4554 = vld [vmem:[#allocation2 + $0x44] sm:$0xf]
      %v4555 = vld [vmem:[#allocation2 + $0x48] sm:$0xf]
      %v4556 = vld [vmem:[#allocation2 + $0x4c] sm:$0xf]
      %v4557 = vld [vmem:[#allocation2 + $0x50] sm:$0xf]
      %v4558 = vld [vmem:[#allocation2 + $0x54] sm:$0xf]
      %v4559 = vld [vmem:[#allocation2 + $0x58] sm:$0xf]
      %v4560 = vld [vmem:[#allocation2 + $0x5c] sm:$0xf]
      %v4569 = vunpack.c.l.b16 %v4529
      %v4570 = vunpack.c.h.b16 %v4529
      %v4571 = vunpack.c.l.b16 %v4530
      %v4572 = vunpack.c.h.b16 %v4530
      %v4573 = vunpack.c.l.b16 %v4531
      %v4574 = vunpack.c.h.b16 %v4531
      %v4575 = vunpack.c.l.b16 %v4532
      %v4576 = vunpack.c.h.b16 %v4532
      %v4577 = vunpack.c.l.b16 %v4533
      %v4578 = vunpack.c.h.b16 %v4533
      %v4579 = vunpack.c.l.b16 %v4534
      %v4580 = vunpack.c.h.b16 %v4534
      %v4581 = vunpack.c.l.b16 %v4535
      %v4582 = vunpack.c.h.b16 %v4535
      %v4583 = vunpack.c.l.b16 %v4536
      %v4584 = vunpack.c.h.b16 %v4536
      %v4585 = vpack.c.b16 %v4571, %v4569
      %v4586 = vpack.c.b16 %v4572, %v4570
      %v4587 = vpack.c.b16 %v4575, %v4573
      %v4588 = vpack.c.b16 %v4576, %v4574
      %v4589 = vpack.c.b16 %v4579, %v4577
      %v4590 = vpack.c.b16 %v4580, %v4578
      %v4591 = vpack.c.b16 %v4583, %v4581
      %v4592 = vpack.c.b16 %v4584, %v4582
      %v4621 = vunpack.c.l.b16 %v4537
      %v4622 = vunpack.c.l.b16 %v4538
      %v4623 = vunpack.c.l.b16 %v4539
      %v4624 = vunpack.c.l.b16 %v4540
      %v4625 = vunpack.c.l.b16 %v4541
      %v4626 = vunpack.c.l.b16 %v4542
      %v4627 = vunpack.c.l.b16 %v4543
      %v4628 = vunpack.c.l.b16 %v4544
      %v4629 = vunpack.c.l.b16 %v4545
      %v4630 = vunpack.c.l.b16 %v4546
      %v4631 = vunpack.c.l.b16 %v4547
      %v4632 = vunpack.c.l.b16 %v4548
      %v4633 = vunpack.c.l.b16 %v4549
      %v4634 = vunpack.c.l.b16 %v4550
      %v4635 = vunpack.c.l.b16 %v4551
      %v4636 = vunpack.c.l.b16 %v4552
      %v4637 = vunpack.c.l.b16 %v4553
      %v4638 = vunpack.c.l.b16 %v4554
      %v4639 = vunpack.c.l.b16 %v4555
      %v4640 = vunpack.c.l.b16 %v4556
      %v4641 = vunpack.c.l.b16 %v4557
      %v4642 = vunpack.c.l.b16 %v4558
      %v4643 = vunpack.c.l.b16 %v4559
      %v4644 = vunpack.c.l.b16 %v4560
      %v4645 = vpack.c.b16 %v4622, %v4621
      %v4646 = vpack.c.b16 %v4624, %v4623
      %v4647 = vpack.c.b16 %v4626, %v4625
      %v4648 = vpack.c.b16 %v4628, %v4627
      %v4649 = vpack.c.b16 %v4630, %v4629
      %v4650 = vpack.c.b16 %v4632, %v4631
      %v4651 = vpack.c.b16 %v4634, %v4633
      %v4652 = vpack.c.b16 %v4636, %v4635
      %v4653 = vpack.c.b16 %v4638, %v4637
      %v4654 = vpack.c.b16 %v4640, %v4639
      %v4655 = vpack.c.b16 %v4642, %v4641
      %v4656 = vpack.c.b16 %v4644, %v4643
      %v4670 = vsel %vm1296, %v4586, 0
      %v4673 = vsel %vm1296, %v4588, 0
      %v4676 = vsel %vm1296, %v4590, 0
      %v4679 = vsel %vm1296, %v4592, 0
      %4681 = vmatpush.bf16.msra.mxu0 %v4652
      %4682 = vmatpush.bf16.msra.mxu0 %v4651
      %4683 = vmatpush.bf16.msra.mxu0 %v4650
      %4684 = vmatpush.bf16.msra.mxu0 %v4649
      %4685 = vmatpush.bf16.msra.mxu0 %v4648
      %4686 = vmatpush.bf16.msra.mxu0 %v4647
      %4687 = vmatpush.bf16.msra.mxu0 %v4646
      %4688 = vmatpush.bf16.msra.mxu0 %v4645
      %4689 = vmatmul.bf16.gmra.mxu0 %v4585
      %v4690 = vpop.f32.mrf.mxu0
      %v4691 = vadd.f32 0.0, %v4690
      %v4692 = vpop.f32.mrf.mxu0
      %v4693 = vadd.f32 0.0, %v4692
      %4694 = vmatmul.bf16.gmra.mxu0 %v4587
      %v4695 = vpop.f32.mrf.mxu0
      %v4696 = vadd.f32 0.0, %v4695
      %v4697 = vpop.f32.mrf.mxu0
      %v4698 = vadd.f32 0.0, %v4697
      %4699 = vmatmul.bf16.gmra.mxu0 %v4589
      %v4700 = vpop.f32.mrf.mxu0
      %v4701 = vadd.f32 0.0, %v4700
      %v4702 = vpop.f32.mrf.mxu0
      %v4703 = vadd.f32 0.0, %v4702
      %4704 = vmatmul.bf16.gmra.mxu0 %v4591
      %v4705 = vpop.f32.mrf.mxu0
      %v4706 = vadd.f32 0.0, %v4705
      %v4707 = vpop.f32.mrf.mxu0
      %v4708 = vadd.f32 0.0, %v4707
      %4709 = vdwg.mxu0
      %4710 = vmatpush.bf16.msra.mxu0 0
      %4711 = vmatpush.bf16.msra.mxu0 0
      %4712 = vmatpush.bf16.msra.mxu0 0
      %4713 = vmatpush.bf16.msra.mxu0 0
      %4714 = vmatpush.bf16.msra.mxu0 %v4656
      %4715 = vmatpush.bf16.msra.mxu0 %v4655
      %4716 = vmatpush.bf16.msra.mxu0 %v4654
      %4717 = vmatpush.bf16.msra.mxu0 %v4653
      %4718 = vmatmul.bf16.gmra.mxu0 %v4670
      %v4719 = vpop.f32.mrf.mxu0
      %v4720 = vadd.f32 %v4691, %v4719
      %v4721 = vpop.f32.mrf.mxu0
      %v4722 = vadd.f32 %v4693, %v4721
      %4723 = vmatmul.bf16.gmra.mxu0 %v4673
      %v4724 = vpop.f32.mrf.mxu0
      %v4725 = vadd.f32 %v4696, %v4724
      %v4726 = vpop.f32.mrf.mxu0
      %v4727 = vadd.f32 %v4698, %v4726
      %4728 = vmatmul.bf16.gmra.mxu0 %v4676
      %v4729 = vpop.f32.mrf.mxu0
      %v4730 = vadd.f32 %v4701, %v4729
      %v4731 = vpop.f32.mrf.mxu0
      %v4732 = vadd.f32 %v4703, %v4731
      %4733 = vmatmul.bf16.gmra.mxu0 %v4679
      %v4734 = vpop.f32.mrf.mxu0
      %v4735 = vadd.f32 %v4706, %v4734
      %v4736 = vpop.f32.mrf.mxu0
      %v4737 = vadd.f32 %v4708, %v4736
      %4738 = vdwg.mxu0
      %v4739 = vmin.f32 %v4720, 20.0
      %v4740 = vmin.f32 %v4722, 20.0
      %v4741 = vmin.f32 %v4725, 20.0
      %v4742 = vmin.f32 %v4727, 20.0
      %v4743 = vmin.f32 %v4730, 20.0
      %v4744 = vmin.f32 %v4732, 20.0
      %v4745 = vmin.f32 %v4735, 20.0
      %v4746 = vmin.f32 %v4737, 20.0
      %v4747 = vmul.f32 %v4739, 1.442695
      %v4748 = vpow.pop %v4747
      %v4749 = vmul.f32 %v4740, 1.442695
      %v4750 = vpow.pop %v4749
      %v4751 = vmul.f32 %v4741, 1.442695
      %v4752 = vpow.pop %v4751
      %v4753 = vmul.f32 %v4742, 1.442695
      %v4754 = vpow.pop %v4753
      %v4755 = vmul.f32 %v4743, 1.442695
      %v4756 = vpow.pop %v4755
      %v4757 = vmul.f32 %v4744, 1.442695
      %v4758 = vpow.pop %v4757
      %v4759 = vmul.f32 %v4745, 1.442695
      %v4760 = vpow.pop %v4759
      %v4761 = vmul.f32 %v4746, 1.442695
      %v4762 = vpow.pop %v4761
      %v4763 = vadd.f32 %v4748, 2.0
      %v4764 = vadd.f32 %v4750, 2.0
      %v4765 = vadd.f32 %v4752, 2.0
      %v4766 = vadd.f32 %v4754, 2.0
      %v4767 = vadd.f32 %v4756, 2.0
      %v4768 = vadd.f32 %v4758, 2.0
      %v4769 = vadd.f32 %v4760, 2.0
      %v4770 = vadd.f32 %v4762, 2.0
      %v4771 = vmul.f32 %v4748, %v4763
      %v4772 = vmul.f32 %v4750, %v4764
      %v4773 = vmul.f32 %v4752, %v4765
      %v4774 = vmul.f32 %v4754, %v4766
      %v4775 = vmul.f32 %v4756, %v4767
      %v4776 = vmul.f32 %v4758, %v4768
      %v4777 = vmul.f32 %v4760, %v4769
      %v4778 = vmul.f32 %v4762, %v4770
      %v4779 = vadd.f32 %v4771, 2.0
      %v4780 = vadd.f32 %v4772, 2.0
      %v4781 = vadd.f32 %v4773, 2.0
      %v4782 = vadd.f32 %v4774, 2.0
      %v4783 = vadd.f32 %v4775, 2.0
      %v4784 = vadd.f32 %v4776, 2.0
      %v4785 = vadd.f32 %v4777, 2.0
      %v4786 = vadd.f32 %v4778, 2.0
      %v4787 = vrcp.pop %v4779
      %v4788 = vrcp.pop %v4780
      %v4789 = vrcp.pop %v4781
      %v4790 = vrcp.pop %v4782
      %v4791 = vrcp.pop %v4783
      %v4792 = vrcp.pop %v4784
      %v4793 = vrcp.pop %v4785
      %v4794 = vrcp.pop %v4786
      %v4795 = vmul.f32 %v4771, %v4787
      %v4796 = vmul.f32 %v4772, %v4788
      %v4797 = vmul.f32 %v4773, %v4789
      %v4798 = vmul.f32 %v4774, %v4790
      %v4799 = vmul.f32 %v4775, %v4791
      %v4800 = vmul.f32 %v4776, %v4792
      %v4801 = vmul.f32 %v4777, %v4793
      %v4802 = vmul.f32 %v4778, %v4794
      %v4803 = vmul.f32 %v4720, %v4795
      %v4804 = vmul.f32 %v4722, %v4796
      %v4805 = vmul.f32 %v4725, %v4797
      %v4806 = vmul.f32 %v4727, %v4798
      %v4807 = vmul.f32 %v4730, %v4799
      %v4808 = vmul.f32 %v4732, %v4800
      %v4809 = vmul.f32 %v4735, %v4801
      %v4810 = vmul.f32 %v4737, %v4802
      %v4811 = vpack.c.bf16 %v4803, %v4803
      %v4812 = vpack.c.bf16 %v4804, %v4804
      %v4813 = vpack.c.bf16 %v4805, %v4805
      %v4814 = vpack.c.bf16 %v4806, %v4806
      %v4815 = vpack.c.bf16 %v4807, %v4807
      %v4816 = vpack.c.bf16 %v4808, %v4808
      %v4817 = vpack.c.bf16 %v4809, %v4809
      %v4818 = vpack.c.bf16 %v4810, %v4810
      %4819 = vst [vmem:[#allocation2 + $0x20] sm:$0xf] %v4811
      %4820 = vst [vmem:[#allocation2 + $0x24] sm:$0xf] %v4812
      %4821 = vst [vmem:[#allocation2 + $0x28] sm:$0xf] %v4813
      %4822 = vst [vmem:[#allocation2 + $0x2c] sm:$0xf] %v4814
      %4823 = vst [vmem:[#allocation2 + $0x30] sm:$0xf] %v4815
      %4824 = vst [vmem:[#allocation2 + $0x34] sm:$0xf] %v4816
      %4825 = vst [vmem:[#allocation2 + $0x38] sm:$0xf] %v4817
      %4826 = vst [vmem:[#allocation2 + $0x3c] sm:$0xf] %v4818
      %4835 = vrot.lane.b32.xlu0 %v4811, 8
      %v4836 = vpop.permute.xlu0 %4835
      %4837 = vrot.lane.b32.xlu0 %v4812, 8
      %v4838 = vpop.permute.xlu0 %4837
      %4839 = vrot.lane.b32.xlu0 %v4813, 8
      %v4840 = vpop.permute.xlu0 %4839
      %4841 = vrot.lane.b32.xlu0 %v4814, 8
      %v4842 = vpop.permute.xlu0 %4841
      %4843 = vrot.lane.b32.xlu0 %v4815, 8
      %v4844 = vpop.permute.xlu0 %4843
      %4845 = vrot.lane.b32.xlu0 %v4816, 8
      %v4846 = vpop.permute.xlu0 %4845
      %4847 = vrot.lane.b32.xlu0 %v4817, 8
      %v4848 = vpop.permute.xlu0 %4847
      %4849 = vrot.lane.b32.xlu0 %v4818, 8
      %v4850 = vpop.permute.xlu0 %4849
      %4859 = vst.msk [vmem:[#allocation2] sm:$0xf] %vm4087, %v4836
      %4860 = vst.msk [vmem:[#allocation2 + $0x4] sm:$0xf] %vm4087, %v4838
      %4861 = vst.msk [vmem:[#allocation2 + $0x8] sm:$0xf] %vm4087, %v4840
      %4862 = vst.msk [vmem:[#allocation2 + $0xc] sm:$0xf] %vm4087, %v4842
      %4863 = vst.msk [vmem:[#allocation2 + $0x10] sm:$0xf] %vm4087, %v4844
      %4864 = vst.msk [vmem:[#allocation2 + $0x14] sm:$0xf] %vm4087, %v4846
      %4865 = vst.msk [vmem:[#allocation2 + $0x18] sm:$0xf] %vm4087, %v4848
      %4866 = vst.msk [vmem:[#allocation2 + $0x1c] sm:$0xf] %vm4087, %v4850
      %4867 = vrot.lane.b32.xlu0 %v4811, 120
      %v4868 = vpop.permute.xlu0 %4867
      %4869 = vrot.lane.b32.xlu0 %v4812, 120
      %v4870 = vpop.permute.xlu0 %4869
      %4871 = vrot.lane.b32.xlu0 %v4813, 120
      %v4872 = vpop.permute.xlu0 %4871
      %4873 = vrot.lane.b32.xlu0 %v4814, 120
      %v4874 = vpop.permute.xlu0 %4873
      %4875 = vrot.lane.b32.xlu0 %v4815, 120
      %v4876 = vpop.permute.xlu0 %4875
      %4877 = vrot.lane.b32.xlu0 %v4816, 120
      %v4878 = vpop.permute.xlu0 %4877
      %4879 = vrot.lane.b32.xlu0 %v4817, 120
      %v4880 = vpop.permute.xlu0 %4879
      %4881 = vrot.lane.b32.xlu0 %v4818, 120
      %v4882 = vpop.permute.xlu0 %4881
      %4891 = vst.msk [vmem:[#allocation2 + $0x40] sm:$0xf] %vm4120, %v4868
      %4892 = vst.msk [vmem:[#allocation2 + $0x44] sm:$0xf] %vm4120, %v4870
      %4893 = vst.msk [vmem:[#allocation2 + $0x48] sm:$0xf] %vm4120, %v4872
      %4894 = vst.msk [vmem:[#allocation2 + $0x4c] sm:$0xf] %vm4120, %v4874
      %4895 = vst.msk [vmem:[#allocation2 + $0x50] sm:$0xf] %vm4120, %v4876
      %4896 = vst.msk [vmem:[#allocation2 + $0x54] sm:$0xf] %vm4120, %v4878
      %4897 = vst.msk [vmem:[#allocation2 + $0x58] sm:$0xf] %vm4120, %v4880
      %4898 = vst.msk [vmem:[#allocation2 + $0x5c] sm:$0xf] %vm4120, %v4882
      %v4899 = vld [vmem:[%s1 + $0xc] sm:$0xf]
      %v4900 = vunpack.c.l.b16 %v4811
      %v4901 = vunpack.c.l.b16 %v4812
      %v4902 = vunpack.c.l.b16 %v4813
      %v4903 = vunpack.c.l.b16 %v4814
      %v4904 = vunpack.c.l.b16 %v4815
      %v4905 = vunpack.c.l.b16 %v4816
      %v4906 = vunpack.c.l.b16 %v4817
      %v4907 = vunpack.c.l.b16 %v4818
      %v4908 = vpack.c.b16 %v4901, %v4900
      %v4909 = vpack.c.b16 %v4903, %v4902
      %v4910 = vpack.c.b16 %v4905, %v4904
      %v4911 = vpack.c.b16 %v4907, %v4906
      %4912 = vrot.lane.b32.xlu0 %v4908, 127
      %v4913 = vpop.permute.xlu0 %4912
      %4914 = vrot.lane.b32.xlu0 %v4909, 127
      %v4915 = vpop.permute.xlu0 %4914
      %4916 = vrot.lane.b32.xlu0 %v4910, 127
      %v4917 = vpop.permute.xlu0 %4916
      %4918 = vrot.lane.b32.xlu0 %v4911, 127
      %v4919 = vpop.permute.xlu0 %4918
      %v4921 = vsel %vm4150, %v4913, 0
      %v4924 = vsel %vm4150, %v4915, 0
      %v4927 = vsel %vm4150, %v4917, 0
      %v4930 = vsel %vm4150, %v4919, 0
      %v4933 = vsel %vm4163, %v4899, 0
      %4935 = vmatpush.bf16.msra.mxu0 0
      %4936 = vmatpush.bf16.msra.mxu0 0
      %4937 = vmatpush.bf16.msra.mxu0 0
      %4938 = vmatpush.bf16.msra.mxu0 0
      %4939 = vmatpush.bf16.msra.mxu0 0
      %4940 = vmatpush.bf16.msra.mxu0 0
      %4941 = vmatpush.bf16.msra.mxu0 0
      %4942 = vmatpush.bf16.msra.mxu0 %v4933
      %4943 = vmatmul.bf16.gmra.mxu0 %v4921
      %v4944 = vpop.f32.mrf.mxu0
      %v4945 = vadd.f32 0.0, %v4944
      %v4946 = vpop.f32.mrf.mxu0
      %v4947 = vadd.f32 0.0, %v4946
      %4948 = vmatmul.bf16.gmra.mxu0 %v4924
      %v4949 = vpop.f32.mrf.mxu0
      %v4950 = vadd.f32 0.0, %v4949
      %v4951 = vpop.f32.mrf.mxu0
      %v4952 = vadd.f32 0.0, %v4951
      %4953 = vmatmul.bf16.gmra.mxu0 %v4927
      %v4954 = vpop.f32.mrf.mxu0
      %v4955 = vadd.f32 0.0, %v4954
      %v4956 = vpop.f32.mrf.mxu0
      %v4957 = vadd.f32 0.0, %v4956
      %4958 = vmatmul.bf16.gmra.mxu0 %v4930
      %v4959 = vpop.f32.mrf.mxu0
      %v4960 = vadd.f32 0.0, %v4959
      %v4961 = vpop.f32.mrf.mxu0
      %v4962 = vadd.f32 0.0, %v4961
      %4963 = vdwg.mxu0
      %v4964 = vpack.c.bf16 %v4945, %v4945
      %v4965 = vpack.c.bf16 %v4947, %v4947
      %v4966 = vpack.c.bf16 %v4950, %v4950
      %v4967 = vpack.c.bf16 %v4952, %v4952
      %v4968 = vpack.c.bf16 %v4955, %v4955
      %v4969 = vpack.c.bf16 %v4957, %v4957
      %v4970 = vpack.c.bf16 %v4960, %v4960
      %v4971 = vpack.c.bf16 %v4962, %v4962
      %4972 = vrot.lane.b32.xlu0 %v4908, 73
      %v4973 = vpop.permute.xlu0 %4972
      %4974 = vrot.lane.b32.xlu0 %v4909, 73
      %v4975 = vpop.permute.xlu0 %4974
      %4976 = vrot.lane.b32.xlu0 %v4910, 73
      %v4977 = vpop.permute.xlu0 %4976
      %4978 = vrot.lane.b32.xlu0 %v4911, 73
      %v4979 = vpop.permute.xlu0 %4978
      %v4981 = vsel %vm4150, %v4973, 0
      %v4984 = vsel %vm4150, %v4975, 0
      %v4987 = vsel %vm4150, %v4977, 0
      %v4990 = vsel %vm4150, %v4979, 0
      %4992 = vmatpush.bf16.msra.mxu0 0
      %4993 = vmatpush.bf16.msra.mxu0 0
      %4994 = vmatpush.bf16.msra.mxu0 0
      %4995 = vmatpush.bf16.msra.mxu0 0
      %4996 = vmatpush.bf16.msra.mxu0 0
      %4997 = vmatpush.bf16.msra.mxu0 0
      %4998 = vmatpush.bf16.msra.mxu0 0
      %4999 = vmatpush.bf16.msra.mxu0 %v4933
      %5000 = vmatmul.bf16.gmra.mxu0 %v4981
      %v5001 = vpop.f32.mrf.mxu0
      %v5002 = vadd.f32 0.0, %v5001
      %v5003 = vpop.f32.mrf.mxu0
      %v5004 = vadd.f32 0.0, %v5003
      %5005 = vmatmul.bf16.gmra.mxu0 %v4984
      %v5006 = vpop.f32.mrf.mxu0
      %v5007 = vadd.f32 0.0, %v5006
      %v5008 = vpop.f32.mrf.mxu0
      %v5009 = vadd.f32 0.0, %v5008
      %5010 = vmatmul.bf16.gmra.mxu0 %v4987
      %v5011 = vpop.f32.mrf.mxu0
      %v5012 = vadd.f32 0.0, %v5011
      %v5013 = vpop.f32.mrf.mxu0
      %v5014 = vadd.f32 0.0, %v5013
      %5015 = vmatmul.bf16.gmra.mxu0 %v4990
      %v5016 = vpop.f32.mrf.mxu0
      %v5017 = vadd.f32 0.0, %v5016
      %v5018 = vpop.f32.mrf.mxu0
      %v5019 = vadd.f32 0.0, %v5018
      %5020 = vdwg.mxu0
      %v5021 = vpack.c.bf16 %v5002, %v5002
      %v5022 = vpack.c.bf16 %v5004, %v5004
      %v5023 = vpack.c.bf16 %v5007, %v5007
      %v5024 = vpack.c.bf16 %v5009, %v5009
      %v5025 = vpack.c.bf16 %v5012, %v5012
      %v5026 = vpack.c.bf16 %v5014, %v5014
      %v5027 = vpack.c.bf16 %v5017, %v5017
      %v5028 = vpack.c.bf16 %v5019, %v5019
      %5029 = vst.msk [vmem:[#allocation2] sm:$0xf] %vm4261, %v4964
      %5030 = vst.msk [vmem:[#allocation2 + $0x4] sm:$0xf] %vm4261, %v4965
      %5031 = vst.msk [vmem:[#allocation2 + $0x8] sm:$0xf] %vm4261, %v4966
      %5032 = vst.msk [vmem:[#allocation2 + $0xc] sm:$0xf] %vm4261, %v4967
      %5033 = vst.msk [vmem:[#allocation2 + $0x10] sm:$0xf] %vm4261, %v4968
      %5034 = vst.msk [vmem:[#allocation2 + $0x14] sm:$0xf] %vm4261, %v4969
      %5035 = vst.msk [vmem:[#allocation2 + $0x18] sm:$0xf] %vm4261, %v4970
      %5036 = vst.msk [vmem:[#allocation2 + $0x1c] sm:$0xf] %vm4261, %v4971
      %5045 = vrot.lane.b32.xlu0 %v5021, 56
      %v5046 = vpop.permute.xlu0 %5045
      %5047 = vrot.lane.b32.xlu0 %v5022, 56
      %v5048 = vpop.permute.xlu0 %5047
      %5049 = vrot.lane.b32.xlu0 %v5023, 56
      %v5050 = vpop.permute.xlu0 %5049
      %5051 = vrot.lane.b32.xlu0 %v5024, 56
      %v5052 = vpop.permute.xlu0 %5051
      %5053 = vrot.lane.b32.xlu0 %v5025, 56
      %v5054 = vpop.permute.xlu0 %5053
      %5055 = vrot.lane.b32.xlu0 %v5026, 56
      %v5056 = vpop.permute.xlu0 %5055
      %5057 = vrot.lane.b32.xlu0 %v5027, 56
      %v5058 = vpop.permute.xlu0 %5057
      %5059 = vrot.lane.b32.xlu0 %v5028, 56
      %v5060 = vpop.permute.xlu0 %5059
      %5069 = vst.msk [vmem:[#allocation2 + $0x40] sm:$0xf] %vm4302, %v5046
      %5070 = vst.msk [vmem:[#allocation2 + $0x44] sm:$0xf] %vm4302, %v5048
      %5071 = vst.msk [vmem:[#allocation2 + $0x48] sm:$0xf] %vm4302, %v5050
      %5072 = vst.msk [vmem:[#allocation2 + $0x4c] sm:$0xf] %vm4302, %v5052
      %5073 = vst.msk [vmem:[#allocation2 + $0x50] sm:$0xf] %vm4302, %v5054
      %5074 = vst.msk [vmem:[#allocation2 + $0x54] sm:$0xf] %vm4302, %v5056
      %5075 = vst.msk [vmem:[#allocation2 + $0x58] sm:$0xf] %vm4302, %v5058
      %5076 = vst.msk [vmem:[#allocation2 + $0x5c] sm:$0xf] %vm4302, %v5060
      %5077 = vst.msk [vmem:[#allocation2] sm:$0xf] %vm4311, %v4836
      %5078 = vst.msk [vmem:[#allocation2 + $0x4] sm:$0xf] %vm4311, %v4838
      %5079 = vst.msk [vmem:[#allocation2 + $0x8] sm:$0xf] %vm4311, %v4840
      %5080 = vst.msk [vmem:[#allocation2 + $0xc] sm:$0xf] %vm4311, %v4842
      %5081 = vst.msk [vmem:[#allocation2 + $0x10] sm:$0xf] %vm4311, %v4844
      %5082 = vst.msk [vmem:[#allocation2 + $0x14] sm:$0xf] %vm4311, %v4846
      %5083 = vst.msk [vmem:[#allocation2 + $0x18] sm:$0xf] %vm4311, %v4848
      %5084 = vst.msk [vmem:[#allocation2 + $0x1c] sm:$0xf] %vm4311, %v4850
      %5085 = vst.msk [vmem:[#allocation2 + $0x40] sm:$0xf] %vm4320, %v4868
      %5086 = vst.msk [vmem:[#allocation2 + $0x44] sm:$0xf] %vm4320, %v4870
      %5087 = vst.msk [vmem:[#allocation2 + $0x48] sm:$0xf] %vm4320, %v4872
      %5088 = vst.msk [vmem:[#allocation2 + $0x4c] sm:$0xf] %vm4320, %v4874
      %5089 = vst.msk [vmem:[#allocation2 + $0x50] sm:$0xf] %vm4320, %v4876
      %5090 = vst.msk [vmem:[#allocation2 + $0x54] sm:$0xf] %vm4320, %v4878
      %5091 = vst.msk [vmem:[#allocation2 + $0x58] sm:$0xf] %vm4320, %v4880
      %5092 = vst.msk [vmem:[#allocation2 + $0x5c] sm:$0xf] %vm4320, %v4882
      %v5093 = vld [vmem:[%s1 + $0xc] sm:$0xf]
      %5094 = vrot.lane.b32.xlu0 %v4908, 63
      %v5095 = vpop.permute.xlu0 %5094
      %5096 = vrot.lane.b32.xlu0 %v4909, 63
      %v5097 = vpop.permute.xlu0 %5096
      %5098 = vrot.lane.b32.xlu0 %v4910, 63
      %v5099 = vpop.permute.xlu0 %5098
      %5100 = vrot.lane.b32.xlu0 %v4911, 63
      %v5101 = vpop.permute.xlu0 %5100
      %v5103 = vsel %vm4150, %v5095, 0
      %v5106 = vsel %vm4150, %v5097, 0
      %v5109 = vsel %vm4150, %v5099, 0
      %v5112 = vsel %vm4150, %v5101, 0
      %v5115 = vsel %vm4163, %v5093, 0
      %5117 = vmatpush.bf16.msra.mxu0 0
      %5118 = vmatpush.bf16.msra.mxu0 0
      %5119 = vmatpush.bf16.msra.mxu0 0
      %5120 = vmatpush.bf16.msra.mxu0 0
      %5121 = vmatpush.bf16.msra.mxu0 0
      %5122 = vmatpush.bf16.msra.mxu0 0
      %5123 = vmatpush.bf16.msra.mxu0 0
      %5124 = vmatpush.bf16.msra.mxu0 %v5115
      %5125 = vmatmul.bf16.gmra.mxu0 %v5103
      %v5126 = vpop.f32.mrf.mxu0
      %v5127 = vadd.f32 0.0, %v5126
      %v5128 = vpop.f32.mrf.mxu0
      %v5129 = vadd.f32 0.0, %v5128
      %5130 = vmatmul.bf16.gmra.mxu0 %v5106
      %v5131 = vpop.f32.mrf.mxu0
      %v5132 = vadd.f32 0.0, %v5131
      %v5133 = vpop.f32.mrf.mxu0
      %v5134 = vadd.f32 0.0, %v5133
      %5135 = vmatmul.bf16.gmra.mxu0 %v5109
      %v5136 = vpop.f32.mrf.mxu0
      %v5137 = vadd.f32 0.0, %v5136
      %v5138 = vpop.f32.mrf.mxu0
      %v5139 = vadd.f32 0.0, %v5138
      %5140 = vmatmul.bf16.gmra.mxu0 %v5112
      %v5141 = vpop.f32.mrf.mxu0
      %v5142 = vadd.f32 0.0, %v5141
      %v5143 = vpop.f32.mrf.mxu0
      %v5144 = vadd.f32 0.0, %v5143
      %5145 = vdwg.mxu0
      %v5146 = vpack.c.bf16 %v5127, %v5127
      %v5147 = vpack.c.bf16 %v5129, %v5129
      %v5148 = vpack.c.bf16 %v5132, %v5132
      %v5149 = vpack.c.bf16 %v5134, %v5134
      %v5150 = vpack.c.bf16 %v5137, %v5137
      %v5151 = vpack.c.bf16 %v5139, %v5139
      %v5152 = vpack.c.bf16 %v5142, %v5142
      %v5153 = vpack.c.bf16 %v5144, %v5144
      %5154 = vrot.lane.b32.xlu0 %v4908, 9
      %v5155 = vpop.permute.xlu0 %5154
      %5156 = vrot.lane.b32.xlu0 %v4909, 9
      %v5157 = vpop.permute.xlu0 %5156
      %5158 = vrot.lane.b32.xlu0 %v4910, 9
      %v5159 = vpop.permute.xlu0 %5158
      %5160 = vrot.lane.b32.xlu0 %v4911, 9
      %v5161 = vpop.permute.xlu0 %5160
      %v5163 = vsel %vm4150, %v5155, 0
      %v5166 = vsel %vm4150, %v5157, 0
      %v5169 = vsel %vm4150, %v5159, 0
      %v5172 = vsel %vm4150, %v5161, 0
      %5174 = vmatpush.bf16.msra.mxu0 0
      %5175 = vmatpush.bf16.msra.mxu0 0
      %5176 = vmatpush.bf16.msra.mxu0 0
      %5177 = vmatpush.bf16.msra.mxu0 0
      %5178 = vmatpush.bf16.msra.mxu0 0
      %5179 = vmatpush.bf16.msra.mxu0 0
      %5180 = vmatpush.bf16.msra.mxu0 0
      %5181 = vmatpush.bf16.msra.mxu0 %v5115
      %5182 = vmatmul.bf16.gmra.mxu0 %v5163
      %v5183 = vpop.f32.mrf.mxu0
      %v5184 = vadd.f32 0.0, %v5183
      %v5185 = vpop.f32.mrf.mxu0
      %v5186 = vadd.f32 0.0, %v5185
      %5187 = vmatmul.bf16.gmra.mxu0 %v5166
      %v5188 = vpop.f32.mrf.mxu0
      %v5189 = vadd.f32 0.0, %v5188
      %v5190 = vpop.f32.mrf.mxu0
      %v5191 = vadd.f32 0.0, %v5190
      %5192 = vmatmul.bf16.gmra.mxu0 %v5169
      %v5193 = vpop.f32.mrf.mxu0
      %v5194 = vadd.f32 0.0, %v5193
      %v5195 = vpop.f32.mrf.mxu0
      %v5196 = vadd.f32 0.0, %v5195
      %5197 = vmatmul.bf16.gmra.mxu0 %v5172
      %v5198 = vpop.f32.mrf.mxu0
      %v5199 = vadd.f32 0.0, %v5198
      %v5200 = vpop.f32.mrf.mxu0
      %v5201 = vadd.f32 0.0, %v5200
      %5202 = vdwg.mxu0
      %v5203 = vpack.c.bf16 %v5184, %v5184
      %v5204 = vpack.c.bf16 %v5186, %v5186
      %v5205 = vpack.c.bf16 %v5189, %v5189
      %v5206 = vpack.c.bf16 %v5191, %v5191
      %v5207 = vpack.c.bf16 %v5194, %v5194
      %v5208 = vpack.c.bf16 %v5196, %v5196
      %v5209 = vpack.c.bf16 %v5199, %v5199
      %v5210 = vpack.c.bf16 %v5201, %v5201
      %5219 = vrot.lane.b32.xlu0 %v5146, 64
      %v5220 = vpop.permute.xlu0 %5219
      %5221 = vrot.lane.b32.xlu0 %v5147, 64
      %v5222 = vpop.permute.xlu0 %5221
      %5223 = vrot.lane.b32.xlu0 %v5148, 64
      %v5224 = vpop.permute.xlu0 %5223
      %5225 = vrot.lane.b32.xlu0 %v5149, 64
      %v5226 = vpop.permute.xlu0 %5225
      %5227 = vrot.lane.b32.xlu0 %v5150, 64
      %v5228 = vpop.permute.xlu0 %5227
      %5229 = vrot.lane.b32.xlu0 %v5151, 64
      %v5230 = vpop.permute.xlu0 %5229
      %5231 = vrot.lane.b32.xlu0 %v5152, 64
      %v5232 = vpop.permute.xlu0 %5231
      %5233 = vrot.lane.b32.xlu0 %v5153, 64
      %v5234 = vpop.permute.xlu0 %5233
      %5243 = vst.msk [vmem:[#allocation2] sm:$0xf] %vm4479, %v5220
      %5244 = vst.msk [vmem:[#allocation2 + $0x4] sm:$0xf] %vm4479, %v5222
      %5245 = vst.msk [vmem:[#allocation2 + $0x8] sm:$0xf] %vm4479, %v5224
      %5246 = vst.msk [vmem:[#allocation2 + $0xc] sm:$0xf] %vm4479, %v5226
      %5247 = vst.msk [vmem:[#allocation2 + $0x10] sm:$0xf] %vm4479, %v5228
      %5248 = vst.msk [vmem:[#allocation2 + $0x14] sm:$0xf] %vm4479, %v5230
      %5249 = vst.msk [vmem:[#allocation2 + $0x18] sm:$0xf] %vm4479, %v5232
      %5250 = vst.msk [vmem:[#allocation2 + $0x1c] sm:$0xf] %vm4479, %v5234
      %5259 = vrot.lane.b32.xlu0 %v5203, 120
      %v5260 = vpop.permute.xlu0 %5259
      %5261 = vrot.lane.b32.xlu0 %v5204, 120
      %v5262 = vpop.permute.xlu0 %5261
      %5263 = vrot.lane.b32.xlu0 %v5205, 120
      %v5264 = vpop.permute.xlu0 %5263
      %5265 = vrot.lane.b32.xlu0 %v5206, 120
      %v5266 = vpop.permute.xlu0 %5265
      %5267 = vrot.lane.b32.xlu0 %v5207, 120
      %v5268 = vpop.permute.xlu0 %5267
      %5269 = vrot.lane.b32.xlu0 %v5208, 120
      %v5270 = vpop.permute.xlu0 %5269
      %5271 = vrot.lane.b32.xlu0 %v5209, 120
      %v5272 = vpop.permute.xlu0 %5271
      %5273 = vrot.lane.b32.xlu0 %v5210, 120
      %v5274 = vpop.permute.xlu0 %5273
      %5283 = vst.msk [vmem:[#allocation2 + $0x40] sm:$0xf] %vm4520, %v5260
      %5284 = vst.msk [vmem:[#allocation2 + $0x44] sm:$0xf] %vm4520, %v5262
      %5285 = vst.msk [vmem:[#allocation2 + $0x48] sm:$0xf] %vm4520, %v5264
      %5286 = vst.msk [vmem:[#allocation2 + $0x4c] sm:$0xf] %vm4520, %v5266
      %5287 = vst.msk [vmem:[#allocation2 + $0x50] sm:$0xf] %vm4520, %v5268
      %5288 = vst.msk [vmem:[#allocation2 + $0x54] sm:$0xf] %vm4520, %v5270
      %5289 = vst.msk [vmem:[#allocation2 + $0x58] sm:$0xf] %vm4520, %v5272
      %5290 = vst.msk [vmem:[#allocation2 + $0x5c] sm:$0xf] %vm4520, %v5274
      %v5291 = vld [vmem:[%s12] sm:$0xff]
      %v5292 = vld [vmem:[%s12 + $0x8] sm:$0xff]
      %v5293 = vld [vmem:[%s12 + $0x10] sm:$0xff]
      %v5294 = vld [vmem:[%s12 + $0x18] sm:$0xff]
      %v5295 = vld [vmem:[%s12 + $0x20] sm:$0xff]
      %v5296 = vld [vmem:[%s12 + $0x28] sm:$0xff]
      %v5297 = vld [vmem:[%s12 + $0x30] sm:$0xff]
      %v5298 = vld [vmem:[%s12 + $0x38] sm:$0xff]
      %v5299 = vld [vmem:[#allocation2] sm:$0xf]
      %v5300 = vld [vmem:[#allocation2 + $0x4] sm:$0xf]
      %v5301 = vld [vmem:[#allocation2 + $0x8] sm:$0xf]
      %v5302 = vld [vmem:[#allocation2 + $0xc] sm:$0xf]
      %v5303 = vld [vmem:[#allocation2 + $0x10] sm:$0xf]
      %v5304 = vld [vmem:[#allocation2 + $0x14] sm:$0xf]
      %v5305 = vld [vmem:[#allocation2 + $0x18] sm:$0xf]
      %v5306 = vld [vmem:[#allocation2 + $0x1c] sm:$0xf]
      %v5307 = vld [vmem:[#allocation2 + $0x20] sm:$0xf]
      %v5308 = vld [vmem:[#allocation2 + $0x24] sm:$0xf]
      %v5309 = vld [vmem:[#allocation2 + $0x28] sm:$0xf]
      %v5310 = vld [vmem:[#allocation2 + $0x2c] sm:$0xf]
      %v5311 = vld [vmem:[#allocation2 + $0x30] sm:$0xf]
      %v5312 = vld [vmem:[#allocation2 + $0x34] sm:$0xf]
      %v5313 = vld [vmem:[#allocation2 + $0x38] sm:$0xf]
      %v5314 = vld [vmem:[#allocation2 + $0x3c] sm:$0xf]
      %v5315 = vld [vmem:[#allocation2 + $0x40] sm:$0xf]
      %v5316 = vld [vmem:[#allocation2 + $0x44] sm:$0xf]
      %v5317 = vld [vmem:[#allocation2 + $0x48] sm:$0xf]
      %v5318 = vld [vmem:[#allocation2 + $0x4c] sm:$0xf]
      %v5319 = vld [vmem:[#allocation2 + $0x50] sm:$0xf]
      %v5320 = vld [vmem:[#allocation2 + $0x54] sm:$0xf]
      %v5321 = vld [vmem:[#allocation2 + $0x58] sm:$0xf]
      %v5322 = vld [vmem:[#allocation2 + $0x5c] sm:$0xf]
      %v5331 = vunpack.c.l.b16 %v5291
      %v5332 = vunpack.c.h.b16 %v5291
      %v5333 = vunpack.c.l.b16 %v5292
      %v5334 = vunpack.c.h.b16 %v5292
      %v5335 = vunpack.c.l.b16 %v5293
      %v5336 = vunpack.c.h.b16 %v5293
      %v5337 = vunpack.c.l.b16 %v5294
      %v5338 = vunpack.c.h.b16 %v5294
      %v5339 = vunpack.c.l.b16 %v5295
      %v5340 = vunpack.c.h.b16 %v5295
      %v5341 = vunpack.c.l.b16 %v5296
      %v5342 = vunpack.c.h.b16 %v5296
      %v5343 = vunpack.c.l.b16 %v5297
      %v5344 = vunpack.c.h.b16 %v5297
      %v5345 = vunpack.c.l.b16 %v5298
      %v5346 = vunpack.c.h.b16 %v5298
      %v5347 = vpack.c.b16 %v5333, %v5331
      %v5348 = vpack.c.b16 %v5334, %v5332
      %v5349 = vpack.c.b16 %v5337, %v5335
      %v5350 = vpack.c.b16 %v5338, %v5336
      %v5351 = vpack.c.b16 %v5341, %v5339
      %v5352 = vpack.c.b16 %v5342, %v5340
      %v5353 = vpack.c.b16 %v5345, %v5343
      %v5354 = vpack.c.b16 %v5346, %v5344
      %v5383 = vunpack.c.l.b16 %v5299
      %v5384 = vunpack.c.l.b16 %v5300
      %v5385 = vunpack.c.l.b16 %v5301
      %v5386 = vunpack.c.l.b16 %v5302
      %v5387 = vunpack.c.l.b16 %v5303
      %v5388 = vunpack.c.l.b16 %v5304
      %v5389 = vunpack.c.l.b16 %v5305
      %v5390 = vunpack.c.l.b16 %v5306
      %v5391 = vunpack.c.l.b16 %v5307
      %v5392 = vunpack.c.l.b16 %v5308
      %v5393 = vunpack.c.l.b16 %v5309
      %v5394 = vunpack.c.l.b16 %v5310
      %v5395 = vunpack.c.l.b16 %v5311
      %v5396 = vunpack.c.l.b16 %v5312
      %v5397 = vunpack.c.l.b16 %v5313
      %v5398 = vunpack.c.l.b16 %v5314
      %v5399 = vunpack.c.l.b16 %v5315
      %v5400 = vunpack.c.l.b16 %v5316
      %v5401 = vunpack.c.l.b16 %v5317
      %v5402 = vunpack.c.l.b16 %v5318
      %v5403 = vunpack.c.l.b16 %v5319
      %v5404 = vunpack.c.l.b16 %v5320
      %v5405 = vunpack.c.l.b16 %v5321
      %v5406 = vunpack.c.l.b16 %v5322
      %v5407 = vpack.c.b16 %v5384, %v5383
      %v5408 = vpack.c.b16 %v5386, %v5385
      %v5409 = vpack.c.b16 %v5388, %v5387
      %v5410 = vpack.c.b16 %v5390, %v5389
      %v5411 = vpack.c.b16 %v5392, %v5391
      %v5412 = vpack.c.b16 %v5394, %v5393
      %v5413 = vpack.c.b16 %v5396, %v5395
      %v5414 = vpack.c.b16 %v5398, %v5397
      %v5415 = vpack.c.b16 %v5400, %v5399
      %v5416 = vpack.c.b16 %v5402, %v5401
      %v5417 = vpack.c.b16 %v5404, %v5403
      %v5418 = vpack.c.b16 %v5406, %v5405
      %v5432 = vsel %vm1296, %v5348, 0
      %v5435 = vsel %vm1296, %v5350, 0
      %v5438 = vsel %vm1296, %v5352, 0
      %v5441 = vsel %vm1296, %v5354, 0
      %5443 = vmatpush.bf16.msra.mxu0 %v5414
      %5444 = vmatpush.bf16.msra.mxu0 %v5413
      %5445 = vmatpush.bf16.msra.mxu0 %v5412
      %5446 = vmatpush.bf16.msra.mxu0 %v5411
      %5447 = vmatpush.bf16.msra.mxu0 %v5410
      %5448 = vmatpush.bf16.msra.mxu0 %v5409
      %5449 = vmatpush.bf16.msra.mxu0 %v5408
      %5450 = vmatpush.bf16.msra.mxu0 %v5407
      %5451 = vmatmul.bf16.gmra.mxu0 %v5347
      %v5452 = vpop.f32.mrf.mxu0
      %v5453 = vadd.f32 0.0, %v5452
      %v5454 = vpop.f32.mrf.mxu0
      %v5455 = vadd.f32 0.0, %v5454
      %5456 = vmatmul.bf16.gmra.mxu0 %v5349
      %v5457 = vpop.f32.mrf.mxu0
      %v5458 = vadd.f32 0.0, %v5457
      %v5459 = vpop.f32.mrf.mxu0
      %v5460 = vadd.f32 0.0, %v5459
      %5461 = vmatmul.bf16.gmra.mxu0 %v5351
      %v5462 = vpop.f32.mrf.mxu0
      %v5463 = vadd.f32 0.0, %v5462
      %v5464 = vpop.f32.mrf.mxu0
      %v5465 = vadd.f32 0.0, %v5464
      %5466 = vmatmul.bf16.gmra.mxu0 %v5353
      %v5467 = vpop.f32.mrf.mxu0
      %v5468 = vadd.f32 0.0, %v5467
      %v5469 = vpop.f32.mrf.mxu0
      %v5470 = vadd.f32 0.0, %v5469
      %5471 = vdwg.mxu0
      %5472 = vmatpush.bf16.msra.mxu0 0
      %5473 = vmatpush.bf16.msra.mxu0 0
      %5474 = vmatpush.bf16.msra.mxu0 0
      %5475 = vmatpush.bf16.msra.mxu0 0
      %5476 = vmatpush.bf16.msra.mxu0 %v5418
      %5477 = vmatpush.bf16.msra.mxu0 %v5417
      %5478 = vmatpush.bf16.msra.mxu0 %v5416
      %5479 = vmatpush.bf16.msra.mxu0 %v5415
      %5480 = vmatmul.bf16.gmra.mxu0 %v5432
      %v5481 = vpop.f32.mrf.mxu0
      %v5482 = vadd.f32 %v5453, %v5481
      %v5483 = vpop.f32.mrf.mxu0
      %v5484 = vadd.f32 %v5455, %v5483
      %5485 = vmatmul.bf16.gmra.mxu0 %v5435
      %v5486 = vpop.f32.mrf.mxu0
      %v5487 = vadd.f32 %v5458, %v5486
      %v5488 = vpop.f32.mrf.mxu0
      %v5489 = vadd.f32 %v5460, %v5488
      %5490 = vmatmul.bf16.gmra.mxu0 %v5438
      %v5491 = vpop.f32.mrf.mxu0
      %v5492 = vadd.f32 %v5463, %v5491
      %v5493 = vpop.f32.mrf.mxu0
      %v5494 = vadd.f32 %v5465, %v5493
      %5495 = vmatmul.bf16.gmra.mxu0 %v5441
      %v5496 = vpop.f32.mrf.mxu0
      %v5497 = vadd.f32 %v5468, %v5496
      %v5498 = vpop.f32.mrf.mxu0
      %v5499 = vadd.f32 %v5470, %v5498
      %5500 = vdwg.mxu0
      %v5501 = vmin.f32 %v5482, 20.0
      %v5502 = vmin.f32 %v5484, 20.0
      %v5503 = vmin.f32 %v5487, 20.0
      %v5504 = vmin.f32 %v5489, 20.0
      %v5505 = vmin.f32 %v5492, 20.0
      %v5506 = vmin.f32 %v5494, 20.0
      %v5507 = vmin.f32 %v5497, 20.0
      %v5508 = vmin.f32 %v5499, 20.0
      %v5509 = vmul.f32 %v5501, 1.442695
      %v5510 = vpow.pop %v5509
      %v5511 = vmul.f32 %v5502, 1.442695
      %v5512 = vpow.pop %v5511
      %v5513 = vmul.f32 %v5503, 1.442695
      %v5514 = vpow.pop %v5513
      %v5515 = vmul.f32 %v5504, 1.442695
      %v5516 = vpow.pop %v5515
      %v5517 = vmul.f32 %v5505, 1.442695
      %v5518 = vpow.pop %v5517
      %v5519 = vmul.f32 %v5506, 1.442695
      %v5520 = vpow.pop %v5519
      %v5521 = vmul.f32 %v5507, 1.442695
      %v5522 = vpow.pop %v5521
      %v5523 = vmul.f32 %v5508, 1.442695
      %v5524 = vpow.pop %v5523
      %v5525 = vadd.f32 %v5510, 2.0
      %v5526 = vadd.f32 %v5512, 2.0
      %v5527 = vadd.f32 %v5514, 2.0
      %v5528 = vadd.f32 %v5516, 2.0
      %v5529 = vadd.f32 %v5518, 2.0
      %v5530 = vadd.f32 %v5520, 2.0
      %v5531 = vadd.f32 %v5522, 2.0
      %v5532 = vadd.f32 %v5524, 2.0
      %v5533 = vmul.f32 %v5510, %v5525
      %v5534 = vmul.f32 %v5512, %v5526
      %v5535 = vmul.f32 %v5514, %v5527
      %v5536 = vmul.f32 %v5516, %v5528
      %v5537 = vmul.f32 %v5518, %v5529
      %v5538 = vmul.f32 %v5520, %v5530
      %v5539 = vmul.f32 %v5522, %v5531
      %v5540 = vmul.f32 %v5524, %v5532
      %v5541 = vadd.f32 %v5533, 2.0
      %v5542 = vadd.f32 %v5534, 2.0
      %v5543 = vadd.f32 %v5535, 2.0
      %v5544 = vadd.f32 %v5536, 2.0
      %v5545 = vadd.f32 %v5537, 2.0
      %v5546 = vadd.f32 %v5538, 2.0
      %v5547 = vadd.f32 %v5539, 2.0
      %v5548 = vadd.f32 %v5540, 2.0
      %v5549 = vrcp.pop %v5541
      %v5550 = vrcp.pop %v5542
      %v5551 = vrcp.pop %v5543
      %v5552 = vrcp.pop %v5544
      %v5553 = vrcp.pop %v5545
      %v5554 = vrcp.pop %v5546
      %v5555 = vrcp.pop %v5547
      %v5556 = vrcp.pop %v5548
      %v5557 = vmul.f32 %v5533, %v5549
      %v5558 = vmul.f32 %v5534, %v5550
      %v5559 = vmul.f32 %v5535, %v5551
      %v5560 = vmul.f32 %v5536, %v5552
      %v5561 = vmul.f32 %v5537, %v5553
      %v5562 = vmul.f32 %v5538, %v5554
      %v5563 = vmul.f32 %v5539, %v5555
      %v5564 = vmul.f32 %v5540, %v5556
      %v5565 = vmul.f32 %v5482, %v5557
      %v5566 = vmul.f32 %v5484, %v5558
      %v5567 = vmul.f32 %v5487, %v5559
      %v5568 = vmul.f32 %v5489, %v5560
      %v5569 = vmul.f32 %v5492, %v5561
      %v5570 = vmul.f32 %v5494, %v5562
      %v5571 = vmul.f32 %v5497, %v5563
      %v5572 = vmul.f32 %v5499, %v5564
      %v5573 = vsel %vm1296, %v5565, 0.0
      %v5574 = vsel %vm1296, %v5566, 0.0
      %v5575 = vadd.f32 %v5573, %v5574
      %v5576 = vsel %vm1296, %v5567, 0.0
      %v5577 = vadd.f32 %v5575, %v5576
      %v5578 = vsel %vm1296, %v5568, 0.0
      %v5579 = vadd.f32 %v5577, %v5578
      %v5580 = vsel %vm1296, %v5569, 0.0
      %v5581 = vadd.f32 %v5579, %v5580
      %v5582 = vsel %vm1296, %v5570, 0.0
      %v5583 = vadd.f32 %v5581, %v5582
      %v5584 = vsel %vm1296, %v5571, 0.0
      %v5585 = vadd.f32 %v5583, %v5584
      %v5586 = vsel %vm1296, %v5572, 0.0
      %v5587 = vadd.f32 %v5585, %v5586
      %5588 = vadd.xlane.f32.xlu0 %v5587
      %v5589 = vpop.xlane.xlu0 %5588
      %v5590 = vrot.slane %v5589, 4
      %v5591 = vadd.f32 %v5589, %v5590
      %v5592 = vrot.slane %v5591, 2
      %v5593 = vadd.f32 %v5591, %v5592
      %v5594 = vrot.slane %v5593, 1
      %v5595 = vadd.f32 %v5593, %v5594
      %s5596 = vtos %v5595
      %s5597 = smul.f32 %s5596, 0.00024414063
      %v5598 = vmul.f32 %v5565, %v5565
      %v5599 = vmul.f32 %v5566, %v5566
      %v5600 = vmul.f32 %v5567, %v5567
      %v5601 = vmul.f32 %v5568, %v5568
      %v5602 = vmul.f32 %v5569, %v5569
      %v5603 = vmul.f32 %v5570, %v5570
      %v5604 = vmul.f32 %v5571, %v5571
      %v5605 = vmul.f32 %v5572, %v5572
      %v5606 = vsel %vm1296, %v5598, 0.0
      %v5607 = vsel %vm1296, %v5599, 0.0
      %v5608 = vadd.f32 %v5606, %v5607
      %v5609 = vsel %vm1296, %v5600, 0.0
      %v5610 = vadd.f32 %v5608, %v5609
      %v5611 = vsel %vm1296, %v5601, 0.0
      %v5612 = vadd.f32 %v5610, %v5611
      %v5613 = vsel %vm1296, %v5602, 0.0
      %v5614 = vadd.f32 %v5612, %v5613
      %v5615 = vsel %vm1296, %v5603, 0.0
      %v5616 = vadd.f32 %v5614, %v5615
      %v5617 = vsel %vm1296, %v5604, 0.0
      %v5618 = vadd.f32 %v5616, %v5617
      %v5619 = vsel %vm1296, %v5605, 0.0
      %v5620 = vadd.f32 %v5618, %v5619
      %5621 = vadd.xlane.f32.xlu0 %v5620
      %v5622 = vpop.xlane.xlu0 %5621
      %v5623 = vrot.slane %v5622, 4
      %v5624 = vadd.f32 %v5622, %v5623
      %v5625 = vrot.slane %v5624, 2
      %v5626 = vadd.f32 %v5624, %v5625
      %v5627 = vrot.slane %v5626, 1
      %v5628 = vadd.f32 %v5626, %v5627
      %s5629 = vtos %v5628
      %s5630 = smul.f32 %s5629, 0.00024414063
      %s5631 = smul.f32 %s5597, %s5597
      %s5632 = ssub.f32 %s5630, %s5631
      %s5633 = sadd.f32 %s5632, 1e-05
      %v5634 = vstv %s5633
      %v5635 = vrsqrt.pop %v5634
      %v5636 = vmul.f32 %v5635, %v5634
      %v5637 = vmul.f32 %v5636, %v5635
      %v5638 = vmul.f32 0.5, %v5637
      %v5639 = vsub.f32 1.5, %v5638
      %v5640 = vmul.f32 %v5635, %v5639
      %vm5641 = vweird.f32 %v5634
      %vm5642 = vweird.f32 %v5635
      %vm5643 = vmor %vm5641, %vm5642
      %v5644 = vsel %vm5643, %v5635, %v5640
      %s5645 = vtos %v5644
      %v5646 = vstv %s5597
      %v5647 = vsel %vm2504, %v5646, 0.0
      %v5648 = vstv %s5645
      %v5649 = vsel %vm2504, %v5648, 0.0
      %5658 = vrot.lane.b32.xlu0 %v5565, 64
      %v5659 = vpop.permute.xlu0 %5658
      %5660 = vrot.lane.b32.xlu0 %v5566, 64
      %v5661 = vpop.permute.xlu0 %5660
      %5662 = vrot.lane.b32.xlu0 %v5567, 64
      %v5663 = vpop.permute.xlu0 %5662
      %5664 = vrot.lane.b32.xlu0 %v5568, 64
      %v5665 = vpop.permute.xlu0 %5664
      %5666 = vrot.lane.b32.xlu0 %v5569, 64
      %v5667 = vpop.permute.xlu0 %5666
      %5668 = vrot.lane.b32.xlu0 %v5570, 64
      %v5669 = vpop.permute.xlu0 %5668
      %5670 = vrot.lane.b32.xlu0 %v5571, 64
      %v5671 = vpop.permute.xlu0 %5670
      %5672 = vrot.lane.b32.xlu0 %v5572, 64
      %v5673 = vpop.permute.xlu0 %5672
      %v5682 = vsel %vm1296, %v5659, 0.0
      %v5683 = vsel %vm1296, %v5661, 0.0
      %v5684 = vadd.f32 %v5682, %v5683
      %v5685 = vsel %vm1296, %v5663, 0.0
      %v5686 = vadd.f32 %v5684, %v5685
      %v5687 = vsel %vm1296, %v5665, 0.0
      %v5688 = vadd.f32 %v5686, %v5687
      %v5689 = vsel %vm1296, %v5667, 0.0
      %v5690 = vadd.f32 %v5688, %v5689
      %v5691 = vsel %vm1296, %v5669, 0.0
      %v5692 = vadd.f32 %v5690, %v5691
      %v5693 = vsel %vm1296, %v5671, 0.0
      %v5694 = vadd.f32 %v5692, %v5693
      %v5695 = vsel %vm1296, %v5673, 0.0
      %v5696 = vadd.f32 %v5694, %v5695
      %5697 = vadd.xlane.f32.xlu0 %v5696
      %v5698 = vpop.xlane.xlu0 %5697
      %v5699 = vrot.slane %v5698, 4
      %v5700 = vadd.f32 %v5698, %v5699
      %v5701 = vrot.slane %v5700, 2
      %v5702 = vadd.f32 %v5700, %v5701
      %v5703 = vrot.slane %v5702, 1
      %v5704 = vadd.f32 %v5702, %v5703
      %s5705 = vtos %v5704
      %s5706 = smul.f32 %s5705, 0.00024414063
      %5715 = vrot.lane.b32.xlu0 %v5598, 64
      %v5716 = vpop.permute.xlu0 %5715
      %5717 = vrot.lane.b32.xlu0 %v5599, 64
      %v5718 = vpop.permute.xlu0 %5717
      %5719 = vrot.lane.b32.xlu0 %v5600, 64
      %v5720 = vpop.permute.xlu0 %5719
      %5721 = vrot.lane.b32.xlu0 %v5601, 64
      %v5722 = vpop.permute.xlu0 %5721
      %5723 = vrot.lane.b32.xlu0 %v5602, 64
      %v5724 = vpop.permute.xlu0 %5723
      %5725 = vrot.lane.b32.xlu0 %v5603, 64
      %v5726 = vpop.permute.xlu0 %5725
      %5727 = vrot.lane.b32.xlu0 %v5604, 64
      %v5728 = vpop.permute.xlu0 %5727
      %5729 = vrot.lane.b32.xlu0 %v5605, 64
      %v5730 = vpop.permute.xlu0 %5729
      %v5739 = vsel %vm1296, %v5716, 0.0
      %v5740 = vsel %vm1296, %v5718, 0.0
      %v5741 = vadd.f32 %v5739, %v5740
      %v5742 = vsel %vm1296, %v5720, 0.0
      %v5743 = vadd.f32 %v5741, %v5742
      %v5744 = vsel %vm1296, %v5722, 0.0
      %v5745 = vadd.f32 %v5743, %v5744
      %v5746 = vsel %vm1296, %v5724, 0.0
      %v5747 = vadd.f32 %v5745, %v5746
      %v5748 = vsel %vm1296, %v5726, 0.0
      %v5749 = vadd.f32 %v5747, %v5748
      %v5750 = vsel %vm1296, %v5728, 0.0
      %v5751 = vadd.f32 %v5749, %v5750
      %v5752 = vsel %vm1296, %v5730, 0.0
      %v5753 = vadd.f32 %v5751, %v5752
      %5754 = vadd.xlane.f32.xlu0 %v5753
      %v5755 = vpop.xlane.xlu0 %5754
      %v5756 = vrot.slane %v5755, 4
      %v5757 = vadd.f32 %v5755, %v5756
      %v5758 = vrot.slane %v5757, 2
      %v5759 = vadd.f32 %v5757, %v5758
      %v5760 = vrot.slane %v5759, 1
      %v5761 = vadd.f32 %v5759, %v5760
      %s5762 = vtos %v5761
      %s5763 = smul.f32 %s5762, 0.00024414063
      %s5764 = smul.f32 %s5706, %s5706
      %s5765 = ssub.f32 %s5763, %s5764
      %s5766 = sadd.f32 %s5765, 1e-05
      %v5767 = vstv %s5766
      %v5768 = vrsqrt.pop %v5767
      %v5769 = vmul.f32 %v5768, %v5767
      %v5770 = vmul.f32 %v5769, %v5768
      %v5771 = vmul.f32 0.5, %v5770
      %v5772 = vsub.f32 1.5, %v5771
      %v5773 = vmul.f32 %v5768, %v5772
      %vm5774 = vweird.f32 %v5767
      %vm5775 = vweird.f32 %v5768
      %vm5776 = vmor %vm5774, %vm5775
      %v5777 = vsel %vm5776, %v5768, %v5773
      %s5778 = vtos %v5777
      %v5779 = vstv %s5706
      %v5780 = vsel %vm2640, %v5779, %v5647
      %v5781 = vstv %s5778
      %v5782 = vsel %vm2640, %v5781, %v5649
      %v5783 = vsub.f32 %v5565, %v5780
      %v5784 = vsub.f32 %v5566, %v5780
      %v5785 = vsub.f32 %v5567, %v5780
      %v5786 = vsub.f32 %v5568, %v5780
      %v5787 = vsub.f32 %v5569, %v5780
      %v5788 = vsub.f32 %v5570, %v5780
      %v5789 = vsub.f32 %v5571, %v5780
      %v5790 = vsub.f32 %v5572, %v5780
      %v5791 = vmul.f32 %v5783, %v5782
      %v5792 = vmul.f32 %v5784, %v5782
      %v5793 = vmul.f32 %v5785, %v5782
      %v5794 = vmul.f32 %v5786, %v5782
      %v5795 = vmul.f32 %v5787, %v5782
      %v5796 = vmul.f32 %v5788, %v5782
      %v5797 = vmul.f32 %v5789, %v5782
      %v5798 = vmul.f32 %v5790, %v5782
      %v5799 = vadd.f32 %v5791, %v4031
      %v5800 = vadd.f32 %v5792, %v4032
      %v5801 = vadd.f32 %v5793, %v4033
      %v5802 = vadd.f32 %v5794, %v4034
      %v5803 = vadd.f32 %v5795, %v4035
      %v5804 = vadd.f32 %v5796, %v4036
      %v5805 = vadd.f32 %v5797, %v4037
      %v5806 = vadd.f32 %v5798, %v4038
      %v5807 = vpack.c.bf16 %v5799, %v5799
      %v5808 = vpack.c.bf16 %v5800, %v5800
      %v5809 = vpack.c.bf16 %v5801, %v5801
      %v5810 = vpack.c.bf16 %v5802, %v5802
      %v5811 = vpack.c.bf16 %v5803, %v5803
      %v5812 = vpack.c.bf16 %v5804, %v5804
      %v5813 = vpack.c.bf16 %v5805, %v5805
      %v5814 = vpack.c.bf16 %v5806, %v5806
      %5815 = vst [vmem:[#allocation2 + $0x20] sm:$0xf] %v5807
      %5816 = vst [vmem:[#allocation2 + $0x24] sm:$0xf] %v5808
      %5817 = vst [vmem:[#allocation2 + $0x28] sm:$0xf] %v5809
      %5818 = vst [vmem:[#allocation2 + $0x2c] sm:$0xf] %v5810
      %5819 = vst [vmem:[#allocation2 + $0x30] sm:$0xf] %v5811
      %5820 = vst [vmem:[#allocation2 + $0x34] sm:$0xf] %v5812
      %5821 = vst [vmem:[#allocation2 + $0x38] sm:$0xf] %v5813
      %5822 = vst [vmem:[#allocation2 + $0x3c] sm:$0xf] %v5814
      %5831 = vrot.lane.b32.xlu0 %v5807, 16
      %v5832 = vpop.permute.xlu0 %5831
      %5833 = vrot.lane.b32.xlu0 %v5808, 16
      %v5834 = vpop.permute.xlu0 %5833
      %5835 = vrot.lane.b32.xlu0 %v5809, 16
      %v5836 = vpop.permute.xlu0 %5835
      %5837 = vrot.lane.b32.xlu0 %v5810, 16
      %v5838 = vpop.permute.xlu0 %5837
      %5839 = vrot.lane.b32.xlu0 %v5811, 16
      %v5840 = vpop.permute.xlu0 %5839
      %5841 = vrot.lane.b32.xlu0 %v5812, 16
      %v5842 = vpop.permute.xlu0 %5841
      %5843 = vrot.lane.b32.xlu0 %v5813, 16
      %v5844 = vpop.permute.xlu0 %5843
      %5845 = vrot.lane.b32.xlu0 %v5814, 16
      %v5846 = vpop.permute.xlu0 %5845
      %vm5855 = vcmask 519296
      %5856 = vst.msk [vmem:[#allocation2] sm:$0xf] %vm5855, %v5832
      %5857 = vst.msk [vmem:[#allocation2 + $0x4] sm:$0xf] %vm5855, %v5834
      %5858 = vst.msk [vmem:[#allocation2 + $0x8] sm:$0xf] %vm5855, %v5836
      %5859 = vst.msk [vmem:[#allocation2 + $0xc] sm:$0xf] %vm5855, %v5838
      %5860 = vst.msk [vmem:[#allocation2 + $0x10] sm:$0xf] %vm5855, %v5840
      %5861 = vst.msk [vmem:[#allocation2 + $0x14] sm:$0xf] %vm5855, %v5842
      %5862 = vst.msk [vmem:[#allocation2 + $0x18] sm:$0xf] %vm5855, %v5844
      %5863 = vst.msk [vmem:[#allocation2 + $0x1c] sm:$0xf] %vm5855, %v5846
      %5864 = vrot.lane.b32.xlu0 %v5807, 112
      %v5865 = vpop.permute.xlu0 %5864
      %5866 = vrot.lane.b32.xlu0 %v5808, 112
      %v5867 = vpop.permute.xlu0 %5866
      %5868 = vrot.lane.b32.xlu0 %v5809, 112
      %v5869 = vpop.permute.xlu0 %5868
      %5870 = vrot.lane.b32.xlu0 %v5810, 112
      %v5871 = vpop.permute.xlu0 %5870
      %5872 = vrot.lane.b32.xlu0 %v5811, 112
      %v5873 = vpop.permute.xlu0 %5872
      %5874 = vrot.lane.b32.xlu0 %v5812, 112
      %v5875 = vpop.permute.xlu0 %5874
      %5876 = vrot.lane.b32.xlu0 %v5813, 112
      %v5877 = vpop.permute.xlu0 %5876
      %5878 = vrot.lane.b32.xlu0 %v5814, 112
      %v5879 = vpop.permute.xlu0 %5878
      %vm5888 = vcmask 388096
      %5889 = vst.msk [vmem:[#allocation2 + $0x40] sm:$0xf] %vm5888, %v5865
      %5890 = vst.msk [vmem:[#allocation2 + $0x44] sm:$0xf] %vm5888, %v5867
      %5891 = vst.msk [vmem:[#allocation2 + $0x48] sm:$0xf] %vm5888, %v5869
      %5892 = vst.msk [vmem:[#allocation2 + $0x4c] sm:$0xf] %vm5888, %v5871
      %5893 = vst.msk [vmem:[#allocation2 + $0x50] sm:$0xf] %vm5888, %v5873
      %5894 = vst.msk [vmem:[#allocation2 + $0x54] sm:$0xf] %vm5888, %v5875
      %5895 = vst.msk [vmem:[#allocation2 + $0x58] sm:$0xf] %vm5888, %v5877
      %5896 = vst.msk [vmem:[#allocation2 + $0x5c] sm:$0xf] %vm5888, %v5879
      %v5897 = vld [vmem:[%s1 + $0x8] sm:$0xf]
      %v5898 = vld [vmem:[%s1 + $0xc] sm:$0xf]
      %v5899 = vunpack.c.l.b16 %v5807
      %v5900 = vunpack.c.l.b16 %v5808
      %v5901 = vunpack.c.l.b16 %v5809
      %v5902 = vunpack.c.l.b16 %v5810
      %v5903 = vunpack.c.l.b16 %v5811
      %v5904 = vunpack.c.l.b16 %v5812
      %v5905 = vunpack.c.l.b16 %v5813
      %v5906 = vunpack.c.l.b16 %v5814
      %v5907 = vpack.c.b16 %v5900, %v5899
      %v5908 = vpack.c.b16 %v5902, %v5901
      %v5909 = vpack.c.b16 %v5904, %v5903
      %v5910 = vpack.c.b16 %v5906, %v5905
      %5911 = vrot.lane.b32.xlu0 %v5907, 127
      %v5912 = vpop.permute.xlu0 %5911
      %5913 = vrot.lane.b32.xlu0 %v5908, 127
      %v5914 = vpop.permute.xlu0 %5913
      %5915 = vrot.lane.b32.xlu0 %v5909, 127
      %v5916 = vpop.permute.xlu0 %5915
      %5917 = vrot.lane.b32.xlu0 %v5910, 127
      %v5918 = vpop.permute.xlu0 %5917
      %v5921 = vunpack.c.l.b16 %v5897
      %v5922 = vunpack.c.l.b16 %v5898
      %v5923 = vpack.c.b16 %v5922, %v5921
      %v5926 = vsel %vm1471, %v5912, 0
      %v5929 = vsel %vm1471, %v5914, 0
      %v5932 = vsel %vm1471, %v5916, 0
      %v5935 = vsel %vm1471, %v5918, 0
      %5937 = vmatpush.bf16.msra.mxu0 0
      %5938 = vmatpush.bf16.msra.mxu0 0
      %5939 = vmatpush.bf16.msra.mxu0 0
      %5940 = vmatpush.bf16.msra.mxu0 0
      %5941 = vmatpush.bf16.msra.mxu0 0
      %5942 = vmatpush.bf16.msra.mxu0 0
      %5943 = vmatpush.bf16.msra.mxu0 0
      %5944 = vmatpush.bf16.msra.mxu0 %v5923
      %5945 = vmatmul.bf16.gmra.mxu0 %v5926
      %v5946 = vpop.f32.mrf.mxu0
      %v5947 = vadd.f32 0.0, %v5946
      %v5948 = vpop.f32.mrf.mxu0
      %v5949 = vadd.f32 0.0, %v5948
      %5950 = vmatmul.bf16.gmra.mxu0 %v5929
      %v5951 = vpop.f32.mrf.mxu0
      %v5952 = vadd.f32 0.0, %v5951
      %v5953 = vpop.f32.mrf.mxu0
      %v5954 = vadd.f32 0.0, %v5953
      %5955 = vmatmul.bf16.gmra.mxu0 %v5932
      %v5956 = vpop.f32.mrf.mxu0
      %v5957 = vadd.f32 0.0, %v5956
      %v5958 = vpop.f32.mrf.mxu0
      %v5959 = vadd.f32 0.0, %v5958
      %5960 = vmatmul.bf16.gmra.mxu0 %v5935
      %v5961 = vpop.f32.mrf.mxu0
      %v5962 = vadd.f32 0.0, %v5961
      %v5963 = vpop.f32.mrf.mxu0
      %v5964 = vadd.f32 0.0, %v5963
      %5965 = vdwg.mxu0
      %v5966 = vpack.c.bf16 %v5947, %v5947
      %v5967 = vpack.c.bf16 %v5949, %v5949
      %v5968 = vpack.c.bf16 %v5952, %v5952
      %v5969 = vpack.c.bf16 %v5954, %v5954
      %v5970 = vpack.c.bf16 %v5957, %v5957
      %v5971 = vpack.c.bf16 %v5959, %v5959
      %v5972 = vpack.c.bf16 %v5962, %v5962
      %v5973 = vpack.c.bf16 %v5964, %v5964
      %5974 = vrot.lane.b32.xlu0 %v5907, 81
      %v5975 = vpop.permute.xlu0 %5974
      %5976 = vrot.lane.b32.xlu0 %v5908, 81
      %v5977 = vpop.permute.xlu0 %5976
      %5978 = vrot.lane.b32.xlu0 %v5909, 81
      %v5979 = vpop.permute.xlu0 %5978
      %5980 = vrot.lane.b32.xlu0 %v5910, 81
      %v5981 = vpop.permute.xlu0 %5980
      %v5983 = vsel %vm1471, %v5975, 0
      %v5986 = vsel %vm1471, %v5977, 0
      %v5989 = vsel %vm1471, %v5979, 0
      %v5992 = vsel %vm1471, %v5981, 0
      %5994 = vmatpush.bf16.msra.mxu0 0
      %5995 = vmatpush.bf16.msra.mxu0 0
      %5996 = vmatpush.bf16.msra.mxu0 0
      %5997 = vmatpush.bf16.msra.mxu0 0
      %5998 = vmatpush.bf16.msra.mxu0 0
      %5999 = vmatpush.bf16.msra.mxu0 0
      %6000 = vmatpush.bf16.msra.mxu0 0
      %6001 = vmatpush.bf16.msra.mxu0 %v5923
      %6002 = vmatmul.bf16.gmra.mxu0 %v5983
      %v6003 = vpop.f32.mrf.mxu0
      %v6004 = vadd.f32 0.0, %v6003
      %v6005 = vpop.f32.mrf.mxu0
      %v6006 = vadd.f32 0.0, %v6005
      %6007 = vmatmul.bf16.gmra.mxu0 %v5986
      %v6008 = vpop.f32.mrf.mxu0
      %v6009 = vadd.f32 0.0, %v6008
      %v6010 = vpop.f32.mrf.mxu0
      %v6011 = vadd.f32 0.0, %v6010
      %6012 = vmatmul.bf16.gmra.mxu0 %v5989
      %v6013 = vpop.f32.mrf.mxu0
      %v6014 = vadd.f32 0.0, %v6013
      %v6015 = vpop.f32.mrf.mxu0
      %v6016 = vadd.f32 0.0, %v6015
      %6017 = vmatmul.bf16.gmra.mxu0 %v5992
      %v6018 = vpop.f32.mrf.mxu0
      %v6019 = vadd.f32 0.0, %v6018
      %v6020 = vpop.f32.mrf.mxu0
      %v6021 = vadd.f32 0.0, %v6020
      %6022 = vdwg.mxu0
      %v6023 = vpack.c.bf16 %v6004, %v6004
      %v6024 = vpack.c.bf16 %v6006, %v6006
      %v6025 = vpack.c.bf16 %v6009, %v6009
      %v6026 = vpack.c.bf16 %v6011, %v6011
      %v6027 = vpack.c.bf16 %v6014, %v6014
      %v6028 = vpack.c.bf16 %v6016, %v6016
      %v6029 = vpack.c.bf16 %v6019, %v6019
      %v6030 = vpack.c.bf16 %v6021, %v6021
      %vm6031 = vcmask 125952
      %6032 = vst.msk [vmem:[#allocation2] sm:$0xf] %vm6031, %v5966
      %6033 = vst.msk [vmem:[#allocation2 + $0x4] sm:$0xf] %vm6031, %v5967
      %6034 = vst.msk [vmem:[#allocation2 + $0x8] sm:$0xf] %vm6031, %v5968
      %6035 = vst.msk [vmem:[#allocation2 + $0xc] sm:$0xf] %vm6031, %v5969
      %6036 = vst.msk [vmem:[#allocation2 + $0x10] sm:$0xf] %vm6031, %v5970
      %6037 = vst.msk [vmem:[#allocation2 + $0x14] sm:$0xf] %vm6031, %v5971
      %6038 = vst.msk [vmem:[#allocation2 + $0x18] sm:$0xf] %vm6031, %v5972
      %6039 = vst.msk [vmem:[#allocation2 + $0x1c] sm:$0xf] %vm6031, %v5973
      %6048 = vrot.lane.b32.xlu0 %v6023, 48
      %v6049 = vpop.permute.xlu0 %6048
      %6050 = vrot.lane.b32.xlu0 %v6024, 48
      %v6051 = vpop.permute.xlu0 %6050
      %6052 = vrot.lane.b32.xlu0 %v6025, 48
      %v6053 = vpop.permute.xlu0 %6052
      %6054 = vrot.lane.b32.xlu0 %v6026, 48
      %v6055 = vpop.permute.xlu0 %6054
      %6056 = vrot.lane.b32.xlu0 %v6027, 48
      %v6057 = vpop.permute.xlu0 %6056
      %6058 = vrot.lane.b32.xlu0 %v6028, 48
      %v6059 = vpop.permute.xlu0 %6058
      %6060 = vrot.lane.b32.xlu0 %v6029, 48
      %v6061 = vpop.permute.xlu0 %6060
      %6062 = vrot.lane.b32.xlu0 %v6030, 48
      %v6063 = vpop.permute.xlu0 %6062
      %vm6072 = vcmask 519552
      %6073 = vst.msk [vmem:[#allocation2 + $0x40] sm:$0xf] %vm6072, %v6049
      %6074 = vst.msk [vmem:[#allocation2 + $0x44] sm:$0xf] %vm6072, %v6051
      %6075 = vst.msk [vmem:[#allocation2 + $0x48] sm:$0xf] %vm6072, %v6053
      %6076 = vst.msk [vmem:[#allocation2 + $0x4c] sm:$0xf] %vm6072, %v6055
      %6077 = vst.msk [vmem:[#allocation2 + $0x50] sm:$0xf] %vm6072, %v6057
      %6078 = vst.msk [vmem:[#allocation2 + $0x54] sm:$0xf] %vm6072, %v6059
      %6079 = vst.msk [vmem:[#allocation2 + $0x58] sm:$0xf] %vm6072, %v6061
      %6080 = vst.msk [vmem:[#allocation2 + $0x5c] sm:$0xf] %vm6072, %v6063
      %vm6081 = vcmask 1044096
      %6082 = vst.msk [vmem:[#allocation2] sm:$0xf] %vm6081, %v5832
      %6083 = vst.msk [vmem:[#allocation2 + $0x4] sm:$0xf] %vm6081, %v5834
      %6084 = vst.msk [vmem:[#allocation2 + $0x8] sm:$0xf] %vm6081, %v5836
      %6085 = vst.msk [vmem:[#allocation2 + $0xc] sm:$0xf] %vm6081, %v5838
      %6086 = vst.msk [vmem:[#allocation2 + $0x10] sm:$0xf] %vm6081, %v5840
      %6087 = vst.msk [vmem:[#allocation2 + $0x14] sm:$0xf] %vm6081, %v5842
      %6088 = vst.msk [vmem:[#allocation2 + $0x18] sm:$0xf] %vm6081, %v5844
      %6089 = vst.msk [vmem:[#allocation2 + $0x1c] sm:$0xf] %vm6081, %v5846
      %vm6090 = vcmask 912896
      %6091 = vst.msk [vmem:[#allocation2 + $0x40] sm:$0xf] %vm6090, %v5865
      %6092 = vst.msk [vmem:[#allocation2 + $0x44] sm:$0xf] %vm6090, %v5867
      %6093 = vst.msk [vmem:[#allocation2 + $0x48] sm:$0xf] %vm6090, %v5869
      %6094 = vst.msk [vmem:[#allocation2 + $0x4c] sm:$0xf] %vm6090, %v5871
      %6095 = vst.msk [vmem:[#allocation2 + $0x50] sm:$0xf] %vm6090, %v5873
      %6096 = vst.msk [vmem:[#allocation2 + $0x54] sm:$0xf] %vm6090, %v5875
      %6097 = vst.msk [vmem:[#allocation2 + $0x58] sm:$0xf] %vm6090, %v5877
      %6098 = vst.msk [vmem:[#allocation2 + $0x5c] sm:$0xf] %vm6090, %v5879
      %v6099 = vld [vmem:[%s1 + $0x8] sm:$0xf]
      %v6100 = vld [vmem:[%s1 + $0xc] sm:$0xf]
      %6101 = vrot.lane.b32.xlu0 %v5907, 63
      %v6102 = vpop.permute.xlu0 %6101
      %6103 = vrot.lane.b32.xlu0 %v5908, 63
      %v6104 = vpop.permute.xlu0 %6103
      %6105 = vrot.lane.b32.xlu0 %v5909, 63
      %v6106 = vpop.permute.xlu0 %6105
      %6107 = vrot.lane.b32.xlu0 %v5910, 63
      %v6108 = vpop.permute.xlu0 %6107
      %v6111 = vunpack.c.l.b16 %v6099
      %v6112 = vunpack.c.l.b16 %v6100
      %v6113 = vpack.c.b16 %v6112, %v6111
      %v6116 = vsel %vm1471, %v6102, 0
      %v6119 = vsel %vm1471, %v6104, 0
      %v6122 = vsel %vm1471, %v6106, 0
      %v6125 = vsel %vm1471, %v6108, 0
      %6127 = vmatpush.bf16.msra.mxu0 0
      %6128 = vmatpush.bf16.msra.mxu0 0
      %6129 = vmatpush.bf16.msra.mxu0 0
      %6130 = vmatpush.bf16.msra.mxu0 0
      %6131 = vmatpush.bf16.msra.mxu0 0
      %6132 = vmatpush.bf16.msra.mxu0 0
      %6133 = vmatpush.bf16.msra.mxu0 0
      %6134 = vmatpush.bf16.msra.mxu0 %v6113
      %6135 = vmatmul.bf16.gmra.mxu0 %v6116
      %v6136 = vpop.f32.mrf.mxu0
      %v6137 = vadd.f32 0.0, %v6136
      %v6138 = vpop.f32.mrf.mxu0
      %v6139 = vadd.f32 0.0, %v6138
      %6140 = vmatmul.bf16.gmra.mxu0 %v6119
      %v6141 = vpop.f32.mrf.mxu0
      %v6142 = vadd.f32 0.0, %v6141
      %v6143 = vpop.f32.mrf.mxu0
      %v6144 = vadd.f32 0.0, %v6143
      %6145 = vmatmul.bf16.gmra.mxu0 %v6122
      %v6146 = vpop.f32.mrf.mxu0
      %v6147 = vadd.f32 0.0, %v6146
      %v6148 = vpop.f32.mrf.mxu0
      %v6149 = vadd.f32 0.0, %v6148
      %6150 = vmatmul.bf16.gmra.mxu0 %v6125
      %v6151 = vpop.f32.mrf.mxu0
      %v6152 = vadd.f32 0.0, %v6151
      %v6153 = vpop.f32.mrf.mxu0
      %v6154 = vadd.f32 0.0, %v6153
      %6155 = vdwg.mxu0
      %v6156 = vpack.c.bf16 %v6137, %v6137
      %v6157 = vpack.c.bf16 %v6139, %v6139
      %v6158 = vpack.c.bf16 %v6142, %v6142
      %v6159 = vpack.c.bf16 %v6144, %v6144
      %v6160 = vpack.c.bf16 %v6147, %v6147
      %v6161 = vpack.c.bf16 %v6149, %v6149
      %v6162 = vpack.c.bf16 %v6152, %v6152
      %v6163 = vpack.c.bf16 %v6154, %v6154
      %6164 = vrot.lane.b32.xlu0 %v5907, 17
      %v6165 = vpop.permute.xlu0 %6164
      %6166 = vrot.lane.b32.xlu0 %v5908, 17
      %v6167 = vpop.permute.xlu0 %6166
      %6168 = vrot.lane.b32.xlu0 %v5909, 17
      %v6169 = vpop.permute.xlu0 %6168
      %6170 = vrot.lane.b32.xlu0 %v5910, 17
      %v6171 = vpop.permute.xlu0 %6170
      %v6173 = vsel %vm1471, %v6165, 0
      %v6176 = vsel %vm1471, %v6167, 0
      %v6179 = vsel %vm1471, %v6169, 0
      %v6182 = vsel %vm1471, %v6171, 0
      %6184 = vmatpush.bf16.msra.mxu0 0
      %6185 = vmatpush.bf16.msra.mxu0 0
      %6186 = vmatpush.bf16.msra.mxu0 0
      %6187 = vmatpush.bf16.msra.mxu0 0
      %6188 = vmatpush.bf16.msra.mxu0 0
      %6189 = vmatpush.bf16.msra.mxu0 0
      %6190 = vmatpush.bf16.msra.mxu0 0
      %6191 = vmatpush.bf16.msra.mxu0 %v6113
      %6192 = vmatmul.bf16.gmra.mxu0 %v6173
      %v6193 = vpop.f32.mrf.mxu0
      %v6194 = vadd.f32 0.0, %v6193
      %v6195 = vpop.f32.mrf.mxu0
      %v6196 = vadd.f32 0.0, %v6195
      %6197 = vmatmul.bf16.gmra.mxu0 %v6176
      %v6198 = vpop.f32.mrf.mxu0
      %v6199 = vadd.f32 0.0, %v6198
      %v6200 = vpop.f32.mrf.mxu0
      %v6201 = vadd.f32 0.0, %v6200
      %6202 = vmatmul.bf16.gmra.mxu0 %v6179
      %v6203 = vpop.f32.mrf.mxu0
      %v6204 = vadd.f32 0.0, %v6203
      %v6205 = vpop.f32.mrf.mxu0
      %v6206 = vadd.f32 0.0, %v6205
      %6207 = vmatmul.bf16.gmra.mxu0 %v6182
      %v6208 = vpop.f32.mrf.mxu0
      %v6209 = vadd.f32 0.0, %v6208
      %v6210 = vpop.f32.mrf.mxu0
      %v6211 = vadd.f32 0.0, %v6210
      %6212 = vdwg.mxu0
      %v6213 = vpack.c.bf16 %v6194, %v6194
      %v6214 = vpack.c.bf16 %v6196, %v6196
      %v6215 = vpack.c.bf16 %v6199, %v6199
      %v6216 = vpack.c.bf16 %v6201, %v6201
      %v6217 = vpack.c.bf16 %v6204, %v6204
      %v6218 = vpack.c.bf16 %v6206, %v6206
      %v6219 = vpack.c.bf16 %v6209, %v6209
      %v6220 = vpack.c.bf16 %v6211, %v6211
      %6229 = vrot.lane.b32.xlu0 %v6156, 64
      %v6230 = vpop.permute.xlu0 %6229
      %6231 = vrot.lane.b32.xlu0 %v6157, 64
      %v6232 = vpop.permute.xlu0 %6231
      %6233 = vrot.lane.b32.xlu0 %v6158, 64
      %v6234 = vpop.permute.xlu0 %6233
      %6235 = vrot.lane.b32.xlu0 %v6159, 64
      %v6236 = vpop.permute.xlu0 %6235
      %6237 = vrot.lane.b32.xlu0 %v6160, 64
      %v6238 = vpop.permute.xlu0 %6237
      %6239 = vrot.lane.b32.xlu0 %v6161, 64
      %v6240 = vpop.permute.xlu0 %6239
      %6241 = vrot.lane.b32.xlu0 %v6162, 64
      %v6242 = vpop.permute.xlu0 %6241
      %6243 = vrot.lane.b32.xlu0 %v6163, 64
      %v6244 = vpop.permute.xlu0 %6243
      %vm6253 = vcmask 650752
      %6254 = vst.msk [vmem:[#allocation2] sm:$0xf] %vm6253, %v6230
      %6255 = vst.msk [vmem:[#allocation2 + $0x4] sm:$0xf] %vm6253, %v6232
      %6256 = vst.msk [vmem:[#allocation2 + $0x8] sm:$0xf] %vm6253, %v6234
      %6257 = vst.msk [vmem:[#allocation2 + $0xc] sm:$0xf] %vm6253, %v6236
      %6258 = vst.msk [vmem:[#allocation2 + $0x10] sm:$0xf] %vm6253, %v6238
      %6259 = vst.msk [vmem:[#allocation2 + $0x14] sm:$0xf] %vm6253, %v6240
      %6260 = vst.msk [vmem:[#allocation2 + $0x18] sm:$0xf] %vm6253, %v6242
      %6261 = vst.msk [vmem:[#allocation2 + $0x1c] sm:$0xf] %vm6253, %v6244
      %6270 = vrot.lane.b32.xlu0 %v6213, 112
      %v6271 = vpop.permute.xlu0 %6270
      %6272 = vrot.lane.b32.xlu0 %v6214, 112
      %v6273 = vpop.permute.xlu0 %6272
      %6274 = vrot.lane.b32.xlu0 %v6215, 112
      %v6275 = vpop.permute.xlu0 %6274
      %6276 = vrot.lane.b32.xlu0 %v6216, 112
      %v6277 = vpop.permute.xlu0 %6276
      %6278 = vrot.lane.b32.xlu0 %v6217, 112
      %v6279 = vpop.permute.xlu0 %6278
      %6280 = vrot.lane.b32.xlu0 %v6218, 112
      %v6281 = vpop.permute.xlu0 %6280
      %6282 = vrot.lane.b32.xlu0 %v6219, 112
      %v6283 = vpop.permute.xlu0 %6282
      %6284 = vrot.lane.b32.xlu0 %v6220, 112
      %v6285 = vpop.permute.xlu0 %6284
      %vm6294 = vcmask 1044352
      %6295 = vst.msk [vmem:[#allocation2 + $0x40] sm:$0xf] %vm6294, %v6271
      %6296 = vst.msk [vmem:[#allocation2 + $0x44] sm:$0xf] %vm6294, %v6273
      %6297 = vst.msk [vmem:[#allocation2 + $0x48] sm:$0xf] %vm6294, %v6275
      %6298 = vst.msk [vmem:[#allocation2 + $0x4c] sm:$0xf] %vm6294, %v6277
      %6299 = vst.msk [vmem:[#allocation2 + $0x50] sm:$0xf] %vm6294, %v6279
      %6300 = vst.msk [vmem:[#allocation2 + $0x54] sm:$0xf] %vm6294, %v6281
      %6301 = vst.msk [vmem:[#allocation2 + $0x58] sm:$0xf] %vm6294, %v6283
      %6302 = vst.msk [vmem:[#allocation2 + $0x5c] sm:$0xf] %vm6294, %v6285
      %v6303 = vld [vmem:[%s13] sm:$0xff]
      %v6304 = vld [vmem:[%s13 + $0x8] sm:$0xff]
      %v6305 = vld [vmem:[%s13 + $0x10] sm:$0xff]
      %v6306 = vld [vmem:[%s13 + $0x18] sm:$0xff]
      %v6307 = vld [vmem:[#allocation2] sm:$0xf]
      %v6308 = vld [vmem:[#allocation2 + $0x4] sm:$0xf]
      %v6309 = vld [vmem:[#allocation2 + $0x8] sm:$0xf]
      %v6310 = vld [vmem:[#allocation2 + $0xc] sm:$0xf]
      %v6311 = vld [vmem:[#allocation2 + $0x10] sm:$0xf]
      %v6312 = vld [vmem:[#allocation2 + $0x14] sm:$0xf]
      %v6313 = vld [vmem:[#allocation2 + $0x18] sm:$0xf]
      %v6314 = vld [vmem:[#allocation2 + $0x1c] sm:$0xf]
      %v6315 = vld [vmem:[#allocation2 + $0x20] sm:$0xf]
      %v6316 = vld [vmem:[#allocation2 + $0x24] sm:$0xf]
      %v6317 = vld [vmem:[#allocation2 + $0x28] sm:$0xf]
      %v6318 = vld [vmem:[#allocation2 + $0x2c] sm:$0xf]
      %v6319 = vld [vmem:[#allocation2 + $0x30] sm:$0xf]
      %v6320 = vld [vmem:[#allocation2 + $0x34] sm:$0xf]
      %v6321 = vld [vmem:[#allocation2 + $0x38] sm:$0xf]
      %v6322 = vld [vmem:[#allocation2 + $0x3c] sm:$0xf]
      %v6323 = vld [vmem:[#allocation2 + $0x40] sm:$0xf]
      %v6324 = vld [vmem:[#allocation2 + $0x44] sm:$0xf]
      %v6325 = vld [vmem:[#allocation2 + $0x48] sm:$0xf]
      %v6326 = vld [vmem:[#allocation2 + $0x4c] sm:$0xf]
      %v6327 = vld [vmem:[#allocation2 + $0x50] sm:$0xf]
      %v6328 = vld [vmem:[#allocation2 + $0x54] sm:$0xf]
      %v6329 = vld [vmem:[#allocation2 + $0x58] sm:$0xf]
      %v6330 = vld [vmem:[#allocation2 + $0x5c] sm:$0xf]
      %v6335 = vunpack.c.l.b16 %v6303
      %v6336 = vunpack.c.h.b16 %v6303
      %v6337 = vunpack.c.l.b16 %v6304
      %v6338 = vunpack.c.h.b16 %v6304
      %v6339 = vunpack.c.l.b16 %v6305
      %v6340 = vunpack.c.h.b16 %v6305
      %v6341 = vunpack.c.l.b16 %v6306
      %v6342 = vunpack.c.h.b16 %v6306
      %v6343 = vpack.c.b16 %v6337, %v6335
      %v6344 = vpack.c.b16 %v6338, %v6336
      %v6345 = vpack.c.b16 %v6341, %v6339
      %v6346 = vpack.c.b16 %v6342, %v6340
      %v6373 = vunpack.c.l.b16 %v6307
      %v6374 = vunpack.c.l.b16 %v6308
      %v6375 = vunpack.c.l.b16 %v6309
      %v6376 = vunpack.c.l.b16 %v6310
      %v6377 = vunpack.c.l.b16 %v6311
      %v6378 = vunpack.c.l.b16 %v6312
      %v6379 = vunpack.c.l.b16 %v6313
      %v6380 = vunpack.c.l.b16 %v6314
      %v6381 = vunpack.c.l.b16 %v6315
      %v6382 = vunpack.c.l.b16 %v6316
      %v6383 = vunpack.c.l.b16 %v6317
      %v6384 = vunpack.c.l.b16 %v6318
      %v6385 = vunpack.c.l.b16 %v6319
      %v6386 = vunpack.c.l.b16 %v6320
      %v6387 = vunpack.c.l.b16 %v6321
      %v6388 = vunpack.c.l.b16 %v6322
      %v6389 = vunpack.c.l.b16 %v6323
      %v6390 = vunpack.c.l.b16 %v6324
      %v6391 = vunpack.c.l.b16 %v6325
      %v6392 = vunpack.c.l.b16 %v6326
      %v6393 = vunpack.c.l.b16 %v6327
      %v6394 = vunpack.c.l.b16 %v6328
      %v6395 = vunpack.c.l.b16 %v6329
      %v6396 = vunpack.c.l.b16 %v6330
      %v6397 = vpack.c.b16 %v6374, %v6373
      %v6398 = vpack.c.b16 %v6376, %v6375
      %v6399 = vpack.c.b16 %v6378, %v6377
      %v6400 = vpack.c.b16 %v6380, %v6379
      %v6401 = vpack.c.b16 %v6382, %v6381
      %v6402 = vpack.c.b16 %v6384, %v6383
      %v6403 = vpack.c.b16 %v6386, %v6385
      %v6404 = vpack.c.b16 %v6388, %v6387
      %v6405 = vpack.c.b16 %v6390, %v6389
      %v6406 = vpack.c.b16 %v6392, %v6391
      %v6407 = vpack.c.b16 %v6394, %v6393
      %v6408 = vpack.c.b16 %v6396, %v6395
      %v6422 = vsel %vm1296, %v6344, 0
      %v6425 = vsel %vm1296, %v6346, 0
      %6427 = vmatpush.bf16.msra.mxu0 %v6404
      %6428 = vmatpush.bf16.msra.mxu0 %v6403
      %6429 = vmatpush.bf16.msra.mxu0 %v6402
      %6430 = vmatpush.bf16.msra.mxu0 %v6401
      %6431 = vmatpush.bf16.msra.mxu0 %v6400
      %6432 = vmatpush.bf16.msra.mxu0 %v6399
      %6433 = vmatpush.bf16.msra.mxu0 %v6398
      %6434 = vmatpush.bf16.msra.mxu0 %v6397
      %6435 = vmatmul.bf16.gmra.mxu0 %v6343
      %v6436 = vpop.f32.mrf.mxu0
      %v6437 = vadd.f32 0.0, %v6436
      %v6438 = vpop.f32.mrf.mxu0
      %v6439 = vadd.f32 0.0, %v6438
      %6440 = vmatmul.bf16.gmra.mxu0 %v6345
      %v6441 = vpop.f32.mrf.mxu0
      %v6442 = vadd.f32 0.0, %v6441
      %v6443 = vpop.f32.mrf.mxu0
      %v6444 = vadd.f32 0.0, %v6443
      %6445 = vdwg.mxu0
      %6446 = vmatpush.bf16.msra.mxu0 0
      %6447 = vmatpush.bf16.msra.mxu0 0
      %6448 = vmatpush.bf16.msra.mxu0 0
      %6449 = vmatpush.bf16.msra.mxu0 0
      %6450 = vmatpush.bf16.msra.mxu0 %v6408
      %6451 = vmatpush.bf16.msra.mxu0 %v6407
      %6452 = vmatpush.bf16.msra.mxu0 %v6406
      %6453 = vmatpush.bf16.msra.mxu0 %v6405
      %6454 = vmatmul.bf16.gmra.mxu0 %v6422
      %v6455 = vpop.f32.mrf.mxu0
      %v6456 = vadd.f32 %v6437, %v6455
      %v6457 = vpop.f32.mrf.mxu0
      %v6458 = vadd.f32 %v6439, %v6457
      %6459 = vmatmul.bf16.gmra.mxu0 %v6425
      %v6460 = vpop.f32.mrf.mxu0
      %v6461 = vadd.f32 %v6442, %v6460
      %v6462 = vpop.f32.mrf.mxu0
      %v6463 = vadd.f32 %v6444, %v6462
      %6464 = vdwg.mxu0
      %v6465 = vmin.f32 %v6456, 20.0
      %v6466 = vmin.f32 %v6458, 20.0
      %v6467 = vmin.f32 %v6461, 20.0
      %v6468 = vmin.f32 %v6463, 20.0
      %v6469 = vmul.f32 %v6465, 1.442695
      %v6470 = vpow.pop %v6469
      %v6471 = vmul.f32 %v6466, 1.442695
      %v6472 = vpow.pop %v6471
      %v6473 = vmul.f32 %v6467, 1.442695
      %v6474 = vpow.pop %v6473
      %v6475 = vmul.f32 %v6468, 1.442695
      %v6476 = vpow.pop %v6475
      %v6477 = vadd.f32 %v6470, 2.0
      %v6478 = vadd.f32 %v6472, 2.0
      %v6479 = vadd.f32 %v6474, 2.0
      %v6480 = vadd.f32 %v6476, 2.0
      %v6481 = vmul.f32 %v6470, %v6477
      %v6482 = vmul.f32 %v6472, %v6478
      %v6483 = vmul.f32 %v6474, %v6479
      %v6484 = vmul.f32 %v6476, %v6480
      %v6485 = vadd.f32 %v6481, 2.0
      %v6486 = vadd.f32 %v6482, 2.0
      %v6487 = vadd.f32 %v6483, 2.0
      %v6488 = vadd.f32 %v6484, 2.0
      %v6489 = vrcp.pop %v6485
      %v6490 = vrcp.pop %v6486
      %v6491 = vrcp.pop %v6487
      %v6492 = vrcp.pop %v6488
      %v6493 = vmul.f32 %v6481, %v6489
      %v6494 = vmul.f32 %v6482, %v6490
      %v6495 = vmul.f32 %v6483, %v6491
      %v6496 = vmul.f32 %v6484, %v6492
      %v6497 = vmul.f32 %v6456, %v6493
      %v6498 = vmul.f32 %v6458, %v6494
      %v6499 = vmul.f32 %v6461, %v6495
      %v6500 = vmul.f32 %v6463, %v6496
      %v6501 = vpack.c.bf16 %v6497, %v6497
      %v6502 = vpack.c.bf16 %v6498, %v6498
      %v6503 = vpack.c.bf16 %v6499, %v6499
      %v6504 = vpack.c.bf16 %v6500, %v6500
      %6505 = vst [vmem:[#allocation2 + $0x10] sm:$0xf] %v6501
      %6506 = vst [vmem:[#allocation2 + $0x14] sm:$0xf] %v6502
      %6507 = vst [vmem:[#allocation2 + $0x18] sm:$0xf] %v6503
      %6508 = vst [vmem:[#allocation2 + $0x1c] sm:$0xf] %v6504
      %6513 = vrot.lane.b32.xlu0 %v6501, 16
      %v6514 = vpop.permute.xlu0 %6513
      %6515 = vrot.lane.b32.xlu0 %v6502, 16
      %v6516 = vpop.permute.xlu0 %6515
      %6517 = vrot.lane.b32.xlu0 %v6503, 16
      %v6518 = vpop.permute.xlu0 %6517
      %6519 = vrot.lane.b32.xlu0 %v6504, 16
      %v6520 = vpop.permute.xlu0 %6519
      %6525 = vst.msk [vmem:[#allocation2] sm:$0xf] %vm5855, %v6514
      %6526 = vst.msk [vmem:[#allocation2 + $0x4] sm:$0xf] %vm5855, %v6516
      %6527 = vst.msk [vmem:[#allocation2 + $0x8] sm:$0xf] %vm5855, %v6518
      %6528 = vst.msk [vmem:[#allocation2 + $0xc] sm:$0xf] %vm5855, %v6520
      %6529 = vrot.lane.b32.xlu0 %v6501, 112
      %v6530 = vpop.permute.xlu0 %6529
      %6531 = vrot.lane.b32.xlu0 %v6502, 112
      %v6532 = vpop.permute.xlu0 %6531
      %6533 = vrot.lane.b32.xlu0 %v6503, 112
      %v6534 = vpop.permute.xlu0 %6533
      %6535 = vrot.lane.b32.xlu0 %v6504, 112
      %v6536 = vpop.permute.xlu0 %6535
      %6541 = vst.msk [vmem:[#allocation2 + $0x20] sm:$0xf] %vm5888, %v6530
      %6542 = vst.msk [vmem:[#allocation2 + $0x24] sm:$0xf] %vm5888, %v6532
      %6543 = vst.msk [vmem:[#allocation2 + $0x28] sm:$0xf] %vm5888, %v6534
      %6544 = vst.msk [vmem:[#allocation2 + $0x2c] sm:$0xf] %vm5888, %v6536
      %v6545 = vld [vmem:[%s1 + $0x8] sm:$0xf]
      %v6546 = vld [vmem:[%s1 + $0xc] sm:$0xf]
      %v6547 = vunpack.c.l.b16 %v6501
      %v6548 = vunpack.c.l.b16 %v6502
      %v6549 = vunpack.c.l.b16 %v6503
      %v6550 = vunpack.c.l.b16 %v6504
      %v6551 = vpack.c.b16 %v6548, %v6547
      %v6552 = vpack.c.b16 %v6550, %v6549
      %6553 = vrot.lane.b32.xlu0 %v6551, 127
      %v6554 = vpop.permute.xlu0 %6553
      %6555 = vrot.lane.b32.xlu0 %v6552, 127
      %v6556 = vpop.permute.xlu0 %6555
      %v6559 = vunpack.c.l.b16 %v6545
      %v6560 = vunpack.c.l.b16 %v6546
      %v6561 = vpack.c.b16 %v6560, %v6559
      %v6564 = vsel %vm1471, %v6554, 0
      %v6567 = vsel %vm1471, %v6556, 0
      %6569 = vmatpush.bf16.msra.mxu0 0
      %6570 = vmatpush.bf16.msra.mxu0 0
      %6571 = vmatpush.bf16.msra.mxu0 0
      %6572 = vmatpush.bf16.msra.mxu0 0
      %6573 = vmatpush.bf16.msra.mxu0 0
      %6574 = vmatpush.bf16.msra.mxu0 0
      %6575 = vmatpush.bf16.msra.mxu0 0
      %6576 = vmatpush.bf16.msra.mxu0 %v6561
      %6577 = vmatmul.bf16.gmra.mxu0 %v6564
      %v6578 = vpop.f32.mrf.mxu0
      %v6579 = vadd.f32 0.0, %v6578
      %v6580 = vpop.f32.mrf.mxu0
      %v6581 = vadd.f32 0.0, %v6580
      %6582 = vmatmul.bf16.gmra.mxu0 %v6567
      %v6583 = vpop.f32.mrf.mxu0
      %v6584 = vadd.f32 0.0, %v6583
      %v6585 = vpop.f32.mrf.mxu0
      %v6586 = vadd.f32 0.0, %v6585
      %6587 = vdwg.mxu0
      %v6588 = vpack.c.bf16 %v6579, %v6579
      %v6589 = vpack.c.bf16 %v6581, %v6581
      %v6590 = vpack.c.bf16 %v6584, %v6584
      %v6591 = vpack.c.bf16 %v6586, %v6586
      %6592 = vrot.lane.b32.xlu0 %v6551, 81
      %v6593 = vpop.permute.xlu0 %6592
      %6594 = vrot.lane.b32.xlu0 %v6552, 81
      %v6595 = vpop.permute.xlu0 %6594
      %v6597 = vsel %vm1471, %v6593, 0
      %v6600 = vsel %vm1471, %v6595, 0
      %6602 = vmatpush.bf16.msra.mxu0 0
      %6603 = vmatpush.bf16.msra.mxu0 0
      %6604 = vmatpush.bf16.msra.mxu0 0
      %6605 = vmatpush.bf16.msra.mxu0 0
      %6606 = vmatpush.bf16.msra.mxu0 0
      %6607 = vmatpush.bf16.msra.mxu0 0
      %6608 = vmatpush.bf16.msra.mxu0 0
      %6609 = vmatpush.bf16.msra.mxu0 %v6561
      %6610 = vmatmul.bf16.gmra.mxu0 %v6597
      %v6611 = vpop.f32.mrf.mxu0
      %v6612 = vadd.f32 0.0, %v6611
      %v6613 = vpop.f32.mrf.mxu0
      %v6614 = vadd.f32 0.0, %v6613
      %6615 = vmatmul.bf16.gmra.mxu0 %v6600
      %v6616 = vpop.f32.mrf.mxu0
      %v6617 = vadd.f32 0.0, %v6616
      %v6618 = vpop.f32.mrf.mxu0
      %v6619 = vadd.f32 0.0, %v6618
      %6620 = vdwg.mxu0
      %v6621 = vpack.c.bf16 %v6612, %v6612
      %v6622 = vpack.c.bf16 %v6614, %v6614
      %v6623 = vpack.c.bf16 %v6617, %v6617
      %v6624 = vpack.c.bf16 %v6619, %v6619
      %6625 = vst.msk [vmem:[#allocation2] sm:$0xf] %vm6031, %v6588
      %6626 = vst.msk [vmem:[#allocation2 + $0x4] sm:$0xf] %vm6031, %v6589
      %6627 = vst.msk [vmem:[#allocation2 + $0x8] sm:$0xf] %vm6031, %v6590
      %6628 = vst.msk [vmem:[#allocation2 + $0xc] sm:$0xf] %vm6031, %v6591
      %6633 = vrot.lane.b32.xlu0 %v6621, 48
      %v6634 = vpop.permute.xlu0 %6633
      %6635 = vrot.lane.b32.xlu0 %v6622, 48
      %v6636 = vpop.permute.xlu0 %6635
      %6637 = vrot.lane.b32.xlu0 %v6623, 48
      %v6638 = vpop.permute.xlu0 %6637
      %6639 = vrot.lane.b32.xlu0 %v6624, 48
      %v6640 = vpop.permute.xlu0 %6639
      %6645 = vst.msk [vmem:[#allocation2 + $0x20] sm:$0xf] %vm6072, %v6634
      %6646 = vst.msk [vmem:[#allocation2 + $0x24] sm:$0xf] %vm6072, %v6636
      %6647 = vst.msk [vmem:[#allocation2 + $0x28] sm:$0xf] %vm6072, %v6638
      %6648 = vst.msk [vmem:[#allocation2 + $0x2c] sm:$0xf] %vm6072, %v6640
      %6649 = vst.msk [vmem:[#allocation2] sm:$0xf] %vm6081, %v6514
      %6650 = vst.msk [vmem:[#allocation2 + $0x4] sm:$0xf] %vm6081, %v6516
      %6651 = vst.msk [vmem:[#allocation2 + $0x8] sm:$0xf] %vm6081, %v6518
      %6652 = vst.msk [vmem:[#allocation2 + $0xc] sm:$0xf] %vm6081, %v6520
      %6653 = vst.msk [vmem:[#allocation2 + $0x20] sm:$0xf] %vm6090, %v6530
      %6654 = vst.msk [vmem:[#allocation2 + $0x24] sm:$0xf] %vm6090, %v6532
      %6655 = vst.msk [vmem:[#allocation2 + $0x28] sm:$0xf] %vm6090, %v6534
      %6656 = vst.msk [vmem:[#allocation2 + $0x2c] sm:$0xf] %vm6090, %v6536
      %v6657 = vld [vmem:[%s1 + $0x8] sm:$0xf]
      %v6658 = vld [vmem:[%s1 + $0xc] sm:$0xf]
      %6659 = vrot.lane.b32.xlu0 %v6551, 63
      %v6660 = vpop.permute.xlu0 %6659
      %6661 = vrot.lane.b32.xlu0 %v6552, 63
      %v6662 = vpop.permute.xlu0 %6661
      %v6665 = vunpack.c.l.b16 %v6657
      %v6666 = vunpack.c.l.b16 %v6658
      %v6667 = vpack.c.b16 %v6666, %v6665
      %v6670 = vsel %vm1471, %v6660, 0
      %v6673 = vsel %vm1471, %v6662, 0
      %6675 = vmatpush.bf16.msra.mxu0 0
      %6676 = vmatpush.bf16.msra.mxu0 0
      %6677 = vmatpush.bf16.msra.mxu0 0
      %6678 = vmatpush.bf16.msra.mxu0 0
      %6679 = vmatpush.bf16.msra.mxu0 0
      %6680 = vmatpush.bf16.msra.mxu0 0
      %6681 = vmatpush.bf16.msra.mxu0 0
      %6682 = vmatpush.bf16.msra.mxu0 %v6667
      %6683 = vmatmul.bf16.gmra.mxu0 %v6670
      %v6684 = vpop.f32.mrf.mxu0
      %v6685 = vadd.f32 0.0, %v6684
      %v6686 = vpop.f32.mrf.mxu0
      %v6687 = vadd.f32 0.0, %v6686
      %6688 = vmatmul.bf16.gmra.mxu0 %v6673
      %v6689 = vpop.f32.mrf.mxu0
      %v6690 = vadd.f32 0.0, %v6689
      %v6691 = vpop.f32.mrf.mxu0
      %v6692 = vadd.f32 0.0, %v6691
      %6693 = vdwg.mxu0
      %v6694 = vpack.c.bf16 %v6685, %v6685
      %v6695 = vpack.c.bf16 %v6687, %v6687
      %v6696 = vpack.c.bf16 %v6690, %v6690
      %v6697 = vpack.c.bf16 %v6692, %v6692
      %6698 = vrot.lane.b32.xlu0 %v6551, 17
      %v6699 = vpop.permute.xlu0 %6698
      %6700 = vrot.lane.b32.xlu0 %v6552, 17
      %v6701 = vpop.permute.xlu0 %6700
      %v6703 = vsel %vm1471, %v6699, 0
      %v6706 = vsel %vm1471, %v6701, 0
      %6708 = vmatpush.bf16.msra.mxu0 0
      %6709 = vmatpush.bf16.msra.mxu0 0
      %6710 = vmatpush.bf16.msra.mxu0 0
      %6711 = vmatpush.bf16.msra.mxu0 0
      %6712 = vmatpush.bf16.msra.mxu0 0
      %6713 = vmatpush.bf16.msra.mxu0 0
      %6714 = vmatpush.bf16.msra.mxu0 0
      %6715 = vmatpush.bf16.msra.mxu0 %v6667
      %6716 = vmatmul.bf16.gmra.mxu0 %v6703
      %v6717 = vpop.f32.mrf.mxu0
      %v6718 = vadd.f32 0.0, %v6717
      %v6719 = vpop.f32.mrf.mxu0
      %v6720 = vadd.f32 0.0, %v6719
      %6721 = vmatmul.bf16.gmra.mxu0 %v6706
      %v6722 = vpop.f32.mrf.mxu0
      %v6723 = vadd.f32 0.0, %v6722
      %v6724 = vpop.f32.mrf.mxu0
      %v6725 = vadd.f32 0.0, %v6724
      %6726 = vdwg.mxu0
      %v6727 = vpack.c.bf16 %v6718, %v6718
      %v6728 = vpack.c.bf16 %v6720, %v6720
      %v6729 = vpack.c.bf16 %v6723, %v6723
      %v6730 = vpack.c.bf16 %v6725, %v6725
      %6735 = vrot.lane.b32.xlu0 %v6694, 64
      %v6736 = vpop.permute.xlu0 %6735
      %6737 = vrot.lane.b32.xlu0 %v6695, 64
      %v6738 = vpop.permute.xlu0 %6737
      %6739 = vrot.lane.b32.xlu0 %v6696, 64
      %v6740 = vpop.permute.xlu0 %6739
      %6741 = vrot.lane.b32.xlu0 %v6697, 64
      %v6742 = vpop.permute.xlu0 %6741
      %6747 = vst.msk [vmem:[#allocation2] sm:$0xf] %vm6253, %v6736
      %6748 = vst.msk [vmem:[#allocation2 + $0x4] sm:$0xf] %vm6253, %v6738
      %6749 = vst.msk [vmem:[#allocation2 + $0x8] sm:$0xf] %vm6253, %v6740
      %6750 = vst.msk [vmem:[#allocation2 + $0xc] sm:$0xf] %vm6253, %v6742
      %6755 = vrot.lane.b32.xlu0 %v6727, 112
      %v6756 = vpop.permute.xlu0 %6755
      %6757 = vrot.lane.b32.xlu0 %v6728, 112
      %v6758 = vpop.permute.xlu0 %6757
      %6759 = vrot.lane.b32.xlu0 %v6729, 112
      %v6760 = vpop.permute.xlu0 %6759
      %6761 = vrot.lane.b32.xlu0 %v6730, 112
      %v6762 = vpop.permute.xlu0 %6761
      %6767 = vst.msk [vmem:[#allocation2 + $0x20] sm:$0xf] %vm6294, %v6756
      %6768 = vst.msk [vmem:[#allocation2 + $0x24] sm:$0xf] %vm6294, %v6758
      %6769 = vst.msk [vmem:[#allocation2 + $0x28] sm:$0xf] %vm6294, %v6760
      %6770 = vst.msk [vmem:[#allocation2 + $0x2c] sm:$0xf] %vm6294, %v6762
      %v6771 = vld [vmem:[%s14] sm:$0xf]
      %v6772 = vld [vmem:[%s14 + $0x4] sm:$0xf]
      %v6773 = vld [vmem:[%s14 + $0x8] sm:$0xf]
      %v6774 = vld [vmem:[%s14 + $0xc] sm:$0xf]
      %v6775 = vld [vmem:[#allocation2] sm:$0xf]
      %v6776 = vld [vmem:[#allocation2 + $0x4] sm:$0xf]
      %v6777 = vld [vmem:[#allocation2 + $0x8] sm:$0xf]
      %v6778 = vld [vmem:[#allocation2 + $0xc] sm:$0xf]
      %v6779 = vld [vmem:[#allocation2 + $0x10] sm:$0xf]
      %v6780 = vld [vmem:[#allocation2 + $0x14] sm:$0xf]
      %v6781 = vld [vmem:[#allocation2 + $0x18] sm:$0xf]
      %v6782 = vld [vmem:[#allocation2 + $0x1c] sm:$0xf]
      %v6783 = vld [vmem:[#allocation2 + $0x20] sm:$0xf]
      %v6784 = vld [vmem:[#allocation2 + $0x24] sm:$0xf]
      %v6785 = vld [vmem:[#allocation2 + $0x28] sm:$0xf]
      %v6786 = vld [vmem:[#allocation2 + $0x2c] sm:$0xf]
      %v6791 = vunpack.c.l.b16 %v6771
      %v6792 = vunpack.c.l.b16 %v6772
      %v6793 = vunpack.c.l.b16 %v6773
      %v6794 = vunpack.c.l.b16 %v6774
      %v6795 = vpack.c.b16 %v6792, %v6791
      %v6796 = vpack.c.b16 %v6794, %v6793
      %v6809 = vunpack.c.l.b16 %v6775
      %v6810 = vunpack.c.l.b16 %v6776
      %v6811 = vunpack.c.l.b16 %v6777
      %v6812 = vunpack.c.l.b16 %v6778
      %v6813 = vunpack.c.l.b16 %v6779
      %v6814 = vunpack.c.l.b16 %v6780
      %v6815 = vunpack.c.l.b16 %v6781
      %v6816 = vunpack.c.l.b16 %v6782
      %v6817 = vunpack.c.l.b16 %v6783
      %v6818 = vunpack.c.l.b16 %v6784
      %v6819 = vunpack.c.l.b16 %v6785
      %v6820 = vunpack.c.l.b16 %v6786
      %v6821 = vpack.c.b16 %v6810, %v6809
      %v6822 = vpack.c.b16 %v6812, %v6811
      %v6823 = vpack.c.b16 %v6814, %v6813
      %v6824 = vpack.c.b16 %v6816, %v6815
      %v6825 = vpack.c.b16 %v6818, %v6817
      %v6826 = vpack.c.b16 %v6820, %v6819
      %vm6833 = vcmask 785408
      %v6835 = vsel %vm6833, %v6795, 0
      %v6838 = vsel %vm6833, %v6796, 0
      %6840 = vmatpush.bf16.msra.mxu0 0
      %6841 = vmatpush.bf16.msra.mxu0 0
      %6842 = vmatpush.bf16.msra.mxu0 %v6826
      %6843 = vmatpush.bf16.msra.mxu0 %v6825
      %6844 = vmatpush.bf16.msra.mxu0 %v6824
      %6845 = vmatpush.bf16.msra.mxu0 %v6823
      %6846 = vmatpush.bf16.msra.mxu0 %v6822
      %6847 = vmatpush.bf16.msra.mxu0 %v6821
      %6848 = vmatmul.bf16.gmra.mxu0 %v6835
      %v6849 = vpop.f32.mrf.mxu0
      %v6850 = vadd.f32 0.0, %v6849
      %v6851 = vpop.f32.mrf.mxu0
      %v6852 = vadd.f32 0.0, %v6851
      %6853 = vmatmul.bf16.gmra.mxu0 %v6838
      %v6854 = vpop.f32.mrf.mxu0
      %v6855 = vadd.f32 0.0, %v6854
      %v6856 = vpop.f32.mrf.mxu0
      %v6857 = vadd.f32 0.0, %v6856
      %6858 = vdwg.mxu0
      %v6859 = vmin.f32 %v6850, 20.0
      %v6860 = vmin.f32 %v6852, 20.0
      %v6861 = vmin.f32 %v6855, 20.0
      %v6862 = vmin.f32 %v6857, 20.0
      %v6863 = vmul.f32 %v6859, 1.442695
      %v6864 = vpow.pop %v6863
      %v6865 = vmul.f32 %v6860, 1.442695
      %v6866 = vpow.pop %v6865
      %v6867 = vmul.f32 %v6861, 1.442695
      %v6868 = vpow.pop %v6867
      %v6869 = vmul.f32 %v6862, 1.442695
      %v6870 = vpow.pop %v6869
      %v6871 = vadd.f32 %v6864, 2.0
      %v6872 = vadd.f32 %v6866, 2.0
      %v6873 = vadd.f32 %v6868, 2.0
      %v6874 = vadd.f32 %v6870, 2.0
      %v6875 = vmul.f32 %v6864, %v6871
      %v6876 = vmul.f32 %v6866, %v6872
      %v6877 = vmul.f32 %v6868, %v6873
      %v6878 = vmul.f32 %v6870, %v6874
      %v6879 = vadd.f32 %v6875, 2.0
      %v6880 = vadd.f32 %v6876, 2.0
      %v6881 = vadd.f32 %v6877, 2.0
      %v6882 = vadd.f32 %v6878, 2.0
      %v6883 = vrcp.pop %v6879
      %v6884 = vrcp.pop %v6880
      %v6885 = vrcp.pop %v6881
      %v6886 = vrcp.pop %v6882
      %v6887 = vmul.f32 %v6875, %v6883
      %v6888 = vmul.f32 %v6876, %v6884
      %v6889 = vmul.f32 %v6877, %v6885
      %v6890 = vmul.f32 %v6878, %v6886
      %v6891 = vmul.f32 %v6850, %v6887
      %v6892 = vmul.f32 %v6852, %v6888
      %v6893 = vmul.f32 %v6855, %v6889
      %v6894 = vmul.f32 %v6857, %v6890
      %v6895 = vsel %vm1296, %v6891, 0.0
      %v6896 = vsel %vm1296, %v6892, 0.0
      %v6897 = vadd.f32 %v6895, %v6896
      %v6898 = vsel %vm1296, %v6893, 0.0
      %v6899 = vadd.f32 %v6897, %v6898
      %v6900 = vsel %vm1296, %v6894, 0.0
      %v6901 = vadd.f32 %v6899, %v6900
      %6902 = vadd.xlane.f32.xlu0 %v6901
      %v6903 = vpop.xlane.xlu0 %6902
      %v6904 = vrot.slane %v6903, 4
      %v6905 = vadd.f32 %v6903, %v6904
      %v6906 = vrot.slane %v6905, 2
      %v6907 = vadd.f32 %v6905, %v6906
      %v6908 = vrot.slane %v6907, 1
      %v6909 = vadd.f32 %v6907, %v6908
      %s6910 = vtos %v6909
      %s6911 = smul.f32 %s6910, 0.00048828125
      %v6912 = vmul.f32 %v6891, %v6891
      %v6913 = vmul.f32 %v6892, %v6892
      %v6914 = vmul.f32 %v6893, %v6893
      %v6915 = vmul.f32 %v6894, %v6894
      %v6916 = vsel %vm1296, %v6912, 0.0
      %v6917 = vsel %vm1296, %v6913, 0.0
      %v6918 = vadd.f32 %v6916, %v6917
      %v6919 = vsel %vm1296, %v6914, 0.0
      %v6920 = vadd.f32 %v6918, %v6919
      %v6921 = vsel %vm1296, %v6915, 0.0
      %v6922 = vadd.f32 %v6920, %v6921
      %6923 = vadd.xlane.f32.xlu0 %v6922
      %v6924 = vpop.xlane.xlu0 %6923
      %v6925 = vrot.slane %v6924, 4
      %v6926 = vadd.f32 %v6924, %v6925
      %v6927 = vrot.slane %v6926, 2
      %v6928 = vadd.f32 %v6926, %v6927
      %v6929 = vrot.slane %v6928, 1
      %v6930 = vadd.f32 %v6928, %v6929
      %s6931 = vtos %v6930
      %s6932 = smul.f32 %s6931, 0.00048828125
      %s6933 = smul.f32 %s6911, %s6911
      %s6934 = ssub.f32 %s6932, %s6933
      %s6935 = sadd.f32 %s6934, 1e-05
      %v6936 = vstv %s6935
      %v6937 = vrsqrt.pop %v6936
      %v6938 = vmul.f32 %v6937, %v6936
      %v6939 = vmul.f32 %v6938, %v6937
      %v6940 = vmul.f32 0.5, %v6939
      %v6941 = vsub.f32 1.5, %v6940
      %v6942 = vmul.f32 %v6937, %v6941
      %vm6943 = vweird.f32 %v6936
      %vm6944 = vweird.f32 %v6937
      %vm6945 = vmor %vm6943, %vm6944
      %v6946 = vsel %vm6945, %v6937, %v6942
      %s6947 = vtos %v6946
      %v6948 = vstv %s6911
      %v6949 = vsel %vm2504, %v6948, 0.0
      %v6950 = vstv %s6947
      %v6951 = vsel %vm2504, %v6950, 0.0
      %6956 = vrot.lane.b32.xlu0 %v6891, 64
      %v6957 = vpop.permute.xlu0 %6956
      %6958 = vrot.lane.b32.xlu0 %v6892, 64
      %v6959 = vpop.permute.xlu0 %6958
      %6960 = vrot.lane.b32.xlu0 %v6893, 64
      %v6961 = vpop.permute.xlu0 %6960
      %6962 = vrot.lane.b32.xlu0 %v6894, 64
      %v6963 = vpop.permute.xlu0 %6962
      %v6968 = vsel %vm1296, %v6957, 0.0
      %v6969 = vsel %vm1296, %v6959, 0.0
      %v6970 = vadd.f32 %v6968, %v6969
      %v6971 = vsel %vm1296, %v6961, 0.0
      %v6972 = vadd.f32 %v6970, %v6971
      %v6973 = vsel %vm1296, %v6963, 0.0
      %v6974 = vadd.f32 %v6972, %v6973
      %6975 = vadd.xlane.f32.xlu0 %v6974
      %v6976 = vpop.xlane.xlu0 %6975
      %v6977 = vrot.slane %v6976, 4
      %v6978 = vadd.f32 %v6976, %v6977
      %v6979 = vrot.slane %v6978, 2
      %v6980 = vadd.f32 %v6978, %v6979
      %v6981 = vrot.slane %v6980, 1
      %v6982 = vadd.f32 %v6980, %v6981
      %s6983 = vtos %v6982
      %s6984 = smul.f32 %s6983, 0.00048828125
      %6989 = vrot.lane.b32.xlu0 %v6912, 64
      %v6990 = vpop.permute.xlu0 %6989
      %6991 = vrot.lane.b32.xlu0 %v6913, 64
      %v6992 = vpop.permute.xlu0 %6991
      %6993 = vrot.lane.b32.xlu0 %v6914, 64
      %v6994 = vpop.permute.xlu0 %6993
      %6995 = vrot.lane.b32.xlu0 %v6915, 64
      %v6996 = vpop.permute.xlu0 %6995
      %v7001 = vsel %vm1296, %v6990, 0.0
      %v7002 = vsel %vm1296, %v6992, 0.0
      %v7003 = vadd.f32 %v7001, %v7002
      %v7004 = vsel %vm1296, %v6994, 0.0
      %v7005 = vadd.f32 %v7003, %v7004
      %v7006 = vsel %vm1296, %v6996, 0.0
      %v7007 = vadd.f32 %v7005, %v7006
      %7008 = vadd.xlane.f32.xlu0 %v7007
      %v7009 = vpop.xlane.xlu0 %7008
      %v7010 = vrot.slane %v7009, 4
      %v7011 = vadd.f32 %v7009, %v7010
      %v7012 = vrot.slane %v7011, 2
      %v7013 = vadd.f32 %v7011, %v7012
      %v7014 = vrot.slane %v7013, 1
      %v7015 = vadd.f32 %v7013, %v7014
      %s7016 = vtos %v7015
      %s7017 = smul.f32 %s7016, 0.00048828125
      %s7018 = smul.f32 %s6984, %s6984
      %s7019 = ssub.f32 %s7017, %s7018
      %s7020 = sadd.f32 %s7019, 1e-05
      %v7021 = vstv %s7020
      %v7022 = vrsqrt.pop %v7021
      %v7023 = vmul.f32 %v7022, %v7021
      %v7024 = vmul.f32 %v7023, %v7022
      %v7025 = vmul.f32 0.5, %v7024
      %v7026 = vsub.f32 1.5, %v7025
      %v7027 = vmul.f32 %v7022, %v7026
      %vm7028 = vweird.f32 %v7021
      %vm7029 = vweird.f32 %v7022
      %vm7030 = vmor %vm7028, %vm7029
      %v7031 = vsel %vm7030, %v7022, %v7027
      %s7032 = vtos %v7031
      %v7033 = vstv %s6984
      %v7034 = vsel %vm2640, %v7033, %v6949
      %v7035 = vstv %s7032
      %v7036 = vsel %vm2640, %v7035, %v6951
      %v7037 = vsub.f32 %v6891, %v7034
      %v7038 = vsub.f32 %v6892, %v7034
      %v7039 = vsub.f32 %v6893, %v7034
      %v7040 = vsub.f32 %v6894, %v7034
      %v7041 = vmul.f32 %v7037, %v7036
      %v7042 = vmul.f32 %v7038, %v7036
      %v7043 = vmul.f32 %v7039, %v7036
      %v7044 = vmul.f32 %v7040, %v7036
      %v7045 = vld [vmem:[%s15] sm:$0xf]
      %v7046 = vld [vmem:[%s15 + $0x4] sm:$0xf]
      %v7047 = vld [vmem:[%s15 + $0x8] sm:$0xf]
      %v7048 = vld [vmem:[%s15 + $0xc] sm:$0xf]
      %v7053 = vunpack.c.l.b16 %v7045
      %v7054 = vunpack.c.l.b16 %v7046
      %v7055 = vunpack.c.l.b16 %v7047
      %v7056 = vunpack.c.l.b16 %v7048
      %v7057 = vpack.c.b16 %v7054, %v7053
      %v7058 = vpack.c.b16 %v7056, %v7055
      %v7064 = vsel %vm1296, %v7057, 0
      %v7067 = vsel %vm1296, %v7058, 0
      %7069 = vmatpush.bf16.msra.mxu0 0
      %7070 = vmatpush.bf16.msra.mxu0 0
      %7071 = vmatpush.bf16.msra.mxu0 0
      %7072 = vmatpush.bf16.msra.mxu0 0
      %7073 = vmatpush.bf16.msra.mxu0 %v5910
      %7074 = vmatpush.bf16.msra.mxu0 %v5909
      %7075 = vmatpush.bf16.msra.mxu0 %v5908
      %7076 = vmatpush.bf16.msra.mxu0 %v5907
      %7077 = vmatmul.bf16.gmra.mxu0 %v7064
      %v7078 = vpop.f32.mrf.mxu0
      %v7079 = vadd.f32 0.0, %v7078
      %v7080 = vpop.f32.mrf.mxu0
      %v7081 = vadd.f32 0.0, %v7080
      %7082 = vmatmul.bf16.gmra.mxu0 %v7067
      %v7083 = vpop.f32.mrf.mxu0
      %v7084 = vadd.f32 0.0, %v7083
      %v7085 = vpop.f32.mrf.mxu0
      %v7086 = vadd.f32 0.0, %v7085
      %7087 = vdwg.mxu0
      %v7088 = vadd.f32 %v7041, %v7079
      %v7089 = vadd.f32 %v7042, %v7081
      %v7090 = vadd.f32 %v7043, %v7084
      %v7091 = vadd.f32 %v7044, %v7086
      %v7092 = vpack.c.bf16 %v7088, %v7088
      %v7093 = vpack.c.bf16 %v7089, %v7089
      %v7094 = vpack.c.bf16 %v7090, %v7090
      %v7095 = vpack.c.bf16 %v7091, %v7091
      %7096 = vst [vmem:[#allocation2 + $0x10] sm:$0xf] %v7092
      %7097 = vst [vmem:[#allocation2 + $0x14] sm:$0xf] %v7093
      %7098 = vst [vmem:[#allocation2 + $0x18] sm:$0xf] %v7094
      %7099 = vst [vmem:[#allocation2 + $0x1c] sm:$0xf] %v7095
      %7104 = vrot.lane.b32.xlu0 %v7092, 32
      %v7105 = vpop.permute.xlu0 %7104
      %7106 = vrot.lane.b32.xlu0 %v7093, 32
      %v7107 = vpop.permute.xlu0 %7106
      %7108 = vrot.lane.b32.xlu0 %v7094, 32
      %v7109 = vpop.permute.xlu0 %7108
      %7110 = vrot.lane.b32.xlu0 %v7095, 32
      %v7111 = vpop.permute.xlu0 %7110
      %vm7116 = vcmask 519424
      %7117 = vst.msk [vmem:[#allocation2] sm:$0xf] %vm7116, %v7105
      %7118 = vst.msk [vmem:[#allocation2 + $0x4] sm:$0xf] %vm7116, %v7107
      %7119 = vst.msk [vmem:[#allocation2 + $0x8] sm:$0xf] %vm7116, %v7109
      %7120 = vst.msk [vmem:[#allocation2 + $0xc] sm:$0xf] %vm7116, %v7111
      %7121 = vrot.lane.b32.xlu0 %v7092, 96
      %v7122 = vpop.permute.xlu0 %7121
      %7123 = vrot.lane.b32.xlu0 %v7093, 96
      %v7124 = vpop.permute.xlu0 %7123
      %7125 = vrot.lane.b32.xlu0 %v7094, 96
      %v7126 = vpop.permute.xlu0 %7125
      %7127 = vrot.lane.b32.xlu0 %v7095, 96
      %v7128 = vpop.permute.xlu0 %7127
      %vm7133 = vcmask 257024
      %7134 = vst.msk [vmem:[#allocation2 + $0x20] sm:$0xf] %vm7133, %v7122
      %7135 = vst.msk [vmem:[#allocation2 + $0x24] sm:$0xf] %vm7133, %v7124
      %7136 = vst.msk [vmem:[#allocation2 + $0x28] sm:$0xf] %vm7133, %v7126
      %7137 = vst.msk [vmem:[#allocation2 + $0x2c] sm:$0xf] %vm7133, %v7128
      %v7138 = vld [vmem:[%s1] sm:$0xf]
      %v7139 = vld [vmem:[%s1 + $0x4] sm:$0xf]
      %v7140 = vld [vmem:[%s1 + $0x8] sm:$0xf]
      %v7141 = vld [vmem:[%s1 + $0xc] sm:$0xf]
      %v7142 = vunpack.c.l.b16 %v7092
      %v7143 = vunpack.c.l.b16 %v7093
      %v7144 = vunpack.c.l.b16 %v7094
      %v7145 = vunpack.c.l.b16 %v7095
      %v7146 = vpack.c.b16 %v7143, %v7142
      %v7147 = vpack.c.b16 %v7145, %v7144
      %7148 = vrot.lane.b32.xlu0 %v7146, 127
      %v7149 = vpop.permute.xlu0 %7148
      %7150 = vrot.lane.b32.xlu0 %v7147, 127
      %v7151 = vpop.permute.xlu0 %7150
      %v7156 = vunpack.c.l.b16 %v7138
      %v7157 = vunpack.c.l.b16 %v7139
      %v7158 = vunpack.c.l.b16 %v7140
      %v7159 = vunpack.c.l.b16 %v7141
      %v7160 = vpack.c.b16 %v7157, %v7156
      %v7161 = vpack.c.b16 %v7159, %v7158
      %vm7164 = vcmask 261120
      %v7166 = vsel %vm7164, %v7149, 0
      %v7169 = vsel %vm7164, %v7151, 0
      %7171 = vmatpush.bf16.msra.mxu0 0
      %7172 = vmatpush.bf16.msra.mxu0 0
      %7173 = vmatpush.bf16.msra.mxu0 0
      %7174 = vmatpush.bf16.msra.mxu0 0
      %7175 = vmatpush.bf16.msra.mxu0 0
      %7176 = vmatpush.bf16.msra.mxu0 0
      %7177 = vmatpush.bf16.msra.mxu0 %v7161
      %7178 = vmatpush.bf16.msra.mxu0 %v7160
      %7179 = vmatmul.bf16.gmra.mxu0 %v7166
      %v7180 = vpop.f32.mrf.mxu0
      %v7181 = vadd.f32 0.0, %v7180
      %v7182 = vpop.f32.mrf.mxu0
      %v7183 = vadd.f32 0.0, %v7182
      %7184 = vmatmul.bf16.gmra.mxu0 %v7169
      %v7185 = vpop.f32.mrf.mxu0
      %v7186 = vadd.f32 0.0, %v7185
      %v7187 = vpop.f32.mrf.mxu0
      %v7188 = vadd.f32 0.0, %v7187
      %7189 = vdwg.mxu0
      %v7190 = vpack.c.bf16 %v7181, %v7181
      %v7191 = vpack.c.bf16 %v7183, %v7183
      %v7192 = vpack.c.bf16 %v7186, %v7186
      %v7193 = vpack.c.bf16 %v7188, %v7188
      %7194 = vrot.lane.b32.xlu0 %v7146, 97
      %v7195 = vpop.permute.xlu0 %7194
      %7196 = vrot.lane.b32.xlu0 %v7147, 97
      %v7197 = vpop.permute.xlu0 %7196
      %v7199 = vsel %vm7164, %v7195, 0
      %v7202 = vsel %vm7164, %v7197, 0
      %7204 = vmatpush.bf16.msra.mxu0 0
      %7205 = vmatpush.bf16.msra.mxu0 0
      %7206 = vmatpush.bf16.msra.mxu0 0
      %7207 = vmatpush.bf16.msra.mxu0 0
      %7208 = vmatpush.bf16.msra.mxu0 0
      %7209 = vmatpush.bf16.msra.mxu0 0
      %7210 = vmatpush.bf16.msra.mxu0 %v7161
      %7211 = vmatpush.bf16.msra.mxu0 %v7160
      %7212 = vmatmul.bf16.gmra.mxu0 %v7199
      %v7213 = vpop.f32.mrf.mxu0
      %v7214 = vadd.f32 0.0, %v7213
      %v7215 = vpop.f32.mrf.mxu0
      %v7216 = vadd.f32 0.0, %v7215
      %7217 = vmatmul.bf16.gmra.mxu0 %v7202
      %v7218 = vpop.f32.mrf.mxu0
      %v7219 = vadd.f32 0.0, %v7218
      %v7220 = vpop.f32.mrf.mxu0
      %v7221 = vadd.f32 0.0, %v7220
      %7222 = vdwg.mxu0
      %v7223 = vpack.c.bf16 %v7214, %v7214
      %v7224 = vpack.c.bf16 %v7216, %v7216
      %v7225 = vpack.c.bf16 %v7219, %v7219
      %v7226 = vpack.c.bf16 %v7221, %v7221
      %7227 = vst.msk [vmem:[#allocation2] sm:$0xf] %vm7133, %v7190
      %7228 = vst.msk [vmem:[#allocation2 + $0x4] sm:$0xf] %vm7133, %v7191
      %7229 = vst.msk [vmem:[#allocation2 + $0x8] sm:$0xf] %vm7133, %v7192
      %7230 = vst.msk [vmem:[#allocation2 + $0xc] sm:$0xf] %vm7133, %v7193
      %7235 = vrot.lane.b32.xlu0 %v7223, 32
      %v7236 = vpop.permute.xlu0 %7235
      %7237 = vrot.lane.b32.xlu0 %v7224, 32
      %v7238 = vpop.permute.xlu0 %7237
      %7239 = vrot.lane.b32.xlu0 %v7225, 32
      %v7240 = vpop.permute.xlu0 %7239
      %7241 = vrot.lane.b32.xlu0 %v7226, 32
      %v7242 = vpop.permute.xlu0 %7241
      %7247 = vst.msk [vmem:[#allocation2 + $0x20] sm:$0xf] %vm7116, %v7236
      %7248 = vst.msk [vmem:[#allocation2 + $0x24] sm:$0xf] %vm7116, %v7238
      %7249 = vst.msk [vmem:[#allocation2 + $0x28] sm:$0xf] %vm7116, %v7240
      %7250 = vst.msk [vmem:[#allocation2 + $0x2c] sm:$0xf] %vm7116, %v7242
      %vm7251 = vcmask 1044224
      %7252 = vst.msk [vmem:[#allocation2] sm:$0xf] %vm7251, %v7105
      %7253 = vst.msk [vmem:[#allocation2 + $0x4] sm:$0xf] %vm7251, %v7107
      %7254 = vst.msk [vmem:[#allocation2 + $0x8] sm:$0xf] %vm7251, %v7109
      %7255 = vst.msk [vmem:[#allocation2 + $0xc] sm:$0xf] %vm7251, %v7111
      %vm7256 = vcmask 781824
      %7257 = vst.msk [vmem:[#allocation2 + $0x20] sm:$0xf] %vm7256, %v7122
      %7258 = vst.msk [vmem:[#allocation2 + $0x24] sm:$0xf] %vm7256, %v7124
      %7259 = vst.msk [vmem:[#allocation2 + $0x28] sm:$0xf] %vm7256, %v7126
      %7260 = vst.msk [vmem:[#allocation2 + $0x2c] sm:$0xf] %vm7256, %v7128
      %v7261 = vld [vmem:[%s1] sm:$0xf]
      %v7262 = vld [vmem:[%s1 + $0x4] sm:$0xf]
      %v7263 = vld [vmem:[%s1 + $0x8] sm:$0xf]
      %v7264 = vld [vmem:[%s1 + $0xc] sm:$0xf]
      %7265 = vrot.lane.b32.xlu0 %v7146, 63
      %v7266 = vpop.permute.xlu0 %7265
      %7267 = vrot.lane.b32.xlu0 %v7147, 63
      %v7268 = vpop.permute.xlu0 %7267
      %v7273 = vunpack.c.l.b16 %v7261
      %v7274 = vunpack.c.l.b16 %v7262
      %v7275 = vunpack.c.l.b16 %v7263
      %v7276 = vunpack.c.l.b16 %v7264
      %v7277 = vpack.c.b16 %v7274, %v7273
      %v7278 = vpack.c.b16 %v7276, %v7275
      %v7282 = vsel %vm7164, %v7266, 0
      %v7285 = vsel %vm7164, %v7268, 0
      %7287 = vmatpush.bf16.msra.mxu0 0
      %7288 = vmatpush.bf16.msra.mxu0 0
      %7289 = vmatpush.bf16.msra.mxu0 0
      %7290 = vmatpush.bf16.msra.mxu0 0
      %7291 = vmatpush.bf16.msra.mxu0 0
      %7292 = vmatpush.bf16.msra.mxu0 0
      %7293 = vmatpush.bf16.msra.mxu0 %v7278
      %7294 = vmatpush.bf16.msra.mxu0 %v7277
      %7295 = vmatmul.bf16.gmra.mxu0 %v7282
      %v7296 = vpop.f32.mrf.mxu0
      %v7297 = vadd.f32 0.0, %v7296
      %v7298 = vpop.f32.mrf.mxu0
      %v7299 = vadd.f32 0.0, %v7298
      %7300 = vmatmul.bf16.gmra.mxu0 %v7285
      %v7301 = vpop.f32.mrf.mxu0
      %v7302 = vadd.f32 0.0, %v7301
      %v7303 = vpop.f32.mrf.mxu0
      %v7304 = vadd.f32 0.0, %v7303
      %7305 = vdwg.mxu0
      %v7306 = vpack.c.bf16 %v7297, %v7297
      %v7307 = vpack.c.bf16 %v7299, %v7299
      %v7308 = vpack.c.bf16 %v7302, %v7302
      %v7309 = vpack.c.bf16 %v7304, %v7304
      %7310 = vrot.lane.b32.xlu0 %v7146, 33
      %v7311 = vpop.permute.xlu0 %7310
      %7312 = vrot.lane.b32.xlu0 %v7147, 33
      %v7313 = vpop.permute.xlu0 %7312
      %v7315 = vsel %vm7164, %v7311, 0
      %v7318 = vsel %vm7164, %v7313, 0
      %7320 = vmatpush.bf16.msra.mxu0 0
      %7321 = vmatpush.bf16.msra.mxu0 0
      %7322 = vmatpush.bf16.msra.mxu0 0
      %7323 = vmatpush.bf16.msra.mxu0 0
      %7324 = vmatpush.bf16.msra.mxu0 0
      %7325 = vmatpush.bf16.msra.mxu0 0
      %7326 = vmatpush.bf16.msra.mxu0 %v7278
      %7327 = vmatpush.bf16.msra.mxu0 %v7277
      %7328 = vmatmul.bf16.gmra.mxu0 %v7315
      %v7329 = vpop.f32.mrf.mxu0
      %v7330 = vadd.f32 0.0, %v7329
      %v7331 = vpop.f32.mrf.mxu0
      %v7332 = vadd.f32 0.0, %v7331
      %7333 = vmatmul.bf16.gmra.mxu0 %v7318
      %v7334 = vpop.f32.mrf.mxu0
      %v7335 = vadd.f32 0.0, %v7334
      %v7336 = vpop.f32.mrf.mxu0
      %v7337 = vadd.f32 0.0, %v7336
      %7338 = vdwg.mxu0
      %v7339 = vpack.c.bf16 %v7330, %v7330
      %v7340 = vpack.c.bf16 %v7332, %v7332
      %v7341 = vpack.c.bf16 %v7335, %v7335
      %v7342 = vpack.c.bf16 %v7337, %v7337
      %7347 = vrot.lane.b32.xlu0 %v7306, 64
      %v7348 = vpop.permute.xlu0 %7347
      %7349 = vrot.lane.b32.xlu0 %v7307, 64
      %v7350 = vpop.permute.xlu0 %7349
      %7351 = vrot.lane.b32.xlu0 %v7308, 64
      %v7352 = vpop.permute.xlu0 %7351
      %7353 = vrot.lane.b32.xlu0 %v7309, 64
      %v7354 = vpop.permute.xlu0 %7353
      %7359 = vst.msk [vmem:[#allocation2] sm:$0xf] %vm7256, %v7348
      %7360 = vst.msk [vmem:[#allocation2 + $0x4] sm:$0xf] %vm7256, %v7350
      %7361 = vst.msk [vmem:[#allocation2 + $0x8] sm:$0xf] %vm7256, %v7352
      %7362 = vst.msk [vmem:[#allocation2 + $0xc] sm:$0xf] %vm7256, %v7354
      %7367 = vrot.lane.b32.xlu0 %v7339, 96
      %v7368 = vpop.permute.xlu0 %7367
      %7369 = vrot.lane.b32.xlu0 %v7340, 96
      %v7370 = vpop.permute.xlu0 %7369
      %7371 = vrot.lane.b32.xlu0 %v7341, 96
      %v7372 = vpop.permute.xlu0 %7371
      %7373 = vrot.lane.b32.xlu0 %v7342, 96
      %v7374 = vpop.permute.xlu0 %7373
      %7379 = vst.msk [vmem:[#allocation2 + $0x20] sm:$0xf] %vm7251, %v7368
      %7380 = vst.msk [vmem:[#allocation2 + $0x24] sm:$0xf] %vm7251, %v7370
      %7381 = vst.msk [vmem:[#allocation2 + $0x28] sm:$0xf] %vm7251, %v7372
      %7382 = vst.msk [vmem:[#allocation2 + $0x2c] sm:$0xf] %vm7251, %v7374
      %v7383 = vld [vmem:[%s16] sm:$0xf]
      %v7384 = vld [vmem:[%s16 + $0x4] sm:$0xf]
      %v7385 = vld [vmem:[#allocation2] sm:$0xf]
      %v7386 = vld [vmem:[#allocation2 + $0x4] sm:$0xf]
      %v7387 = vld [vmem:[#allocation2 + $0x8] sm:$0xf]
      %v7388 = vld [vmem:[#allocation2 + $0xc] sm:$0xf]
      %v7389 = vld [vmem:[#allocation2 + $0x10] sm:$0xf]
      %v7390 = vld [vmem:[#allocation2 + $0x14] sm:$0xf]
      %v7391 = vld [vmem:[#allocation2 + $0x18] sm:$0xf]
      %v7392 = vld [vmem:[#allocation2 + $0x1c] sm:$0xf]
      %v7393 = vld [vmem:[#allocation2 + $0x20] sm:$0xf]
      %v7394 = vld [vmem:[#allocation2 + $0x24] sm:$0xf]
      %v7395 = vld [vmem:[#allocation2 + $0x28] sm:$0xf]
      %v7396 = vld [vmem:[#allocation2 + $0x2c] sm:$0xf]
      %v7397 = vld [vmem:[%s17] sm:$0xff]
      %v7398 = vld [vmem:[%s17 + $0x8] sm:$0xff]
      %7400 = vset.pattern.permute.xlu0 0
      %7401 = vperm.xlu0 %7400, %v7397
      %v7402 = vpop.permute.xlu0 %7401
      %7405 = vset.pattern.permute.xlu0 0
      %7406 = vperm.xlu0 %7405, %v7398
      %v7407 = vpop.permute.xlu0 %7406
      %v7411 = vunpack.c.l.b16 %v7383
      %v7412 = vunpack.c.l.b16 %v7384
      %v7413 = vpack.c.b16 %v7412, %v7411
      %v7426 = vunpack.c.l.b16 %v7385
      %v7427 = vunpack.c.l.b16 %v7386
      %v7428 = vunpack.c.l.b16 %v7387
      %v7429 = vunpack.c.l.b16 %v7388
      %v7430 = vunpack.c.l.b16 %v7389
      %v7431 = vunpack.c.l.b16 %v7390
      %v7432 = vunpack.c.l.b16 %v7391
      %v7433 = vunpack.c.l.b16 %v7392
      %v7434 = vunpack.c.l.b16 %v7393
      %v7435 = vunpack.c.l.b16 %v7394
      %v7436 = vunpack.c.l.b16 %v7395
      %v7437 = vunpack.c.l.b16 %v7396
      %v7438 = vpack.c.b16 %v7427, %v7426
      %v7439 = vpack.c.b16 %v7429, %v7428
      %v7440 = vpack.c.b16 %v7431, %v7430
      %v7441 = vpack.c.b16 %v7433, %v7432
      %v7442 = vpack.c.b16 %v7435, %v7434
      %v7443 = vpack.c.b16 %v7437, %v7436
      %v7451 = vsel %vm6833, %v7413, 0
      %7453 = vmatpush.bf16.msra.mxu0 0
      %7454 = vmatpush.bf16.msra.mxu0 0
      %7455 = vmatpush.bf16.msra.mxu0 %v7443
      %7456 = vmatpush.bf16.msra.mxu0 %v7442
      %7457 = vmatpush.bf16.msra.mxu0 %v7441
      %7458 = vmatpush.bf16.msra.mxu0 %v7440
      %7459 = vmatpush.bf16.msra.mxu0 %v7439
      %7460 = vmatpush.bf16.msra.mxu0 %v7438
      %7461 = vmatmul.bf16.gmra.mxu0 %v7451
      %v7462 = vpop.f32.mrf.mxu0
      %v7463 = vadd.f32 %v7402, %v7462
      %v7464 = vpop.f32.mrf.mxu0
      %v7465 = vadd.f32 %v7407, %v7464
      %7466 = vdwg.mxu0
      %v7467 = vmin.f32 %v7463, 20.0
      %v7468 = vmin.f32 %v7465, 20.0
      %v7469 = vmul.f32 %v7467, 1.442695
      %v7470 = vpow.pop %v7469
      %v7471 = vmul.f32 %v7468, 1.442695
      %v7472 = vpow.pop %v7471
      %v7473 = vadd.f32 %v7470, 2.0
      %v7474 = vadd.f32 %v7472, 2.0
      %v7475 = vmul.f32 %v7470, %v7473
      %v7476 = vmul.f32 %v7472, %v7474
      %v7477 = vadd.f32 %v7475, 2.0
      %v7478 = vadd.f32 %v7476, 2.0
      %v7479 = vrcp.pop %v7477
      %v7480 = vrcp.pop %v7478
      %v7481 = vmul.f32 %v7475, %v7479
      %v7482 = vmul.f32 %v7476, %v7480
      %v7483 = vmul.f32 %v7463, %v7481
      %v7484 = vmul.f32 %v7465, %v7482
      %v7485 = vpack.c.bf16 %v7483, %v7483
      %v7486 = vpack.c.bf16 %v7484, %v7484
      %7487 = vst [vmem:[#allocation2 + $0x8] sm:$0xf] %v7485
      %7488 = vst [vmem:[#allocation2 + $0xc] sm:$0xf] %v7486
      %7491 = vrot.lane.b32.xlu0 %v7485, 32
      %v7492 = vpop.permute.xlu0 %7491
      %7493 = vrot.lane.b32.xlu0 %v7486, 32
      %v7494 = vpop.permute.xlu0 %7493
      %7497 = vst.msk [vmem:[#allocation2] sm:$0xf] %vm7116, %v7492
      %7498 = vst.msk [vmem:[#allocation2 + $0x4] sm:$0xf] %vm7116, %v7494
      %7499 = vrot.lane.b32.xlu0 %v7485, 96
      %v7500 = vpop.permute.xlu0 %7499
      %7501 = vrot.lane.b32.xlu0 %v7486, 96
      %v7502 = vpop.permute.xlu0 %7501
      %7505 = vst.msk [vmem:[#allocation2 + $0x10] sm:$0xf] %vm7133, %v7500
      %7506 = vst.msk [vmem:[#allocation2 + $0x14] sm:$0xf] %vm7133, %v7502
      %v7507 = vld [vmem:[%s1] sm:$0xf]
      %v7508 = vld [vmem:[%s1 + $0x4] sm:$0xf]
      %v7509 = vld [vmem:[%s1 + $0x8] sm:$0xf]
      %v7510 = vld [vmem:[%s1 + $0xc] sm:$0xf]
      %v7511 = vunpack.c.l.b16 %v7485
      %v7512 = vunpack.c.l.b16 %v7486
      %v7513 = vpack.c.b16 %v7512, %v7511
      %7514 = vrot.lane.b32.xlu0 %v7513, 127
      %v7515 = vpop.permute.xlu0 %7514
      %v7520 = vunpack.c.l.b16 %v7507
      %v7521 = vunpack.c.l.b16 %v7508
      %v7522 = vunpack.c.l.b16 %v7509
      %v7523 = vunpack.c.l.b16 %v7510
      %v7524 = vpack.c.b16 %v7521, %v7520
      %v7525 = vpack.c.b16 %v7523, %v7522
      %v7529 = vsel %vm7164, %v7515, 0
      %7531 = vmatpush.bf16.msra.mxu0 0
      %7532 = vmatpush.bf16.msra.mxu0 0
      %7533 = vmatpush.bf16.msra.mxu0 0
      %7534 = vmatpush.bf16.msra.mxu0 0
      %7535 = vmatpush.bf16.msra.mxu0 0
      %7536 = vmatpush.bf16.msra.mxu0 0
      %7537 = vmatpush.bf16.msra.mxu0 %v7525
      %7538 = vmatpush.bf16.msra.mxu0 %v7524
      %7539 = vmatmul.bf16.gmra.mxu0 %v7529
      %v7540 = vpop.f32.mrf.mxu0
      %v7541 = vadd.f32 0.0, %v7540
      %v7542 = vpop.f32.mrf.mxu0
      %v7543 = vadd.f32 0.0, %v7542
      %7544 = vdwg.mxu0
      %v7545 = vpack.c.bf16 %v7541, %v7541
      %v7546 = vpack.c.bf16 %v7543, %v7543
      %7547 = vrot.lane.b32.xlu0 %v7513, 97
      %v7548 = vpop.permute.xlu0 %7547
      %v7550 = vsel %vm7164, %v7548, 0
      %7552 = vmatpush.bf16.msra.mxu0 0
      %7553 = vmatpush.bf16.msra.mxu0 0
      %7554 = vmatpush.bf16.msra.mxu0 0
      %7555 = vmatpush.bf16.msra.mxu0 0
      %7556 = vmatpush.bf16.msra.mxu0 0
      %7557 = vmatpush.bf16.msra.mxu0 0
      %7558 = vmatpush.bf16.msra.mxu0 %v7525
      %7559 = vmatpush.bf16.msra.mxu0 %v7524
      %7560 = vmatmul.bf16.gmra.mxu0 %v7550
      %v7561 = vpop.f32.mrf.mxu0
      %v7562 = vadd.f32 0.0, %v7561
      %v7563 = vpop.f32.mrf.mxu0
      %v7564 = vadd.f32 0.0, %v7563
      %7565 = vdwg.mxu0
      %v7566 = vpack.c.bf16 %v7562, %v7562
      %v7567 = vpack.c.bf16 %v7564, %v7564
      %7568 = vst.msk [vmem:[#allocation2] sm:$0xf] %vm7133, %v7545
      %7569 = vst.msk [vmem:[#allocation2 + $0x4] sm:$0xf] %vm7133, %v7546
      %7572 = vrot.lane.b32.xlu0 %v7566, 32
      %v7573 = vpop.permute.xlu0 %7572
      %7574 = vrot.lane.b32.xlu0 %v7567, 32
      %v7575 = vpop.permute.xlu0 %7574
      %7578 = vst.msk [vmem:[#allocation2 + $0x10] sm:$0xf] %vm7116, %v7573
      %7579 = vst.msk [vmem:[#allocation2 + $0x14] sm:$0xf] %vm7116, %v7575
      %7580 = vst.msk [vmem:[#allocation2] sm:$0xf] %vm7251, %v7492
      %7581 = vst.msk [vmem:[#allocation2 + $0x4] sm:$0xf] %vm7251, %v7494
      %7582 = vst.msk [vmem:[#allocation2 + $0x10] sm:$0xf] %vm7256, %v7500
      %7583 = vst.msk [vmem:[#allocation2 + $0x14] sm:$0xf] %vm7256, %v7502
      %v7584 = vld [vmem:[%s1] sm:$0xf]
      %v7585 = vld [vmem:[%s1 + $0x4] sm:$0xf]
      %v7586 = vld [vmem:[%s1 + $0x8] sm:$0xf]
      %v7587 = vld [vmem:[%s1 + $0xc] sm:$0xf]
      %7588 = vrot.lane.b32.xlu0 %v7513, 63
      %v7589 = vpop.permute.xlu0 %7588
      %v7594 = vunpack.c.l.b16 %v7584
      %v7595 = vunpack.c.l.b16 %v7585
      %v7596 = vunpack.c.l.b16 %v7586
      %v7597 = vunpack.c.l.b16 %v7587
      %v7598 = vpack.c.b16 %v7595, %v7594
      %v7599 = vpack.c.b16 %v7597, %v7596
      %v7603 = vsel %vm7164, %v7589, 0
      %7605 = vmatpush.bf16.msra.mxu0 0
      %7606 = vmatpush.bf16.msra.mxu0 0
      %7607 = vmatpush.bf16.msra.mxu0 0
      %7608 = vmatpush.bf16.msra.mxu0 0
      %7609 = vmatpush.bf16.msra.mxu0 0
      %7610 = vmatpush.bf16.msra.mxu0 0
      %7611 = vmatpush.bf16.msra.mxu0 %v7599
      %7612 = vmatpush.bf16.msra.mxu0 %v7598
      %7613 = vmatmul.bf16.gmra.mxu0 %v7603
      %v7614 = vpop.f32.mrf.mxu0
      %v7615 = vadd.f32 0.0, %v7614
      %v7616 = vpop.f32.mrf.mxu0
      %v7617 = vadd.f32 0.0, %v7616
      %7618 = vdwg.mxu0
      %v7619 = vpack.c.bf16 %v7615, %v7615
      %v7620 = vpack.c.bf16 %v7617, %v7617
      %7621 = vrot.lane.b32.xlu0 %v7513, 33
      %v7622 = vpop.permute.xlu0 %7621
      %v7624 = vsel %vm7164, %v7622, 0
      %7626 = vmatpush.bf16.msra.mxu0 0
      %7627 = vmatpush.bf16.msra.mxu0 0
      %7628 = vmatpush.bf16.msra.mxu0 0
      %7629 = vmatpush.bf16.msra.mxu0 0
      %7630 = vmatpush.bf16.msra.mxu0 0
      %7631 = vmatpush.bf16.msra.mxu0 0
      %7632 = vmatpush.bf16.msra.mxu0 %v7599
      %7633 = vmatpush.bf16.msra.mxu0 %v7598
      %7634 = vmatmul.bf16.gmra.mxu0 %v7624
      %v7635 = vpop.f32.mrf.mxu0
      %v7636 = vadd.f32 0.0, %v7635
      %v7637 = vpop.f32.mrf.mxu0
      %v7638 = vadd.f32 0.0, %v7637
      %7639 = vdwg.mxu0
      %v7640 = vpack.c.bf16 %v7636, %v7636
      %v7641 = vpack.c.bf16 %v7638, %v7638
      %7644 = vrot.lane.b32.xlu0 %v7619, 64
      %v7645 = vpop.permute.xlu0 %7644
      %7646 = vrot.lane.b32.xlu0 %v7620, 64
      %v7647 = vpop.permute.xlu0 %7646
      %7650 = vst.msk [vmem:[#allocation2] sm:$0xf] %vm7256, %v7645
      %7651 = vst.msk [vmem:[#allocation2 + $0x4] sm:$0xf] %vm7256, %v7647
      %7654 = vrot.lane.b32.xlu0 %v7640, 96
      %v7655 = vpop.permute.xlu0 %7654
      %7656 = vrot.lane.b32.xlu0 %v7641, 96
      %v7657 = vpop.permute.xlu0 %7656
      %7660 = vst.msk [vmem:[#allocation2 + $0x10] sm:$0xf] %vm7251, %v7655
      %7661 = vst.msk [vmem:[#allocation2 + $0x14] sm:$0xf] %vm7251, %v7657
      %v7662 = vld [vmem:[%s18] sm:$0xf]
      %v7663 = vld [vmem:[%s18 + $0x4] sm:$0xf]
      %v7664 = vld [vmem:[#allocation2] sm:$0xf]
      %v7665 = vld [vmem:[#allocation2 + $0x4] sm:$0xf]
      %v7666 = vld [vmem:[#allocation2 + $0x8] sm:$0xf]
      %v7667 = vld [vmem:[#allocation2 + $0xc] sm:$0xf]
      %v7668 = vld [vmem:[#allocation2 + $0x10] sm:$0xf]
      %v7669 = vld [vmem:[#allocation2 + $0x14] sm:$0xf]
      %v7670 = vld [vmem:[%s19] sm:$0xff]
      %v7671 = vld [vmem:[%s19 + $0x8] sm:$0xff]
      %7673 = vset.pattern.permute.xlu0 0
      %7674 = vperm.xlu0 %7673, %v7670
      %v7675 = vpop.permute.xlu0 %7674
      %7678 = vset.pattern.permute.xlu0 0
      %7679 = vperm.xlu0 %7678, %v7671
      %v7680 = vpop.permute.xlu0 %7679
      %v7684 = vunpack.c.l.b16 %v7662
      %v7685 = vunpack.c.l.b16 %v7663
      %v7686 = vpack.c.b16 %v7685, %v7684
      %v7693 = vunpack.c.l.b16 %v7664
      %v7694 = vunpack.c.l.b16 %v7665
      %v7695 = vunpack.c.l.b16 %v7666
      %v7696 = vunpack.c.l.b16 %v7667
      %v7697 = vunpack.c.l.b16 %v7668
      %v7698 = vunpack.c.l.b16 %v7669
      %v7699 = vpack.c.b16 %v7694, %v7693
      %v7700 = vpack.c.b16 %v7696, %v7695
      %v7701 = vpack.c.b16 %v7698, %v7697
      %v7706 = vsel %vm858, %v7686, 0
      %7708 = vmatpush.bf16.msra.mxu0 0
      %7709 = vmatpush.bf16.msra.mxu0 0
      %7710 = vmatpush.bf16.msra.mxu0 0
      %7711 = vmatpush.bf16.msra.mxu0 0
      %7712 = vmatpush.bf16.msra.mxu0 0
      %7713 = vmatpush.bf16.msra.mxu0 %v7701
      %7714 = vmatpush.bf16.msra.mxu0 %v7700
      %7715 = vmatpush.bf16.msra.mxu0 %v7699
      %7716 = vmatmul.bf16.gmra.mxu0 %v7706
      %v7717 = vpop.f32.mrf.mxu0
      %v7718 = vadd.f32 %v7675, %v7717
      %v7719 = vpop.f32.mrf.mxu0
      %v7720 = vadd.f32 %v7680, %v7719
      %7721 = vdwg.mxu0
      %v7722 = vmin.f32 %v7718, 20.0
      %v7723 = vmin.f32 %v7720, 20.0
      %v7724 = vmul.f32 %v7722, 1.442695
      %v7725 = vpow.pop %v7724
      %v7726 = vmul.f32 %v7723, 1.442695
      %v7727 = vpow.pop %v7726
      %v7728 = vadd.f32 %v7725, 2.0
      %v7729 = vadd.f32 %v7727, 2.0
      %v7730 = vmul.f32 %v7725, %v7728
      %v7731 = vmul.f32 %v7727, %v7729
      %v7732 = vadd.f32 %v7730, 2.0
      %v7733 = vadd.f32 %v7731, 2.0
      %v7734 = vrcp.pop %v7732
      %v7735 = vrcp.pop %v7733
      %v7736 = vmul.f32 %v7730, %v7734
      %v7737 = vmul.f32 %v7731, %v7735
      %v7738 = vmul.f32 %v7718, %v7736
      %v7739 = vmul.f32 %v7720, %v7737
      %v7740 = vld [vmem:[%s20] sm:$0xf]
      %v7741 = vld [vmem:[%s20 + $0x4] sm:$0xf]
      %v7744 = vunpack.c.l.b16 %v7740
      %v7745 = vunpack.c.l.b16 %v7741
      %v7746 = vpack.c.b16 %v7745, %v7744
      %v7750 = vsel %vm7164, %v7746, 0
      %7752 = vmatpush.bf16.msra.mxu0 0
      %7753 = vmatpush.bf16.msra.mxu0 0
      %7754 = vmatpush.bf16.msra.mxu0 0
      %7755 = vmatpush.bf16.msra.mxu0 0
      %7756 = vmatpush.bf16.msra.mxu0 0
      %7757 = vmatpush.bf16.msra.mxu0 0
      %7758 = vmatpush.bf16.msra.mxu0 %v7147
      %7759 = vmatpush.bf16.msra.mxu0 %v7146
      %7760 = vmatmul.bf16.gmra.mxu0 %v7750
      %v7761 = vpop.f32.mrf.mxu0
      %v7762 = vadd.f32 0.0, %v7761
      %v7763 = vpop.f32.mrf.mxu0
      %v7764 = vadd.f32 0.0, %v7763
      %7765 = vdwg.mxu0
      %v7766 = vadd.f32 %v7738, %v7762
      %v7767 = vadd.f32 %v7739, %v7764
      %v7768 = vld [vmem:[%s21] sm:$0xf]
      %v7769 = vld [vmem:[%s21 + $0x4] sm:$0x3]
      %v7770 = vpack.c.bf16 %v7767, %v7766
      %v7771 = vld [vmem:[%s22] sm:$0xff]
      %v7772 = vld [vmem:[%s22 + $0x8] sm:$0x7]
      %7774 = vset.pattern.permute.xlu0 0
      %7775 = vperm.xlu0 %7774, %v7771
      %v7776 = vpop.permute.xlu0 %7775
      %7779 = vset.pattern.permute.xlu0 0
      %7780 = vperm.xlu0 %7779, %v7772
      %v7781 = vpop.permute.xlu0 %7780
      %v7785 = vunpack.c.l.b16 %v7768
      %v7786 = vunpack.c.l.b16 %v7769
      %v7787 = vpack.c.b16 %v7786, %v7785
      %v7789 = vsel %vm1471, %v7787, 0
      %7791 = vmatpush.bf16.msra.mxu0 0
      %7792 = vmatpush.bf16.msra.mxu0 0
      %7793 = vmatpush.bf16.msra.mxu0 0
      %7794 = vmatpush.bf16.msra.mxu0 0
      %7795 = vmatpush.bf16.msra.mxu0 0
      %7796 = vmatpush.bf16.msra.mxu0 0
      %7797 = vmatpush.bf16.msra.mxu0 0
      %7798 = vmatpush.bf16.msra.mxu0 %v7770
      %7799 = vmatmul.bf16.gmra.mxu0 %v7789
      %v7800 = vpop.f32.mrf.mxu0
      %v7801 = vadd.f32 %v7776, %v7800
      %v7802 = vpop.f32.mrf.mxu0
      %v7803 = vadd.f32 %v7781, %v7802
      %7804 = vdwg.mxu0
      %7805 = vst [vmem:[%s710] sm:$0xff] %v7801
      %7806 = vst [vmem:[%s710 + $0x8] sm:$0x7] %v7803
      %p7807 = scmp.lt.s32.totalorder %s34, 1
      %s7808 = scalar_select %p7807, %s34, 1
      %s7809 = smul.addr %s7808, 2
      %s7810 = smul.addr %s7809, 8
      %s7811 = scalar_lea.vmem %s23, %s7810
      // Predicated region
      $region113: #{generator_tcn_forward.1} parent=111 // pred_check
        %p7812 = pneg %p540
      $region114: #{generator_tcn_forward.1} parent=111 // pred_check_branch
        %7814 = sbr.rel (%p7812) target = $region116
      $region115: #{generator_tcn_forward.1} parent=111 // pred_region
        _
      $region116: #{generator_tcn_forward.1} parent=111 // pred_fallthru
        _
    $region112: #{generator_tcn_forward.1} parent=5 // pred_fallthru
      _
    %p7815 = scmp.le.s32.totalorder 2, %s29
    // Predicated region
    $region117: #{generator_tcn_forward.1} parent=5 // pred_check
      %p7816 = pneg %p7815
    $region118: #{generator_tcn_forward.1} parent=5 // pred_check_branch
      %7818 = sbr.rel (%p7816) target = $region120
    $region119: #{generator_tcn_forward.1} parent=5 // pred_region
      %s7819 = ssub.s32 %s29, 2
      // Predicated region
      $region121: #{generator_tcn_forward.1} parent=119 // pred_check
        %p7820 = pneg %p546
      $region122: #{generator_tcn_forward.1} parent=119 // pred_check_branch
        %7822 = sbr.rel (%p7820) target = $region124
      $region123: #{generator_tcn_forward.1} parent=119 // pred_region
        %p7823 = scmp.lt.s32.totalorder %s35, 1
        %s7824 = scalar_select %p7823, %s35, 1
        %s7825 = smul.addr %s7824, 2
        %s7826 = smul.addr %s7825, 8
        %s7827 = scalar_lea.vmem %s23, %s7826
      $region124: #{generator_tcn_forward.1} parent=119 // pred_fallthru
        _
    $region120: #{generator_tcn_forward.1} parent=5 // pred_fallthru
      _
  $region6: #{generator_tcn_forward.1} parent=0 // loop_footer
    %s33 = sadd.s32 1, %s29
  $region7: #{generator_tcn_forward.1} parent=0 // loop_footer_branch
    %28 = sbr.rel target = $region3
  $region8: #{generator_tcn_forward.1} parent=0 // loop_exit
    _

</llo_original>
